<compile_context>
chip_gen: v7x
topology: tpu7x:2x2x1
jax: 0.10.0
libtpu: 0.0.40
codegen_flags: <defaults>
</compile_context>

<pallas_src>
import jax
import jax.numpy as jnp
from jax.experimental import pallas as pl
from jax.experimental.pallas import tpu as pltpu

EPS = 1e-5
LANE = 128
SUBLANE = 8


def _round_up(x, m):
    return (x + m - 1) // m * m


def up_block_kernel(x_ref, w1_ref, g1_ref, be1_ref, w2_ref, g2_ref, be2_ref,
                    o_ref, xp_ref):
    """Fused Conv3x3+BN+ReLU -> Conv3x3+BN+ReLU on a channel-padded NHWC block.

    x_ref:   (B, H, W, C)       bf16 lane-dense (channel-padded) NHWC input
    w*_ref:  (9, C, C)          bf16 per-tap conv weights (zeros in the channel pad)
    g*_ref:  (1, C)             f32 BN gamma (zeros in channel pad)
    be*_ref: (1, C)             f32 BN beta  (zeros in channel pad)
    o_ref:   (B, H, W, C)       f32 output (padded channels are exactly 0)
    xp_ref:  (B, H+2, Wp, C)    bf16 VMEM scratch: halo-padded activations
                                (Wp = round_up(W+2, 8) for sublane alignment)
    """
    B, H, W, C = x_ref.shape
    Wp = xp_ref.shape[2]
    M = B * H * W
    inv_m = 1.0 / M

    # ---- zero only the 1-px halo ring (interior is rewritten right below) ----
    zrow = jnp.zeros((B, 1, Wp, C), xp_ref.dtype)
    xp_ref[:, 0:1, :, :] = zrow                 # top halo row
    xp_ref[:, H + 1:H + 2, :, :] = zrow         # bottom halo row
    zcol = jnp.zeros((B, H + 2, 1, C), xp_ref.dtype)
    xp_ref[:, :, 0:1, :] = zcol                 # left halo column
    xp_ref[:, :, W + 1:W + 2, :] = zcol         # right halo column
    # columns >= W+2 of the sublane pad are never read by any tap -> left untouched.

    # interior <- input activations (halo stays zero across both stages)
    xp_ref[:, 1:H + 1, 1:W + 1, :] = x_ref[...]

    def conv_bn_relu(w_ref, g_ref, be_ref):
        # 9 accumulating tap matmuls straight off the halo scratch (no im2col slab).
        acc = jnp.zeros((M, C), jnp.float32)
        for k in range(9):
            dy, dx = k // 3, k % 3
            tap = xp_ref[:, dy:dy + H, dx:dx + W, :].reshape(M, C)   # bf16 (M, C)
            acc = acc + jnp.dot(tap, w_ref[k],
                                preferred_element_type=jnp.float32)  # f32 (M, C)

        # Training-mode BatchNorm over all N*H*W rows, biased variance, one pass.
        # Conv bias is omitted: it is cancelled exactly by the mean subtraction.
        s = jnp.sum(acc, axis=0, keepdims=True)                      # (1, C)
        sq = jnp.sum(acc * acc, axis=0, keepdims=True)               # (1, C)
        mean = s * inv_m
        var = jnp.maximum(sq * inv_m - mean * mean, 0.0)
        scale = g_ref[...] * jax.lax.rsqrt(var + EPS)
        shift = be_ref[...] - mean * scale
        return jnp.maximum(acc * scale + shift, 0.0)                 # f32 (M, C)

    # ---- stage 1 ----
    y1 = conv_bn_relu(w1_ref, g1_ref, be1_ref)
    # Stage-1 activations never leave VMEM: write back into the interior of the
    # halo scratch (halo stays zero) and reuse as the conv-2 input.
    xp_ref[:, 1:H + 1, 1:W + 1, :] = y1.reshape(B, H, W, C).astype(xp_ref.dtype)

    # ---- stage 2 ----
    o_ref[...] = conv_bn_relu(w2_ref, g2_ref, be2_ref).reshape(B, H, W, C)


def _pack_conv_weight(w_torch, cpad):
    """(Cout, Cin, 3, 3) PyTorch layout -> (9, cpad, cpad) per-tap bf16 (zero pad)."""
    cout, cin, kh, kw = w_torch.shape
    w = jnp.transpose(w_torch, (2, 3, 1, 0))                          # (3,3,Cin,Cout)
    w = jnp.pad(w, ((0, 0), (0, 0), (0, cpad - cin), (0, cpad - cout)))
    return w.reshape(kh * kw, cpad, cpad).astype(jnp.bfloat16)


def _pack_bn_vec(v, cpad):
    return jnp.pad(v.astype(jnp.float32), (0, cpad - v.shape[0])).reshape(1, cpad)


def up_block_forward(params, x1, x2, x3, x4, x5):
    """Inputs/outputs are NCHW (PyTorch convention)."""
    cout = params["g1"].shape[0]

    # Thin glue (tiny data here): per-tensor NCHW->NHWC, channel concat,
    # lane-dense channel pad, bf16 cast.
    # TODO(synk): fold this glue into the kernel for realistic activation sizes.
    xs = [jnp.transpose(x, (0, 2, 3, 1)) for x in (x1, x2, x3, x4, x5)]
    x = jnp.concatenate(xs, axis=-1)
    B, H, W, cin = x.shape
    cpad = _round_up(max(cin, cout), LANE)
    x = jnp.pad(x, ((0, 0), (0, 0), (0, 0), (0, cpad - cin))).astype(jnp.bfloat16)

    w1 = _pack_conv_weight(params["w1"], cpad)
    w2 = _pack_conv_weight(params["w2"], cpad)
    g1 = _pack_bn_vec(params["g1"], cpad)
    be1 = _pack_bn_vec(params["be1"], cpad)
    g2 = _pack_bn_vec(params["g2"], cpad)
    be2 = _pack_bn_vec(params["be2"], cpad)
    # params["b1"]/params["b2"] (conv biases) are intentionally NOT passed: training
    # mode BatchNorm subtracts the per-channel mean, which cancels them exactly.

    wp = _round_up(W + 2, SUBLANE)   # sublane-aligned halo width

    vmem = pl.BlockSpec(memory_space=pltpu.MemorySpace.VMEM)
    out = pl.pallas_call(
        up_block_kernel,
        out_shape=jax.ShapeDtypeStruct((B, H, W, cpad), jnp.float32),
        in_specs=[vmem] * 7,
        out_specs=vmem,
        scratch_shapes=[
            pltpu.VMEM((B, H + 2, wp, cpad), jnp.bfloat16),   # halo-padded acts
        ],
        compiler_params=pltpu.CompilerParams(vmem_limit_bytes=32 * 1024 * 1024),
    )(x, w1, g1, be1, w2, g2, be2)

    # Drop channel padding, back to NCHW.
    return jnp.transpose(out[..., :cout], (0, 3, 1, 2))


def init_params(key, input_channel, output_channel):
    k1, k2, k3, k4 = jax.random.split(key, 4)
    scale1 = 1.0 / jnp.sqrt(input_channel * 9.0)
    scale2 = 1.0 / jnp.sqrt(output_channel * 9.0)
    return {
        "w1": jax.random.uniform(k1, (output_channel, input_channel, 3, 3),
                                 jnp.float32, -scale1, scale1),
        "b1": jax.random.uniform(k2, (output_channel,), jnp.float32, -scale1, scale1),
        "g1": jnp.ones((output_channel,), jnp.float32),
        "be1": jnp.zeros((output_channel,), jnp.float32),
        "w2": jax.random.uniform(k3, (output_channel, output_channel, 3, 3),
                                 jnp.float32, -scale2, scale2),
        "b2": jax.random.uniform(k4, (output_channel,), jnp.float32, -scale2, scale2),
        "g2": jnp.ones((output_channel,), jnp.float32),
        "be2": jnp.zeros((output_channel,), jnp.float32),
    }


def _reference_forward(params, x1, x2, x3, x4, x5):
    """Plain-JAX f32 reference (matches the PyTorch module in training mode)."""
    x = jnp.concatenate([x1, x2, x3, x4, x5], axis=1).astype(jnp.float32)  # NCHW

    def conv_bn_relu(x, w, b, g, be):
        y = jax.lax.conv_general_dilated(
            x, w.astype(jnp.float32), window_strides=(1, 1), padding="SAME",
            dimension_numbers=("NCHW", "OIHW", "NCHW"))
        y = y + b[None, :, None, None]
        mean = jnp.mean(y, axis=(0, 2, 3), keepdims=True)
        var = jnp.mean((y - mean) ** 2, axis=(0, 2, 3), keepdims=True)
        y = (y - mean) * jax.lax.rsqrt(var + EPS)
        y = y * g[None, :, None, None] + be[None, :, None, None]
        return jnp.maximum(y, 0.0)

    y = conv_bn_relu(x, params["w1"], params["b1"], params["g1"], params["be1"])
    y = conv_bn_relu(y, params["w2"], params["b2"], params["g2"], params["be2"])
    return y


if __name__ == "__main__":
    key = jax.random.PRNGKey(0)
    kx, kp = jax.random.split(key)

    B, C_each, H, W = 2, 4, 8, 8
    input_channel = 5 * C_each   # concatenation of x1..x5 along channels
    output_channel = 16

    kxs = jax.random.split(kx, 5)
    xs = [jax.random.normal(kxs[i], (B, C_each, H, W), jnp.float32)
          for i in range(5)]

    params = init_params(kp, input_channel, output_channel)

    out = jax.block_until_ready(up_block_forward(params, *xs))
    assert out.shape == (B, output_channel, H, W), out.shape

    # Numerical sanity check against the plain-JAX f32 reference.  The kernel uses
    # bf16 MXU operands with f32 accumulation, so a few e-3 absolute error on the
    # unit-scale (post-BN) activations is expected.
    ref = jax.block_until_ready(_reference_forward(params, *xs))
    max_err = float(jnp.max(jnp.abs(out - ref)))
    assert max_err < 3e-2, f"max abs error {max_err}"

    print("KERNEL_OK")
</pallas_src>

<mosaic_0001>
module attributes {stable_mosaic.version = 11 : i64} {
  func.func @up_block_kernel(%arg0: memref<2x8x8x128xbf16, #tpu.memory_space<vmem>>, %arg1: memref<9x128x128xbf16, #tpu.memory_space<vmem>>, %arg2: memref<1x128xf32, #tpu.memory_space<vmem>>, %arg3: memref<1x128xf32, #tpu.memory_space<vmem>>, %arg4: memref<9x128x128xbf16, #tpu.memory_space<vmem>>, %arg5: memref<1x128xf32, #tpu.memory_space<vmem>>, %arg6: memref<1x128xf32, #tpu.memory_space<vmem>>, %arg7: memref<2x8x8x128xf32, #tpu.memory_space<vmem>>, %arg8: memref<2x10x16x128xbf16, #tpu.memory_space<vmem>>) attributes {dimension_semantics = [], scalar_prefetch = 0 : i64, scratch_operands = 1 : i64, tpu.core_type = #tpu.core_type<tc>} {
    %cst = arith.constant 0.000000e+00 : bf16
    %0 = vector.broadcast %cst : bf16 to vector<2x1x16x128xbf16>
    %c0 = arith.constant 0 : index
    %c0_0 = arith.constant 0 : index
    %c0_1 = arith.constant 0 : index
    %c0_2 = arith.constant 0 : index
    %1 = vector.load %arg8[%c0, %c0_0, %c0_1, %c0_2] : memref<2x10x16x128xbf16, #tpu.memory_space<vmem>>, vector<2x1x16x128xbf16>
    tpu.vector_store %arg8[%c0, %c0_0, %c0_1, %c0_2], %0 {strides = array<i32>} : memref<2x10x16x128xbf16, #tpu.memory_space<vmem>>, vector<2x1x16x128xbf16>,
    %c0_3 = arith.constant 0 : index
    %c9 = arith.constant 9 : index
    %c0_4 = arith.constant 0 : index
    %c0_5 = arith.constant 0 : index
    %2 = vector.load %arg8[%c0_3, %c9, %c0_4, %c0_5] : memref<2x10x16x128xbf16, #tpu.memory_space<vmem>>, vector<2x1x16x128xbf16>
    tpu.vector_store %arg8[%c0_3, %c9, %c0_4, %c0_5], %0 {strides = array<i32>} : memref<2x10x16x128xbf16, #tpu.memory_space<vmem>>, vector<2x1x16x128xbf16>,
    %cst_6 = arith.constant 0.000000e+00 : bf16
    %3 = vector.broadcast %cst_6 : bf16 to vector<2x10x1x128xbf16>
    %c0_7 = arith.constant 0 : index
    %c0_8 = arith.constant 0 : index
    %c0_9 = arith.constant 0 : index
    %c0_10 = arith.constant 0 : index
    %4 = vector.load %arg8[%c0_7, %c0_8, %c0_9, %c0_10] : memref<2x10x16x128xbf16, #tpu.memory_space<vmem>>, vector<2x10x1x128xbf16>
    tpu.vector_store %arg8[%c0_7, %c0_8, %c0_9, %c0_10], %3 {strides = array<i32>} : memref<2x10x16x128xbf16, #tpu.memory_space<vmem>>, vector<2x10x1x128xbf16>,
    %c0_11 = arith.constant 0 : index
    %c0_12 = arith.constant 0 : index
    %c9_13 = arith.constant 9 : index
    %c0_14 = arith.constant 0 : index
    %5 = vector.load %arg8[%c0_11, %c0_12, %c9_13, %c0_14] : memref<2x10x16x128xbf16, #tpu.memory_space<vmem>>, vector<2x10x1x128xbf16>
    tpu.vector_store %arg8[%c0_11, %c0_12, %c9_13, %c0_14], %3 {strides = array<i32>} : memref<2x10x16x128xbf16, #tpu.memory_space<vmem>>, vector<2x10x1x128xbf16>,
    %c0_15 = arith.constant 0 : index
    %c0_16 = arith.constant 0 : index
    %c0_17 = arith.constant 0 : index
    %c0_18 = arith.constant 0 : index
    %6 = vector.load %arg0[%c0_15, %c0_16, %c0_17, %c0_18] : memref<2x8x8x128xbf16, #tpu.memory_space<vmem>>, vector<2x8x8x128xbf16>
    %c0_19 = arith.constant 0 : index
    %c1 = arith.constant 1 : index
    %c1_20 = arith.constant 1 : index
    %c0_21 = arith.constant 0 : index
    %7 = vector.load %arg8[%c0_19, %c1, %c1_20, %c0_21] : memref<2x10x16x128xbf16, #tpu.memory_space<vmem>>, vector<2x8x8x128xbf16>
    tpu.vector_store %arg8[%c0_19, %c1, %c1_20, %c0_21], %6 {strides = array<i32>} : memref<2x10x16x128xbf16, #tpu.memory_space<vmem>>, vector<2x8x8x128xbf16>,
    %cst_22 = arith.constant 0.000000e+00 : f32
    %8 = vector.broadcast %cst_22 : f32 to vector<128x128xf32>
    %c0_23 = arith.constant 0 : index
    %c0_24 = arith.constant 0 : index
    %c0_25 = arith.constant 0 : index
    %c0_26 = arith.constant 0 : index
    %9 = vector.load %arg8[%c0_23, %c0_24, %c0_25, %c0_26] : memref<2x10x16x128xbf16, #tpu.memory_space<vmem>>, vector<2x8x8x128xbf16>
    %10 = vector.shape_cast %9 : vector<2x8x8x128xbf16> to vector<128x128xbf16>
    %c0_27 = arith.constant 0 : index
    %c0_28 = arith.constant 0 : index
    %c0_29 = arith.constant 0 : index
    %11 = vector.load %arg1[%c0_27, %c0_28, %c0_29] : memref<9x128x128xbf16, #tpu.memory_space<vmem>>, vector<1x128x128xbf16>
    %12 = vector.shape_cast %11 : vector<1x128x128xbf16> to vector<128x128xbf16>
    %cst_30 = arith.constant dense<0.000000e+00> : vector<128x128xf32>
    %13 = tpu.matmul %10, %12, %cst_30 {dimension_numbers = #tpu.dot_dimension_numbers<[1], [0], [0], [1], [0, 0, 1, 1], [], []>} : vector<128x128xbf16>, vector<128x128xbf16>, vector<128x128xf32> -> vector<128x128xf32>
    %14 = arith.addf %8, %13 : vector<128x128xf32>
    %c0_31 = arith.constant 0 : index
    %c0_32 = arith.constant 0 : index
    %c1_33 = arith.constant 1 : index
    %c0_34 = arith.constant 0 : index
    %15 = vector.load %arg8[%c0_31, %c0_32, %c1_33, %c0_34] : memref<2x10x16x128xbf16, #tpu.memory_space<vmem>>, vector<2x8x8x128xbf16>
    %16 = vector.shape_cast %15 : vector<2x8x8x128xbf16> to vector<128x128xbf16>
    %c1_35 = arith.constant 1 : index
    %c0_36 = arith.constant 0 : index
    %c0_37 = arith.constant 0 : index
    %17 = vector.load %arg1[%c1_35, %c0_36, %c0_37] : memref<9x128x128xbf16, #tpu.memory_space<vmem>>, vector<1x128x128xbf16>
    %18 = vector.shape_cast %17 : vector<1x128x128xbf16> to vector<128x128xbf16>
    %cst_38 = arith.constant dense<0.000000e+00> : vector<128x128xf32>
    %19 = tpu.matmul %16, %18, %cst_38 {dimension_numbers = #tpu.dot_dimension_numbers<[1], [0], [0], [1], [0, 0, 1, 1], [], []>} : vector<128x128xbf16>, vector<128x128xbf16>, vector<128x128xf32> -> vector<128x128xf32>
    %20 = arith.addf %14, %19 : vector<128x128xf32>
    %c0_39 = arith.constant 0 : index
    %c0_40 = arith.constant 0 : index
    %c2 = arith.constant 2 : index
    %c0_41 = arith.constant 0 : index
    %21 = vector.load %arg8[%c0_39, %c0_40, %c2, %c0_41] : memref<2x10x16x128xbf16, #tpu.memory_space<vmem>>, vector<2x8x8x128xbf16>
    %22 = vector.shape_cast %21 : vector<2x8x8x128xbf16> to vector<128x128xbf16>
    %c2_42 = arith.constant 2 : index
    %c0_43 = arith.constant 0 : index
    %c0_44 = arith.constant 0 : index
    %23 = vector.load %arg1[%c2_42, %c0_43, %c0_44] : memref<9x128x128xbf16, #tpu.memory_space<vmem>>, vector<1x128x128xbf16>
    %24 = vector.shape_cast %23 : vector<1x128x128xbf16> to vector<128x128xbf16>
    %cst_45 = arith.constant dense<0.000000e+00> : vector<128x128xf32>
    %25 = tpu.matmul %22, %24, %cst_45 {dimension_numbers = #tpu.dot_dimension_numbers<[1], [0], [0], [1], [0, 0, 1, 1], [], []>} : vector<128x128xbf16>, vector<128x128xbf16>, vector<128x128xf32> -> vector<128x128xf32>
    %26 = arith.addf %20, %25 : vector<128x128xf32>
    %c0_46 = arith.constant 0 : index
    %c1_47 = arith.constant 1 : index
    %c0_48 = arith.constant 0 : index
    %c0_49 = arith.constant 0 : index
    %27 = vector.load %arg8[%c0_46, %c1_47, %c0_48, %c0_49] : memref<2x10x16x128xbf16, #tpu.memory_space<vmem>>, vector<2x8x8x128xbf16>
    %28 = vector.shape_cast %27 : vector<2x8x8x128xbf16> to vector<128x128xbf16>
    %c3 = arith.constant 3 : index
    %c0_50 = arith.constant 0 : index
    %c0_51 = arith.constant 0 : index
    %29 = vector.load %arg1[%c3, %c0_50, %c0_51] : memref<9x128x128xbf16, #tpu.memory_space<vmem>>, vector<1x128x128xbf16>
    %30 = vector.shape_cast %29 : vector<1x128x128xbf16> to vector<128x128xbf16>
    %cst_52 = arith.constant dense<0.000000e+00> : vector<128x128xf32>
    %31 = tpu.matmul %28, %30, %cst_52 {dimension_numbers = #tpu.dot_dimension_numbers<[1], [0], [0], [1], [0, 0, 1, 1], [], []>} : vector<128x128xbf16>, vector<128x128xbf16>, vector<128x128xf32> -> vector<128x128xf32>
    %32 = arith.addf %26, %31 : vector<128x128xf32>
    %c0_53 = arith.constant 0 : index
    %c1_54 = arith.constant 1 : index
    %c1_55 = arith.constant 1 : index
    %c0_56 = arith.constant 0 : index
    %33 = vector.load %arg8[%c0_53, %c1_54, %c1_55, %c0_56] : memref<2x10x16x128xbf16, #tpu.memory_space<vmem>>, vector<2x8x8x128xbf16>
    %34 = vector.shape_cast %33 : vector<2x8x8x128xbf16> to vector<128x128xbf16>
    %c4 = arith.constant 4 : index
    %c0_57 = arith.constant 0 : index
    %c0_58 = arith.constant 0 : index
    %35 = vector.load %arg1[%c4, %c0_57, %c0_58] : memref<9x128x128xbf16, #tpu.memory_space<vmem>>, vector<1x128x128xbf16>
    %36 = vector.shape_cast %35 : vector<1x128x128xbf16> to vector<128x128xbf16>
    %cst_59 = arith.constant dense<0.000000e+00> : vector<128x128xf32>
    %37 = tpu.matmul %34, %36, %cst_59 {dimension_numbers = #tpu.dot_dimension_numbers<[1], [0], [0], [1], [0, 0, 1, 1], [], []>} : vector<128x128xbf16>, vector<128x128xbf16>, vector<128x128xf32> -> vector<128x128xf32>
    %38 = arith.addf %32, %37 : vector<128x128xf32>
    %c0_60 = arith.constant 0 : index
    %c1_61 = arith.constant 1 : index
    %c2_62 = arith.constant 2 : index
    %c0_63 = arith.constant 0 : index
    %39 = vector.load %arg8[%c0_60, %c1_61, %c2_62, %c0_63] : memref<2x10x16x128xbf16, #tpu.memory_space<vmem>>, vector<2x8x8x128xbf16>
    %40 = vector.shape_cast %39 : vector<2x8x8x128xbf16> to vector<128x128xbf16>
    %c5 = arith.constant 5 : index
    %c0_64 = arith.constant 0 : index
    %c0_65 = arith.constant 0 : index
    %41 = vector.load %arg1[%c5, %c0_64, %c0_65] : memref<9x128x128xbf16, #tpu.memory_space<vmem>>, vector<1x128x128xbf16>
    %42 = vector.shape_cast %41 : vector<1x128x128xbf16> to vector<128x128xbf16>
    %cst_66 = arith.constant dense<0.000000e+00> : vector<128x128xf32>
    %43 = tpu.matmul %40, %42, %cst_66 {dimension_numbers = #tpu.dot_dimension_numbers<[1], [0], [0], [1], [0, 0, 1, 1], [], []>} : vector<128x128xbf16>, vector<128x128xbf16>, vector<128x128xf32> -> vector<128x128xf32>
    %44 = arith.addf %38, %43 : vector<128x128xf32>
    %c0_67 = arith.constant 0 : index
    %c2_68 = arith.constant 2 : index
    %c0_69 = arith.constant 0 : index
    %c0_70 = arith.constant 0 : index
    %45 = vector.load %arg8[%c0_67, %c2_68, %c0_69, %c0_70] : memref<2x10x16x128xbf16, #tpu.memory_space<vmem>>, vector<2x8x8x128xbf16>
    %46 = vector.shape_cast %45 : vector<2x8x8x128xbf16> to vector<128x128xbf16>
    %c6 = arith.constant 6 : index
    %c0_71 = arith.constant 0 : index
    %c0_72 = arith.constant 0 : index
    %47 = vector.load %arg1[%c6, %c0_71, %c0_72] : memref<9x128x128xbf16, #tpu.memory_space<vmem>>, vector<1x128x128xbf16>
    %48 = vector.shape_cast %47 : vector<1x128x128xbf16> to vector<128x128xbf16>
    %cst_73 = arith.constant dense<0.000000e+00> : vector<128x128xf32>
    %49 = tpu.matmul %46, %48, %cst_73 {dimension_numbers = #tpu.dot_dimension_numbers<[1], [0], [0], [1], [0, 0, 1, 1], [], []>} : vector<128x128xbf16>, vector<128x128xbf16>, vector<128x128xf32> -> vector<128x128xf32>
    %50 = arith.addf %44, %49 : vector<128x128xf32>
    %c0_74 = arith.constant 0 : index
    %c2_75 = arith.constant 2 : index
    %c1_76 = arith.constant 1 : index
    %c0_77 = arith.constant 0 : index
    %51 = vector.load %arg8[%c0_74, %c2_75, %c1_76, %c0_77] : memref<2x10x16x128xbf16, #tpu.memory_space<vmem>>, vector<2x8x8x128xbf16>
    %52 = vector.shape_cast %51 : vector<2x8x8x128xbf16> to vector<128x128xbf16>
    %c7 = arith.constant 7 : index
    %c0_78 = arith.constant 0 : index
    %c0_79 = arith.constant 0 : index
    %53 = vector.load %arg1[%c7, %c0_78, %c0_79] : memref<9x128x128xbf16, #tpu.memory_space<vmem>>, vector<1x128x128xbf16>
    %54 = vector.shape_cast %53 : vector<1x128x128xbf16> to vector<128x128xbf16>
    %cst_80 = arith.constant dense<0.000000e+00> : vector<128x128xf32>
    %55 = tpu.matmul %52, %54, %cst_80 {dimension_numbers = #tpu.dot_dimension_numbers<[1], [0], [0], [1], [0, 0, 1, 1], [], []>} : vector<128x128xbf16>, vector<128x128xbf16>, vector<128x128xf32> -> vector<128x128xf32>
    %56 = arith.addf %50, %55 : vector<128x128xf32>
    %c0_81 = arith.constant 0 : index
    %c2_82 = arith.constant 2 : index
    %c2_83 = arith.constant 2 : index
    %c0_84 = arith.constant 0 : index
    %57 = vector.load %arg8[%c0_81, %c2_82, %c2_83, %c0_84] : memref<2x10x16x128xbf16, #tpu.memory_space<vmem>>, vector<2x8x8x128xbf16>
    %58 = vector.shape_cast %57 : vector<2x8x8x128xbf16> to vector<128x128xbf16>
    %c8 = arith.constant 8 : index
    %c0_85 = arith.constant 0 : index
    %c0_86 = arith.constant 0 : index
    %59 = vector.load %arg1[%c8, %c0_85, %c0_86] : memref<9x128x128xbf16, #tpu.memory_space<vmem>>, vector<1x128x128xbf16>
    %60 = vector.shape_cast %59 : vector<1x128x128xbf16> to vector<128x128xbf16>
    %cst_87 = arith.constant dense<0.000000e+00> : vector<128x128xf32>
    %61 = tpu.matmul %58, %60, %cst_87 {dimension_numbers = #tpu.dot_dimension_numbers<[1], [0], [0], [1], [0, 0, 1, 1], [], []>} : vector<128x128xbf16>, vector<128x128xbf16>, vector<128x128xf32> -> vector<128x128xf32>
    %62 = arith.addf %56, %61 : vector<128x128xf32>
    %cst_88 = arith.constant dense<0.000000e+00> : vector<128xf32>
    %63 = vector.multi_reduction <add>, %62, %cst_88 [0] : vector<128x128xf32> to vector<128xf32>
    %64 = vector.shape_cast %63 : vector<128xf32> to vector<1x128xf32>
    %65 = arith.mulf %62, %62 : vector<128x128xf32>
    %cst_89 = arith.constant dense<0.000000e+00> : vector<128xf32>
    %66 = vector.multi_reduction <add>, %65, %cst_89 [0] : vector<128x128xf32> to vector<128xf32>
    %67 = vector.shape_cast %66 : vector<128xf32> to vector<1x128xf32>
    %cst_90 = arith.constant 7.812500e-03 : f32
    %68 = vector.broadcast %cst_90 : f32 to vector<1x128xf32>
    %69 = arith.mulf %64, %68 : vector<1x128xf32>
    %cst_91 = arith.constant 7.812500e-03 : f32
    %70 = vector.broadcast %cst_91 : f32 to vector<1x128xf32>
    %71 = arith.mulf %67, %70 : vector<1x128xf32>
    %72 = arith.mulf %69, %69 : vector<1x128xf32>
    %73 = arith.subf %71, %72 : vector<1x128xf32>
    %cst_92 = arith.constant 0.000000e+00 : f32
    %74 = vector.broadcast %cst_92 : f32 to vector<1x128xf32>
    %75 = arith.maximumf %73, %74 : vector<1x128xf32>
    %c0_93 = arith.constant 0 : index
    %c0_94 = arith.constant 0 : index
    %76 = vector.load %arg2[%c0_93, %c0_94] : memref<1x128xf32, #tpu.memory_space<vmem>>, vector<1x128xf32>
    %cst_95 = arith.constant 9.99999974E-6 : f32
    %77 = vector.broadcast %cst_95 : f32 to vector<1x128xf32>
    %78 = arith.addf %75, %77 : vector<1x128xf32>
    %79 = math.rsqrt %78 : vector<1x128xf32>
    %80 = arith.mulf %76, %79 : vector<1x128xf32>
    %c0_96 = arith.constant 0 : index
    %c0_97 = arith.constant 0 : index
    %81 = vector.load %arg3[%c0_96, %c0_97] : memref<1x128xf32, #tpu.memory_space<vmem>>, vector<1x128xf32>
    %82 = arith.mulf %69, %80 : vector<1x128xf32>
    %83 = arith.subf %81, %82 : vector<1x128xf32>
    %84 = vector.broadcast %80 : vector<1x128xf32> to vector<128x128xf32>
    %85 = arith.mulf %62, %84 : vector<128x128xf32>
    %86 = vector.broadcast %83 : vector<1x128xf32> to vector<128x128xf32>
    %87 = arith.addf %85, %86 : vector<128x128xf32>
    %cst_98 = arith.constant 0.000000e+00 : f32
    %88 = vector.broadcast %cst_98 : f32 to vector<128x128xf32>
    %89 = arith.maximumf %87, %88 : vector<128x128xf32>
    %90 = vector.shape_cast %89 : vector<128x128xf32> to vector<2x8x8x128xf32>
    %91 = arith.truncf %90 : vector<2x8x8x128xf32> to vector<2x8x8x128xbf16>
    %c0_99 = arith.constant 0 : index
    %c1_100 = arith.constant 1 : index
    %c1_101 = arith.constant 1 : index
    %c0_102 = arith.constant 0 : index
    %92 = vector.load %arg8[%c0_99, %c1_100, %c1_101, %c0_102] : memref<2x10x16x128xbf16, #tpu.memory_space<vmem>>, vector<2x8x8x128xbf16>
    tpu.vector_store %arg8[%c0_99, %c1_100, %c1_101, %c0_102], %91 {strides = array<i32>} : memref<2x10x16x128xbf16, #tpu.memory_space<vmem>>, vector<2x8x8x128xbf16>,
    %cst_103 = arith.constant 0.000000e+00 : f32
    %93 = vector.broadcast %cst_103 : f32 to vector<128x128xf32>
    %c0_104 = arith.constant 0 : index
    %c0_105 = arith.constant 0 : index
    %c0_106 = arith.constant 0 : index
    %c0_107 = arith.constant 0 : index
    %94 = vector.load %arg8[%c0_104, %c0_105, %c0_106, %c0_107] : memref<2x10x16x128xbf16, #tpu.memory_space<vmem>>, vector<2x8x8x128xbf16>
    %95 = vector.shape_cast %94 : vector<2x8x8x128xbf16> to vector<128x128xbf16>
    %c0_108 = arith.constant 0 : index
    %c0_109 = arith.constant 0 : index
    %c0_110 = arith.constant 0 : index
    %96 = vector.load %arg4[%c0_108, %c0_109, %c0_110] : memref<9x128x128xbf16, #tpu.memory_space<vmem>>, vector<1x128x128xbf16>
    %97 = vector.shape_cast %96 : vector<1x128x128xbf16> to vector<128x128xbf16>
    %cst_111 = arith.constant dense<0.000000e+00> : vector<128x128xf32>
    %98 = tpu.matmul %95, %97, %cst_111 {dimension_numbers = #tpu.dot_dimension_numbers<[1], [0], [0], [1], [0, 0, 1, 1], [], []>} : vector<128x128xbf16>, vector<128x128xbf16>, vector<128x128xf32> -> vector<128x128xf32>
    %99 = arith.addf %93, %98 : vector<128x128xf32>
    %c0_112 = arith.constant 0 : index
    %c0_113 = arith.constant 0 : index
    %c1_114 = arith.constant 1 : index
    %c0_115 = arith.constant 0 : index
    %100 = vector.load %arg8[%c0_112, %c0_113, %c1_114, %c0_115] : memref<2x10x16x128xbf16, #tpu.memory_space<vmem>>, vector<2x8x8x128xbf16>
    %101 = vector.shape_cast %100 : vector<2x8x8x128xbf16> to vector<128x128xbf16>
    %c1_116 = arith.constant 1 : index
    %c0_117 = arith.constant 0 : index
    %c0_118 = arith.constant 0 : index
    %102 = vector.load %arg4[%c1_116, %c0_117, %c0_118] : memref<9x128x128xbf16, #tpu.memory_space<vmem>>, vector<1x128x128xbf16>
    %103 = vector.shape_cast %102 : vector<1x128x128xbf16> to vector<128x128xbf16>
    %cst_119 = arith.constant dense<0.000000e+00> : vector<128x128xf32>
    %104 = tpu.matmul %101, %103, %cst_119 {dimension_numbers = #tpu.dot_dimension_numbers<[1], [0], [0], [1], [0, 0, 1, 1], [], []>} : vector<128x128xbf16>, vector<128x128xbf16>, vector<128x128xf32> -> vector<128x128xf32>
    %105 = arith.addf %99, %104 : vector<128x128xf32>
    %c0_120 = arith.constant 0 : index
    %c0_121 = arith.constant 0 : index
    %c2_122 = arith.constant 2 : index
    %c0_123 = arith.constant 0 : index
    %106 = vector.load %arg8[%c0_120, %c0_121, %c2_122, %c0_123] : memref<2x10x16x128xbf16, #tpu.memory_space<vmem>>, vector<2x8x8x128xbf16>
    %107 = vector.shape_cast %106 : vector<2x8x8x128xbf16> to vector<128x128xbf16>
    %c2_124 = arith.constant 2 : index
    %c0_125 = arith.constant 0 : index
    %c0_126 = arith.constant 0 : index
    %108 = vector.load %arg4[%c2_124, %c0_125, %c0_126] : memref<9x128x128xbf16, #tpu.memory_space<vmem>>, vector<1x128x128xbf16>
    %109 = vector.shape_cast %108 : vector<1x128x128xbf16> to vector<128x128xbf16>
    %cst_127 = arith.constant dense<0.000000e+00> : vector<128x128xf32>
    %110 = tpu.matmul %107, %109, %cst_127 {dimension_numbers = #tpu.dot_dimension_numbers<[1], [0], [0], [1], [0, 0, 1, 1], [], []>} : vector<128x128xbf16>, vector<128x128xbf16>, vector<128x128xf32> -> vector<128x128xf32>
    %111 = arith.addf %105, %110 : vector<128x128xf32>
    %c0_128 = arith.constant 0 : index
    %c1_129 = arith.constant 1 : index
    %c0_130 = arith.constant 0 : index
    %c0_131 = arith.constant 0 : index
    %112 = vector.load %arg8[%c0_128, %c1_129, %c0_130, %c0_131] : memref<2x10x16x128xbf16, #tpu.memory_space<vmem>>, vector<2x8x8x128xbf16>
    %113 = vector.shape_cast %112 : vector<2x8x8x128xbf16> to vector<128x128xbf16>
    %c3_132 = arith.constant 3 : index
    %c0_133 = arith.constant 0 : index
    %c0_134 = arith.constant 0 : index
    %114 = vector.load %arg4[%c3_132, %c0_133, %c0_134] : memref<9x128x128xbf16, #tpu.memory_space<vmem>>, vector<1x128x128xbf16>
    %115 = vector.shape_cast %114 : vector<1x128x128xbf16> to vector<128x128xbf16>
    %cst_135 = arith.constant dense<0.000000e+00> : vector<128x128xf32>
    %116 = tpu.matmul %113, %115, %cst_135 {dimension_numbers = #tpu.dot_dimension_numbers<[1], [0], [0], [1], [0, 0, 1, 1], [], []>} : vector<128x128xbf16>, vector<128x128xbf16>, vector<128x128xf32> -> vector<128x128xf32>
    %117 = arith.addf %111, %116 : vector<128x128xf32>
    %c0_136 = arith.constant 0 : index
    %c1_137 = arith.constant 1 : index
    %c1_138 = arith.constant 1 : index
    %c0_139 = arith.constant 0 : index
    %118 = vector.load %arg8[%c0_136, %c1_137, %c1_138, %c0_139] : memref<2x10x16x128xbf16, #tpu.memory_space<vmem>>, vector<2x8x8x128xbf16>
    %119 = vector.shape_cast %118 : vector<2x8x8x128xbf16> to vector<128x128xbf16>
    %c4_140 = arith.constant 4 : index
    %c0_141 = arith.constant 0 : index
    %c0_142 = arith.constant 0 : index
    %120 = vector.load %arg4[%c4_140, %c0_141, %c0_142] : memref<9x128x128xbf16, #tpu.memory_space<vmem>>, vector<1x128x128xbf16>
    %121 = vector.shape_cast %120 : vector<1x128x128xbf16> to vector<128x128xbf16>
    %cst_143 = arith.constant dense<0.000000e+00> : vector<128x128xf32>
    %122 = tpu.matmul %119, %121, %cst_143 {dimension_numbers = #tpu.dot_dimension_numbers<[1], [0], [0], [1], [0, 0, 1, 1], [], []>} : vector<128x128xbf16>, vector<128x128xbf16>, vector<128x128xf32> -> vector<128x128xf32>
    %123 = arith.addf %117, %122 : vector<128x128xf32>
    %c0_144 = arith.constant 0 : index
    %c1_145 = arith.constant 1 : index
    %c2_146 = arith.constant 2 : index
    %c0_147 = arith.constant 0 : index
    %124 = vector.load %arg8[%c0_144, %c1_145, %c2_146, %c0_147] : memref<2x10x16x128xbf16, #tpu.memory_space<vmem>>, vector<2x8x8x128xbf16>
    %125 = vector.shape_cast %124 : vector<2x8x8x128xbf16> to vector<128x128xbf16>
    %c5_148 = arith.constant 5 : index
    %c0_149 = arith.constant 0 : index
    %c0_150 = arith.constant 0 : index
    %126 = vector.load %arg4[%c5_148, %c0_149, %c0_150] : memref<9x128x128xbf16, #tpu.memory_space<vmem>>, vector<1x128x128xbf16>
    %127 = vector.shape_cast %126 : vector<1x128x128xbf16> to vector<128x128xbf16>
    %cst_151 = arith.constant dense<0.000000e+00> : vector<128x128xf32>
    %128 = tpu.matmul %125, %127, %cst_151 {dimension_numbers = #tpu.dot_dimension_numbers<[1], [0], [0], [1], [0, 0, 1, 1], [], []>} : vector<128x128xbf16>, vector<128x128xbf16>, vector<128x128xf32> -> vector<128x128xf32>
    %129 = arith.addf %123, %128 : vector<128x128xf32>
    %c0_152 = arith.constant 0 : index
    %c2_153 = arith.constant 2 : index
    %c0_154 = arith.constant 0 : index
    %c0_155 = arith.constant 0 : index
    %130 = vector.load %arg8[%c0_152, %c2_153, %c0_154, %c0_155] : memref<2x10x16x128xbf16, #tpu.memory_space<vmem>>, vector<2x8x8x128xbf16>
    %131 = vector.shape_cast %130 : vector<2x8x8x128xbf16> to vector<128x128xbf16>
    %c6_156 = arith.constant 6 : index
    %c0_157 = arith.constant 0 : index
    %c0_158 = arith.constant 0 : index
    %132 = vector.load %arg4[%c6_156, %c0_157, %c0_158] : memref<9x128x128xbf16, #tpu.memory_space<vmem>>, vector<1x128x128xbf16>
    %133 = vector.shape_cast %132 : vector<1x128x128xbf16> to vector<128x128xbf16>
    %cst_159 = arith.constant dense<0.000000e+00> : vector<128x128xf32>
    %134 = tpu.matmul %131, %133, %cst_159 {dimension_numbers = #tpu.dot_dimension_numbers<[1], [0], [0], [1], [0, 0, 1, 1], [], []>} : vector<128x128xbf16>, vector<128x128xbf16>, vector<128x128xf32> -> vector<128x128xf32>
    %135 = arith.addf %129, %134 : vector<128x128xf32>
    %c0_160 = arith.constant 0 : index
    %c2_161 = arith.constant 2 : index
    %c1_162 = arith.constant 1 : index
    %c0_163 = arith.constant 0 : index
    %136 = vector.load %arg8[%c0_160, %c2_161, %c1_162, %c0_163] : memref<2x10x16x128xbf16, #tpu.memory_space<vmem>>, vector<2x8x8x128xbf16>
    %137 = vector.shape_cast %136 : vector<2x8x8x128xbf16> to vector<128x128xbf16>
    %c7_164 = arith.constant 7 : index
    %c0_165 = arith.constant 0 : index
    %c0_166 = arith.constant 0 : index
    %138 = vector.load %arg4[%c7_164, %c0_165, %c0_166] : memref<9x128x128xbf16, #tpu.memory_space<vmem>>, vector<1x128x128xbf16>
    %139 = vector.shape_cast %138 : vector<1x128x128xbf16> to vector<128x128xbf16>
    %cst_167 = arith.constant dense<0.000000e+00> : vector<128x128xf32>
    %140 = tpu.matmul %137, %139, %cst_167 {dimension_numbers = #tpu.dot_dimension_numbers<[1], [0], [0], [1], [0, 0, 1, 1], [], []>} : vector<128x128xbf16>, vector<128x128xbf16>, vector<128x128xf32> -> vector<128x128xf32>
    %141 = arith.addf %135, %140 : vector<128x128xf32>
    %c0_168 = arith.constant 0 : index
    %c2_169 = arith.constant 2 : index
    %c2_170 = arith.constant 2 : index
    %c0_171 = arith.constant 0 : index
    %142 = vector.load %arg8[%c0_168, %c2_169, %c2_170, %c0_171] : memref<2x10x16x128xbf16, #tpu.memory_space<vmem>>, vector<2x8x8x128xbf16>
    %143 = vector.shape_cast %142 : vector<2x8x8x128xbf16> to vector<128x128xbf16>
    %c8_172 = arith.constant 8 : index
    %c0_173 = arith.constant 0 : index
    %c0_174 = arith.constant 0 : index
    %144 = vector.load %arg4[%c8_172, %c0_173, %c0_174] : memref<9x128x128xbf16, #tpu.memory_space<vmem>>, vector<1x128x128xbf16>
    %145 = vector.shape_cast %144 : vector<1x128x128xbf16> to vector<128x128xbf16>
    %cst_175 = arith.constant dense<0.000000e+00> : vector<128x128xf32>
    %146 = tpu.matmul %143, %145, %cst_175 {dimension_numbers = #tpu.dot_dimension_numbers<[1], [0], [0], [1], [0, 0, 1, 1], [], []>} : vector<128x128xbf16>, vector<128x128xbf16>, vector<128x128xf32> -> vector<128x128xf32>
    %147 = arith.addf %141, %146 : vector<128x128xf32>
    %cst_176 = arith.constant dense<0.000000e+00> : vector<128xf32>
    %148 = vector.multi_reduction <add>, %147, %cst_176 [0] : vector<128x128xf32> to vector<128xf32>
    %149 = vector.shape_cast %148 : vector<128xf32> to vector<1x128xf32>
    %150 = arith.mulf %147, %147 : vector<128x128xf32>
    %cst_177 = arith.constant dense<0.000000e+00> : vector<128xf32>
    %151 = vector.multi_reduction <add>, %150, %cst_177 [0] : vector<128x128xf32> to vector<128xf32>
    %152 = vector.shape_cast %151 : vector<128xf32> to vector<1x128xf32>
    %cst_178 = arith.constant 7.812500e-03 : f32
    %153 = vector.broadcast %cst_178 : f32 to vector<1x128xf32>
    %154 = arith.mulf %149, %153 : vector<1x128xf32>
    %cst_179 = arith.constant 7.812500e-03 : f32
    %155 = vector.broadcast %cst_179 : f32 to vector<1x128xf32>
    %156 = arith.mulf %152, %155 : vector<1x128xf32>
    %157 = arith.mulf %154, %154 : vector<1x128xf32>
    %158 = arith.subf %156, %157 : vector<1x128xf32>
    %cst_180 = arith.constant 0.000000e+00 : f32
    %159 = vector.broadcast %cst_180 : f32 to vector<1x128xf32>
    %160 = arith.maximumf %158, %159 : vector<1x128xf32>
    %c0_181 = arith.constant 0 : index
    %c0_182 = arith.constant 0 : index
    %161 = vector.load %arg5[%c0_181, %c0_182] : memref<1x128xf32, #tpu.memory_space<vmem>>, vector<1x128xf32>
    %cst_183 = arith.constant 9.99999974E-6 : f32
    %162 = vector.broadcast %cst_183 : f32 to vector<1x128xf32>
    %163 = arith.addf %160, %162 : vector<1x128xf32>
    %164 = math.rsqrt %163 : vector<1x128xf32>
    %165 = arith.mulf %161, %164 : vector<1x128xf32>
    %c0_184 = arith.constant 0 : index
    %c0_185 = arith.constant 0 : index
    %166 = vector.load %arg6[%c0_184, %c0_185] : memref<1x128xf32, #tpu.memory_space<vmem>>, vector<1x128xf32>
    %167 = arith.mulf %154, %165 : vector<1x128xf32>
    %168 = arith.subf %166, %167 : vector<1x128xf32>
    %169 = vector.broadcast %165 : vector<1x128xf32> to vector<128x128xf32>
    %170 = arith.mulf %147, %169 : vector<128x128xf32>
    %171 = vector.broadcast %168 : vector<1x128xf32> to vector<128x128xf32>
    %172 = arith.addf %170, %171 : vector<128x128xf32>
    %cst_186 = arith.constant 0.000000e+00 : f32
    %173 = vector.broadcast %cst_186 : f32 to vector<128x128xf32>
    %174 = arith.maximumf %172, %173 : vector<128x128xf32>
    %175 = vector.shape_cast %174 : vector<128x128xf32> to vector<2x8x8x128xf32>
    %c0_187 = arith.constant 0 : index
    %c0_188 = arith.constant 0 : index
    %c0_189 = arith.constant 0 : index
    %c0_190 = arith.constant 0 : index
    %176 = vector.load %arg7[%c0_187, %c0_188, %c0_189, %c0_190] : memref<2x8x8x128xf32, #tpu.memory_space<vmem>>, vector<2x8x8x128xf32>
    tpu.vector_store %arg7[%c0_187, %c0_188, %c0_189, %c0_190], %175 {strides = array<i32>} : memref<2x8x8x128xf32, #tpu.memory_space<vmem>>, vector<2x8x8x128xf32>,
    return
  }
}

</mosaic_0001>

<llo_original>
// kernel: tpu_custom_call.1
$region0: #{tpu_custom_call.1}
  #allocation0 [shape = 'u32[]', space=smem, size = 0x4, offset = 0x4, fixed_abs, tag = 'smem constant byte address 0x4 - core index']
  #allocation1 [shape = 'u32[144,128]{1,0:T(1,128)}', space=vmem, size = 0x12000, scoped, tag = 'internal scratch']
  #allocation2 [shape = 'bf16[2,10,16,128]{3,2,1,0:T(16,128)(2,1)}', space=vmem, size = 0x14000, scoped, tag = 'scratch operand']
  %s0 = inlined_call_operand.hbm [shape: bf16[2,8,8,128], index: 0, kind: input, shape index: {}]
  %s1 = inlined_call_operand.hbm [shape: bf16[9,128,128], index: 1, kind: input, shape index: {}]
  %s2 = inlined_call_operand.vmem [shape: f32[1,128], index: 2, kind: input, shape index: {}]
  %s3 = inlined_call_operand.vmem [shape: f32[1,128], index: 3, kind: input, shape index: {}]
  %s4 = inlined_call_operand.hbm [shape: bf16[9,128,128], index: 4, kind: input, shape index: {}]
  %s5 = inlined_call_operand.vmem [shape: f32[1,128], index: 5, kind: input, shape index: {}]
  %s6 = inlined_call_operand.vmem [shape: f32[1,128], index: 6, kind: input, shape index: {}]
  %s7 = inlined_call_operand.hbm [shape: f32[2,8,8,128], index: 7, kind: output, shape index: {}]
  %s8 = sld [smem:[#allocation0]]
  $region50: #{tpu_custom_call.1} parent=0
    _
  %s10 = ssub.s32 1, %s8
  %s11 = scalar_select 0, %s10, %s8
  $region1: #{tpu_custom_call.1} parent=0
    #allocation3 [shape = 'u8[32768]{0}', space=vmem, size = 0x8000, scoped, tag = 'input window, operand 0, single buffered']
    #allocation4 [shape = 's32[1]{0}', space=sflag, size = 0x4, scoped, tag = 'scoped memory for tpu_custom_call.1']
    #allocation5 [shape = 's32[1]{0}', space=sflag, size = 0x4, scoped, tag = 'scoped memory for tpu_custom_call.1']
    #allocation6 [shape = 'u8[294912]{0}', space=vmem, size = 0x48000, scoped, tag = 'input window, operand 1, single buffered']
    #allocation7 [shape = 's32[1]{0}', space=sflag, size = 0x4, scoped, tag = 'scoped memory for tpu_custom_call.1']
    #allocation8 [shape = 'u8[294912]{0}', space=vmem, size = 0x48000, scoped, tag = 'input window, operand 4, single buffered']
    #allocation9 [shape = 'u8[65536]{0}', space=vmem, size = 0x10000, scoped, tag = 'output window, operand 0, single buffered']
    %12 = vsyncpa [#allocation4], 0
    %13 = vsyncpa [#allocation7], 0
    %14 = vsyncpa [#allocation5], 0
    // Predicated region
    $region2: #{tpu_custom_call.1} parent=1 // pred_check
      _
    $region3: #{tpu_custom_call.1} parent=1 // pred_check_branch
      %16 = sbr.rel (0) target = $region5
    $region4: #{tpu_custom_call.1} parent=1 // pred_region
      %s18 = ssub.s32 1024, 1024
      %19 = vsyncadd [#allocation4], %s18
      %s20 = sshll.u32 [#allocation3], 4
      %s21 = int_to_ptr.vmem [resolvable:$true] %s20
      %26 = dma.hbm_to_vmem [thread:$0]  %s0, 1024, %s21, [#allocation4], 64, 64, 4
    $region5: #{tpu_custom_call.1} parent=1 // pred_fallthru
      _
    // Predicated region
    $region6: #{tpu_custom_call.1} parent=1 // pred_check
      _
    $region7: #{tpu_custom_call.1} parent=1 // pred_check_branch
      %28 = sbr.rel (0) target = $region9
    $region8: #{tpu_custom_call.1} parent=1 // pred_region
      %s30 = ssub.s32 9216, 9216
      %31 = vsyncadd [#allocation7], %s30
      %s32 = sshll.u32 [#allocation6], 4
      %s33 = int_to_ptr.vmem [resolvable:$true] %s32
      %38 = dma.hbm_to_vmem [thread:$0]  %s1, 9216, %s33, [#allocation7], 64, 64, 4
    $region9: #{tpu_custom_call.1} parent=1 // pred_fallthru
      _
    // Predicated region
    $region10: #{tpu_custom_call.1} parent=1 // pred_check
      _
    $region11: #{tpu_custom_call.1} parent=1 // pred_check_branch
      %40 = sbr.rel (0) target = $region13
    $region12: #{tpu_custom_call.1} parent=1 // pred_region
      _
    $region13: #{tpu_custom_call.1} parent=1 // pred_fallthru
      _
    // Predicated region
    $region14: #{tpu_custom_call.1} parent=1 // pred_check
      _
    $region15: #{tpu_custom_call.1} parent=1 // pred_check_branch
      %42 = sbr.rel (0) target = $region17
    $region16: #{tpu_custom_call.1} parent=1 // pred_region
      _
    $region17: #{tpu_custom_call.1} parent=1 // pred_fallthru
      _
    // Predicated region
    $region18: #{tpu_custom_call.1} parent=1 // pred_check
      _
    $region19: #{tpu_custom_call.1} parent=1 // pred_check_branch
      %44 = sbr.rel (0) target = $region21
    $region20: #{tpu_custom_call.1} parent=1 // pred_region
      %s46 = ssub.s32 9216, 9216
      %47 = vsyncadd [#allocation7], %s46
      %s48 = sshll.u32 [#allocation8], 4
      %s49 = int_to_ptr.vmem [resolvable:$true] %s48
      %54 = dma.hbm_to_vmem [thread:$0]  %s4, 9216, %s49, [#allocation7], 64, 64, 4
    $region21: #{tpu_custom_call.1} parent=1 // pred_fallthru
      _
    // Predicated region
    $region22: #{tpu_custom_call.1} parent=1 // pred_check
      _
    $region23: #{tpu_custom_call.1} parent=1 // pred_check_branch
      %56 = sbr.rel (0) target = $region25
    $region24: #{tpu_custom_call.1} parent=1 // pred_region
      _
    $region25: #{tpu_custom_call.1} parent=1 // pred_fallthru
      _
    // Predicated region
    $region26: #{tpu_custom_call.1} parent=1 // pred_check
      _
    $region27: #{tpu_custom_call.1} parent=1 // pred_check_branch
      %58 = sbr.rel (0) target = $region29
    $region28: #{tpu_custom_call.1} parent=1 // pred_region
      _
    $region29: #{tpu_custom_call.1} parent=1 // pred_fallthru
      _
    // Predicated region
    $region30: #{tpu_custom_call.1} parent=1 // pred_check
      _
    $region31: #{tpu_custom_call.1} parent=1 // pred_check_branch
      %60 = sbr.rel (0) target = $region33
    $region32: #{tpu_custom_call.1} parent=1 // pred_region
      %61 = dma.done [#allocation4], 1024
    $region33: #{tpu_custom_call.1} parent=1 // pred_fallthru
      _
    // Predicated region
    $region34: #{tpu_custom_call.1} parent=1 // pred_check
      _
    $region35: #{tpu_custom_call.1} parent=1 // pred_check_branch
      %63 = sbr.rel (0) target = $region37
    $region36: #{tpu_custom_call.1} parent=1 // pred_region
      %64 = dma.done [#allocation7], 9216
    $region37: #{tpu_custom_call.1} parent=1 // pred_fallthru
      _
    // Predicated region
    $region38: #{tpu_custom_call.1} parent=1 // pred_check
      _
    $region39: #{tpu_custom_call.1} parent=1 // pred_check_branch
      %66 = sbr.rel (0) target = $region41
    $region40: #{tpu_custom_call.1} parent=1 // pred_region
      %67 = dma.done [#allocation7], 9216
    $region41: #{tpu_custom_call.1} parent=1 // pred_fallthru
      _
    %69 = vst [vmem:[#allocation2] sm:$0xff] 0
    %70 = vst [vmem:[#allocation2 + $0x50] sm:$0xff] 0
    %s71 = scalar_lea.vmem [#allocation2], 72
    %72 = vst [vmem:[%s71] sm:$0xff] 0
    %73 = vst [vmem:[%s71 + $0x50] sm:$0xff] 0
    %vm74 = vcmask 1040384
    %vm75 = vsmask.f32 256
    %vm76 = vmand %vm74, %vm75
    %v77 = vld [vmem:[#allocation2] sm:$0x1]
    %v78 = vsel %vm76, 0, %v77
    %79 = vst [vmem:[#allocation2] sm:$0x1] %v78
    %v80 = vld [vmem:[#allocation2 + $0x8] sm:$0x1]
    %v81 = vsel %vm76, 0, %v80
    %82 = vst [vmem:[#allocation2 + $0x8] sm:$0x1] %v81
    %v83 = vld [vmem:[#allocation2 + $0x10] sm:$0x1]
    %v84 = vsel %vm76, 0, %v83
    %85 = vst [vmem:[#allocation2 + $0x10] sm:$0x1] %v84
    %v86 = vld [vmem:[#allocation2 + $0x18] sm:$0x1]
    %v87 = vsel %vm76, 0, %v86
    %88 = vst [vmem:[#allocation2 + $0x18] sm:$0x1] %v87
    %v89 = vld [vmem:[#allocation2 + $0x20] sm:$0x1]
    %v90 = vsel %vm76, 0, %v89
    %91 = vst [vmem:[#allocation2 + $0x20] sm:$0x1] %v90
    %v92 = vld [vmem:[#allocation2 + $0x28] sm:$0x1]
    %v93 = vsel %vm76, 0, %v92
    %94 = vst [vmem:[#allocation2 + $0x28] sm:$0x1] %v93
    %v95 = vld [vmem:[#allocation2 + $0x30] sm:$0x1]
    %v96 = vsel %vm76, 0, %v95
    %97 = vst [vmem:[#allocation2 + $0x30] sm:$0x1] %v96
    %v98 = vld [vmem:[#allocation2 + $0x38] sm:$0x1]
    %v99 = vsel %vm76, 0, %v98
    %100 = vst [vmem:[#allocation2 + $0x38] sm:$0x1] %v99
    %v101 = vld [vmem:[#allocation2 + $0x40] sm:$0x1]
    %v102 = vsel %vm76, 0, %v101
    %103 = vst [vmem:[#allocation2 + $0x40] sm:$0x1] %v102
    %v104 = vld [vmem:[#allocation2 + $0x48] sm:$0x1]
    %v105 = vsel %vm76, 0, %v104
    %106 = vst [vmem:[#allocation2 + $0x48] sm:$0x1] %v105
    %v107 = vld [vmem:[#allocation2 + $0x50] sm:$0x1]
    %v108 = vsel %vm76, 0, %v107
    %109 = vst [vmem:[#allocation2 + $0x50] sm:$0x1] %v108
    %v110 = vld [vmem:[#allocation2 + $0x58] sm:$0x1]
    %v111 = vsel %vm76, 0, %v110
    %112 = vst [vmem:[#allocation2 + $0x58] sm:$0x1] %v111
    %v113 = vld [vmem:[#allocation2 + $0x60] sm:$0x1]
    %v114 = vsel %vm76, 0, %v113
    %115 = vst [vmem:[#allocation2 + $0x60] sm:$0x1] %v114
    %v116 = vld [vmem:[#allocation2 + $0x68] sm:$0x1]
    %v117 = vsel %vm76, 0, %v116
    %118 = vst [vmem:[#allocation2 + $0x68] sm:$0x1] %v117
    %v119 = vld [vmem:[#allocation2 + $0x70] sm:$0x1]
    %v120 = vsel %vm76, 0, %v119
    %121 = vst [vmem:[#allocation2 + $0x70] sm:$0x1] %v120
    %v122 = vld [vmem:[#allocation2 + $0x78] sm:$0x1]
    %v123 = vsel %vm76, 0, %v122
    %124 = vst [vmem:[#allocation2 + $0x78] sm:$0x1] %v123
    %v125 = vld [vmem:[#allocation2 + $0x80] sm:$0x1]
    %v126 = vsel %vm76, 0, %v125
    %127 = vst [vmem:[#allocation2 + $0x80] sm:$0x1] %v126
    %v128 = vld [vmem:[#allocation2 + $0x88] sm:$0x1]
    %v129 = vsel %vm76, 0, %v128
    %130 = vst [vmem:[#allocation2 + $0x88] sm:$0x1] %v129
    %v131 = vld [vmem:[#allocation2 + $0x90] sm:$0x1]
    %v132 = vsel %vm76, 0, %v131
    %133 = vst [vmem:[#allocation2 + $0x90] sm:$0x1] %v132
    %v134 = vld [vmem:[#allocation2 + $0x98] sm:$0x1]
    %v135 = vsel %vm76, 0, %v134
    %136 = vst [vmem:[#allocation2 + $0x98] sm:$0x1] %v135
    %vm137 = vcmask 1044484
    %vm138 = vsmask.f32 7954
    %vm139 = vmand %vm137, %vm138
    %v140 = vld [vmem:[#allocation2] sm:$0x10]
    %v141 = vsel %vm139, 0, %v140
    %142 = vst [vmem:[#allocation2] sm:$0x10] %v141
    %v143 = vld [vmem:[#allocation2 + $0x8] sm:$0x10]
    %v144 = vsel %vm139, 0, %v143
    %145 = vst [vmem:[#allocation2 + $0x8] sm:$0x10] %v144
    %v146 = vld [vmem:[#allocation2 + $0x10] sm:$0x10]
    %v147 = vsel %vm139, 0, %v146
    %148 = vst [vmem:[#allocation2 + $0x10] sm:$0x10] %v147
    %v149 = vld [vmem:[#allocation2 + $0x18] sm:$0x10]
    %v150 = vsel %vm139, 0, %v149
    %151 = vst [vmem:[#allocation2 + $0x18] sm:$0x10] %v150
    %v152 = vld [vmem:[#allocation2 + $0x20] sm:$0x10]
    %v153 = vsel %vm139, 0, %v152
    %154 = vst [vmem:[#allocation2 + $0x20] sm:$0x10] %v153
    %v155 = vld [vmem:[#allocation2 + $0x28] sm:$0x10]
    %v156 = vsel %vm139, 0, %v155
    %157 = vst [vmem:[#allocation2 + $0x28] sm:$0x10] %v156
    %v158 = vld [vmem:[#allocation2 + $0x30] sm:$0x10]
    %v159 = vsel %vm139, 0, %v158
    %160 = vst [vmem:[#allocation2 + $0x30] sm:$0x10] %v159
    %v161 = vld [vmem:[#allocation2 + $0x38] sm:$0x10]
    %v162 = vsel %vm139, 0, %v161
    %163 = vst [vmem:[#allocation2 + $0x38] sm:$0x10] %v162
    %v164 = vld [vmem:[#allocation2 + $0x40] sm:$0x10]
    %v165 = vsel %vm139, 0, %v164
    %166 = vst [vmem:[#allocation2 + $0x40] sm:$0x10] %v165
    %v167 = vld [vmem:[#allocation2 + $0x48] sm:$0x10]
    %v168 = vsel %vm139, 0, %v167
    %169 = vst [vmem:[#allocation2 + $0x48] sm:$0x10] %v168
    %v170 = vld [vmem:[#allocation2 + $0x50] sm:$0x10]
    %v171 = vsel %vm139, 0, %v170
    %172 = vst [vmem:[#allocation2 + $0x50] sm:$0x10] %v171
    %v173 = vld [vmem:[#allocation2 + $0x58] sm:$0x10]
    %v174 = vsel %vm139, 0, %v173
    %175 = vst [vmem:[#allocation2 + $0x58] sm:$0x10] %v174
    %v176 = vld [vmem:[#allocation2 + $0x60] sm:$0x10]
    %v177 = vsel %vm139, 0, %v176
    %178 = vst [vmem:[#allocation2 + $0x60] sm:$0x10] %v177
    %v179 = vld [vmem:[#allocation2 + $0x68] sm:$0x10]
    %v180 = vsel %vm139, 0, %v179
    %181 = vst [vmem:[#allocation2 + $0x68] sm:$0x10] %v180
    %v182 = vld [vmem:[#allocation2 + $0x70] sm:$0x10]
    %v183 = vsel %vm139, 0, %v182
    %184 = vst [vmem:[#allocation2 + $0x70] sm:$0x10] %v183
    %v185 = vld [vmem:[#allocation2 + $0x78] sm:$0x10]
    %v186 = vsel %vm139, 0, %v185
    %187 = vst [vmem:[#allocation2 + $0x78] sm:$0x10] %v186
    %v188 = vld [vmem:[#allocation2 + $0x80] sm:$0x10]
    %v189 = vsel %vm139, 0, %v188
    %190 = vst [vmem:[#allocation2 + $0x80] sm:$0x10] %v189
    %v191 = vld [vmem:[#allocation2 + $0x88] sm:$0x10]
    %v192 = vsel %vm139, 0, %v191
    %193 = vst [vmem:[#allocation2 + $0x88] sm:$0x10] %v192
    %v194 = vld [vmem:[#allocation2 + $0x90] sm:$0x10]
    %v195 = vsel %vm139, 0, %v194
    %196 = vst [vmem:[#allocation2 + $0x90] sm:$0x10] %v195
    %v197 = vld [vmem:[#allocation2 + $0x98] sm:$0x10]
    %v198 = vsel %vm139, 0, %v197
    %199 = vst [vmem:[#allocation2 + $0x98] sm:$0x10] %v198
    %v200 = vld [vmem:[#allocation3] sm:$0xf]
    %v201 = vld [vmem:[#allocation3 + $0x4] sm:$0xf]
    %v202 = vld [vmem:[#allocation3 + $0x8] sm:$0xf]
    %v203 = vld [vmem:[#allocation3 + $0xc] sm:$0xf]
    %v204 = vld [vmem:[#allocation3 + $0x10] sm:$0xf]
    %v205 = vld [vmem:[#allocation3 + $0x14] sm:$0xf]
    %v206 = vld [vmem:[#allocation3 + $0x18] sm:$0xf]
    %v207 = vld [vmem:[#allocation3 + $0x1c] sm:$0xf]
    %v208 = vld [vmem:[#allocation3 + $0x20] sm:$0xf]
    %v209 = vld [vmem:[#allocation3 + $0x24] sm:$0xf]
    %v210 = vld [vmem:[#allocation3 + $0x28] sm:$0xf]
    %v211 = vld [vmem:[#allocation3 + $0x2c] sm:$0xf]
    %v212 = vld [vmem:[#allocation3 + $0x30] sm:$0xf]
    %v213 = vld [vmem:[#allocation3 + $0x34] sm:$0xf]
    %v214 = vld [vmem:[#allocation3 + $0x38] sm:$0xf]
    %v215 = vld [vmem:[#allocation3 + $0x3c] sm:$0xf]
    %v232 = vunpack.c.l.b16 %v200
    %v233 = vunpack.c.l.b16 %v201
    %v234 = vunpack.c.l.b16 %v202
    %v235 = vunpack.c.l.b16 %v203
    %v236 = vunpack.c.l.b16 %v204
    %v237 = vunpack.c.l.b16 %v205
    %v238 = vunpack.c.l.b16 %v206
    %v239 = vunpack.c.l.b16 %v207
    %v240 = vunpack.c.l.b16 %v208
    %v241 = vunpack.c.l.b16 %v209
    %v242 = vunpack.c.l.b16 %v210
    %v243 = vunpack.c.l.b16 %v211
    %v244 = vunpack.c.l.b16 %v212
    %v245 = vunpack.c.l.b16 %v213
    %v246 = vunpack.c.l.b16 %v214
    %v247 = vunpack.c.l.b16 %v215
    %v248 = vpack.c.b16 %v232, %v232
    %v249 = vpack.c.b16 %v233, %v233
    %v250 = vpack.c.b16 %v234, %v234
    %v251 = vpack.c.b16 %v235, %v235
    %v252 = vpack.c.b16 %v236, %v236
    %v253 = vpack.c.b16 %v237, %v237
    %v254 = vpack.c.b16 %v238, %v238
    %v255 = vpack.c.b16 %v239, %v239
    %v256 = vpack.c.b16 %v240, %v240
    %v257 = vpack.c.b16 %v241, %v241
    %v258 = vpack.c.b16 %v242, %v242
    %v259 = vpack.c.b16 %v243, %v243
    %v260 = vpack.c.b16 %v244, %v244
    %v261 = vpack.c.b16 %v245, %v245
    %v262 = vpack.c.b16 %v246, %v246
    %v263 = vpack.c.b16 %v247, %v247
    %v265 = vshrl.u32 %v248, 16
    %v267 = vrot.slane %v265, 7
    %v268 = vshll.u32 %v248, 16
    %v270 = vor.u32 %v267, %v268
    %v272 = vshrl.u32 %v249, 16
    %v274 = vrot.slane %v272, 7
    %v275 = vshll.u32 %v249, 16
    %v277 = vor.u32 %v274, %v275
    %v279 = vshrl.u32 %v250, 16
    %v281 = vrot.slane %v279, 7
    %v282 = vshll.u32 %v250, 16
    %v284 = vor.u32 %v281, %v282
    %v286 = vshrl.u32 %v251, 16
    %v288 = vrot.slane %v286, 7
    %v289 = vshll.u32 %v251, 16
    %v291 = vor.u32 %v288, %v289
    %v293 = vshrl.u32 %v252, 16
    %v295 = vrot.slane %v293, 7
    %v296 = vshll.u32 %v252, 16
    %v298 = vor.u32 %v295, %v296
    %v300 = vshrl.u32 %v253, 16
    %v302 = vrot.slane %v300, 7
    %v303 = vshll.u32 %v253, 16
    %v305 = vor.u32 %v302, %v303
    %v307 = vshrl.u32 %v254, 16
    %v309 = vrot.slane %v307, 7
    %v310 = vshll.u32 %v254, 16
    %v312 = vor.u32 %v309, %v310
    %v314 = vshrl.u32 %v255, 16
    %v316 = vrot.slane %v314, 7
    %v317 = vshll.u32 %v255, 16
    %v319 = vor.u32 %v316, %v317
    %v321 = vshrl.u32 %v256, 16
    %v323 = vrot.slane %v321, 7
    %v324 = vshll.u32 %v256, 16
    %v326 = vor.u32 %v323, %v324
    %v328 = vshrl.u32 %v257, 16
    %v330 = vrot.slane %v328, 7
    %v331 = vshll.u32 %v257, 16
    %v333 = vor.u32 %v330, %v331
    %v335 = vshrl.u32 %v258, 16
    %v337 = vrot.slane %v335, 7
    %v338 = vshll.u32 %v258, 16
    %v340 = vor.u32 %v337, %v338
    %v342 = vshrl.u32 %v259, 16
    %v344 = vrot.slane %v342, 7
    %v345 = vshll.u32 %v259, 16
    %v347 = vor.u32 %v344, %v345
    %v349 = vshrl.u32 %v260, 16
    %v351 = vrot.slane %v349, 7
    %v352 = vshll.u32 %v260, 16
    %v354 = vor.u32 %v351, %v352
    %v356 = vshrl.u32 %v261, 16
    %v358 = vrot.slane %v356, 7
    %v359 = vshll.u32 %v261, 16
    %v361 = vor.u32 %v358, %v359
    %v363 = vshrl.u32 %v262, 16
    %v365 = vrot.slane %v363, 7
    %v366 = vshll.u32 %v262, 16
    %v368 = vor.u32 %v365, %v366
    %v370 = vshrl.u32 %v263, 16
    %v372 = vrot.slane %v370, 7
    %v373 = vshll.u32 %v263, 16
    %v375 = vor.u32 %v372, %v373
    %s392 = scalar_lea.vmem [#allocation2], 8
    %vm393 = vcmask 1044480
    %vm394 = vsmask.f32 4354
    %vm395 = vmand %vm393, %vm394
    %v396 = vld [vmem:[%s392] sm:$0x1f]
    %v397 = vsel %vm395, %v270, %v396
    %398 = vst [vmem:[%s392] sm:$0x1f] %v397
    %v399 = vld [vmem:[%s392 + $0x8] sm:$0x1f]
    %v400 = vsel %vm395, %v277, %v399
    %401 = vst [vmem:[%s392 + $0x8] sm:$0x1f] %v400
    %v402 = vld [vmem:[%s392 + $0x10] sm:$0x1f]
    %v403 = vsel %vm395, %v284, %v402
    %404 = vst [vmem:[%s392 + $0x10] sm:$0x1f] %v403
    %v405 = vld [vmem:[%s392 + $0x18] sm:$0x1f]
    %v406 = vsel %vm395, %v291, %v405
    %407 = vst [vmem:[%s392 + $0x18] sm:$0x1f] %v406
    %v408 = vld [vmem:[%s392 + $0x20] sm:$0x1f]
    %v409 = vsel %vm395, %v298, %v408
    %410 = vst [vmem:[%s392 + $0x20] sm:$0x1f] %v409
    %v411 = vld [vmem:[%s392 + $0x28] sm:$0x1f]
    %v412 = vsel %vm395, %v305, %v411
    %413 = vst [vmem:[%s392 + $0x28] sm:$0x1f] %v412
    %v414 = vld [vmem:[%s392 + $0x30] sm:$0x1f]
    %v415 = vsel %vm395, %v312, %v414
    %416 = vst [vmem:[%s392 + $0x30] sm:$0x1f] %v415
    %v417 = vld [vmem:[%s392 + $0x38] sm:$0x1f]
    %v418 = vsel %vm395, %v319, %v417
    %419 = vst [vmem:[%s392 + $0x38] sm:$0x1f] %v418
    %v420 = vld [vmem:[%s392 + $0x50] sm:$0x1f]
    %v421 = vsel %vm395, %v326, %v420
    %422 = vst [vmem:[%s392 + $0x50] sm:$0x1f] %v421
    %v423 = vld [vmem:[%s392 + $0x58] sm:$0x1f]
    %v424 = vsel %vm395, %v333, %v423
    %425 = vst [vmem:[%s392 + $0x58] sm:$0x1f] %v424
    %v426 = vld [vmem:[%s392 + $0x60] sm:$0x1f]
    %v427 = vsel %vm395, %v340, %v426
    %428 = vst [vmem:[%s392 + $0x60] sm:$0x1f] %v427
    %v429 = vld [vmem:[%s392 + $0x68] sm:$0x1f]
    %v430 = vsel %vm395, %v347, %v429
    %431 = vst [vmem:[%s392 + $0x68] sm:$0x1f] %v430
    %v432 = vld [vmem:[%s392 + $0x70] sm:$0x1f]
    %v433 = vsel %vm395, %v354, %v432
    %434 = vst [vmem:[%s392 + $0x70] sm:$0x1f] %v433
    %v435 = vld [vmem:[%s392 + $0x78] sm:$0x1f]
    %v436 = vsel %vm395, %v361, %v435
    %437 = vst [vmem:[%s392 + $0x78] sm:$0x1f] %v436
    %v438 = vld [vmem:[%s392 + $0x80] sm:$0x1f]
    %v439 = vsel %vm395, %v368, %v438
    %440 = vst [vmem:[%s392 + $0x80] sm:$0x1f] %v439
    %v441 = vld [vmem:[%s392 + $0x88] sm:$0x1f]
    %v442 = vsel %vm395, %v375, %v441
    %443 = vst [vmem:[%s392 + $0x88] sm:$0x1f] %v442
    %v444 = vld [vmem:[#allocation2] sm:$0xf]
    %v445 = vld [vmem:[#allocation2 + $0x8] sm:$0xf]
    %v446 = vld [vmem:[#allocation2 + $0x10] sm:$0xf]
    %v447 = vld [vmem:[#allocation2 + $0x18] sm:$0xf]
    %v448 = vld [vmem:[#allocation2 + $0x20] sm:$0xf]
    %v449 = vld [vmem:[#allocation2 + $0x28] sm:$0xf]
    %v450 = vld [vmem:[#allocation2 + $0x30] sm:$0xf]
    %v451 = vld [vmem:[#allocation2 + $0x38] sm:$0xf]
    %v452 = vld [vmem:[#allocation2 + $0x50] sm:$0xf]
    %v453 = vld [vmem:[#allocation2 + $0x58] sm:$0xf]
    %v454 = vld [vmem:[#allocation2 + $0x60] sm:$0xf]
    %v455 = vld [vmem:[#allocation2 + $0x68] sm:$0xf]
    %v456 = vld [vmem:[#allocation2 + $0x70] sm:$0xf]
    %v457 = vld [vmem:[#allocation2 + $0x78] sm:$0xf]
    %v458 = vld [vmem:[#allocation2 + $0x80] sm:$0xf]
    %v459 = vld [vmem:[#allocation2 + $0x88] sm:$0xf]
    %v460 = vld [vmem:[#allocation6] sm:$0xf]
    %v461 = vld [vmem:[#allocation6 + $0x4] sm:$0xf]
    %v462 = vld [vmem:[#allocation6 + $0x8] sm:$0xf]
    %v463 = vld [vmem:[#allocation6 + $0xc] sm:$0xf]
    %v464 = vld [vmem:[#allocation6 + $0x10] sm:$0xf]
    %v465 = vld [vmem:[#allocation6 + $0x14] sm:$0xf]
    %v466 = vld [vmem:[#allocation6 + $0x18] sm:$0xf]
    %v467 = vld [vmem:[#allocation6 + $0x1c] sm:$0xf]
    %v468 = vld [vmem:[#allocation6 + $0x20] sm:$0xf]
    %v469 = vld [vmem:[#allocation6 + $0x24] sm:$0xf]
    %v470 = vld [vmem:[#allocation6 + $0x28] sm:$0xf]
    %v471 = vld [vmem:[#allocation6 + $0x2c] sm:$0xf]
    %v472 = vld [vmem:[#allocation6 + $0x30] sm:$0xf]
    %v473 = vld [vmem:[#allocation6 + $0x34] sm:$0xf]
    %v474 = vld [vmem:[#allocation6 + $0x38] sm:$0xf]
    %v475 = vld [vmem:[#allocation6 + $0x3c] sm:$0xf]
    %v476 = vld [vmem:[#allocation2] sm:$0x1f]
    %v477 = vld [vmem:[#allocation2 + $0x8] sm:$0x1f]
    %v478 = vld [vmem:[#allocation2 + $0x10] sm:$0x1f]
    %v479 = vld [vmem:[#allocation2 + $0x18] sm:$0x1f]
    %v480 = vld [vmem:[#allocation2 + $0x20] sm:$0x1f]
    %v481 = vld [vmem:[#allocation2 + $0x28] sm:$0x1f]
    %v482 = vld [vmem:[#allocation2 + $0x30] sm:$0x1f]
    %v483 = vld [vmem:[#allocation2 + $0x38] sm:$0x1f]
    %v484 = vld [vmem:[#allocation2 + $0x50] sm:$0x1f]
    %v485 = vld [vmem:[#allocation2 + $0x58] sm:$0x1f]
    %v486 = vld [vmem:[#allocation2 + $0x60] sm:$0x1f]
    %v487 = vld [vmem:[#allocation2 + $0x68] sm:$0x1f]
    %v488 = vld [vmem:[#allocation2 + $0x70] sm:$0x1f]
    %v489 = vld [vmem:[#allocation2 + $0x78] sm:$0x1f]
    %v490 = vld [vmem:[#allocation2 + $0x80] sm:$0x1f]
    %v491 = vld [vmem:[#allocation2 + $0x88] sm:$0x1f]
    %v508 = vunpack.c.l.b16 %v476
    %v509 = vunpack.c.h.b16 %v476
    %v510 = vunpack.c.l.b16 %v477
    %v511 = vunpack.c.h.b16 %v477
    %v512 = vunpack.c.l.b16 %v478
    %v513 = vunpack.c.h.b16 %v478
    %v514 = vunpack.c.l.b16 %v479
    %v515 = vunpack.c.h.b16 %v479
    %v516 = vunpack.c.l.b16 %v480
    %v517 = vunpack.c.h.b16 %v480
    %v518 = vunpack.c.l.b16 %v481
    %v519 = vunpack.c.h.b16 %v481
    %v520 = vunpack.c.l.b16 %v482
    %v521 = vunpack.c.h.b16 %v482
    %v522 = vunpack.c.l.b16 %v483
    %v523 = vunpack.c.h.b16 %v483
    %v524 = vunpack.c.l.b16 %v484
    %v525 = vunpack.c.h.b16 %v484
    %v526 = vunpack.c.l.b16 %v485
    %v527 = vunpack.c.h.b16 %v485
    %v528 = vunpack.c.l.b16 %v486
    %v529 = vunpack.c.h.b16 %v486
    %v530 = vunpack.c.l.b16 %v487
    %v531 = vunpack.c.h.b16 %v487
    %v532 = vunpack.c.l.b16 %v488
    %v533 = vunpack.c.h.b16 %v488
    %v534 = vunpack.c.l.b16 %v489
    %v535 = vunpack.c.h.b16 %v489
    %v536 = vunpack.c.l.b16 %v490
    %v537 = vunpack.c.h.b16 %v490
    %v538 = vunpack.c.l.b16 %v491
    %v539 = vunpack.c.h.b16 %v491
    %v540 = vpack.c.b16 %v508, %v508
    %v541 = vpack.c.b16 %v509, %v509
    %v542 = vpack.c.b16 %v510, %v510
    %v543 = vpack.c.b16 %v511, %v511
    %v544 = vpack.c.b16 %v512, %v512
    %v545 = vpack.c.b16 %v513, %v513
    %v546 = vpack.c.b16 %v514, %v514
    %v547 = vpack.c.b16 %v515, %v515
    %v548 = vpack.c.b16 %v516, %v516
    %v549 = vpack.c.b16 %v517, %v517
    %v550 = vpack.c.b16 %v518, %v518
    %v551 = vpack.c.b16 %v519, %v519
    %v552 = vpack.c.b16 %v520, %v520
    %v553 = vpack.c.b16 %v521, %v521
    %v554 = vpack.c.b16 %v522, %v522
    %v555 = vpack.c.b16 %v523, %v523
    %v556 = vpack.c.b16 %v524, %v524
    %v557 = vpack.c.b16 %v525, %v525
    %v558 = vpack.c.b16 %v526, %v526
    %v559 = vpack.c.b16 %v527, %v527
    %v560 = vpack.c.b16 %v528, %v528
    %v561 = vpack.c.b16 %v529, %v529
    %v562 = vpack.c.b16 %v530, %v530
    %v563 = vpack.c.b16 %v531, %v531
    %v564 = vpack.c.b16 %v532, %v532
    %v565 = vpack.c.b16 %v533, %v533
    %v566 = vpack.c.b16 %v534, %v534
    %v567 = vpack.c.b16 %v535, %v535
    %v568 = vpack.c.b16 %v536, %v536
    %v569 = vpack.c.b16 %v537, %v537
    %v570 = vpack.c.b16 %v538, %v538
    %v571 = vpack.c.b16 %v539, %v539
    %vm572 = vsmask.f32 3328
    %vm573 = vsmask.f32 7440
    %vm574 = vmor %vm572, %vm573
    %v576 = vshrl.u32 %v540, 16
    %v578 = vrot.slane %v576, 4
    %v579 = vshll.u32 %v540, 16
    %v581 = vrot.slane %v579, 5
    %v582 = vor.u32 %v578, %v581
    %v583 = vrot.slane %v582, 4
    %v585 = vshll.u32 %v541, 16
    %v587 = vrot.slane %v585, 5
    %v588 = vsel %vm574, %v583, %v587
    %v590 = vshrl.u32 %v542, 16
    %v592 = vrot.slane %v590, 4
    %v593 = vshll.u32 %v542, 16
    %v595 = vrot.slane %v593, 5
    %v596 = vor.u32 %v592, %v595
    %v597 = vrot.slane %v596, 4
    %v599 = vshll.u32 %v543, 16
    %v601 = vrot.slane %v599, 5
    %v602 = vsel %vm574, %v597, %v601
    %v604 = vshrl.u32 %v544, 16
    %v606 = vrot.slane %v604, 4
    %v607 = vshll.u32 %v544, 16
    %v609 = vrot.slane %v607, 5
    %v610 = vor.u32 %v606, %v609
    %v611 = vrot.slane %v610, 4
    %v613 = vshll.u32 %v545, 16
    %v615 = vrot.slane %v613, 5
    %v616 = vsel %vm574, %v611, %v615
    %v618 = vshrl.u32 %v546, 16
    %v620 = vrot.slane %v618, 4
    %v621 = vshll.u32 %v546, 16
    %v623 = vrot.slane %v621, 5
    %v624 = vor.u32 %v620, %v623
    %v625 = vrot.slane %v624, 4
    %v627 = vshll.u32 %v547, 16
    %v629 = vrot.slane %v627, 5
    %v630 = vsel %vm574, %v625, %v629
    %v632 = vshrl.u32 %v548, 16
    %v634 = vrot.slane %v632, 4
    %v635 = vshll.u32 %v548, 16
    %v637 = vrot.slane %v635, 5
    %v638 = vor.u32 %v634, %v637
    %v639 = vrot.slane %v638, 4
    %v641 = vshll.u32 %v549, 16
    %v643 = vrot.slane %v641, 5
    %v644 = vsel %vm574, %v639, %v643
    %v646 = vshrl.u32 %v550, 16
    %v648 = vrot.slane %v646, 4
    %v649 = vshll.u32 %v550, 16
    %v651 = vrot.slane %v649, 5
    %v652 = vor.u32 %v648, %v651
    %v653 = vrot.slane %v652, 4
    %v655 = vshll.u32 %v551, 16
    %v657 = vrot.slane %v655, 5
    %v658 = vsel %vm574, %v653, %v657
    %v660 = vshrl.u32 %v552, 16
    %v662 = vrot.slane %v660, 4
    %v663 = vshll.u32 %v552, 16
    %v665 = vrot.slane %v663, 5
    %v666 = vor.u32 %v662, %v665
    %v667 = vrot.slane %v666, 4
    %v669 = vshll.u32 %v553, 16
    %v671 = vrot.slane %v669, 5
    %v672 = vsel %vm574, %v667, %v671
    %v674 = vshrl.u32 %v554, 16
    %v676 = vrot.slane %v674, 4
    %v677 = vshll.u32 %v554, 16
    %v679 = vrot.slane %v677, 5
    %v680 = vor.u32 %v676, %v679
    %v681 = vrot.slane %v680, 4
    %v683 = vshll.u32 %v555, 16
    %v685 = vrot.slane %v683, 5
    %v686 = vsel %vm574, %v681, %v685
    %v688 = vshrl.u32 %v556, 16
    %v690 = vrot.slane %v688, 4
    %v691 = vshll.u32 %v556, 16
    %v693 = vrot.slane %v691, 5
    %v694 = vor.u32 %v690, %v693
    %v695 = vrot.slane %v694, 4
    %v697 = vshll.u32 %v557, 16
    %v699 = vrot.slane %v697, 5
    %v700 = vsel %vm574, %v695, %v699
    %v702 = vshrl.u32 %v558, 16
    %v704 = vrot.slane %v702, 4
    %v705 = vshll.u32 %v558, 16
    %v707 = vrot.slane %v705, 5
    %v708 = vor.u32 %v704, %v707
    %v709 = vrot.slane %v708, 4
    %v711 = vshll.u32 %v559, 16
    %v713 = vrot.slane %v711, 5
    %v714 = vsel %vm574, %v709, %v713
    %v716 = vshrl.u32 %v560, 16
    %v718 = vrot.slane %v716, 4
    %v719 = vshll.u32 %v560, 16
    %v721 = vrot.slane %v719, 5
    %v722 = vor.u32 %v718, %v721
    %v723 = vrot.slane %v722, 4
    %v725 = vshll.u32 %v561, 16
    %v727 = vrot.slane %v725, 5
    %v728 = vsel %vm574, %v723, %v727
    %v730 = vshrl.u32 %v562, 16
    %v732 = vrot.slane %v730, 4
    %v733 = vshll.u32 %v562, 16
    %v735 = vrot.slane %v733, 5
    %v736 = vor.u32 %v732, %v735
    %v737 = vrot.slane %v736, 4
    %v739 = vshll.u32 %v563, 16
    %v741 = vrot.slane %v739, 5
    %v742 = vsel %vm574, %v737, %v741
    %v744 = vshrl.u32 %v564, 16
    %v746 = vrot.slane %v744, 4
    %v747 = vshll.u32 %v564, 16
    %v749 = vrot.slane %v747, 5
    %v750 = vor.u32 %v746, %v749
    %v751 = vrot.slane %v750, 4
    %v753 = vshll.u32 %v565, 16
    %v755 = vrot.slane %v753, 5
    %v756 = vsel %vm574, %v751, %v755
    %v758 = vshrl.u32 %v566, 16
    %v760 = vrot.slane %v758, 4
    %v761 = vshll.u32 %v566, 16
    %v763 = vrot.slane %v761, 5
    %v764 = vor.u32 %v760, %v763
    %v765 = vrot.slane %v764, 4
    %v767 = vshll.u32 %v567, 16
    %v769 = vrot.slane %v767, 5
    %v770 = vsel %vm574, %v765, %v769
    %v772 = vshrl.u32 %v568, 16
    %v774 = vrot.slane %v772, 4
    %v775 = vshll.u32 %v568, 16
    %v777 = vrot.slane %v775, 5
    %v778 = vor.u32 %v774, %v777
    %v779 = vrot.slane %v778, 4
    %v781 = vshll.u32 %v569, 16
    %v783 = vrot.slane %v781, 5
    %v784 = vsel %vm574, %v779, %v783
    %v786 = vshrl.u32 %v570, 16
    %v788 = vrot.slane %v786, 4
    %v789 = vshll.u32 %v570, 16
    %v791 = vrot.slane %v789, 5
    %v792 = vor.u32 %v788, %v791
    %v793 = vrot.slane %v792, 4
    %v795 = vshll.u32 %v571, 16
    %v797 = vrot.slane %v795, 5
    %v798 = vsel %vm574, %v793, %v797
    %s799 = scalar_lea.vmem [#allocation6], 64
    %v800 = vld [vmem:[%s799] sm:$0xf]
    %v801 = vld [vmem:[%s799 + $0x4] sm:$0xf]
    %v802 = vld [vmem:[%s799 + $0x8] sm:$0xf]
    %v803 = vld [vmem:[%s799 + $0xc] sm:$0xf]
    %v804 = vld [vmem:[%s799 + $0x10] sm:$0xf]
    %v805 = vld [vmem:[%s799 + $0x14] sm:$0xf]
    %v806 = vld [vmem:[%s799 + $0x18] sm:$0xf]
    %v807 = vld [vmem:[%s799 + $0x1c] sm:$0xf]
    %v808 = vld [vmem:[%s799 + $0x20] sm:$0xf]
    %v809 = vld [vmem:[%s799 + $0x24] sm:$0xf]
    %v810 = vld [vmem:[%s799 + $0x28] sm:$0xf]
    %v811 = vld [vmem:[%s799 + $0x2c] sm:$0xf]
    %v812 = vld [vmem:[%s799 + $0x30] sm:$0xf]
    %v813 = vld [vmem:[%s799 + $0x34] sm:$0xf]
    %v814 = vld [vmem:[%s799 + $0x38] sm:$0xf]
    %v815 = vld [vmem:[%s799 + $0x3c] sm:$0xf]
    %v816 = vunpack.c.l.b16 %v588
    %v817 = vunpack.c.l.b16 %v602
    %v818 = vunpack.c.l.b16 %v616
    %v819 = vunpack.c.l.b16 %v630
    %v820 = vunpack.c.l.b16 %v644
    %v821 = vunpack.c.l.b16 %v658
    %v822 = vunpack.c.l.b16 %v672
    %v823 = vunpack.c.l.b16 %v686
    %v824 = vunpack.c.l.b16 %v700
    %v825 = vunpack.c.l.b16 %v714
    %v826 = vunpack.c.l.b16 %v728
    %v827 = vunpack.c.l.b16 %v742
    %v828 = vunpack.c.l.b16 %v756
    %v829 = vunpack.c.l.b16 %v770
    %v830 = vunpack.c.l.b16 %v784
    %v831 = vunpack.c.l.b16 %v798
    %v832 = vpack.c.b16 %v817, %v816
    %v833 = vpack.c.b16 %v819, %v818
    %v834 = vpack.c.b16 %v821, %v820
    %v835 = vpack.c.b16 %v823, %v822
    %v836 = vpack.c.b16 %v825, %v824
    %v837 = vpack.c.b16 %v827, %v826
    %v838 = vpack.c.b16 %v829, %v828
    %v839 = vpack.c.b16 %v831, %v830
    %v864 = vunpack.c.l.b16 %v800
    %v865 = vunpack.c.l.b16 %v801
    %v866 = vunpack.c.l.b16 %v802
    %v867 = vunpack.c.l.b16 %v803
    %v868 = vunpack.c.l.b16 %v804
    %v869 = vunpack.c.l.b16 %v805
    %v870 = vunpack.c.l.b16 %v806
    %v871 = vunpack.c.l.b16 %v807
    %v872 = vunpack.c.l.b16 %v808
    %v873 = vunpack.c.l.b16 %v809
    %v874 = vunpack.c.l.b16 %v810
    %v875 = vunpack.c.l.b16 %v811
    %v876 = vunpack.c.l.b16 %v812
    %v877 = vunpack.c.l.b16 %v813
    %v878 = vunpack.c.l.b16 %v814
    %v879 = vunpack.c.l.b16 %v815
    %v880 = vpack.c.b16 %v865, %v864
    %v881 = vpack.c.b16 %v867, %v866
    %v882 = vpack.c.b16 %v869, %v868
    %v883 = vpack.c.b16 %v871, %v870
    %v884 = vpack.c.b16 %v873, %v872
    %v885 = vpack.c.b16 %v875, %v874
    %v886 = vpack.c.b16 %v877, %v876
    %v887 = vpack.c.b16 %v879, %v878
    %896 = vmatprep.subr.bf16.mxu0 0
    %897 = vmatpush1.bf16.msra.mxu0 %v880
    %898 = vmatprep.subr.bf16.mxu0 0
    %899 = vmatpush1.bf16.msra.mxu0 %v881
    %900 = vmatprep.subr.bf16.mxu0 0
    %901 = vmatpush1.bf16.msra.mxu0 %v882
    %902 = vmatprep.subr.bf16.mxu0 0
    %903 = vmatpush1.bf16.msra.mxu0 %v883
    %904 = vmatprep.subr.bf16.mxu0 0
    %905 = vmatpush1.bf16.msra.mxu0 %v884
    %906 = vmatprep.subr.bf16.mxu0 0
    %907 = vmatpush1.bf16.msra.mxu0 %v885
    %908 = vmatprep.subr.bf16.mxu0 0
    %909 = vmatpush1.bf16.msra.mxu0 %v886
    %910 = vmatprep.subr.bf16.mxu0 0
    %911 = vmatpush1.bf16.msra.mxu0 %v887
    %912 = vmatprep.subr.bf16.mxu0 0
    %913 = vmatpush1.bf16.msra.mxu0 0
    %914 = vmatprep.subr.bf16.mxu0 0
    %915 = vmatpush1.bf16.msra.mxu0 0
    %916 = vmatprep.subr.bf16.mxu0 0
    %917 = vmatpush1.bf16.msra.mxu0 0
    %918 = vmatprep.subr.bf16.mxu0 0
    %919 = vmatpush1.bf16.msra.mxu0 0
    %920 = vmatprep.subr.bf16.mxu0 0
    %921 = vmatpush1.bf16.msra.mxu0 0
    %922 = vmatprep.subr.bf16.mxu0 0
    %923 = vmatpush1.bf16.msra.mxu0 0
    %924 = vmatprep.subr.bf16.mxu0 0
    %925 = vmatpush1.bf16.msra.mxu0 0
    %926 = vmatprep.subr.bf16.mxu0 0
    %927 = vmatpush1.bf16.msra.mxu0 0
    %928 = vmatprep.mubr.bf16.mxu0 0
    %929 = vmatmul.mubr.bf16.gmra.mrb[0].mxu0 %v832
    %v930 = vpop.f32.mrb[0].mxu0
    %v931 = vadd.f32 0.0, %v930
    %v932 = vpop.f32.mrb[0].mxu0
    %v933 = vpop.f32.mrb[0].mxu0
    %v934 = vadd.f32 0.0, %v933
    %v935 = vpop.f32.mrb[0].mxu0
    %936 = vmatprep.mubr.bf16.mxu0 0
    %937 = vmatmul.mubr.bf16.gmra.mrb[0].mxu0 %v833
    %v938 = vpop.f32.mrb[0].mxu0
    %v939 = vadd.f32 0.0, %v938
    %v940 = vpop.f32.mrb[0].mxu0
    %v941 = vpop.f32.mrb[0].mxu0
    %v942 = vadd.f32 0.0, %v941
    %v943 = vpop.f32.mrb[0].mxu0
    %944 = vmatprep.mubr.bf16.mxu0 0
    %945 = vmatmul.mubr.bf16.gmra.mrb[0].mxu0 %v834
    %v946 = vpop.f32.mrb[0].mxu0
    %v947 = vadd.f32 0.0, %v946
    %v948 = vpop.f32.mrb[0].mxu0
    %v949 = vpop.f32.mrb[0].mxu0
    %v950 = vadd.f32 0.0, %v949
    %v951 = vpop.f32.mrb[0].mxu0
    %952 = vmatprep.mubr.bf16.mxu0 0
    %953 = vmatmul.mubr.bf16.gmra.mrb[0].mxu0 %v835
    %v954 = vpop.f32.mrb[0].mxu0
    %v955 = vadd.f32 0.0, %v954
    %v956 = vpop.f32.mrb[0].mxu0
    %v957 = vpop.f32.mrb[0].mxu0
    %v958 = vadd.f32 0.0, %v957
    %v959 = vpop.f32.mrb[0].mxu0
    %960 = vmatprep.mubr.bf16.mxu0 0
    %961 = vmatmul.mubr.bf16.gmra.mrb[0].mxu0 %v836
    %v962 = vpop.f32.mrb[0].mxu0
    %v963 = vadd.f32 0.0, %v962
    %v964 = vpop.f32.mrb[0].mxu0
    %v965 = vpop.f32.mrb[0].mxu0
    %v966 = vadd.f32 0.0, %v965
    %v967 = vpop.f32.mrb[0].mxu0
    %968 = vmatprep.mubr.bf16.mxu0 0
    %969 = vmatmul.mubr.bf16.gmra.mrb[0].mxu0 %v837
    %v970 = vpop.f32.mrb[0].mxu0
    %v971 = vadd.f32 0.0, %v970
    %v972 = vpop.f32.mrb[0].mxu0
    %v973 = vpop.f32.mrb[0].mxu0
    %v974 = vadd.f32 0.0, %v973
    %v975 = vpop.f32.mrb[0].mxu0
    %976 = vmatprep.mubr.bf16.mxu0 0
    %977 = vmatmul.mubr.bf16.gmra.mrb[0].mxu0 %v838
    %v978 = vpop.f32.mrb[0].mxu0
    %v979 = vadd.f32 0.0, %v978
    %v980 = vpop.f32.mrb[0].mxu0
    %v981 = vpop.f32.mrb[0].mxu0
    %v982 = vadd.f32 0.0, %v981
    %v983 = vpop.f32.mrb[0].mxu0
    %984 = vmatprep.mubr.bf16.mxu0 0
    %985 = vmatmul.mubr.bf16.gmra.mrb[0].mxu0 %v839
    %v986 = vpop.f32.mrb[0].mxu0
    %v987 = vadd.f32 0.0, %v986
    %v988 = vpop.f32.mrb[0].mxu0
    %v989 = vpop.f32.mrb[0].mxu0
    %v990 = vadd.f32 0.0, %v989
    %v991 = vpop.f32.mrb[0].mxu0
    %992 = vdwg.mxu0
    %v1009 = vunpack.c.l.b16 %v444
    %v1010 = vunpack.c.l.b16 %v445
    %v1011 = vunpack.c.l.b16 %v446
    %v1012 = vunpack.c.l.b16 %v447
    %v1013 = vunpack.c.l.b16 %v448
    %v1014 = vunpack.c.l.b16 %v449
    %v1015 = vunpack.c.l.b16 %v450
    %v1016 = vunpack.c.l.b16 %v451
    %v1017 = vunpack.c.l.b16 %v452
    %v1018 = vunpack.c.l.b16 %v453
    %v1019 = vunpack.c.l.b16 %v454
    %v1020 = vunpack.c.l.b16 %v455
    %v1021 = vunpack.c.l.b16 %v456
    %v1022 = vunpack.c.l.b16 %v457
    %v1023 = vunpack.c.l.b16 %v458
    %v1024 = vunpack.c.l.b16 %v459
    %v1025 = vpack.c.b16 %v1010, %v1009
    %v1026 = vpack.c.b16 %v1012, %v1011
    %v1027 = vpack.c.b16 %v1014, %v1013
    %v1028 = vpack.c.b16 %v1016, %v1015
    %v1029 = vpack.c.b16 %v1018, %v1017
    %v1030 = vpack.c.b16 %v1020, %v1019
    %v1031 = vpack.c.b16 %v1022, %v1021
    %v1032 = vpack.c.b16 %v1024, %v1023
    %v1057 = vunpack.c.l.b16 %v460
    %v1058 = vunpack.c.l.b16 %v461
    %v1059 = vunpack.c.l.b16 %v462
    %v1060 = vunpack.c.l.b16 %v463
    %v1061 = vunpack.c.l.b16 %v464
    %v1062 = vunpack.c.l.b16 %v465
    %v1063 = vunpack.c.l.b16 %v466
    %v1064 = vunpack.c.l.b16 %v467
    %v1065 = vunpack.c.l.b16 %v468
    %v1066 = vunpack.c.l.b16 %v469
    %v1067 = vunpack.c.l.b16 %v470
    %v1068 = vunpack.c.l.b16 %v471
    %v1069 = vunpack.c.l.b16 %v472
    %v1070 = vunpack.c.l.b16 %v473
    %v1071 = vunpack.c.l.b16 %v474
    %v1072 = vunpack.c.l.b16 %v475
    %v1073 = vpack.c.b16 %v1058, %v1057
    %v1074 = vpack.c.b16 %v1060, %v1059
    %v1075 = vpack.c.b16 %v1062, %v1061
    %v1076 = vpack.c.b16 %v1064, %v1063
    %v1077 = vpack.c.b16 %v1066, %v1065
    %v1078 = vpack.c.b16 %v1068, %v1067
    %v1079 = vpack.c.b16 %v1070, %v1069
    %v1080 = vpack.c.b16 %v1072, %v1071
    %1089 = vmatprep.subr.bf16.mxu0 0
    %1090 = vmatpush1.bf16.msra.mxu0 %v1073
    %1091 = vmatprep.subr.bf16.mxu0 0
    %1092 = vmatpush1.bf16.msra.mxu0 %v1074
    %1093 = vmatprep.subr.bf16.mxu0 0
    %1094 = vmatpush1.bf16.msra.mxu0 %v1075
    %1095 = vmatprep.subr.bf16.mxu0 0
    %1096 = vmatpush1.bf16.msra.mxu0 %v1076
    %1097 = vmatprep.subr.bf16.mxu0 0
    %1098 = vmatpush1.bf16.msra.mxu0 %v1077
    %1099 = vmatprep.subr.bf16.mxu0 0
    %1100 = vmatpush1.bf16.msra.mxu0 %v1078
    %1101 = vmatprep.subr.bf16.mxu0 0
    %1102 = vmatpush1.bf16.msra.mxu0 %v1079
    %1103 = vmatprep.subr.bf16.mxu0 0
    %1104 = vmatpush1.bf16.msra.mxu0 %v1080
    %1105 = vmatprep.subr.bf16.mxu0 0
    %1106 = vmatpush1.bf16.msra.mxu0 0
    %1107 = vmatprep.subr.bf16.mxu0 0
    %1108 = vmatpush1.bf16.msra.mxu0 0
    %1109 = vmatprep.subr.bf16.mxu0 0
    %1110 = vmatpush1.bf16.msra.mxu0 0
    %1111 = vmatprep.subr.bf16.mxu0 0
    %1112 = vmatpush1.bf16.msra.mxu0 0
    %1113 = vmatprep.subr.bf16.mxu0 0
    %1114 = vmatpush1.bf16.msra.mxu0 0
    %1115 = vmatprep.subr.bf16.mxu0 0
    %1116 = vmatpush1.bf16.msra.mxu0 0
    %1117 = vmatprep.subr.bf16.mxu0 0
    %1118 = vmatpush1.bf16.msra.mxu0 0
    %1119 = vmatprep.subr.bf16.mxu0 0
    %1120 = vmatpush1.bf16.msra.mxu0 0
    %1121 = vmatprep.mubr.bf16.mxu0 0
    %1122 = vmatmul.mubr.bf16.gmra.mrb[0].mxu0 %v1025
    %v1123 = vpop.f32.mrb[0].mxu0
    %v1124 = vadd.f32 %v931, %v1123
    %v1125 = vpop.f32.mrb[0].mxu0
    %v1126 = vpop.f32.mrb[0].mxu0
    %v1127 = vadd.f32 %v934, %v1126
    %v1128 = vpop.f32.mrb[0].mxu0
    %1129 = vmatprep.mubr.bf16.mxu0 0
    %1130 = vmatmul.mubr.bf16.gmra.mrb[0].mxu0 %v1026
    %v1131 = vpop.f32.mrb[0].mxu0
    %v1132 = vadd.f32 %v939, %v1131
    %v1133 = vpop.f32.mrb[0].mxu0
    %v1134 = vpop.f32.mrb[0].mxu0
    %v1135 = vadd.f32 %v942, %v1134
    %v1136 = vpop.f32.mrb[0].mxu0
    %1137 = vmatprep.mubr.bf16.mxu0 0
    %1138 = vmatmul.mubr.bf16.gmra.mrb[0].mxu0 %v1027
    %v1139 = vpop.f32.mrb[0].mxu0
    %v1140 = vadd.f32 %v947, %v1139
    %v1141 = vpop.f32.mrb[0].mxu0
    %v1142 = vpop.f32.mrb[0].mxu0
    %v1143 = vadd.f32 %v950, %v1142
    %v1144 = vpop.f32.mrb[0].mxu0
    %1145 = vmatprep.mubr.bf16.mxu0 0
    %1146 = vmatmul.mubr.bf16.gmra.mrb[0].mxu0 %v1028
    %v1147 = vpop.f32.mrb[0].mxu0
    %v1148 = vadd.f32 %v955, %v1147
    %v1149 = vpop.f32.mrb[0].mxu0
    %v1150 = vpop.f32.mrb[0].mxu0
    %v1151 = vadd.f32 %v958, %v1150
    %v1152 = vpop.f32.mrb[0].mxu0
    %1153 = vmatprep.mubr.bf16.mxu0 0
    %1154 = vmatmul.mubr.bf16.gmra.mrb[0].mxu0 %v1029
    %v1155 = vpop.f32.mrb[0].mxu0
    %v1156 = vadd.f32 %v963, %v1155
    %v1157 = vpop.f32.mrb[0].mxu0
    %v1158 = vpop.f32.mrb[0].mxu0
    %v1159 = vadd.f32 %v966, %v1158
    %v1160 = vpop.f32.mrb[0].mxu0
    %1161 = vmatprep.mubr.bf16.mxu0 0
    %1162 = vmatmul.mubr.bf16.gmra.mrb[0].mxu0 %v1030
    %v1163 = vpop.f32.mrb[0].mxu0
    %v1164 = vadd.f32 %v971, %v1163
    %v1165 = vpop.f32.mrb[0].mxu0
    %v1166 = vpop.f32.mrb[0].mxu0
    %v1167 = vadd.f32 %v974, %v1166
    %v1168 = vpop.f32.mrb[0].mxu0
    %1169 = vmatprep.mubr.bf16.mxu0 0
    %1170 = vmatmul.mubr.bf16.gmra.mrb[0].mxu0 %v1031
    %v1171 = vpop.f32.mrb[0].mxu0
    %v1172 = vadd.f32 %v979, %v1171
    %v1173 = vpop.f32.mrb[0].mxu0
    %v1174 = vpop.f32.mrb[0].mxu0
    %v1175 = vadd.f32 %v982, %v1174
    %v1176 = vpop.f32.mrb[0].mxu0
    %1177 = vmatprep.mubr.bf16.mxu0 0
    %1178 = vmatmul.mubr.bf16.gmra.mrb[0].mxu0 %v1032
    %v1179 = vpop.f32.mrb[0].mxu0
    %v1180 = vadd.f32 %v987, %v1179
    %v1181 = vpop.f32.mrb[0].mxu0
    %v1182 = vpop.f32.mrb[0].mxu0
    %v1183 = vadd.f32 %v990, %v1182
    %v1184 = vpop.f32.mrb[0].mxu0
    %1185 = vdwg.mxu0
    %v1186 = vld [vmem:[#allocation2] sm:$0x1e]
    %v1187 = vld [vmem:[#allocation2 + $0x8] sm:$0x1e]
    %v1188 = vld [vmem:[#allocation2 + $0x10] sm:$0x1e]
    %v1189 = vld [vmem:[#allocation2 + $0x18] sm:$0x1e]
    %v1190 = vld [vmem:[#allocation2 + $0x20] sm:$0x1e]
    %v1191 = vld [vmem:[#allocation2 + $0x28] sm:$0x1e]
    %v1192 = vld [vmem:[#allocation2 + $0x30] sm:$0x1e]
    %v1193 = vld [vmem:[#allocation2 + $0x38] sm:$0x1e]
    %v1194 = vld [vmem:[#allocation2 + $0x50] sm:$0x1e]
    %v1195 = vld [vmem:[#allocation2 + $0x58] sm:$0x1e]
    %v1196 = vld [vmem:[#allocation2 + $0x60] sm:$0x1e]
    %v1197 = vld [vmem:[#allocation2 + $0x68] sm:$0x1e]
    %v1198 = vld [vmem:[#allocation2 + $0x70] sm:$0x1e]
    %v1199 = vld [vmem:[#allocation2 + $0x78] sm:$0x1e]
    %v1200 = vld [vmem:[#allocation2 + $0x80] sm:$0x1e]
    %v1201 = vld [vmem:[#allocation2 + $0x88] sm:$0x1e]
    %v1218 = vunpack.c.l.b16 %v1186
    %v1219 = vunpack.c.h.b16 %v1186
    %v1220 = vunpack.c.l.b16 %v1187
    %v1221 = vunpack.c.h.b16 %v1187
    %v1222 = vunpack.c.l.b16 %v1188
    %v1223 = vunpack.c.h.b16 %v1188
    %v1224 = vunpack.c.l.b16 %v1189
    %v1225 = vunpack.c.h.b16 %v1189
    %v1226 = vunpack.c.l.b16 %v1190
    %v1227 = vunpack.c.h.b16 %v1190
    %v1228 = vunpack.c.l.b16 %v1191
    %v1229 = vunpack.c.h.b16 %v1191
    %v1230 = vunpack.c.l.b16 %v1192
    %v1231 = vunpack.c.h.b16 %v1192
    %v1232 = vunpack.c.l.b16 %v1193
    %v1233 = vunpack.c.h.b16 %v1193
    %v1234 = vunpack.c.l.b16 %v1194
    %v1235 = vunpack.c.h.b16 %v1194
    %v1236 = vunpack.c.l.b16 %v1195
    %v1237 = vunpack.c.h.b16 %v1195
    %v1238 = vunpack.c.l.b16 %v1196
    %v1239 = vunpack.c.h.b16 %v1196
    %v1240 = vunpack.c.l.b16 %v1197
    %v1241 = vunpack.c.h.b16 %v1197
    %v1242 = vunpack.c.l.b16 %v1198
    %v1243 = vunpack.c.h.b16 %v1198
    %v1244 = vunpack.c.l.b16 %v1199
    %v1245 = vunpack.c.h.b16 %v1199
    %v1246 = vunpack.c.l.b16 %v1200
    %v1247 = vunpack.c.h.b16 %v1200
    %v1248 = vunpack.c.l.b16 %v1201
    %v1249 = vunpack.c.h.b16 %v1201
    %v1250 = vpack.c.b16 %v1218, %v1218
    %v1251 = vpack.c.b16 %v1219, %v1219
    %v1252 = vpack.c.b16 %v1220, %v1220
    %v1253 = vpack.c.b16 %v1221, %v1221
    %v1254 = vpack.c.b16 %v1222, %v1222
    %v1255 = vpack.c.b16 %v1223, %v1223
    %v1256 = vpack.c.b16 %v1224, %v1224
    %v1257 = vpack.c.b16 %v1225, %v1225
    %v1258 = vpack.c.b16 %v1226, %v1226
    %v1259 = vpack.c.b16 %v1227, %v1227
    %v1260 = vpack.c.b16 %v1228, %v1228
    %v1261 = vpack.c.b16 %v1229, %v1229
    %v1262 = vpack.c.b16 %v1230, %v1230
    %v1263 = vpack.c.b16 %v1231, %v1231
    %v1264 = vpack.c.b16 %v1232, %v1232
    %v1265 = vpack.c.b16 %v1233, %v1233
    %v1266 = vpack.c.b16 %v1234, %v1234
    %v1267 = vpack.c.b16 %v1235, %v1235
    %v1268 = vpack.c.b16 %v1236, %v1236
    %v1269 = vpack.c.b16 %v1237, %v1237
    %v1270 = vpack.c.b16 %v1238, %v1238
    %v1271 = vpack.c.b16 %v1239, %v1239
    %v1272 = vpack.c.b16 %v1240, %v1240
    %v1273 = vpack.c.b16 %v1241, %v1241
    %v1274 = vpack.c.b16 %v1242, %v1242
    %v1275 = vpack.c.b16 %v1243, %v1243
    %v1276 = vpack.c.b16 %v1244, %v1244
    %v1277 = vpack.c.b16 %v1245, %v1245
    %v1278 = vpack.c.b16 %v1246, %v1246
    %v1279 = vpack.c.b16 %v1247, %v1247
    %v1280 = vpack.c.b16 %v1248, %v1248
    %v1281 = vpack.c.b16 %v1249, %v1249
    %vm1282 = vcmask 1042432
    %vm1283 = vcmask 1046532
    %vm1284 = vmor %vm1282, %vm1283
    %v1285 = vrot.slane %v1250, 5
    %v1286 = vrot.slane %v1285, 4
    %v1287 = vrot.slane %v1251, 5
    %v1288 = vsel %vm1284, %v1286, %v1287
    %v1289 = vrot.slane %v1252, 5
    %v1290 = vrot.slane %v1289, 4
    %v1291 = vrot.slane %v1253, 5
    %v1292 = vsel %vm1284, %v1290, %v1291
    %v1293 = vrot.slane %v1254, 5
    %v1294 = vrot.slane %v1293, 4
    %v1295 = vrot.slane %v1255, 5
    %v1296 = vsel %vm1284, %v1294, %v1295
    %v1297 = vrot.slane %v1256, 5
    %v1298 = vrot.slane %v1297, 4
    %v1299 = vrot.slane %v1257, 5
    %v1300 = vsel %vm1284, %v1298, %v1299
    %v1301 = vrot.slane %v1258, 5
    %v1302 = vrot.slane %v1301, 4
    %v1303 = vrot.slane %v1259, 5
    %v1304 = vsel %vm1284, %v1302, %v1303
    %v1305 = vrot.slane %v1260, 5
    %v1306 = vrot.slane %v1305, 4
    %v1307 = vrot.slane %v1261, 5
    %v1308 = vsel %vm1284, %v1306, %v1307
    %v1309 = vrot.slane %v1262, 5
    %v1310 = vrot.slane %v1309, 4
    %v1311 = vrot.slane %v1263, 5
    %v1312 = vsel %vm1284, %v1310, %v1311
    %v1313 = vrot.slane %v1264, 5
    %v1314 = vrot.slane %v1313, 4
    %v1315 = vrot.slane %v1265, 5
    %v1316 = vsel %vm1284, %v1314, %v1315
    %v1317 = vrot.slane %v1266, 5
    %v1318 = vrot.slane %v1317, 4
    %v1319 = vrot.slane %v1267, 5
    %v1320 = vsel %vm1284, %v1318, %v1319
    %v1321 = vrot.slane %v1268, 5
    %v1322 = vrot.slane %v1321, 4
    %v1323 = vrot.slane %v1269, 5
    %v1324 = vsel %vm1284, %v1322, %v1323
    %v1325 = vrot.slane %v1270, 5
    %v1326 = vrot.slane %v1325, 4
    %v1327 = vrot.slane %v1271, 5
    %v1328 = vsel %vm1284, %v1326, %v1327
    %v1329 = vrot.slane %v1272, 5
    %v1330 = vrot.slane %v1329, 4
    %v1331 = vrot.slane %v1273, 5
    %v1332 = vsel %vm1284, %v1330, %v1331
    %v1333 = vrot.slane %v1274, 5
    %v1334 = vrot.slane %v1333, 4
    %v1335 = vrot.slane %v1275, 5
    %v1336 = vsel %vm1284, %v1334, %v1335
    %v1337 = vrot.slane %v1276, 5
    %v1338 = vrot.slane %v1337, 4
    %v1339 = vrot.slane %v1277, 5
    %v1340 = vsel %vm1284, %v1338, %v1339
    %v1341 = vrot.slane %v1278, 5
    %v1342 = vrot.slane %v1341, 4
    %v1343 = vrot.slane %v1279, 5
    %v1344 = vsel %vm1284, %v1342, %v1343
    %v1345 = vrot.slane %v1280, 5
    %v1346 = vrot.slane %v1345, 4
    %v1347 = vrot.slane %v1281, 5
    %v1348 = vsel %vm1284, %v1346, %v1347
    %s1349 = scalar_lea.vmem [#allocation6], 128
    %v1350 = vld [vmem:[%s1349] sm:$0xf]
    %v1351 = vld [vmem:[%s1349 + $0x4] sm:$0xf]
    %v1352 = vld [vmem:[%s1349 + $0x8] sm:$0xf]
    %v1353 = vld [vmem:[%s1349 + $0xc] sm:$0xf]
    %v1354 = vld [vmem:[%s1349 + $0x10] sm:$0xf]
    %v1355 = vld [vmem:[%s1349 + $0x14] sm:$0xf]
    %v1356 = vld [vmem:[%s1349 + $0x18] sm:$0xf]
    %v1357 = vld [vmem:[%s1349 + $0x1c] sm:$0xf]
    %v1358 = vld [vmem:[%s1349 + $0x20] sm:$0xf]
    %v1359 = vld [vmem:[%s1349 + $0x24] sm:$0xf]
    %v1360 = vld [vmem:[%s1349 + $0x28] sm:$0xf]
    %v1361 = vld [vmem:[%s1349 + $0x2c] sm:$0xf]
    %v1362 = vld [vmem:[%s1349 + $0x30] sm:$0xf]
    %v1363 = vld [vmem:[%s1349 + $0x34] sm:$0xf]
    %v1364 = vld [vmem:[%s1349 + $0x38] sm:$0xf]
    %v1365 = vld [vmem:[%s1349 + $0x3c] sm:$0xf]
    %v1366 = vunpack.c.l.b16 %v1288
    %v1367 = vunpack.c.l.b16 %v1292
    %v1368 = vunpack.c.l.b16 %v1296
    %v1369 = vunpack.c.l.b16 %v1300
    %v1370 = vunpack.c.l.b16 %v1304
    %v1371 = vunpack.c.l.b16 %v1308
    %v1372 = vunpack.c.l.b16 %v1312
    %v1373 = vunpack.c.l.b16 %v1316
    %v1374 = vunpack.c.l.b16 %v1320
    %v1375 = vunpack.c.l.b16 %v1324
    %v1376 = vunpack.c.l.b16 %v1328
    %v1377 = vunpack.c.l.b16 %v1332
    %v1378 = vunpack.c.l.b16 %v1336
    %v1379 = vunpack.c.l.b16 %v1340
    %v1380 = vunpack.c.l.b16 %v1344
    %v1381 = vunpack.c.l.b16 %v1348
    %v1382 = vpack.c.b16 %v1367, %v1366
    %v1383 = vpack.c.b16 %v1369, %v1368
    %v1384 = vpack.c.b16 %v1371, %v1370
    %v1385 = vpack.c.b16 %v1373, %v1372
    %v1386 = vpack.c.b16 %v1375, %v1374
    %v1387 = vpack.c.b16 %v1377, %v1376
    %v1388 = vpack.c.b16 %v1379, %v1378
    %v1389 = vpack.c.b16 %v1381, %v1380
    %v1414 = vunpack.c.l.b16 %v1350
    %v1415 = vunpack.c.l.b16 %v1351
    %v1416 = vunpack.c.l.b16 %v1352
    %v1417 = vunpack.c.l.b16 %v1353
    %v1418 = vunpack.c.l.b16 %v1354
    %v1419 = vunpack.c.l.b16 %v1355
    %v1420 = vunpack.c.l.b16 %v1356
    %v1421 = vunpack.c.l.b16 %v1357
    %v1422 = vunpack.c.l.b16 %v1358
    %v1423 = vunpack.c.l.b16 %v1359
    %v1424 = vunpack.c.l.b16 %v1360
    %v1425 = vunpack.c.l.b16 %v1361
    %v1426 = vunpack.c.l.b16 %v1362
    %v1427 = vunpack.c.l.b16 %v1363
    %v1428 = vunpack.c.l.b16 %v1364
    %v1429 = vunpack.c.l.b16 %v1365
    %v1430 = vpack.c.b16 %v1415, %v1414
    %v1431 = vpack.c.b16 %v1417, %v1416
    %v1432 = vpack.c.b16 %v1419, %v1418
    %v1433 = vpack.c.b16 %v1421, %v1420
    %v1434 = vpack.c.b16 %v1423, %v1422
    %v1435 = vpack.c.b16 %v1425, %v1424
    %v1436 = vpack.c.b16 %v1427, %v1426
    %v1437 = vpack.c.b16 %v1429, %v1428
    %1446 = vmatprep.subr.bf16.mxu0 0
    %1447 = vmatpush1.bf16.msra.mxu0 %v1430
    %1448 = vmatprep.subr.bf16.mxu0 0
    %1449 = vmatpush1.bf16.msra.mxu0 %v1431
    %1450 = vmatprep.subr.bf16.mxu0 0
    %1451 = vmatpush1.bf16.msra.mxu0 %v1432
    %1452 = vmatprep.subr.bf16.mxu0 0
    %1453 = vmatpush1.bf16.msra.mxu0 %v1433
    %1454 = vmatprep.subr.bf16.mxu0 0
    %1455 = vmatpush1.bf16.msra.mxu0 %v1434
    %1456 = vmatprep.subr.bf16.mxu0 0
    %1457 = vmatpush1.bf16.msra.mxu0 %v1435
    %1458 = vmatprep.subr.bf16.mxu0 0
    %1459 = vmatpush1.bf16.msra.mxu0 %v1436
    %1460 = vmatprep.subr.bf16.mxu0 0
    %1461 = vmatpush1.bf16.msra.mxu0 %v1437
    %1462 = vmatprep.subr.bf16.mxu0 0
    %1463 = vmatpush1.bf16.msra.mxu0 0
    %1464 = vmatprep.subr.bf16.mxu0 0
    %1465 = vmatpush1.bf16.msra.mxu0 0
    %1466 = vmatprep.subr.bf16.mxu0 0
    %1467 = vmatpush1.bf16.msra.mxu0 0
    %1468 = vmatprep.subr.bf16.mxu0 0
    %1469 = vmatpush1.bf16.msra.mxu0 0
    %1470 = vmatprep.subr.bf16.mxu0 0
    %1471 = vmatpush1.bf16.msra.mxu0 0
    %1472 = vmatprep.subr.bf16.mxu0 0
    %1473 = vmatpush1.bf16.msra.mxu0 0
    %1474 = vmatprep.subr.bf16.mxu0 0
    %1475 = vmatpush1.bf16.msra.mxu0 0
    %1476 = vmatprep.subr.bf16.mxu0 0
    %1477 = vmatpush1.bf16.msra.mxu0 0
    %1478 = vmatprep.mubr.bf16.mxu0 0
    %1479 = vmatmul.mubr.bf16.gmra.mrb[0].mxu0 %v1382
    %v1480 = vpop.f32.mrb[0].mxu0
    %v1481 = vadd.f32 0.0, %v1480
    %v1482 = vpop.f32.mrb[0].mxu0
    %v1483 = vpop.f32.mrb[0].mxu0
    %v1484 = vadd.f32 0.0, %v1483
    %v1485 = vpop.f32.mrb[0].mxu0
    %1486 = vmatprep.mubr.bf16.mxu0 0
    %1487 = vmatmul.mubr.bf16.gmra.mrb[0].mxu0 %v1383
    %v1488 = vpop.f32.mrb[0].mxu0
    %v1489 = vadd.f32 0.0, %v1488
    %v1490 = vpop.f32.mrb[0].mxu0
    %v1491 = vpop.f32.mrb[0].mxu0
    %v1492 = vadd.f32 0.0, %v1491
    %v1493 = vpop.f32.mrb[0].mxu0
    %1494 = vmatprep.mubr.bf16.mxu0 0
    %1495 = vmatmul.mubr.bf16.gmra.mrb[0].mxu0 %v1384
    %v1496 = vpop.f32.mrb[0].mxu0
    %v1497 = vadd.f32 0.0, %v1496
    %v1498 = vpop.f32.mrb[0].mxu0
    %v1499 = vpop.f32.mrb[0].mxu0
    %v1500 = vadd.f32 0.0, %v1499
    %v1501 = vpop.f32.mrb[0].mxu0
    %1502 = vmatprep.mubr.bf16.mxu0 0
    %1503 = vmatmul.mubr.bf16.gmra.mrb[0].mxu0 %v1385
    %v1504 = vpop.f32.mrb[0].mxu0
    %v1505 = vadd.f32 0.0, %v1504
    %v1506 = vpop.f32.mrb[0].mxu0
    %v1507 = vpop.f32.mrb[0].mxu0
    %v1508 = vadd.f32 0.0, %v1507
    %v1509 = vpop.f32.mrb[0].mxu0
    %1510 = vmatprep.mubr.bf16.mxu0 0
    %1511 = vmatmul.mubr.bf16.gmra.mrb[0].mxu0 %v1386
    %v1512 = vpop.f32.mrb[0].mxu0
    %v1513 = vadd.f32 0.0, %v1512
    %v1514 = vpop.f32.mrb[0].mxu0
    %v1515 = vpop.f32.mrb[0].mxu0
    %v1516 = vadd.f32 0.0, %v1515
    %v1517 = vpop.f32.mrb[0].mxu0
    %1518 = vmatprep.mubr.bf16.mxu0 0
    %1519 = vmatmul.mubr.bf16.gmra.mrb[0].mxu0 %v1387
    %v1520 = vpop.f32.mrb[0].mxu0
    %v1521 = vadd.f32 0.0, %v1520
    %v1522 = vpop.f32.mrb[0].mxu0
    %v1523 = vpop.f32.mrb[0].mxu0
    %v1524 = vadd.f32 0.0, %v1523
    %v1525 = vpop.f32.mrb[0].mxu0
    %1526 = vmatprep.mubr.bf16.mxu0 0
    %1527 = vmatmul.mubr.bf16.gmra.mrb[0].mxu0 %v1388
    %v1528 = vpop.f32.mrb[0].mxu0
    %v1529 = vadd.f32 0.0, %v1528
    %v1530 = vpop.f32.mrb[0].mxu0
    %v1531 = vpop.f32.mrb[0].mxu0
    %v1532 = vadd.f32 0.0, %v1531
    %v1533 = vpop.f32.mrb[0].mxu0
    %1534 = vmatprep.mubr.bf16.mxu0 0
    %1535 = vmatmul.mubr.bf16.gmra.mrb[0].mxu0 %v1389
    %v1536 = vpop.f32.mrb[0].mxu0
    %v1537 = vadd.f32 0.0, %v1536
    %v1538 = vpop.f32.mrb[0].mxu0
    %v1539 = vpop.f32.mrb[0].mxu0
    %v1540 = vadd.f32 0.0, %v1539
    %v1541 = vpop.f32.mrb[0].mxu0
    %1542 = vdwg.mxu0
    %v1543 = vadd.f32 %v1124, %v1481
    %v1544 = vadd.f32 %v1127, %v1484
    %v1545 = vadd.f32 %v1132, %v1489
    %v1546 = vadd.f32 %v1135, %v1492
    %v1547 = vadd.f32 %v1140, %v1497
    %v1548 = vadd.f32 %v1143, %v1500
    %v1549 = vadd.f32 %v1148, %v1505
    %v1550 = vadd.f32 %v1151, %v1508
    %v1551 = vadd.f32 %v1156, %v1513
    %v1552 = vadd.f32 %v1159, %v1516
    %v1553 = vadd.f32 %v1164, %v1521
    %v1554 = vadd.f32 %v1167, %v1524
    %v1555 = vadd.f32 %v1172, %v1529
    %v1556 = vadd.f32 %v1175, %v1532
    %v1557 = vadd.f32 %v1180, %v1537
    %v1558 = vadd.f32 %v1183, %v1540
    %v1559 = vld [vmem:[%s392] sm:$0xf]
    %v1560 = vld [vmem:[%s392 + $0x8] sm:$0xf]
    %v1561 = vld [vmem:[%s392 + $0x10] sm:$0xf]
    %v1562 = vld [vmem:[%s392 + $0x18] sm:$0xf]
    %v1563 = vld [vmem:[%s392 + $0x20] sm:$0xf]
    %v1564 = vld [vmem:[%s392 + $0x28] sm:$0xf]
    %v1565 = vld [vmem:[%s392 + $0x30] sm:$0xf]
    %v1566 = vld [vmem:[%s392 + $0x38] sm:$0xf]
    %v1567 = vld [vmem:[%s392 + $0x50] sm:$0xf]
    %v1568 = vld [vmem:[%s392 + $0x58] sm:$0xf]
    %v1569 = vld [vmem:[%s392 + $0x60] sm:$0xf]
    %v1570 = vld [vmem:[%s392 + $0x68] sm:$0xf]
    %v1571 = vld [vmem:[%s392 + $0x70] sm:$0xf]
    %v1572 = vld [vmem:[%s392 + $0x78] sm:$0xf]
    %v1573 = vld [vmem:[%s392 + $0x80] sm:$0xf]
    %v1574 = vld [vmem:[%s392 + $0x88] sm:$0xf]
    %s1575 = scalar_lea.vmem [#allocation6], 192
    %v1576 = vld [vmem:[%s1575] sm:$0xf]
    %v1577 = vld [vmem:[%s1575 + $0x4] sm:$0xf]
    %v1578 = vld [vmem:[%s1575 + $0x8] sm:$0xf]
    %v1579 = vld [vmem:[%s1575 + $0xc] sm:$0xf]
    %v1580 = vld [vmem:[%s1575 + $0x10] sm:$0xf]
    %v1581 = vld [vmem:[%s1575 + $0x14] sm:$0xf]
    %v1582 = vld [vmem:[%s1575 + $0x18] sm:$0xf]
    %v1583 = vld [vmem:[%s1575 + $0x1c] sm:$0xf]
    %v1584 = vld [vmem:[%s1575 + $0x20] sm:$0xf]
    %v1585 = vld [vmem:[%s1575 + $0x24] sm:$0xf]
    %v1586 = vld [vmem:[%s1575 + $0x28] sm:$0xf]
    %v1587 = vld [vmem:[%s1575 + $0x2c] sm:$0xf]
    %v1588 = vld [vmem:[%s1575 + $0x30] sm:$0xf]
    %v1589 = vld [vmem:[%s1575 + $0x34] sm:$0xf]
    %v1590 = vld [vmem:[%s1575 + $0x38] sm:$0xf]
    %v1591 = vld [vmem:[%s1575 + $0x3c] sm:$0xf]
    %v1608 = vunpack.c.l.b16 %v1559
    %v1609 = vunpack.c.l.b16 %v1560
    %v1610 = vunpack.c.l.b16 %v1561
    %v1611 = vunpack.c.l.b16 %v1562
    %v1612 = vunpack.c.l.b16 %v1563
    %v1613 = vunpack.c.l.b16 %v1564
    %v1614 = vunpack.c.l.b16 %v1565
    %v1615 = vunpack.c.l.b16 %v1566
    %v1616 = vunpack.c.l.b16 %v1567
    %v1617 = vunpack.c.l.b16 %v1568
    %v1618 = vunpack.c.l.b16 %v1569
    %v1619 = vunpack.c.l.b16 %v1570
    %v1620 = vunpack.c.l.b16 %v1571
    %v1621 = vunpack.c.l.b16 %v1572
    %v1622 = vunpack.c.l.b16 %v1573
    %v1623 = vunpack.c.l.b16 %v1574
    %v1624 = vpack.c.b16 %v1609, %v1608
    %v1625 = vpack.c.b16 %v1611, %v1610
    %v1626 = vpack.c.b16 %v1613, %v1612
    %v1627 = vpack.c.b16 %v1615, %v1614
    %v1628 = vpack.c.b16 %v1617, %v1616
    %v1629 = vpack.c.b16 %v1619, %v1618
    %v1630 = vpack.c.b16 %v1621, %v1620
    %v1631 = vpack.c.b16 %v1623, %v1622
    %v1656 = vunpack.c.l.b16 %v1576
    %v1657 = vunpack.c.l.b16 %v1577
    %v1658 = vunpack.c.l.b16 %v1578
    %v1659 = vunpack.c.l.b16 %v1579
    %v1660 = vunpack.c.l.b16 %v1580
    %v1661 = vunpack.c.l.b16 %v1581
    %v1662 = vunpack.c.l.b16 %v1582
    %v1663 = vunpack.c.l.b16 %v1583
    %v1664 = vunpack.c.l.b16 %v1584
    %v1665 = vunpack.c.l.b16 %v1585
    %v1666 = vunpack.c.l.b16 %v1586
    %v1667 = vunpack.c.l.b16 %v1587
    %v1668 = vunpack.c.l.b16 %v1588
    %v1669 = vunpack.c.l.b16 %v1589
    %v1670 = vunpack.c.l.b16 %v1590
    %v1671 = vunpack.c.l.b16 %v1591
    %v1672 = vpack.c.b16 %v1657, %v1656
    %v1673 = vpack.c.b16 %v1659, %v1658
    %v1674 = vpack.c.b16 %v1661, %v1660
    %v1675 = vpack.c.b16 %v1663, %v1662
    %v1676 = vpack.c.b16 %v1665, %v1664
    %v1677 = vpack.c.b16 %v1667, %v1666
    %v1678 = vpack.c.b16 %v1669, %v1668
    %v1679 = vpack.c.b16 %v1671, %v1670
    %1688 = vmatprep.subr.bf16.mxu0 0
    %1689 = vmatpush1.bf16.msra.mxu0 %v1672
    %1690 = vmatprep.subr.bf16.mxu0 0
    %1691 = vmatpush1.bf16.msra.mxu0 %v1673
    %1692 = vmatprep.subr.bf16.mxu0 0
    %1693 = vmatpush1.bf16.msra.mxu0 %v1674
    %1694 = vmatprep.subr.bf16.mxu0 0
    %1695 = vmatpush1.bf16.msra.mxu0 %v1675
    %1696 = vmatprep.subr.bf16.mxu0 0
    %1697 = vmatpush1.bf16.msra.mxu0 %v1676
    %1698 = vmatprep.subr.bf16.mxu0 0
    %1699 = vmatpush1.bf16.msra.mxu0 %v1677
    %1700 = vmatprep.subr.bf16.mxu0 0
    %1701 = vmatpush1.bf16.msra.mxu0 %v1678
    %1702 = vmatprep.subr.bf16.mxu0 0
    %1703 = vmatpush1.bf16.msra.mxu0 %v1679
    %1704 = vmatprep.subr.bf16.mxu0 0
    %1705 = vmatpush1.bf16.msra.mxu0 0
    %1706 = vmatprep.subr.bf16.mxu0 0
    %1707 = vmatpush1.bf16.msra.mxu0 0
    %1708 = vmatprep.subr.bf16.mxu0 0
    %1709 = vmatpush1.bf16.msra.mxu0 0
    %1710 = vmatprep.subr.bf16.mxu0 0
    %1711 = vmatpush1.bf16.msra.mxu0 0
    %1712 = vmatprep.subr.bf16.mxu0 0
    %1713 = vmatpush1.bf16.msra.mxu0 0
    %1714 = vmatprep.subr.bf16.mxu0 0
    %1715 = vmatpush1.bf16.msra.mxu0 0
    %1716 = vmatprep.subr.bf16.mxu0 0
    %1717 = vmatpush1.bf16.msra.mxu0 0
    %1718 = vmatprep.subr.bf16.mxu0 0
    %1719 = vmatpush1.bf16.msra.mxu0 0
    %1720 = vmatprep.mubr.bf16.mxu0 0
    %1721 = vmatmul.mubr.bf16.gmra.mrb[0].mxu0 %v1624
    %v1722 = vpop.f32.mrb[0].mxu0
    %v1723 = vadd.f32 0.0, %v1722
    %v1724 = vpop.f32.mrb[0].mxu0
    %v1725 = vpop.f32.mrb[0].mxu0
    %v1726 = vadd.f32 0.0, %v1725
    %v1727 = vpop.f32.mrb[0].mxu0
    %1728 = vmatprep.mubr.bf16.mxu0 0
    %1729 = vmatmul.mubr.bf16.gmra.mrb[0].mxu0 %v1625
    %v1730 = vpop.f32.mrb[0].mxu0
    %v1731 = vadd.f32 0.0, %v1730
    %v1732 = vpop.f32.mrb[0].mxu0
    %v1733 = vpop.f32.mrb[0].mxu0
    %v1734 = vadd.f32 0.0, %v1733
    %v1735 = vpop.f32.mrb[0].mxu0
    %1736 = vmatprep.mubr.bf16.mxu0 0
    %1737 = vmatmul.mubr.bf16.gmra.mrb[0].mxu0 %v1626
    %v1738 = vpop.f32.mrb[0].mxu0
    %v1739 = vadd.f32 0.0, %v1738
    %v1740 = vpop.f32.mrb[0].mxu0
    %v1741 = vpop.f32.mrb[0].mxu0
    %v1742 = vadd.f32 0.0, %v1741
    %v1743 = vpop.f32.mrb[0].mxu0
    %1744 = vmatprep.mubr.bf16.mxu0 0
    %1745 = vmatmul.mubr.bf16.gmra.mrb[0].mxu0 %v1627
    %v1746 = vpop.f32.mrb[0].mxu0
    %v1747 = vadd.f32 0.0, %v1746
    %v1748 = vpop.f32.mrb[0].mxu0
    %v1749 = vpop.f32.mrb[0].mxu0
    %v1750 = vadd.f32 0.0, %v1749
    %v1751 = vpop.f32.mrb[0].mxu0
    %1752 = vmatprep.mubr.bf16.mxu0 0
    %1753 = vmatmul.mubr.bf16.gmra.mrb[0].mxu0 %v1628
    %v1754 = vpop.f32.mrb[0].mxu0
    %v1755 = vadd.f32 0.0, %v1754
    %v1756 = vpop.f32.mrb[0].mxu0
    %v1757 = vpop.f32.mrb[0].mxu0
    %v1758 = vadd.f32 0.0, %v1757
    %v1759 = vpop.f32.mrb[0].mxu0
    %1760 = vmatprep.mubr.bf16.mxu0 0
    %1761 = vmatmul.mubr.bf16.gmra.mrb[0].mxu0 %v1629
    %v1762 = vpop.f32.mrb[0].mxu0
    %v1763 = vadd.f32 0.0, %v1762
    %v1764 = vpop.f32.mrb[0].mxu0
    %v1765 = vpop.f32.mrb[0].mxu0
    %v1766 = vadd.f32 0.0, %v1765
    %v1767 = vpop.f32.mrb[0].mxu0
    %1768 = vmatprep.mubr.bf16.mxu0 0
    %1769 = vmatmul.mubr.bf16.gmra.mrb[0].mxu0 %v1630
    %v1770 = vpop.f32.mrb[0].mxu0
    %v1771 = vadd.f32 0.0, %v1770
    %v1772 = vpop.f32.mrb[0].mxu0
    %v1773 = vpop.f32.mrb[0].mxu0
    %v1774 = vadd.f32 0.0, %v1773
    %v1775 = vpop.f32.mrb[0].mxu0
    %1776 = vmatprep.mubr.bf16.mxu0 0
    %1777 = vmatmul.mubr.bf16.gmra.mrb[0].mxu0 %v1631
    %v1778 = vpop.f32.mrb[0].mxu0
    %v1779 = vadd.f32 0.0, %v1778
    %v1780 = vpop.f32.mrb[0].mxu0
    %v1781 = vpop.f32.mrb[0].mxu0
    %v1782 = vadd.f32 0.0, %v1781
    %v1783 = vpop.f32.mrb[0].mxu0
    %1784 = vdwg.mxu0
    %v1785 = vadd.f32 %v1543, %v1723
    %v1786 = vadd.f32 %v1544, %v1726
    %v1787 = vadd.f32 %v1545, %v1731
    %v1788 = vadd.f32 %v1546, %v1734
    %v1789 = vadd.f32 %v1547, %v1739
    %v1790 = vadd.f32 %v1548, %v1742
    %v1791 = vadd.f32 %v1549, %v1747
    %v1792 = vadd.f32 %v1550, %v1750
    %v1793 = vadd.f32 %v1551, %v1755
    %v1794 = vadd.f32 %v1552, %v1758
    %v1795 = vadd.f32 %v1553, %v1763
    %v1796 = vadd.f32 %v1554, %v1766
    %v1797 = vadd.f32 %v1555, %v1771
    %v1798 = vadd.f32 %v1556, %v1774
    %v1799 = vadd.f32 %v1557, %v1779
    %v1800 = vadd.f32 %v1558, %v1782
    %v1801 = vld [vmem:[%s392] sm:$0x1f]
    %v1802 = vld [vmem:[%s392 + $0x8] sm:$0x1f]
    %v1803 = vld [vmem:[%s392 + $0x10] sm:$0x1f]
    %v1804 = vld [vmem:[%s392 + $0x18] sm:$0x1f]
    %v1805 = vld [vmem:[%s392 + $0x20] sm:$0x1f]
    %v1806 = vld [vmem:[%s392 + $0x28] sm:$0x1f]
    %v1807 = vld [vmem:[%s392 + $0x30] sm:$0x1f]
    %v1808 = vld [vmem:[%s392 + $0x38] sm:$0x1f]
    %v1809 = vld [vmem:[%s392 + $0x50] sm:$0x1f]
    %v1810 = vld [vmem:[%s392 + $0x58] sm:$0x1f]
    %v1811 = vld [vmem:[%s392 + $0x60] sm:$0x1f]
    %v1812 = vld [vmem:[%s392 + $0x68] sm:$0x1f]
    %v1813 = vld [vmem:[%s392 + $0x70] sm:$0x1f]
    %v1814 = vld [vmem:[%s392 + $0x78] sm:$0x1f]
    %v1815 = vld [vmem:[%s392 + $0x80] sm:$0x1f]
    %v1816 = vld [vmem:[%s392 + $0x88] sm:$0x1f]
    %v1833 = vunpack.c.l.b16 %v1801
    %v1834 = vunpack.c.h.b16 %v1801
    %v1835 = vunpack.c.l.b16 %v1802
    %v1836 = vunpack.c.h.b16 %v1802
    %v1837 = vunpack.c.l.b16 %v1803
    %v1838 = vunpack.c.h.b16 %v1803
    %v1839 = vunpack.c.l.b16 %v1804
    %v1840 = vunpack.c.h.b16 %v1804
    %v1841 = vunpack.c.l.b16 %v1805
    %v1842 = vunpack.c.h.b16 %v1805
    %v1843 = vunpack.c.l.b16 %v1806
    %v1844 = vunpack.c.h.b16 %v1806
    %v1845 = vunpack.c.l.b16 %v1807
    %v1846 = vunpack.c.h.b16 %v1807
    %v1847 = vunpack.c.l.b16 %v1808
    %v1848 = vunpack.c.h.b16 %v1808
    %v1849 = vunpack.c.l.b16 %v1809
    %v1850 = vunpack.c.h.b16 %v1809
    %v1851 = vunpack.c.l.b16 %v1810
    %v1852 = vunpack.c.h.b16 %v1810
    %v1853 = vunpack.c.l.b16 %v1811
    %v1854 = vunpack.c.h.b16 %v1811
    %v1855 = vunpack.c.l.b16 %v1812
    %v1856 = vunpack.c.h.b16 %v1812
    %v1857 = vunpack.c.l.b16 %v1813
    %v1858 = vunpack.c.h.b16 %v1813
    %v1859 = vunpack.c.l.b16 %v1814
    %v1860 = vunpack.c.h.b16 %v1814
    %v1861 = vunpack.c.l.b16 %v1815
    %v1862 = vunpack.c.h.b16 %v1815
    %v1863 = vunpack.c.l.b16 %v1816
    %v1864 = vunpack.c.h.b16 %v1816
    %v1865 = vpack.c.b16 %v1833, %v1833
    %v1866 = vpack.c.b16 %v1834, %v1834
    %v1867 = vpack.c.b16 %v1835, %v1835
    %v1868 = vpack.c.b16 %v1836, %v1836
    %v1869 = vpack.c.b16 %v1837, %v1837
    %v1870 = vpack.c.b16 %v1838, %v1838
    %v1871 = vpack.c.b16 %v1839, %v1839
    %v1872 = vpack.c.b16 %v1840, %v1840
    %v1873 = vpack.c.b16 %v1841, %v1841
    %v1874 = vpack.c.b16 %v1842, %v1842
    %v1875 = vpack.c.b16 %v1843, %v1843
    %v1876 = vpack.c.b16 %v1844, %v1844
    %v1877 = vpack.c.b16 %v1845, %v1845
    %v1878 = vpack.c.b16 %v1846, %v1846
    %v1879 = vpack.c.b16 %v1847, %v1847
    %v1880 = vpack.c.b16 %v1848, %v1848
    %v1881 = vpack.c.b16 %v1849, %v1849
    %v1882 = vpack.c.b16 %v1850, %v1850
    %v1883 = vpack.c.b16 %v1851, %v1851
    %v1884 = vpack.c.b16 %v1852, %v1852
    %v1885 = vpack.c.b16 %v1853, %v1853
    %v1886 = vpack.c.b16 %v1854, %v1854
    %v1887 = vpack.c.b16 %v1855, %v1855
    %v1888 = vpack.c.b16 %v1856, %v1856
    %v1889 = vpack.c.b16 %v1857, %v1857
    %v1890 = vpack.c.b16 %v1858, %v1858
    %v1891 = vpack.c.b16 %v1859, %v1859
    %v1892 = vpack.c.b16 %v1860, %v1860
    %v1893 = vpack.c.b16 %v1861, %v1861
    %v1894 = vpack.c.b16 %v1862, %v1862
    %v1895 = vpack.c.b16 %v1863, %v1863
    %v1896 = vpack.c.b16 %v1864, %v1864
    %v1898 = vshrl.u32 %v1865, 16
    %v1900 = vrot.slane %v1898, 4
    %v1901 = vshll.u32 %v1865, 16
    %v1903 = vrot.slane %v1901, 5
    %v1904 = vor.u32 %v1900, %v1903
    %v1905 = vrot.slane %v1904, 4
    %v1907 = vshll.u32 %v1866, 16
    %v1909 = vrot.slane %v1907, 5
    %v1910 = vsel %vm574, %v1905, %v1909
    %v1912 = vshrl.u32 %v1867, 16
    %v1914 = vrot.slane %v1912, 4
    %v1915 = vshll.u32 %v1867, 16
    %v1917 = vrot.slane %v1915, 5
    %v1918 = vor.u32 %v1914, %v1917
    %v1919 = vrot.slane %v1918, 4
    %v1921 = vshll.u32 %v1868, 16
    %v1923 = vrot.slane %v1921, 5
    %v1924 = vsel %vm574, %v1919, %v1923
    %v1926 = vshrl.u32 %v1869, 16
    %v1928 = vrot.slane %v1926, 4
    %v1929 = vshll.u32 %v1869, 16
    %v1931 = vrot.slane %v1929, 5
    %v1932 = vor.u32 %v1928, %v1931
    %v1933 = vrot.slane %v1932, 4
    %v1935 = vshll.u32 %v1870, 16
    %v1937 = vrot.slane %v1935, 5
    %v1938 = vsel %vm574, %v1933, %v1937
    %v1940 = vshrl.u32 %v1871, 16
    %v1942 = vrot.slane %v1940, 4
    %v1943 = vshll.u32 %v1871, 16
    %v1945 = vrot.slane %v1943, 5
    %v1946 = vor.u32 %v1942, %v1945
    %v1947 = vrot.slane %v1946, 4
    %v1949 = vshll.u32 %v1872, 16
    %v1951 = vrot.slane %v1949, 5
    %v1952 = vsel %vm574, %v1947, %v1951
    %v1954 = vshrl.u32 %v1873, 16
    %v1956 = vrot.slane %v1954, 4
    %v1957 = vshll.u32 %v1873, 16
    %v1959 = vrot.slane %v1957, 5
    %v1960 = vor.u32 %v1956, %v1959
    %v1961 = vrot.slane %v1960, 4
    %v1963 = vshll.u32 %v1874, 16
    %v1965 = vrot.slane %v1963, 5
    %v1966 = vsel %vm574, %v1961, %v1965
    %v1968 = vshrl.u32 %v1875, 16
    %v1970 = vrot.slane %v1968, 4
    %v1971 = vshll.u32 %v1875, 16
    %v1973 = vrot.slane %v1971, 5
    %v1974 = vor.u32 %v1970, %v1973
    %v1975 = vrot.slane %v1974, 4
    %v1977 = vshll.u32 %v1876, 16
    %v1979 = vrot.slane %v1977, 5
    %v1980 = vsel %vm574, %v1975, %v1979
    %v1982 = vshrl.u32 %v1877, 16
    %v1984 = vrot.slane %v1982, 4
    %v1985 = vshll.u32 %v1877, 16
    %v1987 = vrot.slane %v1985, 5
    %v1988 = vor.u32 %v1984, %v1987
    %v1989 = vrot.slane %v1988, 4
    %v1991 = vshll.u32 %v1878, 16
    %v1993 = vrot.slane %v1991, 5
    %v1994 = vsel %vm574, %v1989, %v1993
    %v1996 = vshrl.u32 %v1879, 16
    %v1998 = vrot.slane %v1996, 4
    %v1999 = vshll.u32 %v1879, 16
    %v2001 = vrot.slane %v1999, 5
    %v2002 = vor.u32 %v1998, %v2001
    %v2003 = vrot.slane %v2002, 4
    %v2005 = vshll.u32 %v1880, 16
    %v2007 = vrot.slane %v2005, 5
    %v2008 = vsel %vm574, %v2003, %v2007
    %v2010 = vshrl.u32 %v1881, 16
    %v2012 = vrot.slane %v2010, 4
    %v2013 = vshll.u32 %v1881, 16
    %v2015 = vrot.slane %v2013, 5
    %v2016 = vor.u32 %v2012, %v2015
    %v2017 = vrot.slane %v2016, 4
    %v2019 = vshll.u32 %v1882, 16
    %v2021 = vrot.slane %v2019, 5
    %v2022 = vsel %vm574, %v2017, %v2021
    %v2024 = vshrl.u32 %v1883, 16
    %v2026 = vrot.slane %v2024, 4
    %v2027 = vshll.u32 %v1883, 16
    %v2029 = vrot.slane %v2027, 5
    %v2030 = vor.u32 %v2026, %v2029
    %v2031 = vrot.slane %v2030, 4
    %v2033 = vshll.u32 %v1884, 16
    %v2035 = vrot.slane %v2033, 5
    %v2036 = vsel %vm574, %v2031, %v2035
    %v2038 = vshrl.u32 %v1885, 16
    %v2040 = vrot.slane %v2038, 4
    %v2041 = vshll.u32 %v1885, 16
    %v2043 = vrot.slane %v2041, 5
    %v2044 = vor.u32 %v2040, %v2043
    %v2045 = vrot.slane %v2044, 4
    %v2047 = vshll.u32 %v1886, 16
    %v2049 = vrot.slane %v2047, 5
    %v2050 = vsel %vm574, %v2045, %v2049
    %v2052 = vshrl.u32 %v1887, 16
    %v2054 = vrot.slane %v2052, 4
    %v2055 = vshll.u32 %v1887, 16
    %v2057 = vrot.slane %v2055, 5
    %v2058 = vor.u32 %v2054, %v2057
    %v2059 = vrot.slane %v2058, 4
    %v2061 = vshll.u32 %v1888, 16
    %v2063 = vrot.slane %v2061, 5
    %v2064 = vsel %vm574, %v2059, %v2063
    %v2066 = vshrl.u32 %v1889, 16
    %v2068 = vrot.slane %v2066, 4
    %v2069 = vshll.u32 %v1889, 16
    %v2071 = vrot.slane %v2069, 5
    %v2072 = vor.u32 %v2068, %v2071
    %v2073 = vrot.slane %v2072, 4
    %v2075 = vshll.u32 %v1890, 16
    %v2077 = vrot.slane %v2075, 5
    %v2078 = vsel %vm574, %v2073, %v2077
    %v2080 = vshrl.u32 %v1891, 16
    %v2082 = vrot.slane %v2080, 4
    %v2083 = vshll.u32 %v1891, 16
    %v2085 = vrot.slane %v2083, 5
    %v2086 = vor.u32 %v2082, %v2085
    %v2087 = vrot.slane %v2086, 4
    %v2089 = vshll.u32 %v1892, 16
    %v2091 = vrot.slane %v2089, 5
    %v2092 = vsel %vm574, %v2087, %v2091
    %v2094 = vshrl.u32 %v1893, 16
    %v2096 = vrot.slane %v2094, 4
    %v2097 = vshll.u32 %v1893, 16
    %v2099 = vrot.slane %v2097, 5
    %v2100 = vor.u32 %v2096, %v2099
    %v2101 = vrot.slane %v2100, 4
    %v2103 = vshll.u32 %v1894, 16
    %v2105 = vrot.slane %v2103, 5
    %v2106 = vsel %vm574, %v2101, %v2105
    %v2108 = vshrl.u32 %v1895, 16
    %v2110 = vrot.slane %v2108, 4
    %v2111 = vshll.u32 %v1895, 16
    %v2113 = vrot.slane %v2111, 5
    %v2114 = vor.u32 %v2110, %v2113
    %v2115 = vrot.slane %v2114, 4
    %v2117 = vshll.u32 %v1896, 16
    %v2119 = vrot.slane %v2117, 5
    %v2120 = vsel %vm574, %v2115, %v2119
    %s2121 = scalar_lea.vmem [#allocation6], 256
    %v2122 = vld [vmem:[%s2121] sm:$0xf]
    %v2123 = vld [vmem:[%s2121 + $0x4] sm:$0xf]
    %v2124 = vld [vmem:[%s2121 + $0x8] sm:$0xf]
    %v2125 = vld [vmem:[%s2121 + $0xc] sm:$0xf]
    %v2126 = vld [vmem:[%s2121 + $0x10] sm:$0xf]
    %v2127 = vld [vmem:[%s2121 + $0x14] sm:$0xf]
    %v2128 = vld [vmem:[%s2121 + $0x18] sm:$0xf]
    %v2129 = vld [vmem:[%s2121 + $0x1c] sm:$0xf]
    %v2130 = vld [vmem:[%s2121 + $0x20] sm:$0xf]
    %v2131 = vld [vmem:[%s2121 + $0x24] sm:$0xf]
    %v2132 = vld [vmem:[%s2121 + $0x28] sm:$0xf]
    %v2133 = vld [vmem:[%s2121 + $0x2c] sm:$0xf]
    %v2134 = vld [vmem:[%s2121 + $0x30] sm:$0xf]
    %v2135 = vld [vmem:[%s2121 + $0x34] sm:$0xf]
    %v2136 = vld [vmem:[%s2121 + $0x38] sm:$0xf]
    %v2137 = vld [vmem:[%s2121 + $0x3c] sm:$0xf]
    %v2138 = vunpack.c.l.b16 %v1910
    %v2139 = vunpack.c.l.b16 %v1924
    %v2140 = vunpack.c.l.b16 %v1938
    %v2141 = vunpack.c.l.b16 %v1952
    %v2142 = vunpack.c.l.b16 %v1966
    %v2143 = vunpack.c.l.b16 %v1980
    %v2144 = vunpack.c.l.b16 %v1994
    %v2145 = vunpack.c.l.b16 %v2008
    %v2146 = vunpack.c.l.b16 %v2022
    %v2147 = vunpack.c.l.b16 %v2036
    %v2148 = vunpack.c.l.b16 %v2050
    %v2149 = vunpack.c.l.b16 %v2064
    %v2150 = vunpack.c.l.b16 %v2078
    %v2151 = vunpack.c.l.b16 %v2092
    %v2152 = vunpack.c.l.b16 %v2106
    %v2153 = vunpack.c.l.b16 %v2120
    %v2154 = vpack.c.b16 %v2139, %v2138
    %v2155 = vpack.c.b16 %v2141, %v2140
    %v2156 = vpack.c.b16 %v2143, %v2142
    %v2157 = vpack.c.b16 %v2145, %v2144
    %v2158 = vpack.c.b16 %v2147, %v2146
    %v2159 = vpack.c.b16 %v2149, %v2148
    %v2160 = vpack.c.b16 %v2151, %v2150
    %v2161 = vpack.c.b16 %v2153, %v2152
    %v2186 = vunpack.c.l.b16 %v2122
    %v2187 = vunpack.c.l.b16 %v2123
    %v2188 = vunpack.c.l.b16 %v2124
    %v2189 = vunpack.c.l.b16 %v2125
    %v2190 = vunpack.c.l.b16 %v2126
    %v2191 = vunpack.c.l.b16 %v2127
    %v2192 = vunpack.c.l.b16 %v2128
    %v2193 = vunpack.c.l.b16 %v2129
    %v2194 = vunpack.c.l.b16 %v2130
    %v2195 = vunpack.c.l.b16 %v2131
    %v2196 = vunpack.c.l.b16 %v2132
    %v2197 = vunpack.c.l.b16 %v2133
    %v2198 = vunpack.c.l.b16 %v2134
    %v2199 = vunpack.c.l.b16 %v2135
    %v2200 = vunpack.c.l.b16 %v2136
    %v2201 = vunpack.c.l.b16 %v2137
    %v2202 = vpack.c.b16 %v2187, %v2186
    %v2203 = vpack.c.b16 %v2189, %v2188
    %v2204 = vpack.c.b16 %v2191, %v2190
    %v2205 = vpack.c.b16 %v2193, %v2192
    %v2206 = vpack.c.b16 %v2195, %v2194
    %v2207 = vpack.c.b16 %v2197, %v2196
    %v2208 = vpack.c.b16 %v2199, %v2198
    %v2209 = vpack.c.b16 %v2201, %v2200
    %2218 = vmatprep.subr.bf16.mxu0 0
    %2219 = vmatpush1.bf16.msra.mxu0 %v2202
    %2220 = vmatprep.subr.bf16.mxu0 0
    %2221 = vmatpush1.bf16.msra.mxu0 %v2203
    %2222 = vmatprep.subr.bf16.mxu0 0
    %2223 = vmatpush1.bf16.msra.mxu0 %v2204
    %2224 = vmatprep.subr.bf16.mxu0 0
    %2225 = vmatpush1.bf16.msra.mxu0 %v2205
    %2226 = vmatprep.subr.bf16.mxu0 0
    %2227 = vmatpush1.bf16.msra.mxu0 %v2206
    %2228 = vmatprep.subr.bf16.mxu0 0
    %2229 = vmatpush1.bf16.msra.mxu0 %v2207
    %2230 = vmatprep.subr.bf16.mxu0 0
    %2231 = vmatpush1.bf16.msra.mxu0 %v2208
    %2232 = vmatprep.subr.bf16.mxu0 0
    %2233 = vmatpush1.bf16.msra.mxu0 %v2209
    %2234 = vmatprep.subr.bf16.mxu0 0
    %2235 = vmatpush1.bf16.msra.mxu0 0
    %2236 = vmatprep.subr.bf16.mxu0 0
    %2237 = vmatpush1.bf16.msra.mxu0 0
    %2238 = vmatprep.subr.bf16.mxu0 0
    %2239 = vmatpush1.bf16.msra.mxu0 0
    %2240 = vmatprep.subr.bf16.mxu0 0
    %2241 = vmatpush1.bf16.msra.mxu0 0
    %2242 = vmatprep.subr.bf16.mxu0 0
    %2243 = vmatpush1.bf16.msra.mxu0 0
    %2244 = vmatprep.subr.bf16.mxu0 0
    %2245 = vmatpush1.bf16.msra.mxu0 0
    %2246 = vmatprep.subr.bf16.mxu0 0
    %2247 = vmatpush1.bf16.msra.mxu0 0
    %2248 = vmatprep.subr.bf16.mxu0 0
    %2249 = vmatpush1.bf16.msra.mxu0 0
    %2250 = vmatprep.mubr.bf16.mxu0 0
    %2251 = vmatmul.mubr.bf16.gmra.mrb[0].mxu0 %v2154
    %v2252 = vpop.f32.mrb[0].mxu0
    %v2253 = vadd.f32 0.0, %v2252
    %v2254 = vpop.f32.mrb[0].mxu0
    %v2255 = vpop.f32.mrb[0].mxu0
    %v2256 = vadd.f32 0.0, %v2255
    %v2257 = vpop.f32.mrb[0].mxu0
    %2258 = vmatprep.mubr.bf16.mxu0 0
    %2259 = vmatmul.mubr.bf16.gmra.mrb[0].mxu0 %v2155
    %v2260 = vpop.f32.mrb[0].mxu0
    %v2261 = vadd.f32 0.0, %v2260
    %v2262 = vpop.f32.mrb[0].mxu0
    %v2263 = vpop.f32.mrb[0].mxu0
    %v2264 = vadd.f32 0.0, %v2263
    %v2265 = vpop.f32.mrb[0].mxu0
    %2266 = vmatprep.mubr.bf16.mxu0 0
    %2267 = vmatmul.mubr.bf16.gmra.mrb[0].mxu0 %v2156
    %v2268 = vpop.f32.mrb[0].mxu0
    %v2269 = vadd.f32 0.0, %v2268
    %v2270 = vpop.f32.mrb[0].mxu0
    %v2271 = vpop.f32.mrb[0].mxu0
    %v2272 = vadd.f32 0.0, %v2271
    %v2273 = vpop.f32.mrb[0].mxu0
    %2274 = vmatprep.mubr.bf16.mxu0 0
    %2275 = vmatmul.mubr.bf16.gmra.mrb[0].mxu0 %v2157
    %v2276 = vpop.f32.mrb[0].mxu0
    %v2277 = vadd.f32 0.0, %v2276
    %v2278 = vpop.f32.mrb[0].mxu0
    %v2279 = vpop.f32.mrb[0].mxu0
    %v2280 = vadd.f32 0.0, %v2279
    %v2281 = vpop.f32.mrb[0].mxu0
    %2282 = vmatprep.mubr.bf16.mxu0 0
    %2283 = vmatmul.mubr.bf16.gmra.mrb[0].mxu0 %v2158
    %v2284 = vpop.f32.mrb[0].mxu0
    %v2285 = vadd.f32 0.0, %v2284
    %v2286 = vpop.f32.mrb[0].mxu0
    %v2287 = vpop.f32.mrb[0].mxu0
    %v2288 = vadd.f32 0.0, %v2287
    %v2289 = vpop.f32.mrb[0].mxu0
    %2290 = vmatprep.mubr.bf16.mxu0 0
    %2291 = vmatmul.mubr.bf16.gmra.mrb[0].mxu0 %v2159
    %v2292 = vpop.f32.mrb[0].mxu0
    %v2293 = vadd.f32 0.0, %v2292
    %v2294 = vpop.f32.mrb[0].mxu0
    %v2295 = vpop.f32.mrb[0].mxu0
    %v2296 = vadd.f32 0.0, %v2295
    %v2297 = vpop.f32.mrb[0].mxu0
    %2298 = vmatprep.mubr.bf16.mxu0 0
    %2299 = vmatmul.mubr.bf16.gmra.mrb[0].mxu0 %v2160
    %v2300 = vpop.f32.mrb[0].mxu0
    %v2301 = vadd.f32 0.0, %v2300
    %v2302 = vpop.f32.mrb[0].mxu0
    %v2303 = vpop.f32.mrb[0].mxu0
    %v2304 = vadd.f32 0.0, %v2303
    %v2305 = vpop.f32.mrb[0].mxu0
    %2306 = vmatprep.mubr.bf16.mxu0 0
    %2307 = vmatmul.mubr.bf16.gmra.mrb[0].mxu0 %v2161
    %v2308 = vpop.f32.mrb[0].mxu0
    %v2309 = vadd.f32 0.0, %v2308
    %v2310 = vpop.f32.mrb[0].mxu0
    %v2311 = vpop.f32.mrb[0].mxu0
    %v2312 = vadd.f32 0.0, %v2311
    %v2313 = vpop.f32.mrb[0].mxu0
    %2314 = vdwg.mxu0
    %v2315 = vadd.f32 %v1785, %v2253
    %v2316 = vadd.f32 %v1786, %v2256
    %v2317 = vadd.f32 %v1787, %v2261
    %v2318 = vadd.f32 %v1788, %v2264
    %v2319 = vadd.f32 %v1789, %v2269
    %v2320 = vadd.f32 %v1790, %v2272
    %v2321 = vadd.f32 %v1791, %v2277
    %v2322 = vadd.f32 %v1792, %v2280
    %v2323 = vadd.f32 %v1793, %v2285
    %v2324 = vadd.f32 %v1794, %v2288
    %v2325 = vadd.f32 %v1795, %v2293
    %v2326 = vadd.f32 %v1796, %v2296
    %v2327 = vadd.f32 %v1797, %v2301
    %v2328 = vadd.f32 %v1798, %v2304
    %v2329 = vadd.f32 %v1799, %v2309
    %v2330 = vadd.f32 %v1800, %v2312
    %v2331 = vld [vmem:[%s392] sm:$0x1e]
    %v2332 = vld [vmem:[%s392 + $0x8] sm:$0x1e]
    %v2333 = vld [vmem:[%s392 + $0x10] sm:$0x1e]
    %v2334 = vld [vmem:[%s392 + $0x18] sm:$0x1e]
    %v2335 = vld [vmem:[%s392 + $0x20] sm:$0x1e]
    %v2336 = vld [vmem:[%s392 + $0x28] sm:$0x1e]
    %v2337 = vld [vmem:[%s392 + $0x30] sm:$0x1e]
    %v2338 = vld [vmem:[%s392 + $0x38] sm:$0x1e]
    %v2339 = vld [vmem:[%s392 + $0x50] sm:$0x1e]
    %v2340 = vld [vmem:[%s392 + $0x58] sm:$0x1e]
    %v2341 = vld [vmem:[%s392 + $0x60] sm:$0x1e]
    %v2342 = vld [vmem:[%s392 + $0x68] sm:$0x1e]
    %v2343 = vld [vmem:[%s392 + $0x70] sm:$0x1e]
    %v2344 = vld [vmem:[%s392 + $0x78] sm:$0x1e]
    %v2345 = vld [vmem:[%s392 + $0x80] sm:$0x1e]
    %v2346 = vld [vmem:[%s392 + $0x88] sm:$0x1e]
    %v2363 = vunpack.c.l.b16 %v2331
    %v2364 = vunpack.c.h.b16 %v2331
    %v2365 = vunpack.c.l.b16 %v2332
    %v2366 = vunpack.c.h.b16 %v2332
    %v2367 = vunpack.c.l.b16 %v2333
    %v2368 = vunpack.c.h.b16 %v2333
    %v2369 = vunpack.c.l.b16 %v2334
    %v2370 = vunpack.c.h.b16 %v2334
    %v2371 = vunpack.c.l.b16 %v2335
    %v2372 = vunpack.c.h.b16 %v2335
    %v2373 = vunpack.c.l.b16 %v2336
    %v2374 = vunpack.c.h.b16 %v2336
    %v2375 = vunpack.c.l.b16 %v2337
    %v2376 = vunpack.c.h.b16 %v2337
    %v2377 = vunpack.c.l.b16 %v2338
    %v2378 = vunpack.c.h.b16 %v2338
    %v2379 = vunpack.c.l.b16 %v2339
    %v2380 = vunpack.c.h.b16 %v2339
    %v2381 = vunpack.c.l.b16 %v2340
    %v2382 = vunpack.c.h.b16 %v2340
    %v2383 = vunpack.c.l.b16 %v2341
    %v2384 = vunpack.c.h.b16 %v2341
    %v2385 = vunpack.c.l.b16 %v2342
    %v2386 = vunpack.c.h.b16 %v2342
    %v2387 = vunpack.c.l.b16 %v2343
    %v2388 = vunpack.c.h.b16 %v2343
    %v2389 = vunpack.c.l.b16 %v2344
    %v2390 = vunpack.c.h.b16 %v2344
    %v2391 = vunpack.c.l.b16 %v2345
    %v2392 = vunpack.c.h.b16 %v2345
    %v2393 = vunpack.c.l.b16 %v2346
    %v2394 = vunpack.c.h.b16 %v2346
    %v2395 = vpack.c.b16 %v2363, %v2363
    %v2396 = vpack.c.b16 %v2364, %v2364
    %v2397 = vpack.c.b16 %v2365, %v2365
    %v2398 = vpack.c.b16 %v2366, %v2366
    %v2399 = vpack.c.b16 %v2367, %v2367
    %v2400 = vpack.c.b16 %v2368, %v2368
    %v2401 = vpack.c.b16 %v2369, %v2369
    %v2402 = vpack.c.b16 %v2370, %v2370
    %v2403 = vpack.c.b16 %v2371, %v2371
    %v2404 = vpack.c.b16 %v2372, %v2372
    %v2405 = vpack.c.b16 %v2373, %v2373
    %v2406 = vpack.c.b16 %v2374, %v2374
    %v2407 = vpack.c.b16 %v2375, %v2375
    %v2408 = vpack.c.b16 %v2376, %v2376
    %v2409 = vpack.c.b16 %v2377, %v2377
    %v2410 = vpack.c.b16 %v2378, %v2378
    %v2411 = vpack.c.b16 %v2379, %v2379
    %v2412 = vpack.c.b16 %v2380, %v2380
    %v2413 = vpack.c.b16 %v2381, %v2381
    %v2414 = vpack.c.b16 %v2382, %v2382
    %v2415 = vpack.c.b16 %v2383, %v2383
    %v2416 = vpack.c.b16 %v2384, %v2384
    %v2417 = vpack.c.b16 %v2385, %v2385
    %v2418 = vpack.c.b16 %v2386, %v2386
    %v2419 = vpack.c.b16 %v2387, %v2387
    %v2420 = vpack.c.b16 %v2388, %v2388
    %v2421 = vpack.c.b16 %v2389, %v2389
    %v2422 = vpack.c.b16 %v2390, %v2390
    %v2423 = vpack.c.b16 %v2391, %v2391
    %v2424 = vpack.c.b16 %v2392, %v2392
    %v2425 = vpack.c.b16 %v2393, %v2393
    %v2426 = vpack.c.b16 %v2394, %v2394
    %v2427 = vrot.slane %v2395, 5
    %v2428 = vrot.slane %v2427, 4
    %v2429 = vrot.slane %v2396, 5
    %v2430 = vsel %vm1284, %v2428, %v2429
    %v2431 = vrot.slane %v2397, 5
    %v2432 = vrot.slane %v2431, 4
    %v2433 = vrot.slane %v2398, 5
    %v2434 = vsel %vm1284, %v2432, %v2433
    %v2435 = vrot.slane %v2399, 5
    %v2436 = vrot.slane %v2435, 4
    %v2437 = vrot.slane %v2400, 5
    %v2438 = vsel %vm1284, %v2436, %v2437
    %v2439 = vrot.slane %v2401, 5
    %v2440 = vrot.slane %v2439, 4
    %v2441 = vrot.slane %v2402, 5
    %v2442 = vsel %vm1284, %v2440, %v2441
    %v2443 = vrot.slane %v2403, 5
    %v2444 = vrot.slane %v2443, 4
    %v2445 = vrot.slane %v2404, 5
    %v2446 = vsel %vm1284, %v2444, %v2445
    %v2447 = vrot.slane %v2405, 5
    %v2448 = vrot.slane %v2447, 4
    %v2449 = vrot.slane %v2406, 5
    %v2450 = vsel %vm1284, %v2448, %v2449
    %v2451 = vrot.slane %v2407, 5
    %v2452 = vrot.slane %v2451, 4
    %v2453 = vrot.slane %v2408, 5
    %v2454 = vsel %vm1284, %v2452, %v2453
    %v2455 = vrot.slane %v2409, 5
    %v2456 = vrot.slane %v2455, 4
    %v2457 = vrot.slane %v2410, 5
    %v2458 = vsel %vm1284, %v2456, %v2457
    %v2459 = vrot.slane %v2411, 5
    %v2460 = vrot.slane %v2459, 4
    %v2461 = vrot.slane %v2412, 5
    %v2462 = vsel %vm1284, %v2460, %v2461
    %v2463 = vrot.slane %v2413, 5
    %v2464 = vrot.slane %v2463, 4
    %v2465 = vrot.slane %v2414, 5
    %v2466 = vsel %vm1284, %v2464, %v2465
    %v2467 = vrot.slane %v2415, 5
    %v2468 = vrot.slane %v2467, 4
    %v2469 = vrot.slane %v2416, 5
    %v2470 = vsel %vm1284, %v2468, %v2469
    %v2471 = vrot.slane %v2417, 5
    %v2472 = vrot.slane %v2471, 4
    %v2473 = vrot.slane %v2418, 5
    %v2474 = vsel %vm1284, %v2472, %v2473
    %v2475 = vrot.slane %v2419, 5
    %v2476 = vrot.slane %v2475, 4
    %v2477 = vrot.slane %v2420, 5
    %v2478 = vsel %vm1284, %v2476, %v2477
    %v2479 = vrot.slane %v2421, 5
    %v2480 = vrot.slane %v2479, 4
    %v2481 = vrot.slane %v2422, 5
    %v2482 = vsel %vm1284, %v2480, %v2481
    %v2483 = vrot.slane %v2423, 5
    %v2484 = vrot.slane %v2483, 4
    %v2485 = vrot.slane %v2424, 5
    %v2486 = vsel %vm1284, %v2484, %v2485
    %v2487 = vrot.slane %v2425, 5
    %v2488 = vrot.slane %v2487, 4
    %v2489 = vrot.slane %v2426, 5
    %v2490 = vsel %vm1284, %v2488, %v2489
    %s2491 = scalar_lea.vmem [#allocation6], 320
    %v2492 = vld [vmem:[%s2491] sm:$0xf]
    %v2493 = vld [vmem:[%s2491 + $0x4] sm:$0xf]
    %v2494 = vld [vmem:[%s2491 + $0x8] sm:$0xf]
    %v2495 = vld [vmem:[%s2491 + $0xc] sm:$0xf]
    %v2496 = vld [vmem:[%s2491 + $0x10] sm:$0xf]
    %v2497 = vld [vmem:[%s2491 + $0x14] sm:$0xf]
    %v2498 = vld [vmem:[%s2491 + $0x18] sm:$0xf]
    %v2499 = vld [vmem:[%s2491 + $0x1c] sm:$0xf]
    %v2500 = vld [vmem:[%s2491 + $0x20] sm:$0xf]
    %v2501 = vld [vmem:[%s2491 + $0x24] sm:$0xf]
    %v2502 = vld [vmem:[%s2491 + $0x28] sm:$0xf]
    %v2503 = vld [vmem:[%s2491 + $0x2c] sm:$0xf]
    %v2504 = vld [vmem:[%s2491 + $0x30] sm:$0xf]
    %v2505 = vld [vmem:[%s2491 + $0x34] sm:$0xf]
    %v2506 = vld [vmem:[%s2491 + $0x38] sm:$0xf]
    %v2507 = vld [vmem:[%s2491 + $0x3c] sm:$0xf]
    %v2508 = vunpack.c.l.b16 %v2430
    %v2509 = vunpack.c.l.b16 %v2434
    %v2510 = vunpack.c.l.b16 %v2438
    %v2511 = vunpack.c.l.b16 %v2442
    %v2512 = vunpack.c.l.b16 %v2446
    %v2513 = vunpack.c.l.b16 %v2450
    %v2514 = vunpack.c.l.b16 %v2454
    %v2515 = vunpack.c.l.b16 %v2458
    %v2516 = vunpack.c.l.b16 %v2462
    %v2517 = vunpack.c.l.b16 %v2466
    %v2518 = vunpack.c.l.b16 %v2470
    %v2519 = vunpack.c.l.b16 %v2474
    %v2520 = vunpack.c.l.b16 %v2478
    %v2521 = vunpack.c.l.b16 %v2482
    %v2522 = vunpack.c.l.b16 %v2486
    %v2523 = vunpack.c.l.b16 %v2490
    %v2524 = vpack.c.b16 %v2509, %v2508
    %v2525 = vpack.c.b16 %v2511, %v2510
    %v2526 = vpack.c.b16 %v2513, %v2512
    %v2527 = vpack.c.b16 %v2515, %v2514
    %v2528 = vpack.c.b16 %v2517, %v2516
    %v2529 = vpack.c.b16 %v2519, %v2518
    %v2530 = vpack.c.b16 %v2521, %v2520
    %v2531 = vpack.c.b16 %v2523, %v2522
    %v2556 = vunpack.c.l.b16 %v2492
    %v2557 = vunpack.c.l.b16 %v2493
    %v2558 = vunpack.c.l.b16 %v2494
    %v2559 = vunpack.c.l.b16 %v2495
    %v2560 = vunpack.c.l.b16 %v2496
    %v2561 = vunpack.c.l.b16 %v2497
    %v2562 = vunpack.c.l.b16 %v2498
    %v2563 = vunpack.c.l.b16 %v2499
    %v2564 = vunpack.c.l.b16 %v2500
    %v2565 = vunpack.c.l.b16 %v2501
    %v2566 = vunpack.c.l.b16 %v2502
    %v2567 = vunpack.c.l.b16 %v2503
    %v2568 = vunpack.c.l.b16 %v2504
    %v2569 = vunpack.c.l.b16 %v2505
    %v2570 = vunpack.c.l.b16 %v2506
    %v2571 = vunpack.c.l.b16 %v2507
    %v2572 = vpack.c.b16 %v2557, %v2556
    %v2573 = vpack.c.b16 %v2559, %v2558
    %v2574 = vpack.c.b16 %v2561, %v2560
    %v2575 = vpack.c.b16 %v2563, %v2562
    %v2576 = vpack.c.b16 %v2565, %v2564
    %v2577 = vpack.c.b16 %v2567, %v2566
    %v2578 = vpack.c.b16 %v2569, %v2568
    %v2579 = vpack.c.b16 %v2571, %v2570
    %2588 = vmatprep.subr.bf16.mxu0 0
    %2589 = vmatpush1.bf16.msra.mxu0 %v2572
    %2590 = vmatprep.subr.bf16.mxu0 0
    %2591 = vmatpush1.bf16.msra.mxu0 %v2573
    %2592 = vmatprep.subr.bf16.mxu0 0
    %2593 = vmatpush1.bf16.msra.mxu0 %v2574
    %2594 = vmatprep.subr.bf16.mxu0 0
    %2595 = vmatpush1.bf16.msra.mxu0 %v2575
    %2596 = vmatprep.subr.bf16.mxu0 0
    %2597 = vmatpush1.bf16.msra.mxu0 %v2576
    %2598 = vmatprep.subr.bf16.mxu0 0
    %2599 = vmatpush1.bf16.msra.mxu0 %v2577
    %2600 = vmatprep.subr.bf16.mxu0 0
    %2601 = vmatpush1.bf16.msra.mxu0 %v2578
    %2602 = vmatprep.subr.bf16.mxu0 0
    %2603 = vmatpush1.bf16.msra.mxu0 %v2579
    %2604 = vmatprep.subr.bf16.mxu0 0
    %2605 = vmatpush1.bf16.msra.mxu0 0
    %2606 = vmatprep.subr.bf16.mxu0 0
    %2607 = vmatpush1.bf16.msra.mxu0 0
    %2608 = vmatprep.subr.bf16.mxu0 0
    %2609 = vmatpush1.bf16.msra.mxu0 0
    %2610 = vmatprep.subr.bf16.mxu0 0
    %2611 = vmatpush1.bf16.msra.mxu0 0
    %2612 = vmatprep.subr.bf16.mxu0 0
    %2613 = vmatpush1.bf16.msra.mxu0 0
    %2614 = vmatprep.subr.bf16.mxu0 0
    %2615 = vmatpush1.bf16.msra.mxu0 0
    %2616 = vmatprep.subr.bf16.mxu0 0
    %2617 = vmatpush1.bf16.msra.mxu0 0
    %2618 = vmatprep.subr.bf16.mxu0 0
    %2619 = vmatpush1.bf16.msra.mxu0 0
    %2620 = vmatprep.mubr.bf16.mxu0 0
    %2621 = vmatmul.mubr.bf16.gmra.mrb[0].mxu0 %v2524
    %v2622 = vpop.f32.mrb[0].mxu0
    %v2623 = vadd.f32 0.0, %v2622
    %v2624 = vpop.f32.mrb[0].mxu0
    %v2625 = vpop.f32.mrb[0].mxu0
    %v2626 = vadd.f32 0.0, %v2625
    %v2627 = vpop.f32.mrb[0].mxu0
    %2628 = vmatprep.mubr.bf16.mxu0 0
    %2629 = vmatmul.mubr.bf16.gmra.mrb[0].mxu0 %v2525
    %v2630 = vpop.f32.mrb[0].mxu0
    %v2631 = vadd.f32 0.0, %v2630
    %v2632 = vpop.f32.mrb[0].mxu0
    %v2633 = vpop.f32.mrb[0].mxu0
    %v2634 = vadd.f32 0.0, %v2633
    %v2635 = vpop.f32.mrb[0].mxu0
    %2636 = vmatprep.mubr.bf16.mxu0 0
    %2637 = vmatmul.mubr.bf16.gmra.mrb[0].mxu0 %v2526
    %v2638 = vpop.f32.mrb[0].mxu0
    %v2639 = vadd.f32 0.0, %v2638
    %v2640 = vpop.f32.mrb[0].mxu0
    %v2641 = vpop.f32.mrb[0].mxu0
    %v2642 = vadd.f32 0.0, %v2641
    %v2643 = vpop.f32.mrb[0].mxu0
    %2644 = vmatprep.mubr.bf16.mxu0 0
    %2645 = vmatmul.mubr.bf16.gmra.mrb[0].mxu0 %v2527
    %v2646 = vpop.f32.mrb[0].mxu0
    %v2647 = vadd.f32 0.0, %v2646
    %v2648 = vpop.f32.mrb[0].mxu0
    %v2649 = vpop.f32.mrb[0].mxu0
    %v2650 = vadd.f32 0.0, %v2649
    %v2651 = vpop.f32.mrb[0].mxu0
    %2652 = vmatprep.mubr.bf16.mxu0 0
    %2653 = vmatmul.mubr.bf16.gmra.mrb[0].mxu0 %v2528
    %v2654 = vpop.f32.mrb[0].mxu0
    %v2655 = vadd.f32 0.0, %v2654
    %v2656 = vpop.f32.mrb[0].mxu0
    %v2657 = vpop.f32.mrb[0].mxu0
    %v2658 = vadd.f32 0.0, %v2657
    %v2659 = vpop.f32.mrb[0].mxu0
    %2660 = vmatprep.mubr.bf16.mxu0 0
    %2661 = vmatmul.mubr.bf16.gmra.mrb[0].mxu0 %v2529
    %v2662 = vpop.f32.mrb[0].mxu0
    %v2663 = vadd.f32 0.0, %v2662
    %v2664 = vpop.f32.mrb[0].mxu0
    %v2665 = vpop.f32.mrb[0].mxu0
    %v2666 = vadd.f32 0.0, %v2665
    %v2667 = vpop.f32.mrb[0].mxu0
    %2668 = vmatprep.mubr.bf16.mxu0 0
    %2669 = vmatmul.mubr.bf16.gmra.mrb[0].mxu0 %v2530
    %v2670 = vpop.f32.mrb[0].mxu0
    %v2671 = vadd.f32 0.0, %v2670
    %v2672 = vpop.f32.mrb[0].mxu0
    %v2673 = vpop.f32.mrb[0].mxu0
    %v2674 = vadd.f32 0.0, %v2673
    %v2675 = vpop.f32.mrb[0].mxu0
    %2676 = vmatprep.mubr.bf16.mxu0 0
    %2677 = vmatmul.mubr.bf16.gmra.mrb[0].mxu0 %v2531
    %v2678 = vpop.f32.mrb[0].mxu0
    %v2679 = vadd.f32 0.0, %v2678
    %v2680 = vpop.f32.mrb[0].mxu0
    %v2681 = vpop.f32.mrb[0].mxu0
    %v2682 = vadd.f32 0.0, %v2681
    %v2683 = vpop.f32.mrb[0].mxu0
    %2684 = vdwg.mxu0
    %v2685 = vadd.f32 %v2315, %v2623
    %v2686 = vadd.f32 %v2316, %v2626
    %v2687 = vadd.f32 %v2317, %v2631
    %v2688 = vadd.f32 %v2318, %v2634
    %v2689 = vadd.f32 %v2319, %v2639
    %v2690 = vadd.f32 %v2320, %v2642
    %v2691 = vadd.f32 %v2321, %v2647
    %v2692 = vadd.f32 %v2322, %v2650
    %v2693 = vadd.f32 %v2323, %v2655
    %v2694 = vadd.f32 %v2324, %v2658
    %v2695 = vadd.f32 %v2325, %v2663
    %v2696 = vadd.f32 %v2326, %v2666
    %v2697 = vadd.f32 %v2327, %v2671
    %v2698 = vadd.f32 %v2328, %v2674
    %v2699 = vadd.f32 %v2329, %v2679
    %v2700 = vadd.f32 %v2330, %v2682
    %s2701 = scalar_lea.vmem [#allocation2], 16
    %v2702 = vld [vmem:[%s2701] sm:$0xf]
    %v2703 = vld [vmem:[%s2701 + $0x8] sm:$0xf]
    %v2704 = vld [vmem:[%s2701 + $0x10] sm:$0xf]
    %v2705 = vld [vmem:[%s2701 + $0x18] sm:$0xf]
    %v2706 = vld [vmem:[%s2701 + $0x20] sm:$0xf]
    %v2707 = vld [vmem:[%s2701 + $0x28] sm:$0xf]
    %v2708 = vld [vmem:[%s2701 + $0x30] sm:$0xf]
    %v2709 = vld [vmem:[%s2701 + $0x38] sm:$0xf]
    %v2710 = vld [vmem:[%s2701 + $0x50] sm:$0xf]
    %v2711 = vld [vmem:[%s2701 + $0x58] sm:$0xf]
    %v2712 = vld [vmem:[%s2701 + $0x60] sm:$0xf]
    %v2713 = vld [vmem:[%s2701 + $0x68] sm:$0xf]
    %v2714 = vld [vmem:[%s2701 + $0x70] sm:$0xf]
    %v2715 = vld [vmem:[%s2701 + $0x78] sm:$0xf]
    %v2716 = vld [vmem:[%s2701 + $0x80] sm:$0xf]
    %v2717 = vld [vmem:[%s2701 + $0x88] sm:$0xf]
    %s2718 = scalar_lea.vmem [#allocation6], 384
    %v2719 = vld [vmem:[%s2718] sm:$0xf]
    %v2720 = vld [vmem:[%s2718 + $0x4] sm:$0xf]
    %v2721 = vld [vmem:[%s2718 + $0x8] sm:$0xf]
    %v2722 = vld [vmem:[%s2718 + $0xc] sm:$0xf]
    %v2723 = vld [vmem:[%s2718 + $0x10] sm:$0xf]
    %v2724 = vld [vmem:[%s2718 + $0x14] sm:$0xf]
    %v2725 = vld [vmem:[%s2718 + $0x18] sm:$0xf]
    %v2726 = vld [vmem:[%s2718 + $0x1c] sm:$0xf]
    %v2727 = vld [vmem:[%s2718 + $0x20] sm:$0xf]
    %v2728 = vld [vmem:[%s2718 + $0x24] sm:$0xf]
    %v2729 = vld [vmem:[%s2718 + $0x28] sm:$0xf]
    %v2730 = vld [vmem:[%s2718 + $0x2c] sm:$0xf]
    %v2731 = vld [vmem:[%s2718 + $0x30] sm:$0xf]
    %v2732 = vld [vmem:[%s2718 + $0x34] sm:$0xf]
    %v2733 = vld [vmem:[%s2718 + $0x38] sm:$0xf]
    %v2734 = vld [vmem:[%s2718 + $0x3c] sm:$0xf]
    %v2751 = vunpack.c.l.b16 %v2702
    %v2752 = vunpack.c.l.b16 %v2703
    %v2753 = vunpack.c.l.b16 %v2704
    %v2754 = vunpack.c.l.b16 %v2705
    %v2755 = vunpack.c.l.b16 %v2706
    %v2756 = vunpack.c.l.b16 %v2707
    %v2757 = vunpack.c.l.b16 %v2708
    %v2758 = vunpack.c.l.b16 %v2709
    %v2759 = vunpack.c.l.b16 %v2710
    %v2760 = vunpack.c.l.b16 %v2711
    %v2761 = vunpack.c.l.b16 %v2712
    %v2762 = vunpack.c.l.b16 %v2713
    %v2763 = vunpack.c.l.b16 %v2714
    %v2764 = vunpack.c.l.b16 %v2715
    %v2765 = vunpack.c.l.b16 %v2716
    %v2766 = vunpack.c.l.b16 %v2717
    %v2767 = vpack.c.b16 %v2752, %v2751
    %v2768 = vpack.c.b16 %v2754, %v2753
    %v2769 = vpack.c.b16 %v2756, %v2755
    %v2770 = vpack.c.b16 %v2758, %v2757
    %v2771 = vpack.c.b16 %v2760, %v2759
    %v2772 = vpack.c.b16 %v2762, %v2761
    %v2773 = vpack.c.b16 %v2764, %v2763
    %v2774 = vpack.c.b16 %v2766, %v2765
    %v2799 = vunpack.c.l.b16 %v2719
    %v2800 = vunpack.c.l.b16 %v2720
    %v2801 = vunpack.c.l.b16 %v2721
    %v2802 = vunpack.c.l.b16 %v2722
    %v2803 = vunpack.c.l.b16 %v2723
    %v2804 = vunpack.c.l.b16 %v2724
    %v2805 = vunpack.c.l.b16 %v2725
    %v2806 = vunpack.c.l.b16 %v2726
    %v2807 = vunpack.c.l.b16 %v2727
    %v2808 = vunpack.c.l.b16 %v2728
    %v2809 = vunpack.c.l.b16 %v2729
    %v2810 = vunpack.c.l.b16 %v2730
    %v2811 = vunpack.c.l.b16 %v2731
    %v2812 = vunpack.c.l.b16 %v2732
    %v2813 = vunpack.c.l.b16 %v2733
    %v2814 = vunpack.c.l.b16 %v2734
    %v2815 = vpack.c.b16 %v2800, %v2799
    %v2816 = vpack.c.b16 %v2802, %v2801
    %v2817 = vpack.c.b16 %v2804, %v2803
    %v2818 = vpack.c.b16 %v2806, %v2805
    %v2819 = vpack.c.b16 %v2808, %v2807
    %v2820 = vpack.c.b16 %v2810, %v2809
    %v2821 = vpack.c.b16 %v2812, %v2811
    %v2822 = vpack.c.b16 %v2814, %v2813
    %2831 = vmatprep.subr.bf16.mxu0 0
    %2832 = vmatpush1.bf16.msra.mxu0 %v2815
    %2833 = vmatprep.subr.bf16.mxu0 0
    %2834 = vmatpush1.bf16.msra.mxu0 %v2816
    %2835 = vmatprep.subr.bf16.mxu0 0
    %2836 = vmatpush1.bf16.msra.mxu0 %v2817
    %2837 = vmatprep.subr.bf16.mxu0 0
    %2838 = vmatpush1.bf16.msra.mxu0 %v2818
    %2839 = vmatprep.subr.bf16.mxu0 0
    %2840 = vmatpush1.bf16.msra.mxu0 %v2819
    %2841 = vmatprep.subr.bf16.mxu0 0
    %2842 = vmatpush1.bf16.msra.mxu0 %v2820
    %2843 = vmatprep.subr.bf16.mxu0 0
    %2844 = vmatpush1.bf16.msra.mxu0 %v2821
    %2845 = vmatprep.subr.bf16.mxu0 0
    %2846 = vmatpush1.bf16.msra.mxu0 %v2822
    %2847 = vmatprep.subr.bf16.mxu0 0
    %2848 = vmatpush1.bf16.msra.mxu0 0
    %2849 = vmatprep.subr.bf16.mxu0 0
    %2850 = vmatpush1.bf16.msra.mxu0 0
    %2851 = vmatprep.subr.bf16.mxu0 0
    %2852 = vmatpush1.bf16.msra.mxu0 0
    %2853 = vmatprep.subr.bf16.mxu0 0
    %2854 = vmatpush1.bf16.msra.mxu0 0
    %2855 = vmatprep.subr.bf16.mxu0 0
    %2856 = vmatpush1.bf16.msra.mxu0 0
    %2857 = vmatprep.subr.bf16.mxu0 0
    %2858 = vmatpush1.bf16.msra.mxu0 0
    %2859 = vmatprep.subr.bf16.mxu0 0
    %2860 = vmatpush1.bf16.msra.mxu0 0
    %2861 = vmatprep.subr.bf16.mxu0 0
    %2862 = vmatpush1.bf16.msra.mxu0 0
    %2863 = vmatprep.mubr.bf16.mxu0 0
    %2864 = vmatmul.mubr.bf16.gmra.mrb[0].mxu0 %v2767
    %v2865 = vpop.f32.mrb[0].mxu0
    %v2866 = vadd.f32 0.0, %v2865
    %v2867 = vpop.f32.mrb[0].mxu0
    %v2868 = vpop.f32.mrb[0].mxu0
    %v2869 = vadd.f32 0.0, %v2868
    %v2870 = vpop.f32.mrb[0].mxu0
    %2871 = vmatprep.mubr.bf16.mxu0 0
    %2872 = vmatmul.mubr.bf16.gmra.mrb[0].mxu0 %v2768
    %v2873 = vpop.f32.mrb[0].mxu0
    %v2874 = vadd.f32 0.0, %v2873
    %v2875 = vpop.f32.mrb[0].mxu0
    %v2876 = vpop.f32.mrb[0].mxu0
    %v2877 = vadd.f32 0.0, %v2876
    %v2878 = vpop.f32.mrb[0].mxu0
    %2879 = vmatprep.mubr.bf16.mxu0 0
    %2880 = vmatmul.mubr.bf16.gmra.mrb[0].mxu0 %v2769
    %v2881 = vpop.f32.mrb[0].mxu0
    %v2882 = vadd.f32 0.0, %v2881
    %v2883 = vpop.f32.mrb[0].mxu0
    %v2884 = vpop.f32.mrb[0].mxu0
    %v2885 = vadd.f32 0.0, %v2884
    %v2886 = vpop.f32.mrb[0].mxu0
    %2887 = vmatprep.mubr.bf16.mxu0 0
    %2888 = vmatmul.mubr.bf16.gmra.mrb[0].mxu0 %v2770
    %v2889 = vpop.f32.mrb[0].mxu0
    %v2890 = vadd.f32 0.0, %v2889
    %v2891 = vpop.f32.mrb[0].mxu0
    %v2892 = vpop.f32.mrb[0].mxu0
    %v2893 = vadd.f32 0.0, %v2892
    %v2894 = vpop.f32.mrb[0].mxu0
    %2895 = vmatprep.mubr.bf16.mxu0 0
    %2896 = vmatmul.mubr.bf16.gmra.mrb[0].mxu0 %v2771
    %v2897 = vpop.f32.mrb[0].mxu0
    %v2898 = vadd.f32 0.0, %v2897
    %v2899 = vpop.f32.mrb[0].mxu0
    %v2900 = vpop.f32.mrb[0].mxu0
    %v2901 = vadd.f32 0.0, %v2900
    %v2902 = vpop.f32.mrb[0].mxu0
    %2903 = vmatprep.mubr.bf16.mxu0 0
    %2904 = vmatmul.mubr.bf16.gmra.mrb[0].mxu0 %v2772
    %v2905 = vpop.f32.mrb[0].mxu0
    %v2906 = vadd.f32 0.0, %v2905
    %v2907 = vpop.f32.mrb[0].mxu0
    %v2908 = vpop.f32.mrb[0].mxu0
    %v2909 = vadd.f32 0.0, %v2908
    %v2910 = vpop.f32.mrb[0].mxu0
    %2911 = vmatprep.mubr.bf16.mxu0 0
    %2912 = vmatmul.mubr.bf16.gmra.mrb[0].mxu0 %v2773
    %v2913 = vpop.f32.mrb[0].mxu0
    %v2914 = vadd.f32 0.0, %v2913
    %v2915 = vpop.f32.mrb[0].mxu0
    %v2916 = vpop.f32.mrb[0].mxu0
    %v2917 = vadd.f32 0.0, %v2916
    %v2918 = vpop.f32.mrb[0].mxu0
    %2919 = vmatprep.mubr.bf16.mxu0 0
    %2920 = vmatmul.mubr.bf16.gmra.mrb[0].mxu0 %v2774
    %v2921 = vpop.f32.mrb[0].mxu0
    %v2922 = vadd.f32 0.0, %v2921
    %v2923 = vpop.f32.mrb[0].mxu0
    %v2924 = vpop.f32.mrb[0].mxu0
    %v2925 = vadd.f32 0.0, %v2924
    %v2926 = vpop.f32.mrb[0].mxu0
    %2927 = vdwg.mxu0
    %v2928 = vadd.f32 %v2685, %v2866
    %v2929 = vadd.f32 %v2686, %v2869
    %v2930 = vadd.f32 %v2687, %v2874
    %v2931 = vadd.f32 %v2688, %v2877
    %v2932 = vadd.f32 %v2689, %v2882
    %v2933 = vadd.f32 %v2690, %v2885
    %v2934 = vadd.f32 %v2691, %v2890
    %v2935 = vadd.f32 %v2692, %v2893
    %v2936 = vadd.f32 %v2693, %v2898
    %v2937 = vadd.f32 %v2694, %v2901
    %v2938 = vadd.f32 %v2695, %v2906
    %v2939 = vadd.f32 %v2696, %v2909
    %v2940 = vadd.f32 %v2697, %v2914
    %v2941 = vadd.f32 %v2698, %v2917
    %v2942 = vadd.f32 %v2699, %v2922
    %v2943 = vadd.f32 %v2700, %v2925
    %v2944 = vld [vmem:[%s2701] sm:$0x1f]
    %v2945 = vld [vmem:[%s2701 + $0x8] sm:$0x1f]
    %v2946 = vld [vmem:[%s2701 + $0x10] sm:$0x1f]
    %v2947 = vld [vmem:[%s2701 + $0x18] sm:$0x1f]
    %v2948 = vld [vmem:[%s2701 + $0x20] sm:$0x1f]
    %v2949 = vld [vmem:[%s2701 + $0x28] sm:$0x1f]
    %v2950 = vld [vmem:[%s2701 + $0x30] sm:$0x1f]
    %v2951 = vld [vmem:[%s2701 + $0x38] sm:$0x1f]
    %v2952 = vld [vmem:[%s2701 + $0x50] sm:$0x1f]
    %v2953 = vld [vmem:[%s2701 + $0x58] sm:$0x1f]
    %v2954 = vld [vmem:[%s2701 + $0x60] sm:$0x1f]
    %v2955 = vld [vmem:[%s2701 + $0x68] sm:$0x1f]
    %v2956 = vld [vmem:[%s2701 + $0x70] sm:$0x1f]
    %v2957 = vld [vmem:[%s2701 + $0x78] sm:$0x1f]
    %v2958 = vld [vmem:[%s2701 + $0x80] sm:$0x1f]
    %v2959 = vld [vmem:[%s2701 + $0x88] sm:$0x1f]
    %v2976 = vunpack.c.l.b16 %v2944
    %v2977 = vunpack.c.h.b16 %v2944
    %v2978 = vunpack.c.l.b16 %v2945
    %v2979 = vunpack.c.h.b16 %v2945
    %v2980 = vunpack.c.l.b16 %v2946
    %v2981 = vunpack.c.h.b16 %v2946
    %v2982 = vunpack.c.l.b16 %v2947
    %v2983 = vunpack.c.h.b16 %v2947
    %v2984 = vunpack.c.l.b16 %v2948
    %v2985 = vunpack.c.h.b16 %v2948
    %v2986 = vunpack.c.l.b16 %v2949
    %v2987 = vunpack.c.h.b16 %v2949
    %v2988 = vunpack.c.l.b16 %v2950
    %v2989 = vunpack.c.h.b16 %v2950
    %v2990 = vunpack.c.l.b16 %v2951
    %v2991 = vunpack.c.h.b16 %v2951
    %v2992 = vunpack.c.l.b16 %v2952
    %v2993 = vunpack.c.h.b16 %v2952
    %v2994 = vunpack.c.l.b16 %v2953
    %v2995 = vunpack.c.h.b16 %v2953
    %v2996 = vunpack.c.l.b16 %v2954
    %v2997 = vunpack.c.h.b16 %v2954
    %v2998 = vunpack.c.l.b16 %v2955
    %v2999 = vunpack.c.h.b16 %v2955
    %v3000 = vunpack.c.l.b16 %v2956
    %v3001 = vunpack.c.h.b16 %v2956
    %v3002 = vunpack.c.l.b16 %v2957
    %v3003 = vunpack.c.h.b16 %v2957
    %v3004 = vunpack.c.l.b16 %v2958
    %v3005 = vunpack.c.h.b16 %v2958
    %v3006 = vunpack.c.l.b16 %v2959
    %v3007 = vunpack.c.h.b16 %v2959
    %v3008 = vpack.c.b16 %v2976, %v2976
    %v3009 = vpack.c.b16 %v2977, %v2977
    %v3010 = vpack.c.b16 %v2978, %v2978
    %v3011 = vpack.c.b16 %v2979, %v2979
    %v3012 = vpack.c.b16 %v2980, %v2980
    %v3013 = vpack.c.b16 %v2981, %v2981
    %v3014 = vpack.c.b16 %v2982, %v2982
    %v3015 = vpack.c.b16 %v2983, %v2983
    %v3016 = vpack.c.b16 %v2984, %v2984
    %v3017 = vpack.c.b16 %v2985, %v2985
    %v3018 = vpack.c.b16 %v2986, %v2986
    %v3019 = vpack.c.b16 %v2987, %v2987
    %v3020 = vpack.c.b16 %v2988, %v2988
    %v3021 = vpack.c.b16 %v2989, %v2989
    %v3022 = vpack.c.b16 %v2990, %v2990
    %v3023 = vpack.c.b16 %v2991, %v2991
    %v3024 = vpack.c.b16 %v2992, %v2992
    %v3025 = vpack.c.b16 %v2993, %v2993
    %v3026 = vpack.c.b16 %v2994, %v2994
    %v3027 = vpack.c.b16 %v2995, %v2995
    %v3028 = vpack.c.b16 %v2996, %v2996
    %v3029 = vpack.c.b16 %v2997, %v2997
    %v3030 = vpack.c.b16 %v2998, %v2998
    %v3031 = vpack.c.b16 %v2999, %v2999
    %v3032 = vpack.c.b16 %v3000, %v3000
    %v3033 = vpack.c.b16 %v3001, %v3001
    %v3034 = vpack.c.b16 %v3002, %v3002
    %v3035 = vpack.c.b16 %v3003, %v3003
    %v3036 = vpack.c.b16 %v3004, %v3004
    %v3037 = vpack.c.b16 %v3005, %v3005
    %v3038 = vpack.c.b16 %v3006, %v3006
    %v3039 = vpack.c.b16 %v3007, %v3007
    %v3041 = vshrl.u32 %v3008, 16
    %v3043 = vrot.slane %v3041, 4
    %v3044 = vshll.u32 %v3008, 16
    %v3046 = vrot.slane %v3044, 5
    %v3047 = vor.u32 %v3043, %v3046
    %v3048 = vrot.slane %v3047, 4
    %v3050 = vshll.u32 %v3009, 16
    %v3052 = vrot.slane %v3050, 5
    %v3053 = vsel %vm574, %v3048, %v3052
    %v3055 = vshrl.u32 %v3010, 16
    %v3057 = vrot.slane %v3055, 4
    %v3058 = vshll.u32 %v3010, 16
    %v3060 = vrot.slane %v3058, 5
    %v3061 = vor.u32 %v3057, %v3060
    %v3062 = vrot.slane %v3061, 4
    %v3064 = vshll.u32 %v3011, 16
    %v3066 = vrot.slane %v3064, 5
    %v3067 = vsel %vm574, %v3062, %v3066
    %v3069 = vshrl.u32 %v3012, 16
    %v3071 = vrot.slane %v3069, 4
    %v3072 = vshll.u32 %v3012, 16
    %v3074 = vrot.slane %v3072, 5
    %v3075 = vor.u32 %v3071, %v3074
    %v3076 = vrot.slane %v3075, 4
    %v3078 = vshll.u32 %v3013, 16
    %v3080 = vrot.slane %v3078, 5
    %v3081 = vsel %vm574, %v3076, %v3080
    %v3083 = vshrl.u32 %v3014, 16
    %v3085 = vrot.slane %v3083, 4
    %v3086 = vshll.u32 %v3014, 16
    %v3088 = vrot.slane %v3086, 5
    %v3089 = vor.u32 %v3085, %v3088
    %v3090 = vrot.slane %v3089, 4
    %v3092 = vshll.u32 %v3015, 16
    %v3094 = vrot.slane %v3092, 5
    %v3095 = vsel %vm574, %v3090, %v3094
    %v3097 = vshrl.u32 %v3016, 16
    %v3099 = vrot.slane %v3097, 4
    %v3100 = vshll.u32 %v3016, 16
    %v3102 = vrot.slane %v3100, 5
    %v3103 = vor.u32 %v3099, %v3102
    %v3104 = vrot.slane %v3103, 4
    %v3106 = vshll.u32 %v3017, 16
    %v3108 = vrot.slane %v3106, 5
    %v3109 = vsel %vm574, %v3104, %v3108
    %v3111 = vshrl.u32 %v3018, 16
    %v3113 = vrot.slane %v3111, 4
    %v3114 = vshll.u32 %v3018, 16
    %v3116 = vrot.slane %v3114, 5
    %v3117 = vor.u32 %v3113, %v3116
    %v3118 = vrot.slane %v3117, 4
    %v3120 = vshll.u32 %v3019, 16
    %v3122 = vrot.slane %v3120, 5
    %v3123 = vsel %vm574, %v3118, %v3122
    %v3125 = vshrl.u32 %v3020, 16
    %v3127 = vrot.slane %v3125, 4
    %v3128 = vshll.u32 %v3020, 16
    %v3130 = vrot.slane %v3128, 5
    %v3131 = vor.u32 %v3127, %v3130
    %v3132 = vrot.slane %v3131, 4
    %v3134 = vshll.u32 %v3021, 16
    %v3136 = vrot.slane %v3134, 5
    %v3137 = vsel %vm574, %v3132, %v3136
    %v3139 = vshrl.u32 %v3022, 16
    %v3141 = vrot.slane %v3139, 4
    %v3142 = vshll.u32 %v3022, 16
    %v3144 = vrot.slane %v3142, 5
    %v3145 = vor.u32 %v3141, %v3144
    %v3146 = vrot.slane %v3145, 4
    %v3148 = vshll.u32 %v3023, 16
    %v3150 = vrot.slane %v3148, 5
    %v3151 = vsel %vm574, %v3146, %v3150
    %v3153 = vshrl.u32 %v3024, 16
    %v3155 = vrot.slane %v3153, 4
    %v3156 = vshll.u32 %v3024, 16
    %v3158 = vrot.slane %v3156, 5
    %v3159 = vor.u32 %v3155, %v3158
    %v3160 = vrot.slane %v3159, 4
    %v3162 = vshll.u32 %v3025, 16
    %v3164 = vrot.slane %v3162, 5
    %v3165 = vsel %vm574, %v3160, %v3164
    %v3167 = vshrl.u32 %v3026, 16
    %v3169 = vrot.slane %v3167, 4
    %v3170 = vshll.u32 %v3026, 16
    %v3172 = vrot.slane %v3170, 5
    %v3173 = vor.u32 %v3169, %v3172
    %v3174 = vrot.slane %v3173, 4
    %v3176 = vshll.u32 %v3027, 16
    %v3178 = vrot.slane %v3176, 5
    %v3179 = vsel %vm574, %v3174, %v3178
    %v3181 = vshrl.u32 %v3028, 16
    %v3183 = vrot.slane %v3181, 4
    %v3184 = vshll.u32 %v3028, 16
    %v3186 = vrot.slane %v3184, 5
    %v3187 = vor.u32 %v3183, %v3186
    %v3188 = vrot.slane %v3187, 4
    %v3190 = vshll.u32 %v3029, 16
    %v3192 = vrot.slane %v3190, 5
    %v3193 = vsel %vm574, %v3188, %v3192
    %v3195 = vshrl.u32 %v3030, 16
    %v3197 = vrot.slane %v3195, 4
    %v3198 = vshll.u32 %v3030, 16
    %v3200 = vrot.slane %v3198, 5
    %v3201 = vor.u32 %v3197, %v3200
    %v3202 = vrot.slane %v3201, 4
    %v3204 = vshll.u32 %v3031, 16
    %v3206 = vrot.slane %v3204, 5
    %v3207 = vsel %vm574, %v3202, %v3206
    %v3209 = vshrl.u32 %v3032, 16
    %v3211 = vrot.slane %v3209, 4
    %v3212 = vshll.u32 %v3032, 16
    %v3214 = vrot.slane %v3212, 5
    %v3215 = vor.u32 %v3211, %v3214
    %v3216 = vrot.slane %v3215, 4
    %v3218 = vshll.u32 %v3033, 16
    %v3220 = vrot.slane %v3218, 5
    %v3221 = vsel %vm574, %v3216, %v3220
    %v3223 = vshrl.u32 %v3034, 16
    %v3225 = vrot.slane %v3223, 4
    %v3226 = vshll.u32 %v3034, 16
    %v3228 = vrot.slane %v3226, 5
    %v3229 = vor.u32 %v3225, %v3228
    %v3230 = vrot.slane %v3229, 4
    %v3232 = vshll.u32 %v3035, 16
    %v3234 = vrot.slane %v3232, 5
    %v3235 = vsel %vm574, %v3230, %v3234
    %v3237 = vshrl.u32 %v3036, 16
    %v3239 = vrot.slane %v3237, 4
    %v3240 = vshll.u32 %v3036, 16
    %v3242 = vrot.slane %v3240, 5
    %v3243 = vor.u32 %v3239, %v3242
    %v3244 = vrot.slane %v3243, 4
    %v3246 = vshll.u32 %v3037, 16
    %v3248 = vrot.slane %v3246, 5
    %v3249 = vsel %vm574, %v3244, %v3248
    %v3251 = vshrl.u32 %v3038, 16
    %v3253 = vrot.slane %v3251, 4
    %v3254 = vshll.u32 %v3038, 16
    %v3256 = vrot.slane %v3254, 5
    %v3257 = vor.u32 %v3253, %v3256
    %v3258 = vrot.slane %v3257, 4
    %v3260 = vshll.u32 %v3039, 16
    %v3262 = vrot.slane %v3260, 5
    %v3263 = vsel %vm574, %v3258, %v3262
    %s3264 = scalar_lea.vmem [#allocation6], 448
    %v3265 = vld [vmem:[%s3264] sm:$0xf]
    %v3266 = vld [vmem:[%s3264 + $0x4] sm:$0xf]
    %v3267 = vld [vmem:[%s3264 + $0x8] sm:$0xf]
    %v3268 = vld [vmem:[%s3264 + $0xc] sm:$0xf]
    %v3269 = vld [vmem:[%s3264 + $0x10] sm:$0xf]
    %v3270 = vld [vmem:[%s3264 + $0x14] sm:$0xf]
    %v3271 = vld [vmem:[%s3264 + $0x18] sm:$0xf]
    %v3272 = vld [vmem:[%s3264 + $0x1c] sm:$0xf]
    %v3273 = vld [vmem:[%s3264 + $0x20] sm:$0xf]
    %v3274 = vld [vmem:[%s3264 + $0x24] sm:$0xf]
    %v3275 = vld [vmem:[%s3264 + $0x28] sm:$0xf]
    %v3276 = vld [vmem:[%s3264 + $0x2c] sm:$0xf]
    %v3277 = vld [vmem:[%s3264 + $0x30] sm:$0xf]
    %v3278 = vld [vmem:[%s3264 + $0x34] sm:$0xf]
    %v3279 = vld [vmem:[%s3264 + $0x38] sm:$0xf]
    %v3280 = vld [vmem:[%s3264 + $0x3c] sm:$0xf]
    %v3281 = vunpack.c.l.b16 %v3053
    %v3282 = vunpack.c.l.b16 %v3067
    %v3283 = vunpack.c.l.b16 %v3081
    %v3284 = vunpack.c.l.b16 %v3095
    %v3285 = vunpack.c.l.b16 %v3109
    %v3286 = vunpack.c.l.b16 %v3123
    %v3287 = vunpack.c.l.b16 %v3137
    %v3288 = vunpack.c.l.b16 %v3151
    %v3289 = vunpack.c.l.b16 %v3165
    %v3290 = vunpack.c.l.b16 %v3179
    %v3291 = vunpack.c.l.b16 %v3193
    %v3292 = vunpack.c.l.b16 %v3207
    %v3293 = vunpack.c.l.b16 %v3221
    %v3294 = vunpack.c.l.b16 %v3235
    %v3295 = vunpack.c.l.b16 %v3249
    %v3296 = vunpack.c.l.b16 %v3263
    %v3297 = vpack.c.b16 %v3282, %v3281
    %v3298 = vpack.c.b16 %v3284, %v3283
    %v3299 = vpack.c.b16 %v3286, %v3285
    %v3300 = vpack.c.b16 %v3288, %v3287
    %v3301 = vpack.c.b16 %v3290, %v3289
    %v3302 = vpack.c.b16 %v3292, %v3291
    %v3303 = vpack.c.b16 %v3294, %v3293
    %v3304 = vpack.c.b16 %v3296, %v3295
    %v3329 = vunpack.c.l.b16 %v3265
    %v3330 = vunpack.c.l.b16 %v3266
    %v3331 = vunpack.c.l.b16 %v3267
    %v3332 = vunpack.c.l.b16 %v3268
    %v3333 = vunpack.c.l.b16 %v3269
    %v3334 = vunpack.c.l.b16 %v3270
    %v3335 = vunpack.c.l.b16 %v3271
    %v3336 = vunpack.c.l.b16 %v3272
    %v3337 = vunpack.c.l.b16 %v3273
    %v3338 = vunpack.c.l.b16 %v3274
    %v3339 = vunpack.c.l.b16 %v3275
    %v3340 = vunpack.c.l.b16 %v3276
    %v3341 = vunpack.c.l.b16 %v3277
    %v3342 = vunpack.c.l.b16 %v3278
    %v3343 = vunpack.c.l.b16 %v3279
    %v3344 = vunpack.c.l.b16 %v3280
    %v3345 = vpack.c.b16 %v3330, %v3329
    %v3346 = vpack.c.b16 %v3332, %v3331
    %v3347 = vpack.c.b16 %v3334, %v3333
    %v3348 = vpack.c.b16 %v3336, %v3335
    %v3349 = vpack.c.b16 %v3338, %v3337
    %v3350 = vpack.c.b16 %v3340, %v3339
    %v3351 = vpack.c.b16 %v3342, %v3341
    %v3352 = vpack.c.b16 %v3344, %v3343
    %3361 = vmatprep.subr.bf16.mxu0 0
    %3362 = vmatpush1.bf16.msra.mxu0 %v3345
    %3363 = vmatprep.subr.bf16.mxu0 0
    %3364 = vmatpush1.bf16.msra.mxu0 %v3346
    %3365 = vmatprep.subr.bf16.mxu0 0
    %3366 = vmatpush1.bf16.msra.mxu0 %v3347
    %3367 = vmatprep.subr.bf16.mxu0 0
    %3368 = vmatpush1.bf16.msra.mxu0 %v3348
    %3369 = vmatprep.subr.bf16.mxu0 0
    %3370 = vmatpush1.bf16.msra.mxu0 %v3349
    %3371 = vmatprep.subr.bf16.mxu0 0
    %3372 = vmatpush1.bf16.msra.mxu0 %v3350
    %3373 = vmatprep.subr.bf16.mxu0 0
    %3374 = vmatpush1.bf16.msra.mxu0 %v3351
    %3375 = vmatprep.subr.bf16.mxu0 0
    %3376 = vmatpush1.bf16.msra.mxu0 %v3352
    %3377 = vmatprep.subr.bf16.mxu0 0
    %3378 = vmatpush1.bf16.msra.mxu0 0
    %3379 = vmatprep.subr.bf16.mxu0 0
    %3380 = vmatpush1.bf16.msra.mxu0 0
    %3381 = vmatprep.subr.bf16.mxu0 0
    %3382 = vmatpush1.bf16.msra.mxu0 0
    %3383 = vmatprep.subr.bf16.mxu0 0
    %3384 = vmatpush1.bf16.msra.mxu0 0
    %3385 = vmatprep.subr.bf16.mxu0 0
    %3386 = vmatpush1.bf16.msra.mxu0 0
    %3387 = vmatprep.subr.bf16.mxu0 0
    %3388 = vmatpush1.bf16.msra.mxu0 0
    %3389 = vmatprep.subr.bf16.mxu0 0
    %3390 = vmatpush1.bf16.msra.mxu0 0
    %3391 = vmatprep.subr.bf16.mxu0 0
    %3392 = vmatpush1.bf16.msra.mxu0 0
    %3393 = vmatprep.mubr.bf16.mxu0 0
    %3394 = vmatmul.mubr.bf16.gmra.mrb[0].mxu0 %v3297
    %v3395 = vpop.f32.mrb[0].mxu0
    %v3396 = vadd.f32 0.0, %v3395
    %v3397 = vpop.f32.mrb[0].mxu0
    %v3398 = vpop.f32.mrb[0].mxu0
    %v3399 = vadd.f32 0.0, %v3398
    %v3400 = vpop.f32.mrb[0].mxu0
    %3401 = vmatprep.mubr.bf16.mxu0 0
    %3402 = vmatmul.mubr.bf16.gmra.mrb[0].mxu0 %v3298
    %v3403 = vpop.f32.mrb[0].mxu0
    %v3404 = vadd.f32 0.0, %v3403
    %v3405 = vpop.f32.mrb[0].mxu0
    %v3406 = vpop.f32.mrb[0].mxu0
    %v3407 = vadd.f32 0.0, %v3406
    %v3408 = vpop.f32.mrb[0].mxu0
    %3409 = vmatprep.mubr.bf16.mxu0 0
    %3410 = vmatmul.mubr.bf16.gmra.mrb[0].mxu0 %v3299
    %v3411 = vpop.f32.mrb[0].mxu0
    %v3412 = vadd.f32 0.0, %v3411
    %v3413 = vpop.f32.mrb[0].mxu0
    %v3414 = vpop.f32.mrb[0].mxu0
    %v3415 = vadd.f32 0.0, %v3414
    %v3416 = vpop.f32.mrb[0].mxu0
    %3417 = vmatprep.mubr.bf16.mxu0 0
    %3418 = vmatmul.mubr.bf16.gmra.mrb[0].mxu0 %v3300
    %v3419 = vpop.f32.mrb[0].mxu0
    %v3420 = vadd.f32 0.0, %v3419
    %v3421 = vpop.f32.mrb[0].mxu0
    %v3422 = vpop.f32.mrb[0].mxu0
    %v3423 = vadd.f32 0.0, %v3422
    %v3424 = vpop.f32.mrb[0].mxu0
    %3425 = vmatprep.mubr.bf16.mxu0 0
    %3426 = vmatmul.mubr.bf16.gmra.mrb[0].mxu0 %v3301
    %v3427 = vpop.f32.mrb[0].mxu0
    %v3428 = vadd.f32 0.0, %v3427
    %v3429 = vpop.f32.mrb[0].mxu0
    %v3430 = vpop.f32.mrb[0].mxu0
    %v3431 = vadd.f32 0.0, %v3430
    %v3432 = vpop.f32.mrb[0].mxu0
    %3433 = vmatprep.mubr.bf16.mxu0 0
    %3434 = vmatmul.mubr.bf16.gmra.mrb[0].mxu0 %v3302
    %v3435 = vpop.f32.mrb[0].mxu0
    %v3436 = vadd.f32 0.0, %v3435
    %v3437 = vpop.f32.mrb[0].mxu0
    %v3438 = vpop.f32.mrb[0].mxu0
    %v3439 = vadd.f32 0.0, %v3438
    %v3440 = vpop.f32.mrb[0].mxu0
    %3441 = vmatprep.mubr.bf16.mxu0 0
    %3442 = vmatmul.mubr.bf16.gmra.mrb[0].mxu0 %v3303
    %v3443 = vpop.f32.mrb[0].mxu0
    %v3444 = vadd.f32 0.0, %v3443
    %v3445 = vpop.f32.mrb[0].mxu0
    %v3446 = vpop.f32.mrb[0].mxu0
    %v3447 = vadd.f32 0.0, %v3446
    %v3448 = vpop.f32.mrb[0].mxu0
    %3449 = vmatprep.mubr.bf16.mxu0 0
    %3450 = vmatmul.mubr.bf16.gmra.mrb[0].mxu0 %v3304
    %v3451 = vpop.f32.mrb[0].mxu0
    %v3452 = vadd.f32 0.0, %v3451
    %v3453 = vpop.f32.mrb[0].mxu0
    %v3454 = vpop.f32.mrb[0].mxu0
    %v3455 = vadd.f32 0.0, %v3454
    %v3456 = vpop.f32.mrb[0].mxu0
    %3457 = vdwg.mxu0
    %v3458 = vadd.f32 %v2928, %v3396
    %v3459 = vadd.f32 %v2929, %v3399
    %v3460 = vadd.f32 %v2930, %v3404
    %v3461 = vadd.f32 %v2931, %v3407
    %v3462 = vadd.f32 %v2932, %v3412
    %v3463 = vadd.f32 %v2933, %v3415
    %v3464 = vadd.f32 %v2934, %v3420
    %v3465 = vadd.f32 %v2935, %v3423
    %v3466 = vadd.f32 %v2936, %v3428
    %v3467 = vadd.f32 %v2937, %v3431
    %v3468 = vadd.f32 %v2938, %v3436
    %v3469 = vadd.f32 %v2939, %v3439
    %v3470 = vadd.f32 %v2940, %v3444
    %v3471 = vadd.f32 %v2941, %v3447
    %v3472 = vadd.f32 %v2942, %v3452
    %v3473 = vadd.f32 %v2943, %v3455
    %v3474 = vld [vmem:[%s2701] sm:$0x1e]
    %v3475 = vld [vmem:[%s2701 + $0x8] sm:$0x1e]
    %v3476 = vld [vmem:[%s2701 + $0x10] sm:$0x1e]
    %v3477 = vld [vmem:[%s2701 + $0x18] sm:$0x1e]
    %v3478 = vld [vmem:[%s2701 + $0x20] sm:$0x1e]
    %v3479 = vld [vmem:[%s2701 + $0x28] sm:$0x1e]
    %v3480 = vld [vmem:[%s2701 + $0x30] sm:$0x1e]
    %v3481 = vld [vmem:[%s2701 + $0x38] sm:$0x1e]
    %v3482 = vld [vmem:[%s2701 + $0x50] sm:$0x1e]
    %v3483 = vld [vmem:[%s2701 + $0x58] sm:$0x1e]
    %v3484 = vld [vmem:[%s2701 + $0x60] sm:$0x1e]
    %v3485 = vld [vmem:[%s2701 + $0x68] sm:$0x1e]
    %v3486 = vld [vmem:[%s2701 + $0x70] sm:$0x1e]
    %v3487 = vld [vmem:[%s2701 + $0x78] sm:$0x1e]
    %v3488 = vld [vmem:[%s2701 + $0x80] sm:$0x1e]
    %v3489 = vld [vmem:[%s2701 + $0x88] sm:$0x1e]
    %v3506 = vunpack.c.l.b16 %v3474
    %v3507 = vunpack.c.h.b16 %v3474
    %v3508 = vunpack.c.l.b16 %v3475
    %v3509 = vunpack.c.h.b16 %v3475
    %v3510 = vunpack.c.l.b16 %v3476
    %v3511 = vunpack.c.h.b16 %v3476
    %v3512 = vunpack.c.l.b16 %v3477
    %v3513 = vunpack.c.h.b16 %v3477
    %v3514 = vunpack.c.l.b16 %v3478
    %v3515 = vunpack.c.h.b16 %v3478
    %v3516 = vunpack.c.l.b16 %v3479
    %v3517 = vunpack.c.h.b16 %v3479
    %v3518 = vunpack.c.l.b16 %v3480
    %v3519 = vunpack.c.h.b16 %v3480
    %v3520 = vunpack.c.l.b16 %v3481
    %v3521 = vunpack.c.h.b16 %v3481
    %v3522 = vunpack.c.l.b16 %v3482
    %v3523 = vunpack.c.h.b16 %v3482
    %v3524 = vunpack.c.l.b16 %v3483
    %v3525 = vunpack.c.h.b16 %v3483
    %v3526 = vunpack.c.l.b16 %v3484
    %v3527 = vunpack.c.h.b16 %v3484
    %v3528 = vunpack.c.l.b16 %v3485
    %v3529 = vunpack.c.h.b16 %v3485
    %v3530 = vunpack.c.l.b16 %v3486
    %v3531 = vunpack.c.h.b16 %v3486
    %v3532 = vunpack.c.l.b16 %v3487
    %v3533 = vunpack.c.h.b16 %v3487
    %v3534 = vunpack.c.l.b16 %v3488
    %v3535 = vunpack.c.h.b16 %v3488
    %v3536 = vunpack.c.l.b16 %v3489
    %v3537 = vunpack.c.h.b16 %v3489
    %v3538 = vpack.c.b16 %v3506, %v3506
    %v3539 = vpack.c.b16 %v3507, %v3507
    %v3540 = vpack.c.b16 %v3508, %v3508
    %v3541 = vpack.c.b16 %v3509, %v3509
    %v3542 = vpack.c.b16 %v3510, %v3510
    %v3543 = vpack.c.b16 %v3511, %v3511
    %v3544 = vpack.c.b16 %v3512, %v3512
    %v3545 = vpack.c.b16 %v3513, %v3513
    %v3546 = vpack.c.b16 %v3514, %v3514
    %v3547 = vpack.c.b16 %v3515, %v3515
    %v3548 = vpack.c.b16 %v3516, %v3516
    %v3549 = vpack.c.b16 %v3517, %v3517
    %v3550 = vpack.c.b16 %v3518, %v3518
    %v3551 = vpack.c.b16 %v3519, %v3519
    %v3552 = vpack.c.b16 %v3520, %v3520
    %v3553 = vpack.c.b16 %v3521, %v3521
    %v3554 = vpack.c.b16 %v3522, %v3522
    %v3555 = vpack.c.b16 %v3523, %v3523
    %v3556 = vpack.c.b16 %v3524, %v3524
    %v3557 = vpack.c.b16 %v3525, %v3525
    %v3558 = vpack.c.b16 %v3526, %v3526
    %v3559 = vpack.c.b16 %v3527, %v3527
    %v3560 = vpack.c.b16 %v3528, %v3528
    %v3561 = vpack.c.b16 %v3529, %v3529
    %v3562 = vpack.c.b16 %v3530, %v3530
    %v3563 = vpack.c.b16 %v3531, %v3531
    %v3564 = vpack.c.b16 %v3532, %v3532
    %v3565 = vpack.c.b16 %v3533, %v3533
    %v3566 = vpack.c.b16 %v3534, %v3534
    %v3567 = vpack.c.b16 %v3535, %v3535
    %v3568 = vpack.c.b16 %v3536, %v3536
    %v3569 = vpack.c.b16 %v3537, %v3537
    %v3570 = vrot.slane %v3538, 5
    %v3571 = vrot.slane %v3570, 4
    %v3572 = vrot.slane %v3539, 5
    %v3573 = vsel %vm1284, %v3571, %v3572
    %v3574 = vrot.slane %v3540, 5
    %v3575 = vrot.slane %v3574, 4
    %v3576 = vrot.slane %v3541, 5
    %v3577 = vsel %vm1284, %v3575, %v3576
    %v3578 = vrot.slane %v3542, 5
    %v3579 = vrot.slane %v3578, 4
    %v3580 = vrot.slane %v3543, 5
    %v3581 = vsel %vm1284, %v3579, %v3580
    %v3582 = vrot.slane %v3544, 5
    %v3583 = vrot.slane %v3582, 4
    %v3584 = vrot.slane %v3545, 5
    %v3585 = vsel %vm1284, %v3583, %v3584
    %v3586 = vrot.slane %v3546, 5
    %v3587 = vrot.slane %v3586, 4
    %v3588 = vrot.slane %v3547, 5
    %v3589 = vsel %vm1284, %v3587, %v3588
    %v3590 = vrot.slane %v3548, 5
    %v3591 = vrot.slane %v3590, 4
    %v3592 = vrot.slane %v3549, 5
    %v3593 = vsel %vm1284, %v3591, %v3592
    %v3594 = vrot.slane %v3550, 5
    %v3595 = vrot.slane %v3594, 4
    %v3596 = vrot.slane %v3551, 5
    %v3597 = vsel %vm1284, %v3595, %v3596
    %v3598 = vrot.slane %v3552, 5
    %v3599 = vrot.slane %v3598, 4
    %v3600 = vrot.slane %v3553, 5
    %v3601 = vsel %vm1284, %v3599, %v3600
    %v3602 = vrot.slane %v3554, 5
    %v3603 = vrot.slane %v3602, 4
    %v3604 = vrot.slane %v3555, 5
    %v3605 = vsel %vm1284, %v3603, %v3604
    %v3606 = vrot.slane %v3556, 5
    %v3607 = vrot.slane %v3606, 4
    %v3608 = vrot.slane %v3557, 5
    %v3609 = vsel %vm1284, %v3607, %v3608
    %v3610 = vrot.slane %v3558, 5
    %v3611 = vrot.slane %v3610, 4
    %v3612 = vrot.slane %v3559, 5
    %v3613 = vsel %vm1284, %v3611, %v3612
    %v3614 = vrot.slane %v3560, 5
    %v3615 = vrot.slane %v3614, 4
    %v3616 = vrot.slane %v3561, 5
    %v3617 = vsel %vm1284, %v3615, %v3616
    %v3618 = vrot.slane %v3562, 5
    %v3619 = vrot.slane %v3618, 4
    %v3620 = vrot.slane %v3563, 5
    %v3621 = vsel %vm1284, %v3619, %v3620
    %v3622 = vrot.slane %v3564, 5
    %v3623 = vrot.slane %v3622, 4
    %v3624 = vrot.slane %v3565, 5
    %v3625 = vsel %vm1284, %v3623, %v3624
    %v3626 = vrot.slane %v3566, 5
    %v3627 = vrot.slane %v3626, 4
    %v3628 = vrot.slane %v3567, 5
    %v3629 = vsel %vm1284, %v3627, %v3628
    %v3630 = vrot.slane %v3568, 5
    %v3631 = vrot.slane %v3630, 4
    %v3632 = vrot.slane %v3569, 5
    %v3633 = vsel %vm1284, %v3631, %v3632
    %s3634 = scalar_lea.vmem [#allocation6], 512
    %v3635 = vld [vmem:[%s3634] sm:$0xf]
    %v3636 = vld [vmem:[%s3634 + $0x4] sm:$0xf]
    %v3637 = vld [vmem:[%s3634 + $0x8] sm:$0xf]
    %v3638 = vld [vmem:[%s3634 + $0xc] sm:$0xf]
    %v3639 = vld [vmem:[%s3634 + $0x10] sm:$0xf]
    %v3640 = vld [vmem:[%s3634 + $0x14] sm:$0xf]
    %v3641 = vld [vmem:[%s3634 + $0x18] sm:$0xf]
    %v3642 = vld [vmem:[%s3634 + $0x1c] sm:$0xf]
    %v3643 = vld [vmem:[%s3634 + $0x20] sm:$0xf]
    %v3644 = vld [vmem:[%s3634 + $0x24] sm:$0xf]
    %v3645 = vld [vmem:[%s3634 + $0x28] sm:$0xf]
    %v3646 = vld [vmem:[%s3634 + $0x2c] sm:$0xf]
    %v3647 = vld [vmem:[%s3634 + $0x30] sm:$0xf]
    %v3648 = vld [vmem:[%s3634 + $0x34] sm:$0xf]
    %v3649 = vld [vmem:[%s3634 + $0x38] sm:$0xf]
    %v3650 = vld [vmem:[%s3634 + $0x3c] sm:$0xf]
    %v3651 = vunpack.c.l.b16 %v3573
    %v3652 = vunpack.c.l.b16 %v3577
    %v3653 = vunpack.c.l.b16 %v3581
    %v3654 = vunpack.c.l.b16 %v3585
    %v3655 = vunpack.c.l.b16 %v3589
    %v3656 = vunpack.c.l.b16 %v3593
    %v3657 = vunpack.c.l.b16 %v3597
    %v3658 = vunpack.c.l.b16 %v3601
    %v3659 = vunpack.c.l.b16 %v3605
    %v3660 = vunpack.c.l.b16 %v3609
    %v3661 = vunpack.c.l.b16 %v3613
    %v3662 = vunpack.c.l.b16 %v3617
    %v3663 = vunpack.c.l.b16 %v3621
    %v3664 = vunpack.c.l.b16 %v3625
    %v3665 = vunpack.c.l.b16 %v3629
    %v3666 = vunpack.c.l.b16 %v3633
    %v3667 = vpack.c.b16 %v3652, %v3651
    %v3668 = vpack.c.b16 %v3654, %v3653
    %v3669 = vpack.c.b16 %v3656, %v3655
    %v3670 = vpack.c.b16 %v3658, %v3657
    %v3671 = vpack.c.b16 %v3660, %v3659
    %v3672 = vpack.c.b16 %v3662, %v3661
    %v3673 = vpack.c.b16 %v3664, %v3663
    %v3674 = vpack.c.b16 %v3666, %v3665
    %v3699 = vunpack.c.l.b16 %v3635
    %v3700 = vunpack.c.l.b16 %v3636
    %v3701 = vunpack.c.l.b16 %v3637
    %v3702 = vunpack.c.l.b16 %v3638
    %v3703 = vunpack.c.l.b16 %v3639
    %v3704 = vunpack.c.l.b16 %v3640
    %v3705 = vunpack.c.l.b16 %v3641
    %v3706 = vunpack.c.l.b16 %v3642
    %v3707 = vunpack.c.l.b16 %v3643
    %v3708 = vunpack.c.l.b16 %v3644
    %v3709 = vunpack.c.l.b16 %v3645
    %v3710 = vunpack.c.l.b16 %v3646
    %v3711 = vunpack.c.l.b16 %v3647
    %v3712 = vunpack.c.l.b16 %v3648
    %v3713 = vunpack.c.l.b16 %v3649
    %v3714 = vunpack.c.l.b16 %v3650
    %v3715 = vpack.c.b16 %v3700, %v3699
    %v3716 = vpack.c.b16 %v3702, %v3701
    %v3717 = vpack.c.b16 %v3704, %v3703
    %v3718 = vpack.c.b16 %v3706, %v3705
    %v3719 = vpack.c.b16 %v3708, %v3707
    %v3720 = vpack.c.b16 %v3710, %v3709
    %v3721 = vpack.c.b16 %v3712, %v3711
    %v3722 = vpack.c.b16 %v3714, %v3713
    %3731 = vmatprep.subr.bf16.mxu0 0
    %3732 = vmatpush1.bf16.msra.mxu0 %v3715
    %3733 = vmatprep.subr.bf16.mxu0 0
    %3734 = vmatpush1.bf16.msra.mxu0 %v3716
    %3735 = vmatprep.subr.bf16.mxu0 0
    %3736 = vmatpush1.bf16.msra.mxu0 %v3717
    %3737 = vmatprep.subr.bf16.mxu0 0
    %3738 = vmatpush1.bf16.msra.mxu0 %v3718
    %3739 = vmatprep.subr.bf16.mxu0 0
    %3740 = vmatpush1.bf16.msra.mxu0 %v3719
    %3741 = vmatprep.subr.bf16.mxu0 0
    %3742 = vmatpush1.bf16.msra.mxu0 %v3720
    %3743 = vmatprep.subr.bf16.mxu0 0
    %3744 = vmatpush1.bf16.msra.mxu0 %v3721
    %3745 = vmatprep.subr.bf16.mxu0 0
    %3746 = vmatpush1.bf16.msra.mxu0 %v3722
    %3747 = vmatprep.subr.bf16.mxu0 0
    %3748 = vmatpush1.bf16.msra.mxu0 0
    %3749 = vmatprep.subr.bf16.mxu0 0
    %3750 = vmatpush1.bf16.msra.mxu0 0
    %3751 = vmatprep.subr.bf16.mxu0 0
    %3752 = vmatpush1.bf16.msra.mxu0 0
    %3753 = vmatprep.subr.bf16.mxu0 0
    %3754 = vmatpush1.bf16.msra.mxu0 0
    %3755 = vmatprep.subr.bf16.mxu0 0
    %3756 = vmatpush1.bf16.msra.mxu0 0
    %3757 = vmatprep.subr.bf16.mxu0 0
    %3758 = vmatpush1.bf16.msra.mxu0 0
    %3759 = vmatprep.subr.bf16.mxu0 0
    %3760 = vmatpush1.bf16.msra.mxu0 0
    %3761 = vmatprep.subr.bf16.mxu0 0
    %3762 = vmatpush1.bf16.msra.mxu0 0
    %3763 = vmatprep.mubr.bf16.mxu0 0
    %3764 = vmatmul.mubr.bf16.gmra.mrb[0].mxu0 %v3667
    %v3765 = vpop.f32.mrb[0].mxu0
    %v3766 = vadd.f32 0.0, %v3765
    %v3767 = vpop.f32.mrb[0].mxu0
    %v3768 = vpop.f32.mrb[0].mxu0
    %v3769 = vadd.f32 0.0, %v3768
    %v3770 = vpop.f32.mrb[0].mxu0
    %3771 = vmatprep.mubr.bf16.mxu0 0
    %3772 = vmatmul.mubr.bf16.gmra.mrb[0].mxu0 %v3668
    %v3773 = vpop.f32.mrb[0].mxu0
    %v3774 = vadd.f32 0.0, %v3773
    %v3775 = vpop.f32.mrb[0].mxu0
    %v3776 = vpop.f32.mrb[0].mxu0
    %v3777 = vadd.f32 0.0, %v3776
    %v3778 = vpop.f32.mrb[0].mxu0
    %3779 = vmatprep.mubr.bf16.mxu0 0
    %3780 = vmatmul.mubr.bf16.gmra.mrb[0].mxu0 %v3669
    %v3781 = vpop.f32.mrb[0].mxu0
    %v3782 = vadd.f32 0.0, %v3781
    %v3783 = vpop.f32.mrb[0].mxu0
    %v3784 = vpop.f32.mrb[0].mxu0
    %v3785 = vadd.f32 0.0, %v3784
    %v3786 = vpop.f32.mrb[0].mxu0
    %3787 = vmatprep.mubr.bf16.mxu0 0
    %3788 = vmatmul.mubr.bf16.gmra.mrb[0].mxu0 %v3670
    %v3789 = vpop.f32.mrb[0].mxu0
    %v3790 = vadd.f32 0.0, %v3789
    %v3791 = vpop.f32.mrb[0].mxu0
    %v3792 = vpop.f32.mrb[0].mxu0
    %v3793 = vadd.f32 0.0, %v3792
    %v3794 = vpop.f32.mrb[0].mxu0
    %3795 = vmatprep.mubr.bf16.mxu0 0
    %3796 = vmatmul.mubr.bf16.gmra.mrb[0].mxu0 %v3671
    %v3797 = vpop.f32.mrb[0].mxu0
    %v3798 = vadd.f32 0.0, %v3797
    %v3799 = vpop.f32.mrb[0].mxu0
    %v3800 = vpop.f32.mrb[0].mxu0
    %v3801 = vadd.f32 0.0, %v3800
    %v3802 = vpop.f32.mrb[0].mxu0
    %3803 = vmatprep.mubr.bf16.mxu0 0
    %3804 = vmatmul.mubr.bf16.gmra.mrb[0].mxu0 %v3672
    %v3805 = vpop.f32.mrb[0].mxu0
    %v3806 = vadd.f32 0.0, %v3805
    %v3807 = vpop.f32.mrb[0].mxu0
    %v3808 = vpop.f32.mrb[0].mxu0
    %v3809 = vadd.f32 0.0, %v3808
    %v3810 = vpop.f32.mrb[0].mxu0
    %3811 = vmatprep.mubr.bf16.mxu0 0
    %3812 = vmatmul.mubr.bf16.gmra.mrb[0].mxu0 %v3673
    %v3813 = vpop.f32.mrb[0].mxu0
    %v3814 = vadd.f32 0.0, %v3813
    %v3815 = vpop.f32.mrb[0].mxu0
    %v3816 = vpop.f32.mrb[0].mxu0
    %v3817 = vadd.f32 0.0, %v3816
    %v3818 = vpop.f32.mrb[0].mxu0
    %3819 = vmatprep.mubr.bf16.mxu0 0
    %3820 = vmatmul.mubr.bf16.gmra.mrb[0].mxu0 %v3674
    %v3821 = vpop.f32.mrb[0].mxu0
    %v3822 = vadd.f32 0.0, %v3821
    %v3823 = vpop.f32.mrb[0].mxu0
    %v3824 = vpop.f32.mrb[0].mxu0
    %v3825 = vadd.f32 0.0, %v3824
    %v3826 = vpop.f32.mrb[0].mxu0
    %3827 = vdwg.mxu0
    %v3828 = vadd.f32 %v3458, %v3766
    %v3829 = vadd.f32 %v3459, %v3769
    %v3830 = vadd.f32 %v3460, %v3774
    %v3831 = vadd.f32 %v3461, %v3777
    %v3832 = vadd.f32 %v3462, %v3782
    %v3833 = vadd.f32 %v3463, %v3785
    %v3834 = vadd.f32 %v3464, %v3790
    %v3835 = vadd.f32 %v3465, %v3793
    %v3836 = vadd.f32 %v3466, %v3798
    %v3837 = vadd.f32 %v3467, %v3801
    %v3838 = vadd.f32 %v3468, %v3806
    %v3839 = vadd.f32 %v3469, %v3809
    %v3840 = vadd.f32 %v3470, %v3814
    %v3841 = vadd.f32 %v3471, %v3817
    %v3842 = vadd.f32 %v3472, %v3822
    %v3843 = vadd.f32 %v3473, %v3825
    %v3844 = vadd.f32 %v3828, %v3829
    %v3845 = vadd.f32 %v3844, %v3830
    %v3846 = vadd.f32 %v3845, %v3831
    %v3847 = vadd.f32 %v3846, %v3832
    %v3848 = vadd.f32 %v3847, %v3833
    %v3849 = vadd.f32 %v3848, %v3834
    %v3850 = vadd.f32 %v3849, %v3835
    %v3851 = vadd.f32 %v3850, %v3836
    %v3852 = vadd.f32 %v3851, %v3837
    %v3853 = vadd.f32 %v3852, %v3838
    %v3854 = vadd.f32 %v3853, %v3839
    %v3855 = vadd.f32 %v3854, %v3840
    %v3856 = vadd.f32 %v3855, %v3841
    %v3857 = vadd.f32 %v3856, %v3842
    %v3858 = vadd.f32 %v3857, %v3843
    %v3859 = vrot.slane %v3858, 4
    %v3860 = vadd.f32 %v3858, %v3859
    %v3861 = vrot.slane %v3860, 2
    %v3862 = vadd.f32 %v3860, %v3861
    %v3863 = vrot.slane %v3862, 1
    %v3864 = vadd.f32 %v3862, %v3863
    %v3865 = vmul.f32 %v3828, %v3828
    %v3866 = vmul.f32 %v3829, %v3829
    %v3867 = vmul.f32 %v3830, %v3830
    %v3868 = vmul.f32 %v3831, %v3831
    %v3869 = vmul.f32 %v3832, %v3832
    %v3870 = vmul.f32 %v3833, %v3833
    %v3871 = vmul.f32 %v3834, %v3834
    %v3872 = vmul.f32 %v3835, %v3835
    %v3873 = vmul.f32 %v3836, %v3836
    %v3874 = vmul.f32 %v3837, %v3837
    %v3875 = vmul.f32 %v3838, %v3838
    %v3876 = vmul.f32 %v3839, %v3839
    %v3877 = vmul.f32 %v3840, %v3840
    %v3878 = vmul.f32 %v3841, %v3841
    %v3879 = vmul.f32 %v3842, %v3842
    %v3880 = vmul.f32 %v3843, %v3843
    %v3881 = vadd.f32 %v3865, %v3866
    %v3882 = vadd.f32 %v3881, %v3867
    %v3883 = vadd.f32 %v3882, %v3868
    %v3884 = vadd.f32 %v3883, %v3869
    %v3885 = vadd.f32 %v3884, %v3870
    %v3886 = vadd.f32 %v3885, %v3871
    %v3887 = vadd.f32 %v3886, %v3872
    %v3888 = vadd.f32 %v3887, %v3873
    %v3889 = vadd.f32 %v3888, %v3874
    %v3890 = vadd.f32 %v3889, %v3875
    %v3891 = vadd.f32 %v3890, %v3876
    %v3892 = vadd.f32 %v3891, %v3877
    %v3893 = vadd.f32 %v3892, %v3878
    %v3894 = vadd.f32 %v3893, %v3879
    %v3895 = vadd.f32 %v3894, %v3880
    %v3896 = vrot.slane %v3895, 4
    %v3897 = vadd.f32 %v3895, %v3896
    %v3898 = vrot.slane %v3897, 2
    %v3899 = vadd.f32 %v3897, %v3898
    %v3900 = vrot.slane %v3899, 1
    %v3901 = vadd.f32 %v3899, %v3900
    %v3902 = vmul.f32 %v3864, 0.0078125
    %v3903 = vmul.f32 %v3901, 0.0078125
    %v3904 = vmul.f32 %v3902, %v3902
    %v3905 = vsub.f32 %v3903, %v3904
    %v3906 = vmax.f32 %v3905, 0.0
    %v3907 = vld [vmem:[%s2] sm:$0x1]
    %v3908 = vadd.f32 %v3906, 1e-05
    %v3909 = vrsqrt.pop %v3908
    %v3910 = vmul.f32 %v3907, %v3909
    %v3911 = vld [vmem:[%s3] sm:$0x1]
    %v3912 = vmul.f32 %v3902, %v3910
    %v3913 = vsub.f32 %v3911, %v3912
    %v3915 = vlaneseq
    %v3916 = vshrl.u32 %v3915, 7
    %v3917 = vsub.s32 0, %v3916
    %v3918 = vrot.slane %v3910, %v3917
    %v3920 = vmul.f32 %v3828, %v3918
    %v3921 = vmul.f32 %v3829, %v3918
    %v3922 = vmul.f32 %v3830, %v3918
    %v3923 = vmul.f32 %v3831, %v3918
    %v3924 = vmul.f32 %v3832, %v3918
    %v3925 = vmul.f32 %v3833, %v3918
    %v3926 = vmul.f32 %v3834, %v3918
    %v3927 = vmul.f32 %v3835, %v3918
    %v3928 = vmul.f32 %v3836, %v3918
    %v3929 = vmul.f32 %v3837, %v3918
    %v3930 = vmul.f32 %v3838, %v3918
    %v3931 = vmul.f32 %v3839, %v3918
    %v3932 = vmul.f32 %v3840, %v3918
    %v3933 = vmul.f32 %v3841, %v3918
    %v3934 = vmul.f32 %v3842, %v3918
    %v3935 = vmul.f32 %v3843, %v3918
    %v3937 = vlaneseq
    %v3938 = vshrl.u32 %v3937, 7
    %v3939 = vsub.s32 0, %v3938
    %v3940 = vrot.slane %v3913, %v3939
    %v3942 = vadd.f32 %v3920, %v3940
    %v3943 = vadd.f32 %v3921, %v3940
    %v3944 = vadd.f32 %v3922, %v3940
    %v3945 = vadd.f32 %v3923, %v3940
    %v3946 = vadd.f32 %v3924, %v3940
    %v3947 = vadd.f32 %v3925, %v3940
    %v3948 = vadd.f32 %v3926, %v3940
    %v3949 = vadd.f32 %v3927, %v3940
    %v3950 = vadd.f32 %v3928, %v3940
    %v3951 = vadd.f32 %v3929, %v3940
    %v3952 = vadd.f32 %v3930, %v3940
    %v3953 = vadd.f32 %v3931, %v3940
    %v3954 = vadd.f32 %v3932, %v3940
    %v3955 = vadd.f32 %v3933, %v3940
    %v3956 = vadd.f32 %v3934, %v3940
    %v3957 = vadd.f32 %v3935, %v3940
    %v3958 = vmax.f32 %v3942, 0.0
    %v3959 = vmax.f32 %v3943, 0.0
    %v3960 = vmax.f32 %v3944, 0.0
    %v3961 = vmax.f32 %v3945, 0.0
    %v3962 = vmax.f32 %v3946, 0.0
    %v3963 = vmax.f32 %v3947, 0.0
    %v3964 = vmax.f32 %v3948, 0.0
    %v3965 = vmax.f32 %v3949, 0.0
    %v3966 = vmax.f32 %v3950, 0.0
    %v3967 = vmax.f32 %v3951, 0.0
    %v3968 = vmax.f32 %v3952, 0.0
    %v3969 = vmax.f32 %v3953, 0.0
    %v3970 = vmax.f32 %v3954, 0.0
    %v3971 = vmax.f32 %v3955, 0.0
    %v3972 = vmax.f32 %v3956, 0.0
    %v3973 = vmax.f32 %v3957, 0.0
    %v3974 = vpack.c.bf16 %v3958, %v3958
    %v3975 = vpack.c.bf16 %v3959, %v3959
    %v3976 = vpack.c.bf16 %v3960, %v3960
    %v3977 = vpack.c.bf16 %v3961, %v3961
    %v3978 = vpack.c.bf16 %v3962, %v3962
    %v3979 = vpack.c.bf16 %v3963, %v3963
    %v3980 = vpack.c.bf16 %v3964, %v3964
    %v3981 = vpack.c.bf16 %v3965, %v3965
    %v3982 = vpack.c.bf16 %v3966, %v3966
    %v3983 = vpack.c.bf16 %v3967, %v3967
    %v3984 = vpack.c.bf16 %v3968, %v3968
    %v3985 = vpack.c.bf16 %v3969, %v3969
    %v3986 = vpack.c.bf16 %v3970, %v3970
    %v3987 = vpack.c.bf16 %v3971, %v3971
    %v3988 = vpack.c.bf16 %v3972, %v3972
    %v3989 = vpack.c.bf16 %v3973, %v3973
    %v3991 = vshrl.u32 %v3974, 16
    %v3993 = vrot.slane %v3991, 7
    %v3994 = vshll.u32 %v3974, 16
    %v3996 = vor.u32 %v3993, %v3994
    %v3998 = vshrl.u32 %v3975, 16
    %v4000 = vrot.slane %v3998, 7
    %v4001 = vshll.u32 %v3975, 16
    %v4003 = vor.u32 %v4000, %v4001
    %v4005 = vshrl.u32 %v3976, 16
    %v4007 = vrot.slane %v4005, 7
    %v4008 = vshll.u32 %v3976, 16
    %v4010 = vor.u32 %v4007, %v4008
    %v4012 = vshrl.u32 %v3977, 16
    %v4014 = vrot.slane %v4012, 7
    %v4015 = vshll.u32 %v3977, 16
    %v4017 = vor.u32 %v4014, %v4015
    %v4019 = vshrl.u32 %v3978, 16
    %v4021 = vrot.slane %v4019, 7
    %v4022 = vshll.u32 %v3978, 16
    %v4024 = vor.u32 %v4021, %v4022
    %v4026 = vshrl.u32 %v3979, 16
    %v4028 = vrot.slane %v4026, 7
    %v4029 = vshll.u32 %v3979, 16
    %v4031 = vor.u32 %v4028, %v4029
    %v4033 = vshrl.u32 %v3980, 16
    %v4035 = vrot.slane %v4033, 7
    %v4036 = vshll.u32 %v3980, 16
    %v4038 = vor.u32 %v4035, %v4036
    %v4040 = vshrl.u32 %v3981, 16
    %v4042 = vrot.slane %v4040, 7
    %v4043 = vshll.u32 %v3981, 16
    %v4045 = vor.u32 %v4042, %v4043
    %v4047 = vshrl.u32 %v3982, 16
    %v4049 = vrot.slane %v4047, 7
    %v4050 = vshll.u32 %v3982, 16
    %v4052 = vor.u32 %v4049, %v4050
    %v4054 = vshrl.u32 %v3983, 16
    %v4056 = vrot.slane %v4054, 7
    %v4057 = vshll.u32 %v3983, 16
    %v4059 = vor.u32 %v4056, %v4057
    %v4061 = vshrl.u32 %v3984, 16
    %v4063 = vrot.slane %v4061, 7
    %v4064 = vshll.u32 %v3984, 16
    %v4066 = vor.u32 %v4063, %v4064
    %v4068 = vshrl.u32 %v3985, 16
    %v4070 = vrot.slane %v4068, 7
    %v4071 = vshll.u32 %v3985, 16
    %v4073 = vor.u32 %v4070, %v4071
    %v4075 = vshrl.u32 %v3986, 16
    %v4077 = vrot.slane %v4075, 7
    %v4078 = vshll.u32 %v3986, 16
    %v4080 = vor.u32 %v4077, %v4078
    %v4082 = vshrl.u32 %v3987, 16
    %v4084 = vrot.slane %v4082, 7
    %v4085 = vshll.u32 %v3987, 16
    %v4087 = vor.u32 %v4084, %v4085
    %v4089 = vshrl.u32 %v3988, 16
    %v4091 = vrot.slane %v4089, 7
    %v4092 = vshll.u32 %v3988, 16
    %v4094 = vor.u32 %v4091, %v4092
    %v4096 = vshrl.u32 %v3989, 16
    %v4098 = vrot.slane %v4096, 7
    %v4099 = vshll.u32 %v3989, 16
    %v4101 = vor.u32 %v4098, %v4099
    %v4118 = vsel %vm395, %v3996, %v1801
    %4119 = vst [vmem:[%s392] sm:$0x1f] %v4118
    %v4120 = vld [vmem:[%s392 + $0x8] sm:$0x1f]
    %v4121 = vsel %vm395, %v4003, %v4120
    %4122 = vst [vmem:[%s392 + $0x8] sm:$0x1f] %v4121
    %v4123 = vld [vmem:[%s392 + $0x10] sm:$0x1f]
    %v4124 = vsel %vm395, %v4010, %v4123
    %4125 = vst [vmem:[%s392 + $0x10] sm:$0x1f] %v4124
    %v4126 = vld [vmem:[%s392 + $0x18] sm:$0x1f]
    %v4127 = vsel %vm395, %v4017, %v4126
    %4128 = vst [vmem:[%s392 + $0x18] sm:$0x1f] %v4127
    %v4129 = vld [vmem:[%s392 + $0x20] sm:$0x1f]
    %v4130 = vsel %vm395, %v4024, %v4129
    %4131 = vst [vmem:[%s392 + $0x20] sm:$0x1f] %v4130
    %v4132 = vld [vmem:[%s392 + $0x28] sm:$0x1f]
    %v4133 = vsel %vm395, %v4031, %v4132
    %4134 = vst [vmem:[%s392 + $0x28] sm:$0x1f] %v4133
    %v4135 = vld [vmem:[%s392 + $0x30] sm:$0x1f]
    %v4136 = vsel %vm395, %v4038, %v4135
    %4137 = vst [vmem:[%s392 + $0x30] sm:$0x1f] %v4136
    %v4138 = vld [vmem:[%s392 + $0x38] sm:$0x1f]
    %v4139 = vsel %vm395, %v4045, %v4138
    %4140 = vst [vmem:[%s392 + $0x38] sm:$0x1f] %v4139
    %v4141 = vld [vmem:[%s392 + $0x50] sm:$0x1f]
    %v4142 = vsel %vm395, %v4052, %v4141
    %4143 = vst [vmem:[%s392 + $0x50] sm:$0x1f] %v4142
    %v4144 = vld [vmem:[%s392 + $0x58] sm:$0x1f]
    %v4145 = vsel %vm395, %v4059, %v4144
    %4146 = vst [vmem:[%s392 + $0x58] sm:$0x1f] %v4145
    %v4147 = vld [vmem:[%s392 + $0x60] sm:$0x1f]
    %v4148 = vsel %vm395, %v4066, %v4147
    %4149 = vst [vmem:[%s392 + $0x60] sm:$0x1f] %v4148
    %v4150 = vld [vmem:[%s392 + $0x68] sm:$0x1f]
    %v4151 = vsel %vm395, %v4073, %v4150
    %4152 = vst [vmem:[%s392 + $0x68] sm:$0x1f] %v4151
    %v4153 = vld [vmem:[%s392 + $0x70] sm:$0x1f]
    %v4154 = vsel %vm395, %v4080, %v4153
    %4155 = vst [vmem:[%s392 + $0x70] sm:$0x1f] %v4154
    %v4156 = vld [vmem:[%s392 + $0x78] sm:$0x1f]
    %v4157 = vsel %vm395, %v4087, %v4156
    %4158 = vst [vmem:[%s392 + $0x78] sm:$0x1f] %v4157
    %v4159 = vld [vmem:[%s392 + $0x80] sm:$0x1f]
    %v4160 = vsel %vm395, %v4094, %v4159
    %4161 = vst [vmem:[%s392 + $0x80] sm:$0x1f] %v4160
    %v4162 = vld [vmem:[%s392 + $0x88] sm:$0x1f]
    %v4163 = vsel %vm395, %v4101, %v4162
    %4164 = vst [vmem:[%s392 + $0x88] sm:$0x1f] %v4163
    %v4165 = vld [vmem:[#allocation2] sm:$0xf]
    %v4166 = vld [vmem:[#allocation2 + $0x8] sm:$0xf]
    %v4167 = vld [vmem:[#allocation2 + $0x10] sm:$0xf]
    %v4168 = vld [vmem:[#allocation2 + $0x18] sm:$0xf]
    %v4169 = vld [vmem:[#allocation2 + $0x20] sm:$0xf]
    %v4170 = vld [vmem:[#allocation2 + $0x28] sm:$0xf]
    %v4171 = vld [vmem:[#allocation2 + $0x30] sm:$0xf]
    %v4172 = vld [vmem:[#allocation2 + $0x38] sm:$0xf]
    %v4173 = vld [vmem:[#allocation2 + $0x50] sm:$0xf]
    %v4174 = vld [vmem:[#allocation2 + $0x58] sm:$0xf]
    %v4175 = vld [vmem:[#allocation2 + $0x60] sm:$0xf]
    %v4176 = vld [vmem:[#allocation2 + $0x68] sm:$0xf]
    %v4177 = vld [vmem:[#allocation2 + $0x70] sm:$0xf]
    %v4178 = vld [vmem:[#allocation2 + $0x78] sm:$0xf]
    %v4179 = vld [vmem:[#allocation2 + $0x80] sm:$0xf]
    %v4180 = vld [vmem:[#allocation2 + $0x88] sm:$0xf]
    %v4181 = vld [vmem:[#allocation8] sm:$0xf]
    %v4182 = vld [vmem:[#allocation8 + $0x4] sm:$0xf]
    %v4183 = vld [vmem:[#allocation8 + $0x8] sm:$0xf]
    %v4184 = vld [vmem:[#allocation8 + $0xc] sm:$0xf]
    %v4185 = vld [vmem:[#allocation8 + $0x10] sm:$0xf]
    %v4186 = vld [vmem:[#allocation8 + $0x14] sm:$0xf]
    %v4187 = vld [vmem:[#allocation8 + $0x18] sm:$0xf]
    %v4188 = vld [vmem:[#allocation8 + $0x1c] sm:$0xf]
    %v4189 = vld [vmem:[#allocation8 + $0x20] sm:$0xf]
    %v4190 = vld [vmem:[#allocation8 + $0x24] sm:$0xf]
    %v4191 = vld [vmem:[#allocation8 + $0x28] sm:$0xf]
    %v4192 = vld [vmem:[#allocation8 + $0x2c] sm:$0xf]
    %v4193 = vld [vmem:[#allocation8 + $0x30] sm:$0xf]
    %v4194 = vld [vmem:[#allocation8 + $0x34] sm:$0xf]
    %v4195 = vld [vmem:[#allocation8 + $0x38] sm:$0xf]
    %v4196 = vld [vmem:[#allocation8 + $0x3c] sm:$0xf]
    %v4197 = vld [vmem:[#allocation2] sm:$0x1f]
    %v4198 = vld [vmem:[#allocation2 + $0x8] sm:$0x1f]
    %v4199 = vld [vmem:[#allocation2 + $0x10] sm:$0x1f]
    %v4200 = vld [vmem:[#allocation2 + $0x18] sm:$0x1f]
    %v4201 = vld [vmem:[#allocation2 + $0x20] sm:$0x1f]
    %v4202 = vld [vmem:[#allocation2 + $0x28] sm:$0x1f]
    %v4203 = vld [vmem:[#allocation2 + $0x30] sm:$0x1f]
    %v4204 = vld [vmem:[#allocation2 + $0x38] sm:$0x1f]
    %v4205 = vld [vmem:[#allocation2 + $0x50] sm:$0x1f]
    %v4206 = vld [vmem:[#allocation2 + $0x58] sm:$0x1f]
    %v4207 = vld [vmem:[#allocation2 + $0x60] sm:$0x1f]
    %v4208 = vld [vmem:[#allocation2 + $0x68] sm:$0x1f]
    %v4209 = vld [vmem:[#allocation2 + $0x70] sm:$0x1f]
    %v4210 = vld [vmem:[#allocation2 + $0x78] sm:$0x1f]
    %v4211 = vld [vmem:[#allocation2 + $0x80] sm:$0x1f]
    %v4212 = vld [vmem:[#allocation2 + $0x88] sm:$0x1f]
    %v4229 = vunpack.c.l.b16 %v4197
    %v4230 = vunpack.c.h.b16 %v4197
    %v4231 = vunpack.c.l.b16 %v4198
    %v4232 = vunpack.c.h.b16 %v4198
    %v4233 = vunpack.c.l.b16 %v4199
    %v4234 = vunpack.c.h.b16 %v4199
    %v4235 = vunpack.c.l.b16 %v4200
    %v4236 = vunpack.c.h.b16 %v4200
    %v4237 = vunpack.c.l.b16 %v4201
    %v4238 = vunpack.c.h.b16 %v4201
    %v4239 = vunpack.c.l.b16 %v4202
    %v4240 = vunpack.c.h.b16 %v4202
    %v4241 = vunpack.c.l.b16 %v4203
    %v4242 = vunpack.c.h.b16 %v4203
    %v4243 = vunpack.c.l.b16 %v4204
    %v4244 = vunpack.c.h.b16 %v4204
    %v4245 = vunpack.c.l.b16 %v4205
    %v4246 = vunpack.c.h.b16 %v4205
    %v4247 = vunpack.c.l.b16 %v4206
    %v4248 = vunpack.c.h.b16 %v4206
    %v4249 = vunpack.c.l.b16 %v4207
    %v4250 = vunpack.c.h.b16 %v4207
    %v4251 = vunpack.c.l.b16 %v4208
    %v4252 = vunpack.c.h.b16 %v4208
    %v4253 = vunpack.c.l.b16 %v4209
    %v4254 = vunpack.c.h.b16 %v4209
    %v4255 = vunpack.c.l.b16 %v4210
    %v4256 = vunpack.c.h.b16 %v4210
    %v4257 = vunpack.c.l.b16 %v4211
    %v4258 = vunpack.c.h.b16 %v4211
    %v4259 = vunpack.c.l.b16 %v4212
    %v4260 = vunpack.c.h.b16 %v4212
    %v4261 = vpack.c.b16 %v4229, %v4229
    %v4262 = vpack.c.b16 %v4230, %v4230
    %v4263 = vpack.c.b16 %v4231, %v4231
    %v4264 = vpack.c.b16 %v4232, %v4232
    %v4265 = vpack.c.b16 %v4233, %v4233
    %v4266 = vpack.c.b16 %v4234, %v4234
    %v4267 = vpack.c.b16 %v4235, %v4235
    %v4268 = vpack.c.b16 %v4236, %v4236
    %v4269 = vpack.c.b16 %v4237, %v4237
    %v4270 = vpack.c.b16 %v4238, %v4238
    %v4271 = vpack.c.b16 %v4239, %v4239
    %v4272 = vpack.c.b16 %v4240, %v4240
    %v4273 = vpack.c.b16 %v4241, %v4241
    %v4274 = vpack.c.b16 %v4242, %v4242
    %v4275 = vpack.c.b16 %v4243, %v4243
    %v4276 = vpack.c.b16 %v4244, %v4244
    %v4277 = vpack.c.b16 %v4245, %v4245
    %v4278 = vpack.c.b16 %v4246, %v4246
    %v4279 = vpack.c.b16 %v4247, %v4247
    %v4280 = vpack.c.b16 %v4248, %v4248
    %v4281 = vpack.c.b16 %v4249, %v4249
    %v4282 = vpack.c.b16 %v4250, %v4250
    %v4283 = vpack.c.b16 %v4251, %v4251
    %v4284 = vpack.c.b16 %v4252, %v4252
    %v4285 = vpack.c.b16 %v4253, %v4253
    %v4286 = vpack.c.b16 %v4254, %v4254
    %v4287 = vpack.c.b16 %v4255, %v4255
    %v4288 = vpack.c.b16 %v4256, %v4256
    %v4289 = vpack.c.b16 %v4257, %v4257
    %v4290 = vpack.c.b16 %v4258, %v4258
    %v4291 = vpack.c.b16 %v4259, %v4259
    %v4292 = vpack.c.b16 %v4260, %v4260
    %v4294 = vshrl.u32 %v4261, 16
    %v4296 = vrot.slane %v4294, 4
    %v4297 = vshll.u32 %v4261, 16
    %v4299 = vrot.slane %v4297, 5
    %v4300 = vor.u32 %v4296, %v4299
    %v4301 = vrot.slane %v4300, 4
    %v4303 = vshll.u32 %v4262, 16
    %v4305 = vrot.slane %v4303, 5
    %v4306 = vsel %vm574, %v4301, %v4305
    %v4308 = vshrl.u32 %v4263, 16
    %v4310 = vrot.slane %v4308, 4
    %v4311 = vshll.u32 %v4263, 16
    %v4313 = vrot.slane %v4311, 5
    %v4314 = vor.u32 %v4310, %v4313
    %v4315 = vrot.slane %v4314, 4
    %v4317 = vshll.u32 %v4264, 16
    %v4319 = vrot.slane %v4317, 5
    %v4320 = vsel %vm574, %v4315, %v4319
    %v4322 = vshrl.u32 %v4265, 16
    %v4324 = vrot.slane %v4322, 4
    %v4325 = vshll.u32 %v4265, 16
    %v4327 = vrot.slane %v4325, 5
    %v4328 = vor.u32 %v4324, %v4327
    %v4329 = vrot.slane %v4328, 4
    %v4331 = vshll.u32 %v4266, 16
    %v4333 = vrot.slane %v4331, 5
    %v4334 = vsel %vm574, %v4329, %v4333
    %v4336 = vshrl.u32 %v4267, 16
    %v4338 = vrot.slane %v4336, 4
    %v4339 = vshll.u32 %v4267, 16
    %v4341 = vrot.slane %v4339, 5
    %v4342 = vor.u32 %v4338, %v4341
    %v4343 = vrot.slane %v4342, 4
    %v4345 = vshll.u32 %v4268, 16
    %v4347 = vrot.slane %v4345, 5
    %v4348 = vsel %vm574, %v4343, %v4347
    %v4350 = vshrl.u32 %v4269, 16
    %v4352 = vrot.slane %v4350, 4
    %v4353 = vshll.u32 %v4269, 16
    %v4355 = vrot.slane %v4353, 5
    %v4356 = vor.u32 %v4352, %v4355
    %v4357 = vrot.slane %v4356, 4
    %v4359 = vshll.u32 %v4270, 16
    %v4361 = vrot.slane %v4359, 5
    %v4362 = vsel %vm574, %v4357, %v4361
    %v4364 = vshrl.u32 %v4271, 16
    %v4366 = vrot.slane %v4364, 4
    %v4367 = vshll.u32 %v4271, 16
    %v4369 = vrot.slane %v4367, 5
    %v4370 = vor.u32 %v4366, %v4369
    %v4371 = vrot.slane %v4370, 4
    %v4373 = vshll.u32 %v4272, 16
    %v4375 = vrot.slane %v4373, 5
    %v4376 = vsel %vm574, %v4371, %v4375
    %v4378 = vshrl.u32 %v4273, 16
    %v4380 = vrot.slane %v4378, 4
    %v4381 = vshll.u32 %v4273, 16
    %v4383 = vrot.slane %v4381, 5
    %v4384 = vor.u32 %v4380, %v4383
    %v4385 = vrot.slane %v4384, 4
    %v4387 = vshll.u32 %v4274, 16
    %v4389 = vrot.slane %v4387, 5
    %v4390 = vsel %vm574, %v4385, %v4389
    %v4392 = vshrl.u32 %v4275, 16
    %v4394 = vrot.slane %v4392, 4
    %v4395 = vshll.u32 %v4275, 16
    %v4397 = vrot.slane %v4395, 5
    %v4398 = vor.u32 %v4394, %v4397
    %v4399 = vrot.slane %v4398, 4
    %v4401 = vshll.u32 %v4276, 16
    %v4403 = vrot.slane %v4401, 5
    %v4404 = vsel %vm574, %v4399, %v4403
    %v4406 = vshrl.u32 %v4277, 16
    %v4408 = vrot.slane %v4406, 4
    %v4409 = vshll.u32 %v4277, 16
    %v4411 = vrot.slane %v4409, 5
    %v4412 = vor.u32 %v4408, %v4411
    %v4413 = vrot.slane %v4412, 4
    %v4415 = vshll.u32 %v4278, 16
    %v4417 = vrot.slane %v4415, 5
    %v4418 = vsel %vm574, %v4413, %v4417
    %v4420 = vshrl.u32 %v4279, 16
    %v4422 = vrot.slane %v4420, 4
    %v4423 = vshll.u32 %v4279, 16
    %v4425 = vrot.slane %v4423, 5
    %v4426 = vor.u32 %v4422, %v4425
    %v4427 = vrot.slane %v4426, 4
    %v4429 = vshll.u32 %v4280, 16
    %v4431 = vrot.slane %v4429, 5
    %v4432 = vsel %vm574, %v4427, %v4431
    %v4434 = vshrl.u32 %v4281, 16
    %v4436 = vrot.slane %v4434, 4
    %v4437 = vshll.u32 %v4281, 16
    %v4439 = vrot.slane %v4437, 5
    %v4440 = vor.u32 %v4436, %v4439
    %v4441 = vrot.slane %v4440, 4
    %v4443 = vshll.u32 %v4282, 16
    %v4445 = vrot.slane %v4443, 5
    %v4446 = vsel %vm574, %v4441, %v4445
    %v4448 = vshrl.u32 %v4283, 16
    %v4450 = vrot.slane %v4448, 4
    %v4451 = vshll.u32 %v4283, 16
    %v4453 = vrot.slane %v4451, 5
    %v4454 = vor.u32 %v4450, %v4453
    %v4455 = vrot.slane %v4454, 4
    %v4457 = vshll.u32 %v4284, 16
    %v4459 = vrot.slane %v4457, 5
    %v4460 = vsel %vm574, %v4455, %v4459
    %v4462 = vshrl.u32 %v4285, 16
    %v4464 = vrot.slane %v4462, 4
    %v4465 = vshll.u32 %v4285, 16
    %v4467 = vrot.slane %v4465, 5
    %v4468 = vor.u32 %v4464, %v4467
    %v4469 = vrot.slane %v4468, 4
    %v4471 = vshll.u32 %v4286, 16
    %v4473 = vrot.slane %v4471, 5
    %v4474 = vsel %vm574, %v4469, %v4473
    %v4476 = vshrl.u32 %v4287, 16
    %v4478 = vrot.slane %v4476, 4
    %v4479 = vshll.u32 %v4287, 16
    %v4481 = vrot.slane %v4479, 5
    %v4482 = vor.u32 %v4478, %v4481
    %v4483 = vrot.slane %v4482, 4
    %v4485 = vshll.u32 %v4288, 16
    %v4487 = vrot.slane %v4485, 5
    %v4488 = vsel %vm574, %v4483, %v4487
    %v4490 = vshrl.u32 %v4289, 16
    %v4492 = vrot.slane %v4490, 4
    %v4493 = vshll.u32 %v4289, 16
    %v4495 = vrot.slane %v4493, 5
    %v4496 = vor.u32 %v4492, %v4495
    %v4497 = vrot.slane %v4496, 4
    %v4499 = vshll.u32 %v4290, 16
    %v4501 = vrot.slane %v4499, 5
    %v4502 = vsel %vm574, %v4497, %v4501
    %v4504 = vshrl.u32 %v4291, 16
    %v4506 = vrot.slane %v4504, 4
    %v4507 = vshll.u32 %v4291, 16
    %v4509 = vrot.slane %v4507, 5
    %v4510 = vor.u32 %v4506, %v4509
    %v4511 = vrot.slane %v4510, 4
    %v4513 = vshll.u32 %v4292, 16
    %v4515 = vrot.slane %v4513, 5
    %v4516 = vsel %vm574, %v4511, %v4515
    %s4517 = scalar_lea.vmem [#allocation8], 64
    %v4518 = vld [vmem:[%s4517] sm:$0xf]
    %v4519 = vld [vmem:[%s4517 + $0x4] sm:$0xf]
    %v4520 = vld [vmem:[%s4517 + $0x8] sm:$0xf]
    %v4521 = vld [vmem:[%s4517 + $0xc] sm:$0xf]
    %v4522 = vld [vmem:[%s4517 + $0x10] sm:$0xf]
    %v4523 = vld [vmem:[%s4517 + $0x14] sm:$0xf]
    %v4524 = vld [vmem:[%s4517 + $0x18] sm:$0xf]
    %v4525 = vld [vmem:[%s4517 + $0x1c] sm:$0xf]
    %v4526 = vld [vmem:[%s4517 + $0x20] sm:$0xf]
    %v4527 = vld [vmem:[%s4517 + $0x24] sm:$0xf]
    %v4528 = vld [vmem:[%s4517 + $0x28] sm:$0xf]
    %v4529 = vld [vmem:[%s4517 + $0x2c] sm:$0xf]
    %v4530 = vld [vmem:[%s4517 + $0x30] sm:$0xf]
    %v4531 = vld [vmem:[%s4517 + $0x34] sm:$0xf]
    %v4532 = vld [vmem:[%s4517 + $0x38] sm:$0xf]
    %v4533 = vld [vmem:[%s4517 + $0x3c] sm:$0xf]
    %v4534 = vunpack.c.l.b16 %v4306
    %v4535 = vunpack.c.l.b16 %v4320
    %v4536 = vunpack.c.l.b16 %v4334
    %v4537 = vunpack.c.l.b16 %v4348
    %v4538 = vunpack.c.l.b16 %v4362
    %v4539 = vunpack.c.l.b16 %v4376
    %v4540 = vunpack.c.l.b16 %v4390
    %v4541 = vunpack.c.l.b16 %v4404
    %v4542 = vunpack.c.l.b16 %v4418
    %v4543 = vunpack.c.l.b16 %v4432
    %v4544 = vunpack.c.l.b16 %v4446
    %v4545 = vunpack.c.l.b16 %v4460
    %v4546 = vunpack.c.l.b16 %v4474
    %v4547 = vunpack.c.l.b16 %v4488
    %v4548 = vunpack.c.l.b16 %v4502
    %v4549 = vunpack.c.l.b16 %v4516
    %v4550 = vpack.c.b16 %v4535, %v4534
    %v4551 = vpack.c.b16 %v4537, %v4536
    %v4552 = vpack.c.b16 %v4539, %v4538
    %v4553 = vpack.c.b16 %v4541, %v4540
    %v4554 = vpack.c.b16 %v4543, %v4542
    %v4555 = vpack.c.b16 %v4545, %v4544
    %v4556 = vpack.c.b16 %v4547, %v4546
    %v4557 = vpack.c.b16 %v4549, %v4548
    %v4582 = vunpack.c.l.b16 %v4518
    %v4583 = vunpack.c.l.b16 %v4519
    %v4584 = vunpack.c.l.b16 %v4520
    %v4585 = vunpack.c.l.b16 %v4521
    %v4586 = vunpack.c.l.b16 %v4522
    %v4587 = vunpack.c.l.b16 %v4523
    %v4588 = vunpack.c.l.b16 %v4524
    %v4589 = vunpack.c.l.b16 %v4525
    %v4590 = vunpack.c.l.b16 %v4526
    %v4591 = vunpack.c.l.b16 %v4527
    %v4592 = vunpack.c.l.b16 %v4528
    %v4593 = vunpack.c.l.b16 %v4529
    %v4594 = vunpack.c.l.b16 %v4530
    %v4595 = vunpack.c.l.b16 %v4531
    %v4596 = vunpack.c.l.b16 %v4532
    %v4597 = vunpack.c.l.b16 %v4533
    %v4598 = vpack.c.b16 %v4583, %v4582
    %v4599 = vpack.c.b16 %v4585, %v4584
    %v4600 = vpack.c.b16 %v4587, %v4586
    %v4601 = vpack.c.b16 %v4589, %v4588
    %v4602 = vpack.c.b16 %v4591, %v4590
    %v4603 = vpack.c.b16 %v4593, %v4592
    %v4604 = vpack.c.b16 %v4595, %v4594
    %v4605 = vpack.c.b16 %v4597, %v4596
    %4614 = vmatprep.subr.bf16.mxu0 0
    %4615 = vmatpush1.bf16.msra.mxu0 %v4598
    %4616 = vmatprep.subr.bf16.mxu0 0
    %4617 = vmatpush1.bf16.msra.mxu0 %v4599
    %4618 = vmatprep.subr.bf16.mxu0 0
    %4619 = vmatpush1.bf16.msra.mxu0 %v4600
    %4620 = vmatprep.subr.bf16.mxu0 0
    %4621 = vmatpush1.bf16.msra.mxu0 %v4601
    %4622 = vmatprep.subr.bf16.mxu0 0
    %4623 = vmatpush1.bf16.msra.mxu0 %v4602
    %4624 = vmatprep.subr.bf16.mxu0 0
    %4625 = vmatpush1.bf16.msra.mxu0 %v4603
    %4626 = vmatprep.subr.bf16.mxu0 0
    %4627 = vmatpush1.bf16.msra.mxu0 %v4604
    %4628 = vmatprep.subr.bf16.mxu0 0
    %4629 = vmatpush1.bf16.msra.mxu0 %v4605
    %4630 = vmatprep.subr.bf16.mxu0 0
    %4631 = vmatpush1.bf16.msra.mxu0 0
    %4632 = vmatprep.subr.bf16.mxu0 0
    %4633 = vmatpush1.bf16.msra.mxu0 0
    %4634 = vmatprep.subr.bf16.mxu0 0
    %4635 = vmatpush1.bf16.msra.mxu0 0
    %4636 = vmatprep.subr.bf16.mxu0 0
    %4637 = vmatpush1.bf16.msra.mxu0 0
    %4638 = vmatprep.subr.bf16.mxu0 0
    %4639 = vmatpush1.bf16.msra.mxu0 0
    %4640 = vmatprep.subr.bf16.mxu0 0
    %4641 = vmatpush1.bf16.msra.mxu0 0
    %4642 = vmatprep.subr.bf16.mxu0 0
    %4643 = vmatpush1.bf16.msra.mxu0 0
    %4644 = vmatprep.subr.bf16.mxu0 0
    %4645 = vmatpush1.bf16.msra.mxu0 0
    %4646 = vmatprep.mubr.bf16.mxu0 0
    %4647 = vmatmul.mubr.bf16.gmra.mrb[0].mxu0 %v4550
    %v4648 = vpop.f32.mrb[0].mxu0
    %v4649 = vadd.f32 0.0, %v4648
    %v4650 = vpop.f32.mrb[0].mxu0
    %v4651 = vpop.f32.mrb[0].mxu0
    %v4652 = vadd.f32 0.0, %v4651
    %v4653 = vpop.f32.mrb[0].mxu0
    %4654 = vmatprep.mubr.bf16.mxu0 0
    %4655 = vmatmul.mubr.bf16.gmra.mrb[0].mxu0 %v4551
    %v4656 = vpop.f32.mrb[0].mxu0
    %v4657 = vadd.f32 0.0, %v4656
    %v4658 = vpop.f32.mrb[0].mxu0
    %v4659 = vpop.f32.mrb[0].mxu0
    %v4660 = vadd.f32 0.0, %v4659
    %v4661 = vpop.f32.mrb[0].mxu0
    %4662 = vmatprep.mubr.bf16.mxu0 0
    %4663 = vmatmul.mubr.bf16.gmra.mrb[0].mxu0 %v4552
    %v4664 = vpop.f32.mrb[0].mxu0
    %v4665 = vadd.f32 0.0, %v4664
    %v4666 = vpop.f32.mrb[0].mxu0
    %v4667 = vpop.f32.mrb[0].mxu0
    %v4668 = vadd.f32 0.0, %v4667
    %v4669 = vpop.f32.mrb[0].mxu0
    %4670 = vmatprep.mubr.bf16.mxu0 0
    %4671 = vmatmul.mubr.bf16.gmra.mrb[0].mxu0 %v4553
    %v4672 = vpop.f32.mrb[0].mxu0
    %v4673 = vadd.f32 0.0, %v4672
    %v4674 = vpop.f32.mrb[0].mxu0
    %v4675 = vpop.f32.mrb[0].mxu0
    %v4676 = vadd.f32 0.0, %v4675
    %v4677 = vpop.f32.mrb[0].mxu0
    %4678 = vmatprep.mubr.bf16.mxu0 0
    %4679 = vmatmul.mubr.bf16.gmra.mrb[0].mxu0 %v4554
    %v4680 = vpop.f32.mrb[0].mxu0
    %v4681 = vadd.f32 0.0, %v4680
    %v4682 = vpop.f32.mrb[0].mxu0
    %v4683 = vpop.f32.mrb[0].mxu0
    %v4684 = vadd.f32 0.0, %v4683
    %v4685 = vpop.f32.mrb[0].mxu0
    %4686 = vmatprep.mubr.bf16.mxu0 0
    %4687 = vmatmul.mubr.bf16.gmra.mrb[0].mxu0 %v4555
    %v4688 = vpop.f32.mrb[0].mxu0
    %v4689 = vadd.f32 0.0, %v4688
    %v4690 = vpop.f32.mrb[0].mxu0
    %v4691 = vpop.f32.mrb[0].mxu0
    %v4692 = vadd.f32 0.0, %v4691
    %v4693 = vpop.f32.mrb[0].mxu0
    %4694 = vmatprep.mubr.bf16.mxu0 0
    %4695 = vmatmul.mubr.bf16.gmra.mrb[0].mxu0 %v4556
    %v4696 = vpop.f32.mrb[0].mxu0
    %v4697 = vadd.f32 0.0, %v4696
    %v4698 = vpop.f32.mrb[0].mxu0
    %v4699 = vpop.f32.mrb[0].mxu0
    %v4700 = vadd.f32 0.0, %v4699
    %v4701 = vpop.f32.mrb[0].mxu0
    %4702 = vmatprep.mubr.bf16.mxu0 0
    %4703 = vmatmul.mubr.bf16.gmra.mrb[0].mxu0 %v4557
    %v4704 = vpop.f32.mrb[0].mxu0
    %v4705 = vadd.f32 0.0, %v4704
    %v4706 = vpop.f32.mrb[0].mxu0
    %v4707 = vpop.f32.mrb[0].mxu0
    %v4708 = vadd.f32 0.0, %v4707
    %v4709 = vpop.f32.mrb[0].mxu0
    %4710 = vdwg.mxu0
    %v4727 = vunpack.c.l.b16 %v4165
    %v4728 = vunpack.c.l.b16 %v4166
    %v4729 = vunpack.c.l.b16 %v4167
    %v4730 = vunpack.c.l.b16 %v4168
    %v4731 = vunpack.c.l.b16 %v4169
    %v4732 = vunpack.c.l.b16 %v4170
    %v4733 = vunpack.c.l.b16 %v4171
    %v4734 = vunpack.c.l.b16 %v4172
    %v4735 = vunpack.c.l.b16 %v4173
    %v4736 = vunpack.c.l.b16 %v4174
    %v4737 = vunpack.c.l.b16 %v4175
    %v4738 = vunpack.c.l.b16 %v4176
    %v4739 = vunpack.c.l.b16 %v4177
    %v4740 = vunpack.c.l.b16 %v4178
    %v4741 = vunpack.c.l.b16 %v4179
    %v4742 = vunpack.c.l.b16 %v4180
    %v4743 = vpack.c.b16 %v4728, %v4727
    %v4744 = vpack.c.b16 %v4730, %v4729
    %v4745 = vpack.c.b16 %v4732, %v4731
    %v4746 = vpack.c.b16 %v4734, %v4733
    %v4747 = vpack.c.b16 %v4736, %v4735
    %v4748 = vpack.c.b16 %v4738, %v4737
    %v4749 = vpack.c.b16 %v4740, %v4739
    %v4750 = vpack.c.b16 %v4742, %v4741
    %v4775 = vunpack.c.l.b16 %v4181
    %v4776 = vunpack.c.l.b16 %v4182
    %v4777 = vunpack.c.l.b16 %v4183
    %v4778 = vunpack.c.l.b16 %v4184
    %v4779 = vunpack.c.l.b16 %v4185
    %v4780 = vunpack.c.l.b16 %v4186
    %v4781 = vunpack.c.l.b16 %v4187
    %v4782 = vunpack.c.l.b16 %v4188
    %v4783 = vunpack.c.l.b16 %v4189
    %v4784 = vunpack.c.l.b16 %v4190
    %v4785 = vunpack.c.l.b16 %v4191
    %v4786 = vunpack.c.l.b16 %v4192
    %v4787 = vunpack.c.l.b16 %v4193
    %v4788 = vunpack.c.l.b16 %v4194
    %v4789 = vunpack.c.l.b16 %v4195
    %v4790 = vunpack.c.l.b16 %v4196
    %v4791 = vpack.c.b16 %v4776, %v4775
    %v4792 = vpack.c.b16 %v4778, %v4777
    %v4793 = vpack.c.b16 %v4780, %v4779
    %v4794 = vpack.c.b16 %v4782, %v4781
    %v4795 = vpack.c.b16 %v4784, %v4783
    %v4796 = vpack.c.b16 %v4786, %v4785
    %v4797 = vpack.c.b16 %v4788, %v4787
    %v4798 = vpack.c.b16 %v4790, %v4789
    %4807 = vmatprep.subr.bf16.mxu0 0
    %4808 = vmatpush1.bf16.msra.mxu0 %v4791
    %4809 = vmatprep.subr.bf16.mxu0 0
    %4810 = vmatpush1.bf16.msra.mxu0 %v4792
    %4811 = vmatprep.subr.bf16.mxu0 0
    %4812 = vmatpush1.bf16.msra.mxu0 %v4793
    %4813 = vmatprep.subr.bf16.mxu0 0
    %4814 = vmatpush1.bf16.msra.mxu0 %v4794
    %4815 = vmatprep.subr.bf16.mxu0 0
    %4816 = vmatpush1.bf16.msra.mxu0 %v4795
    %4817 = vmatprep.subr.bf16.mxu0 0
    %4818 = vmatpush1.bf16.msra.mxu0 %v4796
    %4819 = vmatprep.subr.bf16.mxu0 0
    %4820 = vmatpush1.bf16.msra.mxu0 %v4797
    %4821 = vmatprep.subr.bf16.mxu0 0
    %4822 = vmatpush1.bf16.msra.mxu0 %v4798
    %4823 = vmatprep.subr.bf16.mxu0 0
    %4824 = vmatpush1.bf16.msra.mxu0 0
    %4825 = vmatprep.subr.bf16.mxu0 0
    %4826 = vmatpush1.bf16.msra.mxu0 0
    %4827 = vmatprep.subr.bf16.mxu0 0
    %4828 = vmatpush1.bf16.msra.mxu0 0
    %4829 = vmatprep.subr.bf16.mxu0 0
    %4830 = vmatpush1.bf16.msra.mxu0 0
    %4831 = vmatprep.subr.bf16.mxu0 0
    %4832 = vmatpush1.bf16.msra.mxu0 0
    %4833 = vmatprep.subr.bf16.mxu0 0
    %4834 = vmatpush1.bf16.msra.mxu0 0
    %4835 = vmatprep.subr.bf16.mxu0 0
    %4836 = vmatpush1.bf16.msra.mxu0 0
    %4837 = vmatprep.subr.bf16.mxu0 0
    %4838 = vmatpush1.bf16.msra.mxu0 0
    %4839 = vmatprep.mubr.bf16.mxu0 0
    %4840 = vmatmul.mubr.bf16.gmra.mrb[0].mxu0 %v4743
    %v4841 = vpop.f32.mrb[0].mxu0
    %v4842 = vadd.f32 %v4649, %v4841
    %v4843 = vpop.f32.mrb[0].mxu0
    %v4844 = vpop.f32.mrb[0].mxu0
    %v4845 = vadd.f32 %v4652, %v4844
    %v4846 = vpop.f32.mrb[0].mxu0
    %4847 = vmatprep.mubr.bf16.mxu0 0
    %4848 = vmatmul.mubr.bf16.gmra.mrb[0].mxu0 %v4744
    %v4849 = vpop.f32.mrb[0].mxu0
    %v4850 = vadd.f32 %v4657, %v4849
    %v4851 = vpop.f32.mrb[0].mxu0
    %v4852 = vpop.f32.mrb[0].mxu0
    %v4853 = vadd.f32 %v4660, %v4852
    %v4854 = vpop.f32.mrb[0].mxu0
    %4855 = vmatprep.mubr.bf16.mxu0 0
    %4856 = vmatmul.mubr.bf16.gmra.mrb[0].mxu0 %v4745
    %v4857 = vpop.f32.mrb[0].mxu0
    %v4858 = vadd.f32 %v4665, %v4857
    %v4859 = vpop.f32.mrb[0].mxu0
    %v4860 = vpop.f32.mrb[0].mxu0
    %v4861 = vadd.f32 %v4668, %v4860
    %v4862 = vpop.f32.mrb[0].mxu0
    %4863 = vmatprep.mubr.bf16.mxu0 0
    %4864 = vmatmul.mubr.bf16.gmra.mrb[0].mxu0 %v4746
    %v4865 = vpop.f32.mrb[0].mxu0
    %v4866 = vadd.f32 %v4673, %v4865
    %v4867 = vpop.f32.mrb[0].mxu0
    %v4868 = vpop.f32.mrb[0].mxu0
    %v4869 = vadd.f32 %v4676, %v4868
    %v4870 = vpop.f32.mrb[0].mxu0
    %4871 = vmatprep.mubr.bf16.mxu0 0
    %4872 = vmatmul.mubr.bf16.gmra.mrb[0].mxu0 %v4747
    %v4873 = vpop.f32.mrb[0].mxu0
    %v4874 = vadd.f32 %v4681, %v4873
    %v4875 = vpop.f32.mrb[0].mxu0
    %v4876 = vpop.f32.mrb[0].mxu0
    %v4877 = vadd.f32 %v4684, %v4876
    %v4878 = vpop.f32.mrb[0].mxu0
    %4879 = vmatprep.mubr.bf16.mxu0 0
    %4880 = vmatmul.mubr.bf16.gmra.mrb[0].mxu0 %v4748
    %v4881 = vpop.f32.mrb[0].mxu0
    %v4882 = vadd.f32 %v4689, %v4881
    %v4883 = vpop.f32.mrb[0].mxu0
    %v4884 = vpop.f32.mrb[0].mxu0
    %v4885 = vadd.f32 %v4692, %v4884
    %v4886 = vpop.f32.mrb[0].mxu0
    %4887 = vmatprep.mubr.bf16.mxu0 0
    %4888 = vmatmul.mubr.bf16.gmra.mrb[0].mxu0 %v4749
    %v4889 = vpop.f32.mrb[0].mxu0
    %v4890 = vadd.f32 %v4697, %v4889
    %v4891 = vpop.f32.mrb[0].mxu0
    %v4892 = vpop.f32.mrb[0].mxu0
    %v4893 = vadd.f32 %v4700, %v4892
    %v4894 = vpop.f32.mrb[0].mxu0
    %4895 = vmatprep.mubr.bf16.mxu0 0
    %4896 = vmatmul.mubr.bf16.gmra.mrb[0].mxu0 %v4750
    %v4897 = vpop.f32.mrb[0].mxu0
    %v4898 = vadd.f32 %v4705, %v4897
    %v4899 = vpop.f32.mrb[0].mxu0
    %v4900 = vpop.f32.mrb[0].mxu0
    %v4901 = vadd.f32 %v4708, %v4900
    %v4902 = vpop.f32.mrb[0].mxu0
    %4903 = vdwg.mxu0
    %v4904 = vld [vmem:[#allocation2] sm:$0x1e]
    %v4905 = vld [vmem:[#allocation2 + $0x8] sm:$0x1e]
    %v4906 = vld [vmem:[#allocation2 + $0x10] sm:$0x1e]
    %v4907 = vld [vmem:[#allocation2 + $0x18] sm:$0x1e]
    %v4908 = vld [vmem:[#allocation2 + $0x20] sm:$0x1e]
    %v4909 = vld [vmem:[#allocation2 + $0x28] sm:$0x1e]
    %v4910 = vld [vmem:[#allocation2 + $0x30] sm:$0x1e]
    %v4911 = vld [vmem:[#allocation2 + $0x38] sm:$0x1e]
    %v4912 = vld [vmem:[#allocation2 + $0x50] sm:$0x1e]
    %v4913 = vld [vmem:[#allocation2 + $0x58] sm:$0x1e]
    %v4914 = vld [vmem:[#allocation2 + $0x60] sm:$0x1e]
    %v4915 = vld [vmem:[#allocation2 + $0x68] sm:$0x1e]
    %v4916 = vld [vmem:[#allocation2 + $0x70] sm:$0x1e]
    %v4917 = vld [vmem:[#allocation2 + $0x78] sm:$0x1e]
    %v4918 = vld [vmem:[#allocation2 + $0x80] sm:$0x1e]
    %v4919 = vld [vmem:[#allocation2 + $0x88] sm:$0x1e]
    %v4936 = vunpack.c.l.b16 %v4904
    %v4937 = vunpack.c.h.b16 %v4904
    %v4938 = vunpack.c.l.b16 %v4905
    %v4939 = vunpack.c.h.b16 %v4905
    %v4940 = vunpack.c.l.b16 %v4906
    %v4941 = vunpack.c.h.b16 %v4906
    %v4942 = vunpack.c.l.b16 %v4907
    %v4943 = vunpack.c.h.b16 %v4907
    %v4944 = vunpack.c.l.b16 %v4908
    %v4945 = vunpack.c.h.b16 %v4908
    %v4946 = vunpack.c.l.b16 %v4909
    %v4947 = vunpack.c.h.b16 %v4909
    %v4948 = vunpack.c.l.b16 %v4910
    %v4949 = vunpack.c.h.b16 %v4910
    %v4950 = vunpack.c.l.b16 %v4911
    %v4951 = vunpack.c.h.b16 %v4911
    %v4952 = vunpack.c.l.b16 %v4912
    %v4953 = vunpack.c.h.b16 %v4912
    %v4954 = vunpack.c.l.b16 %v4913
    %v4955 = vunpack.c.h.b16 %v4913
    %v4956 = vunpack.c.l.b16 %v4914
    %v4957 = vunpack.c.h.b16 %v4914
    %v4958 = vunpack.c.l.b16 %v4915
    %v4959 = vunpack.c.h.b16 %v4915
    %v4960 = vunpack.c.l.b16 %v4916
    %v4961 = vunpack.c.h.b16 %v4916
    %v4962 = vunpack.c.l.b16 %v4917
    %v4963 = vunpack.c.h.b16 %v4917
    %v4964 = vunpack.c.l.b16 %v4918
    %v4965 = vunpack.c.h.b16 %v4918
    %v4966 = vunpack.c.l.b16 %v4919
    %v4967 = vunpack.c.h.b16 %v4919
    %v4968 = vpack.c.b16 %v4936, %v4936
    %v4969 = vpack.c.b16 %v4937, %v4937
    %v4970 = vpack.c.b16 %v4938, %v4938
    %v4971 = vpack.c.b16 %v4939, %v4939
    %v4972 = vpack.c.b16 %v4940, %v4940
    %v4973 = vpack.c.b16 %v4941, %v4941
    %v4974 = vpack.c.b16 %v4942, %v4942
    %v4975 = vpack.c.b16 %v4943, %v4943
    %v4976 = vpack.c.b16 %v4944, %v4944
    %v4977 = vpack.c.b16 %v4945, %v4945
    %v4978 = vpack.c.b16 %v4946, %v4946
    %v4979 = vpack.c.b16 %v4947, %v4947
    %v4980 = vpack.c.b16 %v4948, %v4948
    %v4981 = vpack.c.b16 %v4949, %v4949
    %v4982 = vpack.c.b16 %v4950, %v4950
    %v4983 = vpack.c.b16 %v4951, %v4951
    %v4984 = vpack.c.b16 %v4952, %v4952
    %v4985 = vpack.c.b16 %v4953, %v4953
    %v4986 = vpack.c.b16 %v4954, %v4954
    %v4987 = vpack.c.b16 %v4955, %v4955
    %v4988 = vpack.c.b16 %v4956, %v4956
    %v4989 = vpack.c.b16 %v4957, %v4957
    %v4990 = vpack.c.b16 %v4958, %v4958
    %v4991 = vpack.c.b16 %v4959, %v4959
    %v4992 = vpack.c.b16 %v4960, %v4960
    %v4993 = vpack.c.b16 %v4961, %v4961
    %v4994 = vpack.c.b16 %v4962, %v4962
    %v4995 = vpack.c.b16 %v4963, %v4963
    %v4996 = vpack.c.b16 %v4964, %v4964
    %v4997 = vpack.c.b16 %v4965, %v4965
    %v4998 = vpack.c.b16 %v4966, %v4966
    %v4999 = vpack.c.b16 %v4967, %v4967
    %v5000 = vrot.slane %v4968, 5
    %v5001 = vrot.slane %v5000, 4
    %v5002 = vrot.slane %v4969, 5
    %v5003 = vsel %vm1284, %v5001, %v5002
    %v5004 = vrot.slane %v4970, 5
    %v5005 = vrot.slane %v5004, 4
    %v5006 = vrot.slane %v4971, 5
    %v5007 = vsel %vm1284, %v5005, %v5006
    %v5008 = vrot.slane %v4972, 5
    %v5009 = vrot.slane %v5008, 4
    %v5010 = vrot.slane %v4973, 5
    %v5011 = vsel %vm1284, %v5009, %v5010
    %v5012 = vrot.slane %v4974, 5
    %v5013 = vrot.slane %v5012, 4
    %v5014 = vrot.slane %v4975, 5
    %v5015 = vsel %vm1284, %v5013, %v5014
    %v5016 = vrot.slane %v4976, 5
    %v5017 = vrot.slane %v5016, 4
    %v5018 = vrot.slane %v4977, 5
    %v5019 = vsel %vm1284, %v5017, %v5018
    %v5020 = vrot.slane %v4978, 5
    %v5021 = vrot.slane %v5020, 4
    %v5022 = vrot.slane %v4979, 5
    %v5023 = vsel %vm1284, %v5021, %v5022
    %v5024 = vrot.slane %v4980, 5
    %v5025 = vrot.slane %v5024, 4
    %v5026 = vrot.slane %v4981, 5
    %v5027 = vsel %vm1284, %v5025, %v5026
    %v5028 = vrot.slane %v4982, 5
    %v5029 = vrot.slane %v5028, 4
    %v5030 = vrot.slane %v4983, 5
    %v5031 = vsel %vm1284, %v5029, %v5030
    %v5032 = vrot.slane %v4984, 5
    %v5033 = vrot.slane %v5032, 4
    %v5034 = vrot.slane %v4985, 5
    %v5035 = vsel %vm1284, %v5033, %v5034
    %v5036 = vrot.slane %v4986, 5
    %v5037 = vrot.slane %v5036, 4
    %v5038 = vrot.slane %v4987, 5
    %v5039 = vsel %vm1284, %v5037, %v5038
    %v5040 = vrot.slane %v4988, 5
    %v5041 = vrot.slane %v5040, 4
    %v5042 = vrot.slane %v4989, 5
    %v5043 = vsel %vm1284, %v5041, %v5042
    %v5044 = vrot.slane %v4990, 5
    %v5045 = vrot.slane %v5044, 4
    %v5046 = vrot.slane %v4991, 5
    %v5047 = vsel %vm1284, %v5045, %v5046
    %v5048 = vrot.slane %v4992, 5
    %v5049 = vrot.slane %v5048, 4
    %v5050 = vrot.slane %v4993, 5
    %v5051 = vsel %vm1284, %v5049, %v5050
    %v5052 = vrot.slane %v4994, 5
    %v5053 = vrot.slane %v5052, 4
    %v5054 = vrot.slane %v4995, 5
    %v5055 = vsel %vm1284, %v5053, %v5054
    %v5056 = vrot.slane %v4996, 5
    %v5057 = vrot.slane %v5056, 4
    %v5058 = vrot.slane %v4997, 5
    %v5059 = vsel %vm1284, %v5057, %v5058
    %v5060 = vrot.slane %v4998, 5
    %v5061 = vrot.slane %v5060, 4
    %v5062 = vrot.slane %v4999, 5
    %v5063 = vsel %vm1284, %v5061, %v5062
    %s5064 = scalar_lea.vmem [#allocation8], 128
    %v5065 = vld [vmem:[%s5064] sm:$0xf]
    %v5066 = vld [vmem:[%s5064 + $0x4] sm:$0xf]
    %v5067 = vld [vmem:[%s5064 + $0x8] sm:$0xf]
    %v5068 = vld [vmem:[%s5064 + $0xc] sm:$0xf]
    %v5069 = vld [vmem:[%s5064 + $0x10] sm:$0xf]
    %v5070 = vld [vmem:[%s5064 + $0x14] sm:$0xf]
    %v5071 = vld [vmem:[%s5064 + $0x18] sm:$0xf]
    %v5072 = vld [vmem:[%s5064 + $0x1c] sm:$0xf]
    %v5073 = vld [vmem:[%s5064 + $0x20] sm:$0xf]
    %v5074 = vld [vmem:[%s5064 + $0x24] sm:$0xf]
    %v5075 = vld [vmem:[%s5064 + $0x28] sm:$0xf]
    %v5076 = vld [vmem:[%s5064 + $0x2c] sm:$0xf]
    %v5077 = vld [vmem:[%s5064 + $0x30] sm:$0xf]
    %v5078 = vld [vmem:[%s5064 + $0x34] sm:$0xf]
    %v5079 = vld [vmem:[%s5064 + $0x38] sm:$0xf]
    %v5080 = vld [vmem:[%s5064 + $0x3c] sm:$0xf]
    %v5081 = vunpack.c.l.b16 %v5003
    %v5082 = vunpack.c.l.b16 %v5007
    %v5083 = vunpack.c.l.b16 %v5011
    %v5084 = vunpack.c.l.b16 %v5015
    %v5085 = vunpack.c.l.b16 %v5019
    %v5086 = vunpack.c.l.b16 %v5023
    %v5087 = vunpack.c.l.b16 %v5027
    %v5088 = vunpack.c.l.b16 %v5031
    %v5089 = vunpack.c.l.b16 %v5035
    %v5090 = vunpack.c.l.b16 %v5039
    %v5091 = vunpack.c.l.b16 %v5043
    %v5092 = vunpack.c.l.b16 %v5047
    %v5093 = vunpack.c.l.b16 %v5051
    %v5094 = vunpack.c.l.b16 %v5055
    %v5095 = vunpack.c.l.b16 %v5059
    %v5096 = vunpack.c.l.b16 %v5063
    %v5097 = vpack.c.b16 %v5082, %v5081
    %v5098 = vpack.c.b16 %v5084, %v5083
    %v5099 = vpack.c.b16 %v5086, %v5085
    %v5100 = vpack.c.b16 %v5088, %v5087
    %v5101 = vpack.c.b16 %v5090, %v5089
    %v5102 = vpack.c.b16 %v5092, %v5091
    %v5103 = vpack.c.b16 %v5094, %v5093
    %v5104 = vpack.c.b16 %v5096, %v5095
    %v5129 = vunpack.c.l.b16 %v5065
    %v5130 = vunpack.c.l.b16 %v5066
    %v5131 = vunpack.c.l.b16 %v5067
    %v5132 = vunpack.c.l.b16 %v5068
    %v5133 = vunpack.c.l.b16 %v5069
    %v5134 = vunpack.c.l.b16 %v5070
    %v5135 = vunpack.c.l.b16 %v5071
    %v5136 = vunpack.c.l.b16 %v5072
    %v5137 = vunpack.c.l.b16 %v5073
    %v5138 = vunpack.c.l.b16 %v5074
    %v5139 = vunpack.c.l.b16 %v5075
    %v5140 = vunpack.c.l.b16 %v5076
    %v5141 = vunpack.c.l.b16 %v5077
    %v5142 = vunpack.c.l.b16 %v5078
    %v5143 = vunpack.c.l.b16 %v5079
    %v5144 = vunpack.c.l.b16 %v5080
    %v5145 = vpack.c.b16 %v5130, %v5129
    %v5146 = vpack.c.b16 %v5132, %v5131
    %v5147 = vpack.c.b16 %v5134, %v5133
    %v5148 = vpack.c.b16 %v5136, %v5135
    %v5149 = vpack.c.b16 %v5138, %v5137
    %v5150 = vpack.c.b16 %v5140, %v5139
    %v5151 = vpack.c.b16 %v5142, %v5141
    %v5152 = vpack.c.b16 %v5144, %v5143
    %5161 = vmatprep.subr.bf16.mxu0 0
    %5162 = vmatpush1.bf16.msra.mxu0 %v5145
    %5163 = vmatprep.subr.bf16.mxu0 0
    %5164 = vmatpush1.bf16.msra.mxu0 %v5146
    %5165 = vmatprep.subr.bf16.mxu0 0
    %5166 = vmatpush1.bf16.msra.mxu0 %v5147
    %5167 = vmatprep.subr.bf16.mxu0 0
    %5168 = vmatpush1.bf16.msra.mxu0 %v5148
    %5169 = vmatprep.subr.bf16.mxu0 0
    %5170 = vmatpush1.bf16.msra.mxu0 %v5149
    %5171 = vmatprep.subr.bf16.mxu0 0
    %5172 = vmatpush1.bf16.msra.mxu0 %v5150
    %5173 = vmatprep.subr.bf16.mxu0 0
    %5174 = vmatpush1.bf16.msra.mxu0 %v5151
    %5175 = vmatprep.subr.bf16.mxu0 0
    %5176 = vmatpush1.bf16.msra.mxu0 %v5152
    %5177 = vmatprep.subr.bf16.mxu0 0
    %5178 = vmatpush1.bf16.msra.mxu0 0
    %5179 = vmatprep.subr.bf16.mxu0 0
    %5180 = vmatpush1.bf16.msra.mxu0 0
    %5181 = vmatprep.subr.bf16.mxu0 0
    %5182 = vmatpush1.bf16.msra.mxu0 0
    %5183 = vmatprep.subr.bf16.mxu0 0
    %5184 = vmatpush1.bf16.msra.mxu0 0
    %5185 = vmatprep.subr.bf16.mxu0 0
    %5186 = vmatpush1.bf16.msra.mxu0 0
    %5187 = vmatprep.subr.bf16.mxu0 0
    %5188 = vmatpush1.bf16.msra.mxu0 0
    %5189 = vmatprep.subr.bf16.mxu0 0
    %5190 = vmatpush1.bf16.msra.mxu0 0
    %5191 = vmatprep.subr.bf16.mxu0 0
    %5192 = vmatpush1.bf16.msra.mxu0 0
    %5193 = vmatprep.mubr.bf16.mxu0 0
    %5194 = vmatmul.mubr.bf16.gmra.mrb[0].mxu0 %v5097
    %v5195 = vpop.f32.mrb[0].mxu0
    %v5196 = vadd.f32 0.0, %v5195
    %v5197 = vpop.f32.mrb[0].mxu0
    %v5198 = vpop.f32.mrb[0].mxu0
    %v5199 = vadd.f32 0.0, %v5198
    %v5200 = vpop.f32.mrb[0].mxu0
    %5201 = vmatprep.mubr.bf16.mxu0 0
    %5202 = vmatmul.mubr.bf16.gmra.mrb[0].mxu0 %v5098
    %v5203 = vpop.f32.mrb[0].mxu0
    %v5204 = vadd.f32 0.0, %v5203
    %v5205 = vpop.f32.mrb[0].mxu0
    %v5206 = vpop.f32.mrb[0].mxu0
    %v5207 = vadd.f32 0.0, %v5206
    %v5208 = vpop.f32.mrb[0].mxu0
    %5209 = vmatprep.mubr.bf16.mxu0 0
    %5210 = vmatmul.mubr.bf16.gmra.mrb[0].mxu0 %v5099
    %v5211 = vpop.f32.mrb[0].mxu0
    %v5212 = vadd.f32 0.0, %v5211
    %v5213 = vpop.f32.mrb[0].mxu0
    %v5214 = vpop.f32.mrb[0].mxu0
    %v5215 = vadd.f32 0.0, %v5214
    %v5216 = vpop.f32.mrb[0].mxu0
    %5217 = vmatprep.mubr.bf16.mxu0 0
    %5218 = vmatmul.mubr.bf16.gmra.mrb[0].mxu0 %v5100
    %v5219 = vpop.f32.mrb[0].mxu0
    %v5220 = vadd.f32 0.0, %v5219
    %v5221 = vpop.f32.mrb[0].mxu0
    %v5222 = vpop.f32.mrb[0].mxu0
    %v5223 = vadd.f32 0.0, %v5222
    %v5224 = vpop.f32.mrb[0].mxu0
    %5225 = vmatprep.mubr.bf16.mxu0 0
    %5226 = vmatmul.mubr.bf16.gmra.mrb[0].mxu0 %v5101
    %v5227 = vpop.f32.mrb[0].mxu0
    %v5228 = vadd.f32 0.0, %v5227
    %v5229 = vpop.f32.mrb[0].mxu0
    %v5230 = vpop.f32.mrb[0].mxu0
    %v5231 = vadd.f32 0.0, %v5230
    %v5232 = vpop.f32.mrb[0].mxu0
    %5233 = vmatprep.mubr.bf16.mxu0 0
    %5234 = vmatmul.mubr.bf16.gmra.mrb[0].mxu0 %v5102
    %v5235 = vpop.f32.mrb[0].mxu0
    %v5236 = vadd.f32 0.0, %v5235
    %v5237 = vpop.f32.mrb[0].mxu0
    %v5238 = vpop.f32.mrb[0].mxu0
    %v5239 = vadd.f32 0.0, %v5238
    %v5240 = vpop.f32.mrb[0].mxu0
    %5241 = vmatprep.mubr.bf16.mxu0 0
    %5242 = vmatmul.mubr.bf16.gmra.mrb[0].mxu0 %v5103
    %v5243 = vpop.f32.mrb[0].mxu0
    %v5244 = vadd.f32 0.0, %v5243
    %v5245 = vpop.f32.mrb[0].mxu0
    %v5246 = vpop.f32.mrb[0].mxu0
    %v5247 = vadd.f32 0.0, %v5246
    %v5248 = vpop.f32.mrb[0].mxu0
    %5249 = vmatprep.mubr.bf16.mxu0 0
    %5250 = vmatmul.mubr.bf16.gmra.mrb[0].mxu0 %v5104
    %v5251 = vpop.f32.mrb[0].mxu0
    %v5252 = vadd.f32 0.0, %v5251
    %v5253 = vpop.f32.mrb[0].mxu0
    %v5254 = vpop.f32.mrb[0].mxu0
    %v5255 = vadd.f32 0.0, %v5254
    %v5256 = vpop.f32.mrb[0].mxu0
    %5257 = vdwg.mxu0
    %v5258 = vadd.f32 %v4842, %v5196
    %v5259 = vadd.f32 %v4845, %v5199
    %v5260 = vadd.f32 %v4850, %v5204
    %v5261 = vadd.f32 %v4853, %v5207
    %v5262 = vadd.f32 %v4858, %v5212
    %v5263 = vadd.f32 %v4861, %v5215
    %v5264 = vadd.f32 %v4866, %v5220
    %v5265 = vadd.f32 %v4869, %v5223
    %v5266 = vadd.f32 %v4874, %v5228
    %v5267 = vadd.f32 %v4877, %v5231
    %v5268 = vadd.f32 %v4882, %v5236
    %v5269 = vadd.f32 %v4885, %v5239
    %v5270 = vadd.f32 %v4890, %v5244
    %v5271 = vadd.f32 %v4893, %v5247
    %v5272 = vadd.f32 %v4898, %v5252
    %v5273 = vadd.f32 %v4901, %v5255
    %v5274 = vld [vmem:[%s392] sm:$0xf]
    %v5275 = vld [vmem:[%s392 + $0x8] sm:$0xf]
    %v5276 = vld [vmem:[%s392 + $0x10] sm:$0xf]
    %v5277 = vld [vmem:[%s392 + $0x18] sm:$0xf]
    %v5278 = vld [vmem:[%s392 + $0x20] sm:$0xf]
    %v5279 = vld [vmem:[%s392 + $0x28] sm:$0xf]
    %v5280 = vld [vmem:[%s392 + $0x30] sm:$0xf]
    %v5281 = vld [vmem:[%s392 + $0x38] sm:$0xf]
    %v5282 = vld [vmem:[%s392 + $0x50] sm:$0xf]
    %v5283 = vld [vmem:[%s392 + $0x58] sm:$0xf]
    %v5284 = vld [vmem:[%s392 + $0x60] sm:$0xf]
    %v5285 = vld [vmem:[%s392 + $0x68] sm:$0xf]
    %v5286 = vld [vmem:[%s392 + $0x70] sm:$0xf]
    %v5287 = vld [vmem:[%s392 + $0x78] sm:$0xf]
    %v5288 = vld [vmem:[%s392 + $0x80] sm:$0xf]
    %v5289 = vld [vmem:[%s392 + $0x88] sm:$0xf]
    %s5290 = scalar_lea.vmem [#allocation8], 192
    %v5291 = vld [vmem:[%s5290] sm:$0xf]
    %v5292 = vld [vmem:[%s5290 + $0x4] sm:$0xf]
    %v5293 = vld [vmem:[%s5290 + $0x8] sm:$0xf]
    %v5294 = vld [vmem:[%s5290 + $0xc] sm:$0xf]
    %v5295 = vld [vmem:[%s5290 + $0x10] sm:$0xf]
    %v5296 = vld [vmem:[%s5290 + $0x14] sm:$0xf]
    %v5297 = vld [vmem:[%s5290 + $0x18] sm:$0xf]
    %v5298 = vld [vmem:[%s5290 + $0x1c] sm:$0xf]
    %v5299 = vld [vmem:[%s5290 + $0x20] sm:$0xf]
    %v5300 = vld [vmem:[%s5290 + $0x24] sm:$0xf]
    %v5301 = vld [vmem:[%s5290 + $0x28] sm:$0xf]
    %v5302 = vld [vmem:[%s5290 + $0x2c] sm:$0xf]
    %v5303 = vld [vmem:[%s5290 + $0x30] sm:$0xf]
    %v5304 = vld [vmem:[%s5290 + $0x34] sm:$0xf]
    %v5305 = vld [vmem:[%s5290 + $0x38] sm:$0xf]
    %v5306 = vld [vmem:[%s5290 + $0x3c] sm:$0xf]
    %v5323 = vunpack.c.l.b16 %v5274
    %v5324 = vunpack.c.l.b16 %v5275
    %v5325 = vunpack.c.l.b16 %v5276
    %v5326 = vunpack.c.l.b16 %v5277
    %v5327 = vunpack.c.l.b16 %v5278
    %v5328 = vunpack.c.l.b16 %v5279
    %v5329 = vunpack.c.l.b16 %v5280
    %v5330 = vunpack.c.l.b16 %v5281
    %v5331 = vunpack.c.l.b16 %v5282
    %v5332 = vunpack.c.l.b16 %v5283
    %v5333 = vunpack.c.l.b16 %v5284
    %v5334 = vunpack.c.l.b16 %v5285
    %v5335 = vunpack.c.l.b16 %v5286
    %v5336 = vunpack.c.l.b16 %v5287
    %v5337 = vunpack.c.l.b16 %v5288
    %v5338 = vunpack.c.l.b16 %v5289
    %v5339 = vpack.c.b16 %v5324, %v5323
    %v5340 = vpack.c.b16 %v5326, %v5325
    %v5341 = vpack.c.b16 %v5328, %v5327
    %v5342 = vpack.c.b16 %v5330, %v5329
    %v5343 = vpack.c.b16 %v5332, %v5331
    %v5344 = vpack.c.b16 %v5334, %v5333
    %v5345 = vpack.c.b16 %v5336, %v5335
    %v5346 = vpack.c.b16 %v5338, %v5337
    %v5371 = vunpack.c.l.b16 %v5291
    %v5372 = vunpack.c.l.b16 %v5292
    %v5373 = vunpack.c.l.b16 %v5293
    %v5374 = vunpack.c.l.b16 %v5294
    %v5375 = vunpack.c.l.b16 %v5295
    %v5376 = vunpack.c.l.b16 %v5296
    %v5377 = vunpack.c.l.b16 %v5297
    %v5378 = vunpack.c.l.b16 %v5298
    %v5379 = vunpack.c.l.b16 %v5299
    %v5380 = vunpack.c.l.b16 %v5300
    %v5381 = vunpack.c.l.b16 %v5301
    %v5382 = vunpack.c.l.b16 %v5302
    %v5383 = vunpack.c.l.b16 %v5303
    %v5384 = vunpack.c.l.b16 %v5304
    %v5385 = vunpack.c.l.b16 %v5305
    %v5386 = vunpack.c.l.b16 %v5306
    %v5387 = vpack.c.b16 %v5372, %v5371
    %v5388 = vpack.c.b16 %v5374, %v5373
    %v5389 = vpack.c.b16 %v5376, %v5375
    %v5390 = vpack.c.b16 %v5378, %v5377
    %v5391 = vpack.c.b16 %v5380, %v5379
    %v5392 = vpack.c.b16 %v5382, %v5381
    %v5393 = vpack.c.b16 %v5384, %v5383
    %v5394 = vpack.c.b16 %v5386, %v5385
    %5403 = vmatprep.subr.bf16.mxu0 0
    %5404 = vmatpush1.bf16.msra.mxu0 %v5387
    %5405 = vmatprep.subr.bf16.mxu0 0
    %5406 = vmatpush1.bf16.msra.mxu0 %v5388
    %5407 = vmatprep.subr.bf16.mxu0 0
    %5408 = vmatpush1.bf16.msra.mxu0 %v5389
    %5409 = vmatprep.subr.bf16.mxu0 0
    %5410 = vmatpush1.bf16.msra.mxu0 %v5390
    %5411 = vmatprep.subr.bf16.mxu0 0
    %5412 = vmatpush1.bf16.msra.mxu0 %v5391
    %5413 = vmatprep.subr.bf16.mxu0 0
    %5414 = vmatpush1.bf16.msra.mxu0 %v5392
    %5415 = vmatprep.subr.bf16.mxu0 0
    %5416 = vmatpush1.bf16.msra.mxu0 %v5393
    %5417 = vmatprep.subr.bf16.mxu0 0
    %5418 = vmatpush1.bf16.msra.mxu0 %v5394
    %5419 = vmatprep.subr.bf16.mxu0 0
    %5420 = vmatpush1.bf16.msra.mxu0 0
    %5421 = vmatprep.subr.bf16.mxu0 0
    %5422 = vmatpush1.bf16.msra.mxu0 0
    %5423 = vmatprep.subr.bf16.mxu0 0
    %5424 = vmatpush1.bf16.msra.mxu0 0
    %5425 = vmatprep.subr.bf16.mxu0 0
    %5426 = vmatpush1.bf16.msra.mxu0 0
    %5427 = vmatprep.subr.bf16.mxu0 0
    %5428 = vmatpush1.bf16.msra.mxu0 0
    %5429 = vmatprep.subr.bf16.mxu0 0
    %5430 = vmatpush1.bf16.msra.mxu0 0
    %5431 = vmatprep.subr.bf16.mxu0 0
    %5432 = vmatpush1.bf16.msra.mxu0 0
    %5433 = vmatprep.subr.bf16.mxu0 0
    %5434 = vmatpush1.bf16.msra.mxu0 0
    %5435 = vmatprep.mubr.bf16.mxu0 0
    %5436 = vmatmul.mubr.bf16.gmra.mrb[0].mxu0 %v5339
    %v5437 = vpop.f32.mrb[0].mxu0
    %v5438 = vadd.f32 0.0, %v5437
    %v5439 = vpop.f32.mrb[0].mxu0
    %v5440 = vpop.f32.mrb[0].mxu0
    %v5441 = vadd.f32 0.0, %v5440
    %v5442 = vpop.f32.mrb[0].mxu0
    %5443 = vmatprep.mubr.bf16.mxu0 0
    %5444 = vmatmul.mubr.bf16.gmra.mrb[0].mxu0 %v5340
    %v5445 = vpop.f32.mrb[0].mxu0
    %v5446 = vadd.f32 0.0, %v5445
    %v5447 = vpop.f32.mrb[0].mxu0
    %v5448 = vpop.f32.mrb[0].mxu0
    %v5449 = vadd.f32 0.0, %v5448
    %v5450 = vpop.f32.mrb[0].mxu0
    %5451 = vmatprep.mubr.bf16.mxu0 0
    %5452 = vmatmul.mubr.bf16.gmra.mrb[0].mxu0 %v5341
    %v5453 = vpop.f32.mrb[0].mxu0
    %v5454 = vadd.f32 0.0, %v5453
    %v5455 = vpop.f32.mrb[0].mxu0
    %v5456 = vpop.f32.mrb[0].mxu0
    %v5457 = vadd.f32 0.0, %v5456
    %v5458 = vpop.f32.mrb[0].mxu0
    %5459 = vmatprep.mubr.bf16.mxu0 0
    %5460 = vmatmul.mubr.bf16.gmra.mrb[0].mxu0 %v5342
    %v5461 = vpop.f32.mrb[0].mxu0
    %v5462 = vadd.f32 0.0, %v5461
    %v5463 = vpop.f32.mrb[0].mxu0
    %v5464 = vpop.f32.mrb[0].mxu0
    %v5465 = vadd.f32 0.0, %v5464
    %v5466 = vpop.f32.mrb[0].mxu0
    %5467 = vmatprep.mubr.bf16.mxu0 0
    %5468 = vmatmul.mubr.bf16.gmra.mrb[0].mxu0 %v5343
    %v5469 = vpop.f32.mrb[0].mxu0
    %v5470 = vadd.f32 0.0, %v5469
    %v5471 = vpop.f32.mrb[0].mxu0
    %v5472 = vpop.f32.mrb[0].mxu0
    %v5473 = vadd.f32 0.0, %v5472
    %v5474 = vpop.f32.mrb[0].mxu0
    %5475 = vmatprep.mubr.bf16.mxu0 0
    %5476 = vmatmul.mubr.bf16.gmra.mrb[0].mxu0 %v5344
    %v5477 = vpop.f32.mrb[0].mxu0
    %v5478 = vadd.f32 0.0, %v5477
    %v5479 = vpop.f32.mrb[0].mxu0
    %v5480 = vpop.f32.mrb[0].mxu0
    %v5481 = vadd.f32 0.0, %v5480
    %v5482 = vpop.f32.mrb[0].mxu0
    %5483 = vmatprep.mubr.bf16.mxu0 0
    %5484 = vmatmul.mubr.bf16.gmra.mrb[0].mxu0 %v5345
    %v5485 = vpop.f32.mrb[0].mxu0
    %v5486 = vadd.f32 0.0, %v5485
    %v5487 = vpop.f32.mrb[0].mxu0
    %v5488 = vpop.f32.mrb[0].mxu0
    %v5489 = vadd.f32 0.0, %v5488
    %v5490 = vpop.f32.mrb[0].mxu0
    %5491 = vmatprep.mubr.bf16.mxu0 0
    %5492 = vmatmul.mubr.bf16.gmra.mrb[0].mxu0 %v5346
    %v5493 = vpop.f32.mrb[0].mxu0
    %v5494 = vadd.f32 0.0, %v5493
    %v5495 = vpop.f32.mrb[0].mxu0
    %v5496 = vpop.f32.mrb[0].mxu0
    %v5497 = vadd.f32 0.0, %v5496
    %v5498 = vpop.f32.mrb[0].mxu0
    %5499 = vdwg.mxu0
    %v5500 = vadd.f32 %v5258, %v5438
    %v5501 = vadd.f32 %v5259, %v5441
    %v5502 = vadd.f32 %v5260, %v5446
    %v5503 = vadd.f32 %v5261, %v5449
    %v5504 = vadd.f32 %v5262, %v5454
    %v5505 = vadd.f32 %v5263, %v5457
    %v5506 = vadd.f32 %v5264, %v5462
    %v5507 = vadd.f32 %v5265, %v5465
    %v5508 = vadd.f32 %v5266, %v5470
    %v5509 = vadd.f32 %v5267, %v5473
    %v5510 = vadd.f32 %v5268, %v5478
    %v5511 = vadd.f32 %v5269, %v5481
    %v5512 = vadd.f32 %v5270, %v5486
    %v5513 = vadd.f32 %v5271, %v5489
    %v5514 = vadd.f32 %v5272, %v5494
    %v5515 = vadd.f32 %v5273, %v5497
    %v5516 = vld [vmem:[%s392] sm:$0x1f]
    %v5517 = vld [vmem:[%s392 + $0x8] sm:$0x1f]
    %v5518 = vld [vmem:[%s392 + $0x10] sm:$0x1f]
    %v5519 = vld [vmem:[%s392 + $0x18] sm:$0x1f]
    %v5520 = vld [vmem:[%s392 + $0x20] sm:$0x1f]
    %v5521 = vld [vmem:[%s392 + $0x28] sm:$0x1f]
    %v5522 = vld [vmem:[%s392 + $0x30] sm:$0x1f]
    %v5523 = vld [vmem:[%s392 + $0x38] sm:$0x1f]
    %v5524 = vld [vmem:[%s392 + $0x50] sm:$0x1f]
    %v5525 = vld [vmem:[%s392 + $0x58] sm:$0x1f]
    %v5526 = vld [vmem:[%s392 + $0x60] sm:$0x1f]
    %v5527 = vld [vmem:[%s392 + $0x68] sm:$0x1f]
    %v5528 = vld [vmem:[%s392 + $0x70] sm:$0x1f]
    %v5529 = vld [vmem:[%s392 + $0x78] sm:$0x1f]
    %v5530 = vld [vmem:[%s392 + $0x80] sm:$0x1f]
    %v5531 = vld [vmem:[%s392 + $0x88] sm:$0x1f]
    %v5548 = vunpack.c.l.b16 %v5516
    %v5549 = vunpack.c.h.b16 %v5516
    %v5550 = vunpack.c.l.b16 %v5517
    %v5551 = vunpack.c.h.b16 %v5517
    %v5552 = vunpack.c.l.b16 %v5518
    %v5553 = vunpack.c.h.b16 %v5518
    %v5554 = vunpack.c.l.b16 %v5519
    %v5555 = vunpack.c.h.b16 %v5519
    %v5556 = vunpack.c.l.b16 %v5520
    %v5557 = vunpack.c.h.b16 %v5520
    %v5558 = vunpack.c.l.b16 %v5521
    %v5559 = vunpack.c.h.b16 %v5521
    %v5560 = vunpack.c.l.b16 %v5522
    %v5561 = vunpack.c.h.b16 %v5522
    %v5562 = vunpack.c.l.b16 %v5523
    %v5563 = vunpack.c.h.b16 %v5523
    %v5564 = vunpack.c.l.b16 %v5524
    %v5565 = vunpack.c.h.b16 %v5524
    %v5566 = vunpack.c.l.b16 %v5525
    %v5567 = vunpack.c.h.b16 %v5525
    %v5568 = vunpack.c.l.b16 %v5526
    %v5569 = vunpack.c.h.b16 %v5526
    %v5570 = vunpack.c.l.b16 %v5527
    %v5571 = vunpack.c.h.b16 %v5527
    %v5572 = vunpack.c.l.b16 %v5528
    %v5573 = vunpack.c.h.b16 %v5528
    %v5574 = vunpack.c.l.b16 %v5529
    %v5575 = vunpack.c.h.b16 %v5529
    %v5576 = vunpack.c.l.b16 %v5530
    %v5577 = vunpack.c.h.b16 %v5530
    %v5578 = vunpack.c.l.b16 %v5531
    %v5579 = vunpack.c.h.b16 %v5531
    %v5580 = vpack.c.b16 %v5548, %v5548
    %v5581 = vpack.c.b16 %v5549, %v5549
    %v5582 = vpack.c.b16 %v5550, %v5550
    %v5583 = vpack.c.b16 %v5551, %v5551
    %v5584 = vpack.c.b16 %v5552, %v5552
    %v5585 = vpack.c.b16 %v5553, %v5553
    %v5586 = vpack.c.b16 %v5554, %v5554
    %v5587 = vpack.c.b16 %v5555, %v5555
    %v5588 = vpack.c.b16 %v5556, %v5556
    %v5589 = vpack.c.b16 %v5557, %v5557
    %v5590 = vpack.c.b16 %v5558, %v5558
    %v5591 = vpack.c.b16 %v5559, %v5559
    %v5592 = vpack.c.b16 %v5560, %v5560
    %v5593 = vpack.c.b16 %v5561, %v5561
    %v5594 = vpack.c.b16 %v5562, %v5562
    %v5595 = vpack.c.b16 %v5563, %v5563
    %v5596 = vpack.c.b16 %v5564, %v5564
    %v5597 = vpack.c.b16 %v5565, %v5565
    %v5598 = vpack.c.b16 %v5566, %v5566
    %v5599 = vpack.c.b16 %v5567, %v5567
    %v5600 = vpack.c.b16 %v5568, %v5568
    %v5601 = vpack.c.b16 %v5569, %v5569
    %v5602 = vpack.c.b16 %v5570, %v5570
    %v5603 = vpack.c.b16 %v5571, %v5571
    %v5604 = vpack.c.b16 %v5572, %v5572
    %v5605 = vpack.c.b16 %v5573, %v5573
    %v5606 = vpack.c.b16 %v5574, %v5574
    %v5607 = vpack.c.b16 %v5575, %v5575
    %v5608 = vpack.c.b16 %v5576, %v5576
    %v5609 = vpack.c.b16 %v5577, %v5577
    %v5610 = vpack.c.b16 %v5578, %v5578
    %v5611 = vpack.c.b16 %v5579, %v5579
    %v5613 = vshrl.u32 %v5580, 16
    %v5615 = vrot.slane %v5613, 4
    %v5616 = vshll.u32 %v5580, 16
    %v5618 = vrot.slane %v5616, 5
    %v5619 = vor.u32 %v5615, %v5618
    %v5620 = vrot.slane %v5619, 4
    %v5622 = vshll.u32 %v5581, 16
    %v5624 = vrot.slane %v5622, 5
    %v5625 = vsel %vm574, %v5620, %v5624
    %v5627 = vshrl.u32 %v5582, 16
    %v5629 = vrot.slane %v5627, 4
    %v5630 = vshll.u32 %v5582, 16
    %v5632 = vrot.slane %v5630, 5
    %v5633 = vor.u32 %v5629, %v5632
    %v5634 = vrot.slane %v5633, 4
    %v5636 = vshll.u32 %v5583, 16
    %v5638 = vrot.slane %v5636, 5
    %v5639 = vsel %vm574, %v5634, %v5638
    %v5641 = vshrl.u32 %v5584, 16
    %v5643 = vrot.slane %v5641, 4
    %v5644 = vshll.u32 %v5584, 16
    %v5646 = vrot.slane %v5644, 5
    %v5647 = vor.u32 %v5643, %v5646
    %v5648 = vrot.slane %v5647, 4
    %v5650 = vshll.u32 %v5585, 16
    %v5652 = vrot.slane %v5650, 5
    %v5653 = vsel %vm574, %v5648, %v5652
    %v5655 = vshrl.u32 %v5586, 16
    %v5657 = vrot.slane %v5655, 4
    %v5658 = vshll.u32 %v5586, 16
    %v5660 = vrot.slane %v5658, 5
    %v5661 = vor.u32 %v5657, %v5660
    %v5662 = vrot.slane %v5661, 4
    %v5664 = vshll.u32 %v5587, 16
    %v5666 = vrot.slane %v5664, 5
    %v5667 = vsel %vm574, %v5662, %v5666
    %v5669 = vshrl.u32 %v5588, 16
    %v5671 = vrot.slane %v5669, 4
    %v5672 = vshll.u32 %v5588, 16
    %v5674 = vrot.slane %v5672, 5
    %v5675 = vor.u32 %v5671, %v5674
    %v5676 = vrot.slane %v5675, 4
    %v5678 = vshll.u32 %v5589, 16
    %v5680 = vrot.slane %v5678, 5
    %v5681 = vsel %vm574, %v5676, %v5680
    %v5683 = vshrl.u32 %v5590, 16
    %v5685 = vrot.slane %v5683, 4
    %v5686 = vshll.u32 %v5590, 16
    %v5688 = vrot.slane %v5686, 5
    %v5689 = vor.u32 %v5685, %v5688
    %v5690 = vrot.slane %v5689, 4
    %v5692 = vshll.u32 %v5591, 16
    %v5694 = vrot.slane %v5692, 5
    %v5695 = vsel %vm574, %v5690, %v5694
    %v5697 = vshrl.u32 %v5592, 16
    %v5699 = vrot.slane %v5697, 4
    %v5700 = vshll.u32 %v5592, 16
    %v5702 = vrot.slane %v5700, 5
    %v5703 = vor.u32 %v5699, %v5702
    %v5704 = vrot.slane %v5703, 4
    %v5706 = vshll.u32 %v5593, 16
    %v5708 = vrot.slane %v5706, 5
    %v5709 = vsel %vm574, %v5704, %v5708
    %v5711 = vshrl.u32 %v5594, 16
    %v5713 = vrot.slane %v5711, 4
    %v5714 = vshll.u32 %v5594, 16
    %v5716 = vrot.slane %v5714, 5
    %v5717 = vor.u32 %v5713, %v5716
    %v5718 = vrot.slane %v5717, 4
    %v5720 = vshll.u32 %v5595, 16
    %v5722 = vrot.slane %v5720, 5
    %v5723 = vsel %vm574, %v5718, %v5722
    %v5725 = vshrl.u32 %v5596, 16
    %v5727 = vrot.slane %v5725, 4
    %v5728 = vshll.u32 %v5596, 16
    %v5730 = vrot.slane %v5728, 5
    %v5731 = vor.u32 %v5727, %v5730
    %v5732 = vrot.slane %v5731, 4
    %v5734 = vshll.u32 %v5597, 16
    %v5736 = vrot.slane %v5734, 5
    %v5737 = vsel %vm574, %v5732, %v5736
    %v5739 = vshrl.u32 %v5598, 16
    %v5741 = vrot.slane %v5739, 4
    %v5742 = vshll.u32 %v5598, 16
    %v5744 = vrot.slane %v5742, 5
    %v5745 = vor.u32 %v5741, %v5744
    %v5746 = vrot.slane %v5745, 4
    %v5748 = vshll.u32 %v5599, 16
    %v5750 = vrot.slane %v5748, 5
    %v5751 = vsel %vm574, %v5746, %v5750
    %v5753 = vshrl.u32 %v5600, 16
    %v5755 = vrot.slane %v5753, 4
    %v5756 = vshll.u32 %v5600, 16
    %v5758 = vrot.slane %v5756, 5
    %v5759 = vor.u32 %v5755, %v5758
    %v5760 = vrot.slane %v5759, 4
    %v5762 = vshll.u32 %v5601, 16
    %v5764 = vrot.slane %v5762, 5
    %v5765 = vsel %vm574, %v5760, %v5764
    %v5767 = vshrl.u32 %v5602, 16
    %v5769 = vrot.slane %v5767, 4
    %v5770 = vshll.u32 %v5602, 16
    %v5772 = vrot.slane %v5770, 5
    %v5773 = vor.u32 %v5769, %v5772
    %v5774 = vrot.slane %v5773, 4
    %v5776 = vshll.u32 %v5603, 16
    %v5778 = vrot.slane %v5776, 5
    %v5779 = vsel %vm574, %v5774, %v5778
    %v5781 = vshrl.u32 %v5604, 16
    %v5783 = vrot.slane %v5781, 4
    %v5784 = vshll.u32 %v5604, 16
    %v5786 = vrot.slane %v5784, 5
    %v5787 = vor.u32 %v5783, %v5786
    %v5788 = vrot.slane %v5787, 4
    %v5790 = vshll.u32 %v5605, 16
    %v5792 = vrot.slane %v5790, 5
    %v5793 = vsel %vm574, %v5788, %v5792
    %v5795 = vshrl.u32 %v5606, 16
    %v5797 = vrot.slane %v5795, 4
    %v5798 = vshll.u32 %v5606, 16
    %v5800 = vrot.slane %v5798, 5
    %v5801 = vor.u32 %v5797, %v5800
    %v5802 = vrot.slane %v5801, 4
    %v5804 = vshll.u32 %v5607, 16
    %v5806 = vrot.slane %v5804, 5
    %v5807 = vsel %vm574, %v5802, %v5806
    %v5809 = vshrl.u32 %v5608, 16
    %v5811 = vrot.slane %v5809, 4
    %v5812 = vshll.u32 %v5608, 16
    %v5814 = vrot.slane %v5812, 5
    %v5815 = vor.u32 %v5811, %v5814
    %v5816 = vrot.slane %v5815, 4
    %v5818 = vshll.u32 %v5609, 16
    %v5820 = vrot.slane %v5818, 5
    %v5821 = vsel %vm574, %v5816, %v5820
    %v5823 = vshrl.u32 %v5610, 16
    %v5825 = vrot.slane %v5823, 4
    %v5826 = vshll.u32 %v5610, 16
    %v5828 = vrot.slane %v5826, 5
    %v5829 = vor.u32 %v5825, %v5828
    %v5830 = vrot.slane %v5829, 4
    %v5832 = vshll.u32 %v5611, 16
    %v5834 = vrot.slane %v5832, 5
    %v5835 = vsel %vm574, %v5830, %v5834
    %s5836 = scalar_lea.vmem [#allocation8], 256
    %v5837 = vld [vmem:[%s5836] sm:$0xf]
    %v5838 = vld [vmem:[%s5836 + $0x4] sm:$0xf]
    %v5839 = vld [vmem:[%s5836 + $0x8] sm:$0xf]
    %v5840 = vld [vmem:[%s5836 + $0xc] sm:$0xf]
    %v5841 = vld [vmem:[%s5836 + $0x10] sm:$0xf]
    %v5842 = vld [vmem:[%s5836 + $0x14] sm:$0xf]
    %v5843 = vld [vmem:[%s5836 + $0x18] sm:$0xf]
    %v5844 = vld [vmem:[%s5836 + $0x1c] sm:$0xf]
    %v5845 = vld [vmem:[%s5836 + $0x20] sm:$0xf]
    %v5846 = vld [vmem:[%s5836 + $0x24] sm:$0xf]
    %v5847 = vld [vmem:[%s5836 + $0x28] sm:$0xf]
    %v5848 = vld [vmem:[%s5836 + $0x2c] sm:$0xf]
    %v5849 = vld [vmem:[%s5836 + $0x30] sm:$0xf]
    %v5850 = vld [vmem:[%s5836 + $0x34] sm:$0xf]
    %v5851 = vld [vmem:[%s5836 + $0x38] sm:$0xf]
    %v5852 = vld [vmem:[%s5836 + $0x3c] sm:$0xf]
    %v5853 = vunpack.c.l.b16 %v5625
    %v5854 = vunpack.c.l.b16 %v5639
    %v5855 = vunpack.c.l.b16 %v5653
    %v5856 = vunpack.c.l.b16 %v5667
    %v5857 = vunpack.c.l.b16 %v5681
    %v5858 = vunpack.c.l.b16 %v5695
    %v5859 = vunpack.c.l.b16 %v5709
    %v5860 = vunpack.c.l.b16 %v5723
    %v5861 = vunpack.c.l.b16 %v5737
    %v5862 = vunpack.c.l.b16 %v5751
    %v5863 = vunpack.c.l.b16 %v5765
    %v5864 = vunpack.c.l.b16 %v5779
    %v5865 = vunpack.c.l.b16 %v5793
    %v5866 = vunpack.c.l.b16 %v5807
    %v5867 = vunpack.c.l.b16 %v5821
    %v5868 = vunpack.c.l.b16 %v5835
    %v5869 = vpack.c.b16 %v5854, %v5853
    %v5870 = vpack.c.b16 %v5856, %v5855
    %v5871 = vpack.c.b16 %v5858, %v5857
    %v5872 = vpack.c.b16 %v5860, %v5859
    %v5873 = vpack.c.b16 %v5862, %v5861
    %v5874 = vpack.c.b16 %v5864, %v5863
    %v5875 = vpack.c.b16 %v5866, %v5865
    %v5876 = vpack.c.b16 %v5868, %v5867
    %v5901 = vunpack.c.l.b16 %v5837
    %v5902 = vunpack.c.l.b16 %v5838
    %v5903 = vunpack.c.l.b16 %v5839
    %v5904 = vunpack.c.l.b16 %v5840
    %v5905 = vunpack.c.l.b16 %v5841
    %v5906 = vunpack.c.l.b16 %v5842
    %v5907 = vunpack.c.l.b16 %v5843
    %v5908 = vunpack.c.l.b16 %v5844
    %v5909 = vunpack.c.l.b16 %v5845
    %v5910 = vunpack.c.l.b16 %v5846
    %v5911 = vunpack.c.l.b16 %v5847
    %v5912 = vunpack.c.l.b16 %v5848
    %v5913 = vunpack.c.l.b16 %v5849
    %v5914 = vunpack.c.l.b16 %v5850
    %v5915 = vunpack.c.l.b16 %v5851
    %v5916 = vunpack.c.l.b16 %v5852
    %v5917 = vpack.c.b16 %v5902, %v5901
    %v5918 = vpack.c.b16 %v5904, %v5903
    %v5919 = vpack.c.b16 %v5906, %v5905
    %v5920 = vpack.c.b16 %v5908, %v5907
    %v5921 = vpack.c.b16 %v5910, %v5909
    %v5922 = vpack.c.b16 %v5912, %v5911
    %v5923 = vpack.c.b16 %v5914, %v5913
    %v5924 = vpack.c.b16 %v5916, %v5915
    %5933 = vmatprep.subr.bf16.mxu0 0
    %5934 = vmatpush1.bf16.msra.mxu0 %v5917
    %5935 = vmatprep.subr.bf16.mxu0 0
    %5936 = vmatpush1.bf16.msra.mxu0 %v5918
    %5937 = vmatprep.subr.bf16.mxu0 0
    %5938 = vmatpush1.bf16.msra.mxu0 %v5919
    %5939 = vmatprep.subr.bf16.mxu0 0
    %5940 = vmatpush1.bf16.msra.mxu0 %v5920
    %5941 = vmatprep.subr.bf16.mxu0 0
    %5942 = vmatpush1.bf16.msra.mxu0 %v5921
    %5943 = vmatprep.subr.bf16.mxu0 0
    %5944 = vmatpush1.bf16.msra.mxu0 %v5922
    %5945 = vmatprep.subr.bf16.mxu0 0
    %5946 = vmatpush1.bf16.msra.mxu0 %v5923
    %5947 = vmatprep.subr.bf16.mxu0 0
    %5948 = vmatpush1.bf16.msra.mxu0 %v5924
    %5949 = vmatprep.subr.bf16.mxu0 0
    %5950 = vmatpush1.bf16.msra.mxu0 0
    %5951 = vmatprep.subr.bf16.mxu0 0
    %5952 = vmatpush1.bf16.msra.mxu0 0
    %5953 = vmatprep.subr.bf16.mxu0 0
    %5954 = vmatpush1.bf16.msra.mxu0 0
    %5955 = vmatprep.subr.bf16.mxu0 0
    %5956 = vmatpush1.bf16.msra.mxu0 0
    %5957 = vmatprep.subr.bf16.mxu0 0
    %5958 = vmatpush1.bf16.msra.mxu0 0
    %5959 = vmatprep.subr.bf16.mxu0 0
    %5960 = vmatpush1.bf16.msra.mxu0 0
    %5961 = vmatprep.subr.bf16.mxu0 0
    %5962 = vmatpush1.bf16.msra.mxu0 0
    %5963 = vmatprep.subr.bf16.mxu0 0
    %5964 = vmatpush1.bf16.msra.mxu0 0
    %5965 = vmatprep.mubr.bf16.mxu0 0
    %5966 = vmatmul.mubr.bf16.gmra.mrb[0].mxu0 %v5869
    %v5967 = vpop.f32.mrb[0].mxu0
    %v5968 = vadd.f32 0.0, %v5967
    %v5969 = vpop.f32.mrb[0].mxu0
    %v5970 = vpop.f32.mrb[0].mxu0
    %v5971 = vadd.f32 0.0, %v5970
    %v5972 = vpop.f32.mrb[0].mxu0
    %5973 = vmatprep.mubr.bf16.mxu0 0
    %5974 = vmatmul.mubr.bf16.gmra.mrb[0].mxu0 %v5870
    %v5975 = vpop.f32.mrb[0].mxu0
    %v5976 = vadd.f32 0.0, %v5975
    %v5977 = vpop.f32.mrb[0].mxu0
    %v5978 = vpop.f32.mrb[0].mxu0
    %v5979 = vadd.f32 0.0, %v5978
    %v5980 = vpop.f32.mrb[0].mxu0
    %5981 = vmatprep.mubr.bf16.mxu0 0
    %5982 = vmatmul.mubr.bf16.gmra.mrb[0].mxu0 %v5871
    %v5983 = vpop.f32.mrb[0].mxu0
    %v5984 = vadd.f32 0.0, %v5983
    %v5985 = vpop.f32.mrb[0].mxu0
    %v5986 = vpop.f32.mrb[0].mxu0
    %v5987 = vadd.f32 0.0, %v5986
    %v5988 = vpop.f32.mrb[0].mxu0
    %5989 = vmatprep.mubr.bf16.mxu0 0
    %5990 = vmatmul.mubr.bf16.gmra.mrb[0].mxu0 %v5872
    %v5991 = vpop.f32.mrb[0].mxu0
    %v5992 = vadd.f32 0.0, %v5991
    %v5993 = vpop.f32.mrb[0].mxu0
    %v5994 = vpop.f32.mrb[0].mxu0
    %v5995 = vadd.f32 0.0, %v5994
    %v5996 = vpop.f32.mrb[0].mxu0
    %5997 = vmatprep.mubr.bf16.mxu0 0
    %5998 = vmatmul.mubr.bf16.gmra.mrb[0].mxu0 %v5873
    %v5999 = vpop.f32.mrb[0].mxu0
    %v6000 = vadd.f32 0.0, %v5999
    %v6001 = vpop.f32.mrb[0].mxu0
    %v6002 = vpop.f32.mrb[0].mxu0
    %v6003 = vadd.f32 0.0, %v6002
    %v6004 = vpop.f32.mrb[0].mxu0
    %6005 = vmatprep.mubr.bf16.mxu0 0
    %6006 = vmatmul.mubr.bf16.gmra.mrb[0].mxu0 %v5874
    %v6007 = vpop.f32.mrb[0].mxu0
    %v6008 = vadd.f32 0.0, %v6007
    %v6009 = vpop.f32.mrb[0].mxu0
    %v6010 = vpop.f32.mrb[0].mxu0
    %v6011 = vadd.f32 0.0, %v6010
    %v6012 = vpop.f32.mrb[0].mxu0
    %6013 = vmatprep.mubr.bf16.mxu0 0
    %6014 = vmatmul.mubr.bf16.gmra.mrb[0].mxu0 %v5875
    %v6015 = vpop.f32.mrb[0].mxu0
    %v6016 = vadd.f32 0.0, %v6015
    %v6017 = vpop.f32.mrb[0].mxu0
    %v6018 = vpop.f32.mrb[0].mxu0
    %v6019 = vadd.f32 0.0, %v6018
    %v6020 = vpop.f32.mrb[0].mxu0
    %6021 = vmatprep.mubr.bf16.mxu0 0
    %6022 = vmatmul.mubr.bf16.gmra.mrb[0].mxu0 %v5876
    %v6023 = vpop.f32.mrb[0].mxu0
    %v6024 = vadd.f32 0.0, %v6023
    %v6025 = vpop.f32.mrb[0].mxu0
    %v6026 = vpop.f32.mrb[0].mxu0
    %v6027 = vadd.f32 0.0, %v6026
    %v6028 = vpop.f32.mrb[0].mxu0
    %6029 = vdwg.mxu0
    %v6030 = vadd.f32 %v5500, %v5968
    %v6031 = vadd.f32 %v5501, %v5971
    %v6032 = vadd.f32 %v5502, %v5976
    %v6033 = vadd.f32 %v5503, %v5979
    %v6034 = vadd.f32 %v5504, %v5984
    %v6035 = vadd.f32 %v5505, %v5987
    %v6036 = vadd.f32 %v5506, %v5992
    %v6037 = vadd.f32 %v5507, %v5995
    %v6038 = vadd.f32 %v5508, %v6000
    %v6039 = vadd.f32 %v5509, %v6003
    %v6040 = vadd.f32 %v5510, %v6008
    %v6041 = vadd.f32 %v5511, %v6011
    %v6042 = vadd.f32 %v5512, %v6016
    %v6043 = vadd.f32 %v5513, %v6019
    %v6044 = vadd.f32 %v5514, %v6024
    %v6045 = vadd.f32 %v5515, %v6027
    %v6046 = vld [vmem:[%s392] sm:$0x1e]
    %v6047 = vld [vmem:[%s392 + $0x8] sm:$0x1e]
    %v6048 = vld [vmem:[%s392 + $0x10] sm:$0x1e]
    %v6049 = vld [vmem:[%s392 + $0x18] sm:$0x1e]
    %v6050 = vld [vmem:[%s392 + $0x20] sm:$0x1e]
    %v6051 = vld [vmem:[%s392 + $0x28] sm:$0x1e]
    %v6052 = vld [vmem:[%s392 + $0x30] sm:$0x1e]
    %v6053 = vld [vmem:[%s392 + $0x38] sm:$0x1e]
    %v6054 = vld [vmem:[%s392 + $0x50] sm:$0x1e]
    %v6055 = vld [vmem:[%s392 + $0x58] sm:$0x1e]
    %v6056 = vld [vmem:[%s392 + $0x60] sm:$0x1e]
    %v6057 = vld [vmem:[%s392 + $0x68] sm:$0x1e]
    %v6058 = vld [vmem:[%s392 + $0x70] sm:$0x1e]
    %v6059 = vld [vmem:[%s392 + $0x78] sm:$0x1e]
    %v6060 = vld [vmem:[%s392 + $0x80] sm:$0x1e]
    %v6061 = vld [vmem:[%s392 + $0x88] sm:$0x1e]
    %v6078 = vunpack.c.l.b16 %v6046
    %v6079 = vunpack.c.h.b16 %v6046
    %v6080 = vunpack.c.l.b16 %v6047
    %v6081 = vunpack.c.h.b16 %v6047
    %v6082 = vunpack.c.l.b16 %v6048
    %v6083 = vunpack.c.h.b16 %v6048
    %v6084 = vunpack.c.l.b16 %v6049
    %v6085 = vunpack.c.h.b16 %v6049
    %v6086 = vunpack.c.l.b16 %v6050
    %v6087 = vunpack.c.h.b16 %v6050
    %v6088 = vunpack.c.l.b16 %v6051
    %v6089 = vunpack.c.h.b16 %v6051
    %v6090 = vunpack.c.l.b16 %v6052
    %v6091 = vunpack.c.h.b16 %v6052
    %v6092 = vunpack.c.l.b16 %v6053
    %v6093 = vunpack.c.h.b16 %v6053
    %v6094 = vunpack.c.l.b16 %v6054
    %v6095 = vunpack.c.h.b16 %v6054
    %v6096 = vunpack.c.l.b16 %v6055
    %v6097 = vunpack.c.h.b16 %v6055
    %v6098 = vunpack.c.l.b16 %v6056
    %v6099 = vunpack.c.h.b16 %v6056
    %v6100 = vunpack.c.l.b16 %v6057
    %v6101 = vunpack.c.h.b16 %v6057
    %v6102 = vunpack.c.l.b16 %v6058
    %v6103 = vunpack.c.h.b16 %v6058
    %v6104 = vunpack.c.l.b16 %v6059
    %v6105 = vunpack.c.h.b16 %v6059
    %v6106 = vunpack.c.l.b16 %v6060
    %v6107 = vunpack.c.h.b16 %v6060
    %v6108 = vunpack.c.l.b16 %v6061
    %v6109 = vunpack.c.h.b16 %v6061
    %v6110 = vpack.c.b16 %v6078, %v6078
    %v6111 = vpack.c.b16 %v6079, %v6079
    %v6112 = vpack.c.b16 %v6080, %v6080
    %v6113 = vpack.c.b16 %v6081, %v6081
    %v6114 = vpack.c.b16 %v6082, %v6082
    %v6115 = vpack.c.b16 %v6083, %v6083
    %v6116 = vpack.c.b16 %v6084, %v6084
    %v6117 = vpack.c.b16 %v6085, %v6085
    %v6118 = vpack.c.b16 %v6086, %v6086
    %v6119 = vpack.c.b16 %v6087, %v6087
    %v6120 = vpack.c.b16 %v6088, %v6088
    %v6121 = vpack.c.b16 %v6089, %v6089
    %v6122 = vpack.c.b16 %v6090, %v6090
    %v6123 = vpack.c.b16 %v6091, %v6091
    %v6124 = vpack.c.b16 %v6092, %v6092
    %v6125 = vpack.c.b16 %v6093, %v6093
    %v6126 = vpack.c.b16 %v6094, %v6094
    %v6127 = vpack.c.b16 %v6095, %v6095
    %v6128 = vpack.c.b16 %v6096, %v6096
    %v6129 = vpack.c.b16 %v6097, %v6097
    %v6130 = vpack.c.b16 %v6098, %v6098
    %v6131 = vpack.c.b16 %v6099, %v6099
    %v6132 = vpack.c.b16 %v6100, %v6100
    %v6133 = vpack.c.b16 %v6101, %v6101
    %v6134 = vpack.c.b16 %v6102, %v6102
    %v6135 = vpack.c.b16 %v6103, %v6103
    %v6136 = vpack.c.b16 %v6104, %v6104
    %v6137 = vpack.c.b16 %v6105, %v6105
    %v6138 = vpack.c.b16 %v6106, %v6106
    %v6139 = vpack.c.b16 %v6107, %v6107
    %v6140 = vpack.c.b16 %v6108, %v6108
    %v6141 = vpack.c.b16 %v6109, %v6109
    %v6142 = vrot.slane %v6110, 5
    %v6143 = vrot.slane %v6142, 4
    %v6144 = vrot.slane %v6111, 5
    %v6145 = vsel %vm1284, %v6143, %v6144
    %v6146 = vrot.slane %v6112, 5
    %v6147 = vrot.slane %v6146, 4
    %v6148 = vrot.slane %v6113, 5
    %v6149 = vsel %vm1284, %v6147, %v6148
    %v6150 = vrot.slane %v6114, 5
    %v6151 = vrot.slane %v6150, 4
    %v6152 = vrot.slane %v6115, 5
    %v6153 = vsel %vm1284, %v6151, %v6152
    %v6154 = vrot.slane %v6116, 5
    %v6155 = vrot.slane %v6154, 4
    %v6156 = vrot.slane %v6117, 5
    %v6157 = vsel %vm1284, %v6155, %v6156
    %v6158 = vrot.slane %v6118, 5
    %v6159 = vrot.slane %v6158, 4
    %v6160 = vrot.slane %v6119, 5
    %v6161 = vsel %vm1284, %v6159, %v6160
    %v6162 = vrot.slane %v6120, 5
    %v6163 = vrot.slane %v6162, 4
    %v6164 = vrot.slane %v6121, 5
    %v6165 = vsel %vm1284, %v6163, %v6164
    %v6166 = vrot.slane %v6122, 5
    %v6167 = vrot.slane %v6166, 4
    %v6168 = vrot.slane %v6123, 5
    %v6169 = vsel %vm1284, %v6167, %v6168
    %v6170 = vrot.slane %v6124, 5
    %v6171 = vrot.slane %v6170, 4
    %v6172 = vrot.slane %v6125, 5
    %v6173 = vsel %vm1284, %v6171, %v6172
    %v6174 = vrot.slane %v6126, 5
    %v6175 = vrot.slane %v6174, 4
    %v6176 = vrot.slane %v6127, 5
    %v6177 = vsel %vm1284, %v6175, %v6176
    %v6178 = vrot.slane %v6128, 5
    %v6179 = vrot.slane %v6178, 4
    %v6180 = vrot.slane %v6129, 5
    %v6181 = vsel %vm1284, %v6179, %v6180
    %v6182 = vrot.slane %v6130, 5
    %v6183 = vrot.slane %v6182, 4
    %v6184 = vrot.slane %v6131, 5
    %v6185 = vsel %vm1284, %v6183, %v6184
    %v6186 = vrot.slane %v6132, 5
    %v6187 = vrot.slane %v6186, 4
    %v6188 = vrot.slane %v6133, 5
    %v6189 = vsel %vm1284, %v6187, %v6188
    %v6190 = vrot.slane %v6134, 5
    %v6191 = vrot.slane %v6190, 4
    %v6192 = vrot.slane %v6135, 5
    %v6193 = vsel %vm1284, %v6191, %v6192
    %v6194 = vrot.slane %v6136, 5
    %v6195 = vrot.slane %v6194, 4
    %v6196 = vrot.slane %v6137, 5
    %v6197 = vsel %vm1284, %v6195, %v6196
    %v6198 = vrot.slane %v6138, 5
    %v6199 = vrot.slane %v6198, 4
    %v6200 = vrot.slane %v6139, 5
    %v6201 = vsel %vm1284, %v6199, %v6200
    %v6202 = vrot.slane %v6140, 5
    %v6203 = vrot.slane %v6202, 4
    %v6204 = vrot.slane %v6141, 5
    %v6205 = vsel %vm1284, %v6203, %v6204
    %s6206 = scalar_lea.vmem [#allocation8], 320
    %v6207 = vld [vmem:[%s6206] sm:$0xf]
    %v6208 = vld [vmem:[%s6206 + $0x4] sm:$0xf]
    %v6209 = vld [vmem:[%s6206 + $0x8] sm:$0xf]
    %v6210 = vld [vmem:[%s6206 + $0xc] sm:$0xf]
    %v6211 = vld [vmem:[%s6206 + $0x10] sm:$0xf]
    %v6212 = vld [vmem:[%s6206 + $0x14] sm:$0xf]
    %v6213 = vld [vmem:[%s6206 + $0x18] sm:$0xf]
    %v6214 = vld [vmem:[%s6206 + $0x1c] sm:$0xf]
    %v6215 = vld [vmem:[%s6206 + $0x20] sm:$0xf]
    %v6216 = vld [vmem:[%s6206 + $0x24] sm:$0xf]
    %v6217 = vld [vmem:[%s6206 + $0x28] sm:$0xf]
    %v6218 = vld [vmem:[%s6206 + $0x2c] sm:$0xf]
    %v6219 = vld [vmem:[%s6206 + $0x30] sm:$0xf]
    %v6220 = vld [vmem:[%s6206 + $0x34] sm:$0xf]
    %v6221 = vld [vmem:[%s6206 + $0x38] sm:$0xf]
    %v6222 = vld [vmem:[%s6206 + $0x3c] sm:$0xf]
    %v6223 = vunpack.c.l.b16 %v6145
    %v6224 = vunpack.c.l.b16 %v6149
    %v6225 = vunpack.c.l.b16 %v6153
    %v6226 = vunpack.c.l.b16 %v6157
    %v6227 = vunpack.c.l.b16 %v6161
    %v6228 = vunpack.c.l.b16 %v6165
    %v6229 = vunpack.c.l.b16 %v6169
    %v6230 = vunpack.c.l.b16 %v6173
    %v6231 = vunpack.c.l.b16 %v6177
    %v6232 = vunpack.c.l.b16 %v6181
    %v6233 = vunpack.c.l.b16 %v6185
    %v6234 = vunpack.c.l.b16 %v6189
    %v6235 = vunpack.c.l.b16 %v6193
    %v6236 = vunpack.c.l.b16 %v6197
    %v6237 = vunpack.c.l.b16 %v6201
    %v6238 = vunpack.c.l.b16 %v6205
    %v6239 = vpack.c.b16 %v6224, %v6223
    %v6240 = vpack.c.b16 %v6226, %v6225
    %v6241 = vpack.c.b16 %v6228, %v6227
    %v6242 = vpack.c.b16 %v6230, %v6229
    %v6243 = vpack.c.b16 %v6232, %v6231
    %v6244 = vpack.c.b16 %v6234, %v6233
    %v6245 = vpack.c.b16 %v6236, %v6235
    %v6246 = vpack.c.b16 %v6238, %v6237
    %v6271 = vunpack.c.l.b16 %v6207
    %v6272 = vunpack.c.l.b16 %v6208
    %v6273 = vunpack.c.l.b16 %v6209
    %v6274 = vunpack.c.l.b16 %v6210
    %v6275 = vunpack.c.l.b16 %v6211
    %v6276 = vunpack.c.l.b16 %v6212
    %v6277 = vunpack.c.l.b16 %v6213
    %v6278 = vunpack.c.l.b16 %v6214
    %v6279 = vunpack.c.l.b16 %v6215
    %v6280 = vunpack.c.l.b16 %v6216
    %v6281 = vunpack.c.l.b16 %v6217
    %v6282 = vunpack.c.l.b16 %v6218
    %v6283 = vunpack.c.l.b16 %v6219
    %v6284 = vunpack.c.l.b16 %v6220
    %v6285 = vunpack.c.l.b16 %v6221
    %v6286 = vunpack.c.l.b16 %v6222
    %v6287 = vpack.c.b16 %v6272, %v6271
    %v6288 = vpack.c.b16 %v6274, %v6273
    %v6289 = vpack.c.b16 %v6276, %v6275
    %v6290 = vpack.c.b16 %v6278, %v6277
    %v6291 = vpack.c.b16 %v6280, %v6279
    %v6292 = vpack.c.b16 %v6282, %v6281
    %v6293 = vpack.c.b16 %v6284, %v6283
    %v6294 = vpack.c.b16 %v6286, %v6285
    %6303 = vmatprep.subr.bf16.mxu0 0
    %6304 = vmatpush1.bf16.msra.mxu0 %v6287
    %6305 = vmatprep.subr.bf16.mxu0 0
    %6306 = vmatpush1.bf16.msra.mxu0 %v6288
    %6307 = vmatprep.subr.bf16.mxu0 0
    %6308 = vmatpush1.bf16.msra.mxu0 %v6289
    %6309 = vmatprep.subr.bf16.mxu0 0
    %6310 = vmatpush1.bf16.msra.mxu0 %v6290
    %6311 = vmatprep.subr.bf16.mxu0 0
    %6312 = vmatpush1.bf16.msra.mxu0 %v6291
    %6313 = vmatprep.subr.bf16.mxu0 0
    %6314 = vmatpush1.bf16.msra.mxu0 %v6292
    %6315 = vmatprep.subr.bf16.mxu0 0
    %6316 = vmatpush1.bf16.msra.mxu0 %v6293
    %6317 = vmatprep.subr.bf16.mxu0 0
    %6318 = vmatpush1.bf16.msra.mxu0 %v6294
    %6319 = vmatprep.subr.bf16.mxu0 0
    %6320 = vmatpush1.bf16.msra.mxu0 0
    %6321 = vmatprep.subr.bf16.mxu0 0
    %6322 = vmatpush1.bf16.msra.mxu0 0
    %6323 = vmatprep.subr.bf16.mxu0 0
    %6324 = vmatpush1.bf16.msra.mxu0 0
    %6325 = vmatprep.subr.bf16.mxu0 0
    %6326 = vmatpush1.bf16.msra.mxu0 0
    %6327 = vmatprep.subr.bf16.mxu0 0
    %6328 = vmatpush1.bf16.msra.mxu0 0
    %6329 = vmatprep.subr.bf16.mxu0 0
    %6330 = vmatpush1.bf16.msra.mxu0 0
    %6331 = vmatprep.subr.bf16.mxu0 0
    %6332 = vmatpush1.bf16.msra.mxu0 0
    %6333 = vmatprep.subr.bf16.mxu0 0
    %6334 = vmatpush1.bf16.msra.mxu0 0
    %6335 = vmatprep.mubr.bf16.mxu0 0
    %6336 = vmatmul.mubr.bf16.gmra.mrb[0].mxu0 %v6239
    %v6337 = vpop.f32.mrb[0].mxu0
    %v6338 = vadd.f32 0.0, %v6337
    %v6339 = vpop.f32.mrb[0].mxu0
    %v6340 = vpop.f32.mrb[0].mxu0
    %v6341 = vadd.f32 0.0, %v6340
    %v6342 = vpop.f32.mrb[0].mxu0
    %6343 = vmatprep.mubr.bf16.mxu0 0
    %6344 = vmatmul.mubr.bf16.gmra.mrb[0].mxu0 %v6240
    %v6345 = vpop.f32.mrb[0].mxu0
    %v6346 = vadd.f32 0.0, %v6345
    %v6347 = vpop.f32.mrb[0].mxu0
    %v6348 = vpop.f32.mrb[0].mxu0
    %v6349 = vadd.f32 0.0, %v6348
    %v6350 = vpop.f32.mrb[0].mxu0
    %6351 = vmatprep.mubr.bf16.mxu0 0
    %6352 = vmatmul.mubr.bf16.gmra.mrb[0].mxu0 %v6241
    %v6353 = vpop.f32.mrb[0].mxu0
    %v6354 = vadd.f32 0.0, %v6353
    %v6355 = vpop.f32.mrb[0].mxu0
    %v6356 = vpop.f32.mrb[0].mxu0
    %v6357 = vadd.f32 0.0, %v6356
    %v6358 = vpop.f32.mrb[0].mxu0
    %6359 = vmatprep.mubr.bf16.mxu0 0
    %6360 = vmatmul.mubr.bf16.gmra.mrb[0].mxu0 %v6242
    %v6361 = vpop.f32.mrb[0].mxu0
    %v6362 = vadd.f32 0.0, %v6361
    %v6363 = vpop.f32.mrb[0].mxu0
    %v6364 = vpop.f32.mrb[0].mxu0
    %v6365 = vadd.f32 0.0, %v6364
    %v6366 = vpop.f32.mrb[0].mxu0
    %6367 = vmatprep.mubr.bf16.mxu0 0
    %6368 = vmatmul.mubr.bf16.gmra.mrb[0].mxu0 %v6243
    %v6369 = vpop.f32.mrb[0].mxu0
    %v6370 = vadd.f32 0.0, %v6369
    %v6371 = vpop.f32.mrb[0].mxu0
    %v6372 = vpop.f32.mrb[0].mxu0
    %v6373 = vadd.f32 0.0, %v6372
    %v6374 = vpop.f32.mrb[0].mxu0
    %6375 = vmatprep.mubr.bf16.mxu0 0
    %6376 = vmatmul.mubr.bf16.gmra.mrb[0].mxu0 %v6244
    %v6377 = vpop.f32.mrb[0].mxu0
    %v6378 = vadd.f32 0.0, %v6377
    %v6379 = vpop.f32.mrb[0].mxu0
    %v6380 = vpop.f32.mrb[0].mxu0
    %v6381 = vadd.f32 0.0, %v6380
    %v6382 = vpop.f32.mrb[0].mxu0
    %6383 = vmatprep.mubr.bf16.mxu0 0
    %6384 = vmatmul.mubr.bf16.gmra.mrb[0].mxu0 %v6245
    %v6385 = vpop.f32.mrb[0].mxu0
    %v6386 = vadd.f32 0.0, %v6385
    %v6387 = vpop.f32.mrb[0].mxu0
    %v6388 = vpop.f32.mrb[0].mxu0
    %v6389 = vadd.f32 0.0, %v6388
    %v6390 = vpop.f32.mrb[0].mxu0
    %6391 = vmatprep.mubr.bf16.mxu0 0
    %6392 = vmatmul.mubr.bf16.gmra.mrb[0].mxu0 %v6246
    %v6393 = vpop.f32.mrb[0].mxu0
    %v6394 = vadd.f32 0.0, %v6393
    %v6395 = vpop.f32.mrb[0].mxu0
    %v6396 = vpop.f32.mrb[0].mxu0
    %v6397 = vadd.f32 0.0, %v6396
    %v6398 = vpop.f32.mrb[0].mxu0
    %6399 = vdwg.mxu0
    %v6400 = vadd.f32 %v6030, %v6338
    %v6401 = vadd.f32 %v6031, %v6341
    %v6402 = vadd.f32 %v6032, %v6346
    %v6403 = vadd.f32 %v6033, %v6349
    %v6404 = vadd.f32 %v6034, %v6354
    %v6405 = vadd.f32 %v6035, %v6357
    %v6406 = vadd.f32 %v6036, %v6362
    %v6407 = vadd.f32 %v6037, %v6365
    %v6408 = vadd.f32 %v6038, %v6370
    %v6409 = vadd.f32 %v6039, %v6373
    %v6410 = vadd.f32 %v6040, %v6378
    %v6411 = vadd.f32 %v6041, %v6381
    %v6412 = vadd.f32 %v6042, %v6386
    %v6413 = vadd.f32 %v6043, %v6389
    %v6414 = vadd.f32 %v6044, %v6394
    %v6415 = vadd.f32 %v6045, %v6397
    %v6416 = vld [vmem:[%s2701] sm:$0xf]
    %v6417 = vld [vmem:[%s2701 + $0x8] sm:$0xf]
    %v6418 = vld [vmem:[%s2701 + $0x10] sm:$0xf]
    %v6419 = vld [vmem:[%s2701 + $0x18] sm:$0xf]
    %v6420 = vld [vmem:[%s2701 + $0x20] sm:$0xf]
    %v6421 = vld [vmem:[%s2701 + $0x28] sm:$0xf]
    %v6422 = vld [vmem:[%s2701 + $0x30] sm:$0xf]
    %v6423 = vld [vmem:[%s2701 + $0x38] sm:$0xf]
    %v6424 = vld [vmem:[%s2701 + $0x50] sm:$0xf]
    %v6425 = vld [vmem:[%s2701 + $0x58] sm:$0xf]
    %v6426 = vld [vmem:[%s2701 + $0x60] sm:$0xf]
    %v6427 = vld [vmem:[%s2701 + $0x68] sm:$0xf]
    %v6428 = vld [vmem:[%s2701 + $0x70] sm:$0xf]
    %v6429 = vld [vmem:[%s2701 + $0x78] sm:$0xf]
    %v6430 = vld [vmem:[%s2701 + $0x80] sm:$0xf]
    %v6431 = vld [vmem:[%s2701 + $0x88] sm:$0xf]
    %s6432 = scalar_lea.vmem [#allocation8], 384
    %v6433 = vld [vmem:[%s6432] sm:$0xf]
    %v6434 = vld [vmem:[%s6432 + $0x4] sm:$0xf]
    %v6435 = vld [vmem:[%s6432 + $0x8] sm:$0xf]
    %v6436 = vld [vmem:[%s6432 + $0xc] sm:$0xf]
    %v6437 = vld [vmem:[%s6432 + $0x10] sm:$0xf]
    %v6438 = vld [vmem:[%s6432 + $0x14] sm:$0xf]
    %v6439 = vld [vmem:[%s6432 + $0x18] sm:$0xf]
    %v6440 = vld [vmem:[%s6432 + $0x1c] sm:$0xf]
    %v6441 = vld [vmem:[%s6432 + $0x20] sm:$0xf]
    %v6442 = vld [vmem:[%s6432 + $0x24] sm:$0xf]
    %v6443 = vld [vmem:[%s6432 + $0x28] sm:$0xf]
    %v6444 = vld [vmem:[%s6432 + $0x2c] sm:$0xf]
    %v6445 = vld [vmem:[%s6432 + $0x30] sm:$0xf]
    %v6446 = vld [vmem:[%s6432 + $0x34] sm:$0xf]
    %v6447 = vld [vmem:[%s6432 + $0x38] sm:$0xf]
    %v6448 = vld [vmem:[%s6432 + $0x3c] sm:$0xf]
    %v6465 = vunpack.c.l.b16 %v6416
    %v6466 = vunpack.c.l.b16 %v6417
    %v6467 = vunpack.c.l.b16 %v6418
    %v6468 = vunpack.c.l.b16 %v6419
    %v6469 = vunpack.c.l.b16 %v6420
    %v6470 = vunpack.c.l.b16 %v6421
    %v6471 = vunpack.c.l.b16 %v6422
    %v6472 = vunpack.c.l.b16 %v6423
    %v6473 = vunpack.c.l.b16 %v6424
    %v6474 = vunpack.c.l.b16 %v6425
    %v6475 = vunpack.c.l.b16 %v6426
    %v6476 = vunpack.c.l.b16 %v6427
    %v6477 = vunpack.c.l.b16 %v6428
    %v6478 = vunpack.c.l.b16 %v6429
    %v6479 = vunpack.c.l.b16 %v6430
    %v6480 = vunpack.c.l.b16 %v6431
    %v6481 = vpack.c.b16 %v6466, %v6465
    %v6482 = vpack.c.b16 %v6468, %v6467
    %v6483 = vpack.c.b16 %v6470, %v6469
    %v6484 = vpack.c.b16 %v6472, %v6471
    %v6485 = vpack.c.b16 %v6474, %v6473
    %v6486 = vpack.c.b16 %v6476, %v6475
    %v6487 = vpack.c.b16 %v6478, %v6477
    %v6488 = vpack.c.b16 %v6480, %v6479
    %v6513 = vunpack.c.l.b16 %v6433
    %v6514 = vunpack.c.l.b16 %v6434
    %v6515 = vunpack.c.l.b16 %v6435
    %v6516 = vunpack.c.l.b16 %v6436
    %v6517 = vunpack.c.l.b16 %v6437
    %v6518 = vunpack.c.l.b16 %v6438
    %v6519 = vunpack.c.l.b16 %v6439
    %v6520 = vunpack.c.l.b16 %v6440
    %v6521 = vunpack.c.l.b16 %v6441
    %v6522 = vunpack.c.l.b16 %v6442
    %v6523 = vunpack.c.l.b16 %v6443
    %v6524 = vunpack.c.l.b16 %v6444
    %v6525 = vunpack.c.l.b16 %v6445
    %v6526 = vunpack.c.l.b16 %v6446
    %v6527 = vunpack.c.l.b16 %v6447
    %v6528 = vunpack.c.l.b16 %v6448
    %v6529 = vpack.c.b16 %v6514, %v6513
    %v6530 = vpack.c.b16 %v6516, %v6515
    %v6531 = vpack.c.b16 %v6518, %v6517
    %v6532 = vpack.c.b16 %v6520, %v6519
    %v6533 = vpack.c.b16 %v6522, %v6521
    %v6534 = vpack.c.b16 %v6524, %v6523
    %v6535 = vpack.c.b16 %v6526, %v6525
    %v6536 = vpack.c.b16 %v6528, %v6527
    %6545 = vmatprep.subr.bf16.mxu0 0
    %6546 = vmatpush1.bf16.msra.mxu0 %v6529
    %6547 = vmatprep.subr.bf16.mxu0 0
    %6548 = vmatpush1.bf16.msra.mxu0 %v6530
    %6549 = vmatprep.subr.bf16.mxu0 0
    %6550 = vmatpush1.bf16.msra.mxu0 %v6531
    %6551 = vmatprep.subr.bf16.mxu0 0
    %6552 = vmatpush1.bf16.msra.mxu0 %v6532
    %6553 = vmatprep.subr.bf16.mxu0 0
    %6554 = vmatpush1.bf16.msra.mxu0 %v6533
    %6555 = vmatprep.subr.bf16.mxu0 0
    %6556 = vmatpush1.bf16.msra.mxu0 %v6534
    %6557 = vmatprep.subr.bf16.mxu0 0
    %6558 = vmatpush1.bf16.msra.mxu0 %v6535
    %6559 = vmatprep.subr.bf16.mxu0 0
    %6560 = vmatpush1.bf16.msra.mxu0 %v6536
    %6561 = vmatprep.subr.bf16.mxu0 0
    %6562 = vmatpush1.bf16.msra.mxu0 0
    %6563 = vmatprep.subr.bf16.mxu0 0
    %6564 = vmatpush1.bf16.msra.mxu0 0
    %6565 = vmatprep.subr.bf16.mxu0 0
    %6566 = vmatpush1.bf16.msra.mxu0 0
    %6567 = vmatprep.subr.bf16.mxu0 0
    %6568 = vmatpush1.bf16.msra.mxu0 0
    %6569 = vmatprep.subr.bf16.mxu0 0
    %6570 = vmatpush1.bf16.msra.mxu0 0
    %6571 = vmatprep.subr.bf16.mxu0 0
    %6572 = vmatpush1.bf16.msra.mxu0 0
    %6573 = vmatprep.subr.bf16.mxu0 0
    %6574 = vmatpush1.bf16.msra.mxu0 0
    %6575 = vmatprep.subr.bf16.mxu0 0
    %6576 = vmatpush1.bf16.msra.mxu0 0
    %6577 = vmatprep.mubr.bf16.mxu0 0
    %6578 = vmatmul.mubr.bf16.gmra.mrb[0].mxu0 %v6481
    %v6579 = vpop.f32.mrb[0].mxu0
    %v6580 = vadd.f32 0.0, %v6579
    %v6581 = vpop.f32.mrb[0].mxu0
    %v6582 = vpop.f32.mrb[0].mxu0
    %v6583 = vadd.f32 0.0, %v6582
    %v6584 = vpop.f32.mrb[0].mxu0
    %6585 = vmatprep.mubr.bf16.mxu0 0
    %6586 = vmatmul.mubr.bf16.gmra.mrb[0].mxu0 %v6482
    %v6587 = vpop.f32.mrb[0].mxu0
    %v6588 = vadd.f32 0.0, %v6587
    %v6589 = vpop.f32.mrb[0].mxu0
    %v6590 = vpop.f32.mrb[0].mxu0
    %v6591 = vadd.f32 0.0, %v6590
    %v6592 = vpop.f32.mrb[0].mxu0
    %6593 = vmatprep.mubr.bf16.mxu0 0
    %6594 = vmatmul.mubr.bf16.gmra.mrb[0].mxu0 %v6483
    %v6595 = vpop.f32.mrb[0].mxu0
    %v6596 = vadd.f32 0.0, %v6595
    %v6597 = vpop.f32.mrb[0].mxu0
    %v6598 = vpop.f32.mrb[0].mxu0
    %v6599 = vadd.f32 0.0, %v6598
    %v6600 = vpop.f32.mrb[0].mxu0
    %6601 = vmatprep.mubr.bf16.mxu0 0
    %6602 = vmatmul.mubr.bf16.gmra.mrb[0].mxu0 %v6484
    %v6603 = vpop.f32.mrb[0].mxu0
    %v6604 = vadd.f32 0.0, %v6603
    %v6605 = vpop.f32.mrb[0].mxu0
    %v6606 = vpop.f32.mrb[0].mxu0
    %v6607 = vadd.f32 0.0, %v6606
    %v6608 = vpop.f32.mrb[0].mxu0
    %6609 = vmatprep.mubr.bf16.mxu0 0
    %6610 = vmatmul.mubr.bf16.gmra.mrb[0].mxu0 %v6485
    %v6611 = vpop.f32.mrb[0].mxu0
    %v6612 = vadd.f32 0.0, %v6611
    %v6613 = vpop.f32.mrb[0].mxu0
    %v6614 = vpop.f32.mrb[0].mxu0
    %v6615 = vadd.f32 0.0, %v6614
    %v6616 = vpop.f32.mrb[0].mxu0
    %6617 = vmatprep.mubr.bf16.mxu0 0
    %6618 = vmatmul.mubr.bf16.gmra.mrb[0].mxu0 %v6486
    %v6619 = vpop.f32.mrb[0].mxu0
    %v6620 = vadd.f32 0.0, %v6619
    %v6621 = vpop.f32.mrb[0].mxu0
    %v6622 = vpop.f32.mrb[0].mxu0
    %v6623 = vadd.f32 0.0, %v6622
    %v6624 = vpop.f32.mrb[0].mxu0
    %6625 = vmatprep.mubr.bf16.mxu0 0
    %6626 = vmatmul.mubr.bf16.gmra.mrb[0].mxu0 %v6487
    %v6627 = vpop.f32.mrb[0].mxu0
    %v6628 = vadd.f32 0.0, %v6627
    %v6629 = vpop.f32.mrb[0].mxu0
    %v6630 = vpop.f32.mrb[0].mxu0
    %v6631 = vadd.f32 0.0, %v6630
    %v6632 = vpop.f32.mrb[0].mxu0
    %6633 = vmatprep.mubr.bf16.mxu0 0
    %6634 = vmatmul.mubr.bf16.gmra.mrb[0].mxu0 %v6488
    %v6635 = vpop.f32.mrb[0].mxu0
    %v6636 = vadd.f32 0.0, %v6635
    %v6637 = vpop.f32.mrb[0].mxu0
    %v6638 = vpop.f32.mrb[0].mxu0
    %v6639 = vadd.f32 0.0, %v6638
    %v6640 = vpop.f32.mrb[0].mxu0
    %6641 = vdwg.mxu0
    %v6642 = vadd.f32 %v6400, %v6580
    %v6643 = vadd.f32 %v6401, %v6583
    %v6644 = vadd.f32 %v6402, %v6588
    %v6645 = vadd.f32 %v6403, %v6591
    %v6646 = vadd.f32 %v6404, %v6596
    %v6647 = vadd.f32 %v6405, %v6599
    %v6648 = vadd.f32 %v6406, %v6604
    %v6649 = vadd.f32 %v6407, %v6607
    %v6650 = vadd.f32 %v6408, %v6612
    %v6651 = vadd.f32 %v6409, %v6615
    %v6652 = vadd.f32 %v6410, %v6620
    %v6653 = vadd.f32 %v6411, %v6623
    %v6654 = vadd.f32 %v6412, %v6628
    %v6655 = vadd.f32 %v6413, %v6631
    %v6656 = vadd.f32 %v6414, %v6636
    %v6657 = vadd.f32 %v6415, %v6639
    %v6658 = vld [vmem:[%s2701] sm:$0x1f]
    %v6659 = vld [vmem:[%s2701 + $0x8] sm:$0x1f]
    %v6660 = vld [vmem:[%s2701 + $0x10] sm:$0x1f]
    %v6661 = vld [vmem:[%s2701 + $0x18] sm:$0x1f]
    %v6662 = vld [vmem:[%s2701 + $0x20] sm:$0x1f]
    %v6663 = vld [vmem:[%s2701 + $0x28] sm:$0x1f]
    %v6664 = vld [vmem:[%s2701 + $0x30] sm:$0x1f]
    %v6665 = vld [vmem:[%s2701 + $0x38] sm:$0x1f]
    %v6666 = vld [vmem:[%s2701 + $0x50] sm:$0x1f]
    %v6667 = vld [vmem:[%s2701 + $0x58] sm:$0x1f]
    %v6668 = vld [vmem:[%s2701 + $0x60] sm:$0x1f]
    %v6669 = vld [vmem:[%s2701 + $0x68] sm:$0x1f]
    %v6670 = vld [vmem:[%s2701 + $0x70] sm:$0x1f]
    %v6671 = vld [vmem:[%s2701 + $0x78] sm:$0x1f]
    %v6672 = vld [vmem:[%s2701 + $0x80] sm:$0x1f]
    %v6673 = vld [vmem:[%s2701 + $0x88] sm:$0x1f]
    %v6690 = vunpack.c.l.b16 %v6658
    %v6691 = vunpack.c.h.b16 %v6658
    %v6692 = vunpack.c.l.b16 %v6659
    %v6693 = vunpack.c.h.b16 %v6659
    %v6694 = vunpack.c.l.b16 %v6660
    %v6695 = vunpack.c.h.b16 %v6660
    %v6696 = vunpack.c.l.b16 %v6661
    %v6697 = vunpack.c.h.b16 %v6661
    %v6698 = vunpack.c.l.b16 %v6662
    %v6699 = vunpack.c.h.b16 %v6662
    %v6700 = vunpack.c.l.b16 %v6663
    %v6701 = vunpack.c.h.b16 %v6663
    %v6702 = vunpack.c.l.b16 %v6664
    %v6703 = vunpack.c.h.b16 %v6664
    %v6704 = vunpack.c.l.b16 %v6665
    %v6705 = vunpack.c.h.b16 %v6665
    %v6706 = vunpack.c.l.b16 %v6666
    %v6707 = vunpack.c.h.b16 %v6666
    %v6708 = vunpack.c.l.b16 %v6667
    %v6709 = vunpack.c.h.b16 %v6667
    %v6710 = vunpack.c.l.b16 %v6668
    %v6711 = vunpack.c.h.b16 %v6668
    %v6712 = vunpack.c.l.b16 %v6669
    %v6713 = vunpack.c.h.b16 %v6669
    %v6714 = vunpack.c.l.b16 %v6670
    %v6715 = vunpack.c.h.b16 %v6670
    %v6716 = vunpack.c.l.b16 %v6671
    %v6717 = vunpack.c.h.b16 %v6671
    %v6718 = vunpack.c.l.b16 %v6672
    %v6719 = vunpack.c.h.b16 %v6672
    %v6720 = vunpack.c.l.b16 %v6673
    %v6721 = vunpack.c.h.b16 %v6673
    %v6722 = vpack.c.b16 %v6690, %v6690
    %v6723 = vpack.c.b16 %v6691, %v6691
    %v6724 = vpack.c.b16 %v6692, %v6692
    %v6725 = vpack.c.b16 %v6693, %v6693
    %v6726 = vpack.c.b16 %v6694, %v6694
    %v6727 = vpack.c.b16 %v6695, %v6695
    %v6728 = vpack.c.b16 %v6696, %v6696
    %v6729 = vpack.c.b16 %v6697, %v6697
    %v6730 = vpack.c.b16 %v6698, %v6698
    %v6731 = vpack.c.b16 %v6699, %v6699
    %v6732 = vpack.c.b16 %v6700, %v6700
    %v6733 = vpack.c.b16 %v6701, %v6701
    %v6734 = vpack.c.b16 %v6702, %v6702
    %v6735 = vpack.c.b16 %v6703, %v6703
    %v6736 = vpack.c.b16 %v6704, %v6704
    %v6737 = vpack.c.b16 %v6705, %v6705
    %v6738 = vpack.c.b16 %v6706, %v6706
    %v6739 = vpack.c.b16 %v6707, %v6707
    %v6740 = vpack.c.b16 %v6708, %v6708
    %v6741 = vpack.c.b16 %v6709, %v6709
    %v6742 = vpack.c.b16 %v6710, %v6710
    %v6743 = vpack.c.b16 %v6711, %v6711
    %v6744 = vpack.c.b16 %v6712, %v6712
    %v6745 = vpack.c.b16 %v6713, %v6713
    %v6746 = vpack.c.b16 %v6714, %v6714
    %v6747 = vpack.c.b16 %v6715, %v6715
    %v6748 = vpack.c.b16 %v6716, %v6716
    %v6749 = vpack.c.b16 %v6717, %v6717
    %v6750 = vpack.c.b16 %v6718, %v6718
    %v6751 = vpack.c.b16 %v6719, %v6719
    %v6752 = vpack.c.b16 %v6720, %v6720
    %v6753 = vpack.c.b16 %v6721, %v6721
    %v6755 = vshrl.u32 %v6722, 16
    %v6757 = vrot.slane %v6755, 4
    %v6758 = vshll.u32 %v6722, 16
    %v6760 = vrot.slane %v6758, 5
    %v6761 = vor.u32 %v6757, %v6760
    %v6762 = vrot.slane %v6761, 4
    %v6764 = vshll.u32 %v6723, 16
    %v6766 = vrot.slane %v6764, 5
    %v6767 = vsel %vm574, %v6762, %v6766
    %v6769 = vshrl.u32 %v6724, 16
    %v6771 = vrot.slane %v6769, 4
    %v6772 = vshll.u32 %v6724, 16
    %v6774 = vrot.slane %v6772, 5
    %v6775 = vor.u32 %v6771, %v6774
    %v6776 = vrot.slane %v6775, 4
    %v6778 = vshll.u32 %v6725, 16
    %v6780 = vrot.slane %v6778, 5
    %v6781 = vsel %vm574, %v6776, %v6780
    %v6783 = vshrl.u32 %v6726, 16
    %v6785 = vrot.slane %v6783, 4
    %v6786 = vshll.u32 %v6726, 16
    %v6788 = vrot.slane %v6786, 5
    %v6789 = vor.u32 %v6785, %v6788
    %v6790 = vrot.slane %v6789, 4
    %v6792 = vshll.u32 %v6727, 16
    %v6794 = vrot.slane %v6792, 5
    %v6795 = vsel %vm574, %v6790, %v6794
    %v6797 = vshrl.u32 %v6728, 16
    %v6799 = vrot.slane %v6797, 4
    %v6800 = vshll.u32 %v6728, 16
    %v6802 = vrot.slane %v6800, 5
    %v6803 = vor.u32 %v6799, %v6802
    %v6804 = vrot.slane %v6803, 4
    %v6806 = vshll.u32 %v6729, 16
    %v6808 = vrot.slane %v6806, 5
    %v6809 = vsel %vm574, %v6804, %v6808
    %v6811 = vshrl.u32 %v6730, 16
    %v6813 = vrot.slane %v6811, 4
    %v6814 = vshll.u32 %v6730, 16
    %v6816 = vrot.slane %v6814, 5
    %v6817 = vor.u32 %v6813, %v6816
    %v6818 = vrot.slane %v6817, 4
    %v6820 = vshll.u32 %v6731, 16
    %v6822 = vrot.slane %v6820, 5
    %v6823 = vsel %vm574, %v6818, %v6822
    %v6825 = vshrl.u32 %v6732, 16
    %v6827 = vrot.slane %v6825, 4
    %v6828 = vshll.u32 %v6732, 16
    %v6830 = vrot.slane %v6828, 5
    %v6831 = vor.u32 %v6827, %v6830
    %v6832 = vrot.slane %v6831, 4
    %v6834 = vshll.u32 %v6733, 16
    %v6836 = vrot.slane %v6834, 5
    %v6837 = vsel %vm574, %v6832, %v6836
    %v6839 = vshrl.u32 %v6734, 16
    %v6841 = vrot.slane %v6839, 4
    %v6842 = vshll.u32 %v6734, 16
    %v6844 = vrot.slane %v6842, 5
    %v6845 = vor.u32 %v6841, %v6844
    %v6846 = vrot.slane %v6845, 4
    %v6848 = vshll.u32 %v6735, 16
    %v6850 = vrot.slane %v6848, 5
    %v6851 = vsel %vm574, %v6846, %v6850
    %v6853 = vshrl.u32 %v6736, 16
    %v6855 = vrot.slane %v6853, 4
    %v6856 = vshll.u32 %v6736, 16
    %v6858 = vrot.slane %v6856, 5
    %v6859 = vor.u32 %v6855, %v6858
    %v6860 = vrot.slane %v6859, 4
    %v6862 = vshll.u32 %v6737, 16
    %v6864 = vrot.slane %v6862, 5
    %v6865 = vsel %vm574, %v6860, %v6864
    %v6867 = vshrl.u32 %v6738, 16
    %v6869 = vrot.slane %v6867, 4
    %v6870 = vshll.u32 %v6738, 16
    %v6872 = vrot.slane %v6870, 5
    %v6873 = vor.u32 %v6869, %v6872
    %v6874 = vrot.slane %v6873, 4
    %v6876 = vshll.u32 %v6739, 16
    %v6878 = vrot.slane %v6876, 5
    %v6879 = vsel %vm574, %v6874, %v6878
    %v6881 = vshrl.u32 %v6740, 16
    %v6883 = vrot.slane %v6881, 4
    %v6884 = vshll.u32 %v6740, 16
    %v6886 = vrot.slane %v6884, 5
    %v6887 = vor.u32 %v6883, %v6886
    %v6888 = vrot.slane %v6887, 4
    %v6890 = vshll.u32 %v6741, 16
    %v6892 = vrot.slane %v6890, 5
    %v6893 = vsel %vm574, %v6888, %v6892
    %v6895 = vshrl.u32 %v6742, 16
    %v6897 = vrot.slane %v6895, 4
    %v6898 = vshll.u32 %v6742, 16
    %v6900 = vrot.slane %v6898, 5
    %v6901 = vor.u32 %v6897, %v6900
    %v6902 = vrot.slane %v6901, 4
    %v6904 = vshll.u32 %v6743, 16
    %v6906 = vrot.slane %v6904, 5
    %v6907 = vsel %vm574, %v6902, %v6906
    %v6909 = vshrl.u32 %v6744, 16
    %v6911 = vrot.slane %v6909, 4
    %v6912 = vshll.u32 %v6744, 16
    %v6914 = vrot.slane %v6912, 5
    %v6915 = vor.u32 %v6911, %v6914
    %v6916 = vrot.slane %v6915, 4
    %v6918 = vshll.u32 %v6745, 16
    %v6920 = vrot.slane %v6918, 5
    %v6921 = vsel %vm574, %v6916, %v6920
    %v6923 = vshrl.u32 %v6746, 16
    %v6925 = vrot.slane %v6923, 4
    %v6926 = vshll.u32 %v6746, 16
    %v6928 = vrot.slane %v6926, 5
    %v6929 = vor.u32 %v6925, %v6928
    %v6930 = vrot.slane %v6929, 4
    %v6932 = vshll.u32 %v6747, 16
    %v6934 = vrot.slane %v6932, 5
    %v6935 = vsel %vm574, %v6930, %v6934
    %v6937 = vshrl.u32 %v6748, 16
    %v6939 = vrot.slane %v6937, 4
    %v6940 = vshll.u32 %v6748, 16
    %v6942 = vrot.slane %v6940, 5
    %v6943 = vor.u32 %v6939, %v6942
    %v6944 = vrot.slane %v6943, 4
    %v6946 = vshll.u32 %v6749, 16
    %v6948 = vrot.slane %v6946, 5
    %v6949 = vsel %vm574, %v6944, %v6948
    %v6951 = vshrl.u32 %v6750, 16
    %v6953 = vrot.slane %v6951, 4
    %v6954 = vshll.u32 %v6750, 16
    %v6956 = vrot.slane %v6954, 5
    %v6957 = vor.u32 %v6953, %v6956
    %v6958 = vrot.slane %v6957, 4
    %v6960 = vshll.u32 %v6751, 16
    %v6962 = vrot.slane %v6960, 5
    %v6963 = vsel %vm574, %v6958, %v6962
    %v6965 = vshrl.u32 %v6752, 16
    %v6967 = vrot.slane %v6965, 4
    %v6968 = vshll.u32 %v6752, 16
    %v6970 = vrot.slane %v6968, 5
    %v6971 = vor.u32 %v6967, %v6970
    %v6972 = vrot.slane %v6971, 4
    %v6974 = vshll.u32 %v6753, 16
    %v6976 = vrot.slane %v6974, 5
    %v6977 = vsel %vm574, %v6972, %v6976
    %s6978 = scalar_lea.vmem [#allocation8], 448
    %v6979 = vld [vmem:[%s6978] sm:$0xf]
    %v6980 = vld [vmem:[%s6978 + $0x4] sm:$0xf]
    %v6981 = vld [vmem:[%s6978 + $0x8] sm:$0xf]
    %v6982 = vld [vmem:[%s6978 + $0xc] sm:$0xf]
    %v6983 = vld [vmem:[%s6978 + $0x10] sm:$0xf]
    %v6984 = vld [vmem:[%s6978 + $0x14] sm:$0xf]
    %v6985 = vld [vmem:[%s6978 + $0x18] sm:$0xf]
    %v6986 = vld [vmem:[%s6978 + $0x1c] sm:$0xf]
    %v6987 = vld [vmem:[%s6978 + $0x20] sm:$0xf]
    %v6988 = vld [vmem:[%s6978 + $0x24] sm:$0xf]
    %v6989 = vld [vmem:[%s6978 + $0x28] sm:$0xf]
    %v6990 = vld [vmem:[%s6978 + $0x2c] sm:$0xf]
    %v6991 = vld [vmem:[%s6978 + $0x30] sm:$0xf]
    %v6992 = vld [vmem:[%s6978 + $0x34] sm:$0xf]
    %v6993 = vld [vmem:[%s6978 + $0x38] sm:$0xf]
    %v6994 = vld [vmem:[%s6978 + $0x3c] sm:$0xf]
    %v6995 = vunpack.c.l.b16 %v6767
    %v6996 = vunpack.c.l.b16 %v6781
    %v6997 = vunpack.c.l.b16 %v6795
    %v6998 = vunpack.c.l.b16 %v6809
    %v6999 = vunpack.c.l.b16 %v6823
    %v7000 = vunpack.c.l.b16 %v6837
    %v7001 = vunpack.c.l.b16 %v6851
    %v7002 = vunpack.c.l.b16 %v6865
    %v7003 = vunpack.c.l.b16 %v6879
    %v7004 = vunpack.c.l.b16 %v6893
    %v7005 = vunpack.c.l.b16 %v6907
    %v7006 = vunpack.c.l.b16 %v6921
    %v7007 = vunpack.c.l.b16 %v6935
    %v7008 = vunpack.c.l.b16 %v6949
    %v7009 = vunpack.c.l.b16 %v6963
    %v7010 = vunpack.c.l.b16 %v6977
    %v7011 = vpack.c.b16 %v6996, %v6995
    %v7012 = vpack.c.b16 %v6998, %v6997
    %v7013 = vpack.c.b16 %v7000, %v6999
    %v7014 = vpack.c.b16 %v7002, %v7001
    %v7015 = vpack.c.b16 %v7004, %v7003
    %v7016 = vpack.c.b16 %v7006, %v7005
    %v7017 = vpack.c.b16 %v7008, %v7007
    %v7018 = vpack.c.b16 %v7010, %v7009
    %v7043 = vunpack.c.l.b16 %v6979
    %v7044 = vunpack.c.l.b16 %v6980
    %v7045 = vunpack.c.l.b16 %v6981
    %v7046 = vunpack.c.l.b16 %v6982
    %v7047 = vunpack.c.l.b16 %v6983
    %v7048 = vunpack.c.l.b16 %v6984
    %v7049 = vunpack.c.l.b16 %v6985
    %v7050 = vunpack.c.l.b16 %v6986
    %v7051 = vunpack.c.l.b16 %v6987
    %v7052 = vunpack.c.l.b16 %v6988
    %v7053 = vunpack.c.l.b16 %v6989
    %v7054 = vunpack.c.l.b16 %v6990
    %v7055 = vunpack.c.l.b16 %v6991
    %v7056 = vunpack.c.l.b16 %v6992
    %v7057 = vunpack.c.l.b16 %v6993
    %v7058 = vunpack.c.l.b16 %v6994
    %v7059 = vpack.c.b16 %v7044, %v7043
    %v7060 = vpack.c.b16 %v7046, %v7045
    %v7061 = vpack.c.b16 %v7048, %v7047
    %v7062 = vpack.c.b16 %v7050, %v7049
    %v7063 = vpack.c.b16 %v7052, %v7051
    %v7064 = vpack.c.b16 %v7054, %v7053
    %v7065 = vpack.c.b16 %v7056, %v7055
    %v7066 = vpack.c.b16 %v7058, %v7057
    %7075 = vmatprep.subr.bf16.mxu0 0
    %7076 = vmatpush1.bf16.msra.mxu0 %v7059
    %7077 = vmatprep.subr.bf16.mxu0 0
    %7078 = vmatpush1.bf16.msra.mxu0 %v7060
    %7079 = vmatprep.subr.bf16.mxu0 0
    %7080 = vmatpush1.bf16.msra.mxu0 %v7061
    %7081 = vmatprep.subr.bf16.mxu0 0
    %7082 = vmatpush1.bf16.msra.mxu0 %v7062
    %7083 = vmatprep.subr.bf16.mxu0 0
    %7084 = vmatpush1.bf16.msra.mxu0 %v7063
    %7085 = vmatprep.subr.bf16.mxu0 0
    %7086 = vmatpush1.bf16.msra.mxu0 %v7064
    %7087 = vmatprep.subr.bf16.mxu0 0
    %7088 = vmatpush1.bf16.msra.mxu0 %v7065
    %7089 = vmatprep.subr.bf16.mxu0 0
    %7090 = vmatpush1.bf16.msra.mxu0 %v7066
    %7091 = vmatprep.subr.bf16.mxu0 0
    %7092 = vmatpush1.bf16.msra.mxu0 0
    %7093 = vmatprep.subr.bf16.mxu0 0
    %7094 = vmatpush1.bf16.msra.mxu0 0
    %7095 = vmatprep.subr.bf16.mxu0 0
    %7096 = vmatpush1.bf16.msra.mxu0 0
    %7097 = vmatprep.subr.bf16.mxu0 0
    %7098 = vmatpush1.bf16.msra.mxu0 0
    %7099 = vmatprep.subr.bf16.mxu0 0
    %7100 = vmatpush1.bf16.msra.mxu0 0
    %7101 = vmatprep.subr.bf16.mxu0 0
    %7102 = vmatpush1.bf16.msra.mxu0 0
    %7103 = vmatprep.subr.bf16.mxu0 0
    %7104 = vmatpush1.bf16.msra.mxu0 0
    %7105 = vmatprep.subr.bf16.mxu0 0
    %7106 = vmatpush1.bf16.msra.mxu0 0
    %7107 = vmatprep.mubr.bf16.mxu0 0
    %7108 = vmatmul.mubr.bf16.gmra.mrb[0].mxu0 %v7011
    %v7109 = vpop.f32.mrb[0].mxu0
    %v7110 = vadd.f32 0.0, %v7109
    %v7111 = vpop.f32.mrb[0].mxu0
    %v7112 = vpop.f32.mrb[0].mxu0
    %v7113 = vadd.f32 0.0, %v7112
    %v7114 = vpop.f32.mrb[0].mxu0
    %7115 = vmatprep.mubr.bf16.mxu0 0
    %7116 = vmatmul.mubr.bf16.gmra.mrb[0].mxu0 %v7012
    %v7117 = vpop.f32.mrb[0].mxu0
    %v7118 = vadd.f32 0.0, %v7117
    %v7119 = vpop.f32.mrb[0].mxu0
    %v7120 = vpop.f32.mrb[0].mxu0
    %v7121 = vadd.f32 0.0, %v7120
    %v7122 = vpop.f32.mrb[0].mxu0
    %7123 = vmatprep.mubr.bf16.mxu0 0
    %7124 = vmatmul.mubr.bf16.gmra.mrb[0].mxu0 %v7013
    %v7125 = vpop.f32.mrb[0].mxu0
    %v7126 = vadd.f32 0.0, %v7125
    %v7127 = vpop.f32.mrb[0].mxu0
    %v7128 = vpop.f32.mrb[0].mxu0
    %v7129 = vadd.f32 0.0, %v7128
    %v7130 = vpop.f32.mrb[0].mxu0
    %7131 = vmatprep.mubr.bf16.mxu0 0
    %7132 = vmatmul.mubr.bf16.gmra.mrb[0].mxu0 %v7014
    %v7133 = vpop.f32.mrb[0].mxu0
    %v7134 = vadd.f32 0.0, %v7133
    %v7135 = vpop.f32.mrb[0].mxu0
    %v7136 = vpop.f32.mrb[0].mxu0
    %v7137 = vadd.f32 0.0, %v7136
    %v7138 = vpop.f32.mrb[0].mxu0
    %7139 = vmatprep.mubr.bf16.mxu0 0
    %7140 = vmatmul.mubr.bf16.gmra.mrb[0].mxu0 %v7015
    %v7141 = vpop.f32.mrb[0].mxu0
    %v7142 = vadd.f32 0.0, %v7141
    %v7143 = vpop.f32.mrb[0].mxu0
    %v7144 = vpop.f32.mrb[0].mxu0
    %v7145 = vadd.f32 0.0, %v7144
    %v7146 = vpop.f32.mrb[0].mxu0
    %7147 = vmatprep.mubr.bf16.mxu0 0
    %7148 = vmatmul.mubr.bf16.gmra.mrb[0].mxu0 %v7016
    %v7149 = vpop.f32.mrb[0].mxu0
    %v7150 = vadd.f32 0.0, %v7149
    %v7151 = vpop.f32.mrb[0].mxu0
    %v7152 = vpop.f32.mrb[0].mxu0
    %v7153 = vadd.f32 0.0, %v7152
    %v7154 = vpop.f32.mrb[0].mxu0
    %7155 = vmatprep.mubr.bf16.mxu0 0
    %7156 = vmatmul.mubr.bf16.gmra.mrb[0].mxu0 %v7017
    %v7157 = vpop.f32.mrb[0].mxu0
    %v7158 = vadd.f32 0.0, %v7157
    %v7159 = vpop.f32.mrb[0].mxu0
    %v7160 = vpop.f32.mrb[0].mxu0
    %v7161 = vadd.f32 0.0, %v7160
    %v7162 = vpop.f32.mrb[0].mxu0
    %7163 = vmatprep.mubr.bf16.mxu0 0
    %7164 = vmatmul.mubr.bf16.gmra.mrb[0].mxu0 %v7018
    %v7165 = vpop.f32.mrb[0].mxu0
    %v7166 = vadd.f32 0.0, %v7165
    %v7167 = vpop.f32.mrb[0].mxu0
    %v7168 = vpop.f32.mrb[0].mxu0
    %v7169 = vadd.f32 0.0, %v7168
    %v7170 = vpop.f32.mrb[0].mxu0
    %7171 = vdwg.mxu0
    %v7172 = vadd.f32 %v6642, %v7110
    %v7173 = vadd.f32 %v6643, %v7113
    %v7174 = vadd.f32 %v6644, %v7118
    %v7175 = vadd.f32 %v6645, %v7121
    %v7176 = vadd.f32 %v6646, %v7126
    %v7177 = vadd.f32 %v6647, %v7129
    %v7178 = vadd.f32 %v6648, %v7134
    %v7179 = vadd.f32 %v6649, %v7137
    %v7180 = vadd.f32 %v6650, %v7142
    %v7181 = vadd.f32 %v6651, %v7145
    %v7182 = vadd.f32 %v6652, %v7150
    %v7183 = vadd.f32 %v6653, %v7153
    %v7184 = vadd.f32 %v6654, %v7158
    %v7185 = vadd.f32 %v6655, %v7161
    %v7186 = vadd.f32 %v6656, %v7166
    %v7187 = vadd.f32 %v6657, %v7169
    %v7188 = vld [vmem:[%s2701] sm:$0x1e]
    %v7189 = vld [vmem:[%s2701 + $0x8] sm:$0x1e]
    %v7190 = vld [vmem:[%s2701 + $0x10] sm:$0x1e]
    %v7191 = vld [vmem:[%s2701 + $0x18] sm:$0x1e]
    %v7192 = vld [vmem:[%s2701 + $0x20] sm:$0x1e]
    %v7193 = vld [vmem:[%s2701 + $0x28] sm:$0x1e]
    %v7194 = vld [vmem:[%s2701 + $0x30] sm:$0x1e]
    %v7195 = vld [vmem:[%s2701 + $0x38] sm:$0x1e]
    %v7196 = vld [vmem:[%s2701 + $0x50] sm:$0x1e]
    %v7197 = vld [vmem:[%s2701 + $0x58] sm:$0x1e]
    %v7198 = vld [vmem:[%s2701 + $0x60] sm:$0x1e]
    %v7199 = vld [vmem:[%s2701 + $0x68] sm:$0x1e]
    %v7200 = vld [vmem:[%s2701 + $0x70] sm:$0x1e]
    %v7201 = vld [vmem:[%s2701 + $0x78] sm:$0x1e]
    %v7202 = vld [vmem:[%s2701 + $0x80] sm:$0x1e]
    %v7203 = vld [vmem:[%s2701 + $0x88] sm:$0x1e]
    %v7220 = vunpack.c.l.b16 %v7188
    %v7221 = vunpack.c.h.b16 %v7188
    %v7222 = vunpack.c.l.b16 %v7189
    %v7223 = vunpack.c.h.b16 %v7189
    %v7224 = vunpack.c.l.b16 %v7190
    %v7225 = vunpack.c.h.b16 %v7190
    %v7226 = vunpack.c.l.b16 %v7191
    %v7227 = vunpack.c.h.b16 %v7191
    %v7228 = vunpack.c.l.b16 %v7192
    %v7229 = vunpack.c.h.b16 %v7192
    %v7230 = vunpack.c.l.b16 %v7193
    %v7231 = vunpack.c.h.b16 %v7193
    %v7232 = vunpack.c.l.b16 %v7194
    %v7233 = vunpack.c.h.b16 %v7194
    %v7234 = vunpack.c.l.b16 %v7195
    %v7235 = vunpack.c.h.b16 %v7195
    %v7236 = vunpack.c.l.b16 %v7196
    %v7237 = vunpack.c.h.b16 %v7196
    %v7238 = vunpack.c.l.b16 %v7197
    %v7239 = vunpack.c.h.b16 %v7197
    %v7240 = vunpack.c.l.b16 %v7198
    %v7241 = vunpack.c.h.b16 %v7198
    %v7242 = vunpack.c.l.b16 %v7199
    %v7243 = vunpack.c.h.b16 %v7199
    %v7244 = vunpack.c.l.b16 %v7200
    %v7245 = vunpack.c.h.b16 %v7200
    %v7246 = vunpack.c.l.b16 %v7201
    %v7247 = vunpack.c.h.b16 %v7201
    %v7248 = vunpack.c.l.b16 %v7202
    %v7249 = vunpack.c.h.b16 %v7202
    %v7250 = vunpack.c.l.b16 %v7203
    %v7251 = vunpack.c.h.b16 %v7203
    %v7252 = vpack.c.b16 %v7220, %v7220
    %v7253 = vpack.c.b16 %v7221, %v7221
    %v7254 = vpack.c.b16 %v7222, %v7222
    %v7255 = vpack.c.b16 %v7223, %v7223
    %v7256 = vpack.c.b16 %v7224, %v7224
    %v7257 = vpack.c.b16 %v7225, %v7225
    %v7258 = vpack.c.b16 %v7226, %v7226
    %v7259 = vpack.c.b16 %v7227, %v7227
    %v7260 = vpack.c.b16 %v7228, %v7228
    %v7261 = vpack.c.b16 %v7229, %v7229
    %v7262 = vpack.c.b16 %v7230, %v7230
    %v7263 = vpack.c.b16 %v7231, %v7231
    %v7264 = vpack.c.b16 %v7232, %v7232
    %v7265 = vpack.c.b16 %v7233, %v7233
    %v7266 = vpack.c.b16 %v7234, %v7234
    %v7267 = vpack.c.b16 %v7235, %v7235
    %v7268 = vpack.c.b16 %v7236, %v7236
    %v7269 = vpack.c.b16 %v7237, %v7237
    %v7270 = vpack.c.b16 %v7238, %v7238
    %v7271 = vpack.c.b16 %v7239, %v7239
    %v7272 = vpack.c.b16 %v7240, %v7240
    %v7273 = vpack.c.b16 %v7241, %v7241
    %v7274 = vpack.c.b16 %v7242, %v7242
    %v7275 = vpack.c.b16 %v7243, %v7243
    %v7276 = vpack.c.b16 %v7244, %v7244
    %v7277 = vpack.c.b16 %v7245, %v7245
    %v7278 = vpack.c.b16 %v7246, %v7246
    %v7279 = vpack.c.b16 %v7247, %v7247
    %v7280 = vpack.c.b16 %v7248, %v7248
    %v7281 = vpack.c.b16 %v7249, %v7249
    %v7282 = vpack.c.b16 %v7250, %v7250
    %v7283 = vpack.c.b16 %v7251, %v7251
    %v7284 = vrot.slane %v7252, 5
    %v7285 = vrot.slane %v7284, 4
    %v7286 = vrot.slane %v7253, 5
    %v7287 = vsel %vm1284, %v7285, %v7286
    %v7288 = vrot.slane %v7254, 5
    %v7289 = vrot.slane %v7288, 4
    %v7290 = vrot.slane %v7255, 5
    %v7291 = vsel %vm1284, %v7289, %v7290
    %v7292 = vrot.slane %v7256, 5
    %v7293 = vrot.slane %v7292, 4
    %v7294 = vrot.slane %v7257, 5
    %v7295 = vsel %vm1284, %v7293, %v7294
    %v7296 = vrot.slane %v7258, 5
    %v7297 = vrot.slane %v7296, 4
    %v7298 = vrot.slane %v7259, 5
    %v7299 = vsel %vm1284, %v7297, %v7298
    %v7300 = vrot.slane %v7260, 5
    %v7301 = vrot.slane %v7300, 4
    %v7302 = vrot.slane %v7261, 5
    %v7303 = vsel %vm1284, %v7301, %v7302
    %v7304 = vrot.slane %v7262, 5
    %v7305 = vrot.slane %v7304, 4
    %v7306 = vrot.slane %v7263, 5
    %v7307 = vsel %vm1284, %v7305, %v7306
    %v7308 = vrot.slane %v7264, 5
    %v7309 = vrot.slane %v7308, 4
    %v7310 = vrot.slane %v7265, 5
    %v7311 = vsel %vm1284, %v7309, %v7310
    %v7312 = vrot.slane %v7266, 5
    %v7313 = vrot.slane %v7312, 4
    %v7314 = vrot.slane %v7267, 5
    %v7315 = vsel %vm1284, %v7313, %v7314
    %v7316 = vrot.slane %v7268, 5
    %v7317 = vrot.slane %v7316, 4
    %v7318 = vrot.slane %v7269, 5
    %v7319 = vsel %vm1284, %v7317, %v7318
    %v7320 = vrot.slane %v7270, 5
    %v7321 = vrot.slane %v7320, 4
    %v7322 = vrot.slane %v7271, 5
    %v7323 = vsel %vm1284, %v7321, %v7322
    %v7324 = vrot.slane %v7272, 5
    %v7325 = vrot.slane %v7324, 4
    %v7326 = vrot.slane %v7273, 5
    %v7327 = vsel %vm1284, %v7325, %v7326
    %v7328 = vrot.slane %v7274, 5
    %v7329 = vrot.slane %v7328, 4
    %v7330 = vrot.slane %v7275, 5
    %v7331 = vsel %vm1284, %v7329, %v7330
    %v7332 = vrot.slane %v7276, 5
    %v7333 = vrot.slane %v7332, 4
    %v7334 = vrot.slane %v7277, 5
    %v7335 = vsel %vm1284, %v7333, %v7334
    %v7336 = vrot.slane %v7278, 5
    %v7337 = vrot.slane %v7336, 4
    %v7338 = vrot.slane %v7279, 5
    %v7339 = vsel %vm1284, %v7337, %v7338
    %v7340 = vrot.slane %v7280, 5
    %v7341 = vrot.slane %v7340, 4
    %v7342 = vrot.slane %v7281, 5
    %v7343 = vsel %vm1284, %v7341, %v7342
    %v7344 = vrot.slane %v7282, 5
    %v7345 = vrot.slane %v7344, 4
    %v7346 = vrot.slane %v7283, 5
    %v7347 = vsel %vm1284, %v7345, %v7346
    %s7348 = scalar_lea.vmem [#allocation8], 512
    %v7349 = vld [vmem:[%s7348] sm:$0xf]
    %v7350 = vld [vmem:[%s7348 + $0x4] sm:$0xf]
    %v7351 = vld [vmem:[%s7348 + $0x8] sm:$0xf]
    %v7352 = vld [vmem:[%s7348 + $0xc] sm:$0xf]
    %v7353 = vld [vmem:[%s7348 + $0x10] sm:$0xf]
    %v7354 = vld [vmem:[%s7348 + $0x14] sm:$0xf]
    %v7355 = vld [vmem:[%s7348 + $0x18] sm:$0xf]
    %v7356 = vld [vmem:[%s7348 + $0x1c] sm:$0xf]
    %v7357 = vld [vmem:[%s7348 + $0x20] sm:$0xf]
    %v7358 = vld [vmem:[%s7348 + $0x24] sm:$0xf]
    %v7359 = vld [vmem:[%s7348 + $0x28] sm:$0xf]
    %v7360 = vld [vmem:[%s7348 + $0x2c] sm:$0xf]
    %v7361 = vld [vmem:[%s7348 + $0x30] sm:$0xf]
    %v7362 = vld [vmem:[%s7348 + $0x34] sm:$0xf]
    %v7363 = vld [vmem:[%s7348 + $0x38] sm:$0xf]
    %v7364 = vld [vmem:[%s7348 + $0x3c] sm:$0xf]
    %v7365 = vunpack.c.l.b16 %v7287
    %v7366 = vunpack.c.l.b16 %v7291
    %v7367 = vunpack.c.l.b16 %v7295
    %v7368 = vunpack.c.l.b16 %v7299
    %v7369 = vunpack.c.l.b16 %v7303
    %v7370 = vunpack.c.l.b16 %v7307
    %v7371 = vunpack.c.l.b16 %v7311
    %v7372 = vunpack.c.l.b16 %v7315
    %v7373 = vunpack.c.l.b16 %v7319
    %v7374 = vunpack.c.l.b16 %v7323
    %v7375 = vunpack.c.l.b16 %v7327
    %v7376 = vunpack.c.l.b16 %v7331
    %v7377 = vunpack.c.l.b16 %v7335
    %v7378 = vunpack.c.l.b16 %v7339
    %v7379 = vunpack.c.l.b16 %v7343
    %v7380 = vunpack.c.l.b16 %v7347
    %v7381 = vpack.c.b16 %v7366, %v7365
    %v7382 = vpack.c.b16 %v7368, %v7367
    %v7383 = vpack.c.b16 %v7370, %v7369
    %v7384 = vpack.c.b16 %v7372, %v7371
    %v7385 = vpack.c.b16 %v7374, %v7373
    %v7386 = vpack.c.b16 %v7376, %v7375
    %v7387 = vpack.c.b16 %v7378, %v7377
    %v7388 = vpack.c.b16 %v7380, %v7379
    %v7413 = vunpack.c.l.b16 %v7349
    %v7414 = vunpack.c.l.b16 %v7350
    %v7415 = vunpack.c.l.b16 %v7351
    %v7416 = vunpack.c.l.b16 %v7352
    %v7417 = vunpack.c.l.b16 %v7353
    %v7418 = vunpack.c.l.b16 %v7354
    %v7419 = vunpack.c.l.b16 %v7355
    %v7420 = vunpack.c.l.b16 %v7356
    %v7421 = vunpack.c.l.b16 %v7357
    %v7422 = vunpack.c.l.b16 %v7358
    %v7423 = vunpack.c.l.b16 %v7359
    %v7424 = vunpack.c.l.b16 %v7360
    %v7425 = vunpack.c.l.b16 %v7361
    %v7426 = vunpack.c.l.b16 %v7362
    %v7427 = vunpack.c.l.b16 %v7363
    %v7428 = vunpack.c.l.b16 %v7364
    %v7429 = vpack.c.b16 %v7414, %v7413
    %v7430 = vpack.c.b16 %v7416, %v7415
    %v7431 = vpack.c.b16 %v7418, %v7417
    %v7432 = vpack.c.b16 %v7420, %v7419
    %v7433 = vpack.c.b16 %v7422, %v7421
    %v7434 = vpack.c.b16 %v7424, %v7423
    %v7435 = vpack.c.b16 %v7426, %v7425
    %v7436 = vpack.c.b16 %v7428, %v7427
    %7445 = vmatprep.subr.bf16.mxu0 0
    %7446 = vmatpush1.bf16.msra.mxu0 %v7429
    %7447 = vmatprep.subr.bf16.mxu0 0
    %7448 = vmatpush1.bf16.msra.mxu0 %v7430
    %7449 = vmatprep.subr.bf16.mxu0 0
    %7450 = vmatpush1.bf16.msra.mxu0 %v7431
    %7451 = vmatprep.subr.bf16.mxu0 0
    %7452 = vmatpush1.bf16.msra.mxu0 %v7432
    %7453 = vmatprep.subr.bf16.mxu0 0
    %7454 = vmatpush1.bf16.msra.mxu0 %v7433
    %7455 = vmatprep.subr.bf16.mxu0 0
    %7456 = vmatpush1.bf16.msra.mxu0 %v7434
    %7457 = vmatprep.subr.bf16.mxu0 0
    %7458 = vmatpush1.bf16.msra.mxu0 %v7435
    %7459 = vmatprep.subr.bf16.mxu0 0
    %7460 = vmatpush1.bf16.msra.mxu0 %v7436
    %7461 = vmatprep.subr.bf16.mxu0 0
    %7462 = vmatpush1.bf16.msra.mxu0 0
    %7463 = vmatprep.subr.bf16.mxu0 0
    %7464 = vmatpush1.bf16.msra.mxu0 0
    %7465 = vmatprep.subr.bf16.mxu0 0
    %7466 = vmatpush1.bf16.msra.mxu0 0
    %7467 = vmatprep.subr.bf16.mxu0 0
    %7468 = vmatpush1.bf16.msra.mxu0 0
    %7469 = vmatprep.subr.bf16.mxu0 0
    %7470 = vmatpush1.bf16.msra.mxu0 0
    %7471 = vmatprep.subr.bf16.mxu0 0
    %7472 = vmatpush1.bf16.msra.mxu0 0
    %7473 = vmatprep.subr.bf16.mxu0 0
    %7474 = vmatpush1.bf16.msra.mxu0 0
    %7475 = vmatprep.subr.bf16.mxu0 0
    %7476 = vmatpush1.bf16.msra.mxu0 0
    %7477 = vmatprep.mubr.bf16.mxu0 0
    %7478 = vmatmul.mubr.bf16.gmra.mrb[0].mxu0 %v7381
    %v7479 = vpop.f32.mrb[0].mxu0
    %v7480 = vadd.f32 0.0, %v7479
    %v7481 = vpop.f32.mrb[0].mxu0
    %v7482 = vpop.f32.mrb[0].mxu0
    %v7483 = vadd.f32 0.0, %v7482
    %v7484 = vpop.f32.mrb[0].mxu0
    %7485 = vmatprep.mubr.bf16.mxu0 0
    %7486 = vmatmul.mubr.bf16.gmra.mrb[0].mxu0 %v7382
    %v7487 = vpop.f32.mrb[0].mxu0
    %v7488 = vadd.f32 0.0, %v7487
    %v7489 = vpop.f32.mrb[0].mxu0
    %v7490 = vpop.f32.mrb[0].mxu0
    %v7491 = vadd.f32 0.0, %v7490
    %v7492 = vpop.f32.mrb[0].mxu0
    %7493 = vmatprep.mubr.bf16.mxu0 0
    %7494 = vmatmul.mubr.bf16.gmra.mrb[0].mxu0 %v7383
    %v7495 = vpop.f32.mrb[0].mxu0
    %v7496 = vadd.f32 0.0, %v7495
    %v7497 = vpop.f32.mrb[0].mxu0
    %v7498 = vpop.f32.mrb[0].mxu0
    %v7499 = vadd.f32 0.0, %v7498
    %v7500 = vpop.f32.mrb[0].mxu0
    %7501 = vmatprep.mubr.bf16.mxu0 0
    %7502 = vmatmul.mubr.bf16.gmra.mrb[0].mxu0 %v7384
    %v7503 = vpop.f32.mrb[0].mxu0
    %v7504 = vadd.f32 0.0, %v7503
    %v7505 = vpop.f32.mrb[0].mxu0
    %v7506 = vpop.f32.mrb[0].mxu0
    %v7507 = vadd.f32 0.0, %v7506
    %v7508 = vpop.f32.mrb[0].mxu0
    %7509 = vmatprep.mubr.bf16.mxu0 0
    %7510 = vmatmul.mubr.bf16.gmra.mrb[0].mxu0 %v7385
    %v7511 = vpop.f32.mrb[0].mxu0
    %v7512 = vadd.f32 0.0, %v7511
    %v7513 = vpop.f32.mrb[0].mxu0
    %v7514 = vpop.f32.mrb[0].mxu0
    %v7515 = vadd.f32 0.0, %v7514
    %v7516 = vpop.f32.mrb[0].mxu0
    %7517 = vmatprep.mubr.bf16.mxu0 0
    %7518 = vmatmul.mubr.bf16.gmra.mrb[0].mxu0 %v7386
    %v7519 = vpop.f32.mrb[0].mxu0
    %v7520 = vadd.f32 0.0, %v7519
    %v7521 = vpop.f32.mrb[0].mxu0
    %v7522 = vpop.f32.mrb[0].mxu0
    %v7523 = vadd.f32 0.0, %v7522
    %v7524 = vpop.f32.mrb[0].mxu0
    %7525 = vmatprep.mubr.bf16.mxu0 0
    %7526 = vmatmul.mubr.bf16.gmra.mrb[0].mxu0 %v7387
    %v7527 = vpop.f32.mrb[0].mxu0
    %v7528 = vadd.f32 0.0, %v7527
    %v7529 = vpop.f32.mrb[0].mxu0
    %v7530 = vpop.f32.mrb[0].mxu0
    %v7531 = vadd.f32 0.0, %v7530
    %v7532 = vpop.f32.mrb[0].mxu0
    %7533 = vmatprep.mubr.bf16.mxu0 0
    %7534 = vmatmul.mubr.bf16.gmra.mrb[0].mxu0 %v7388
    %v7535 = vpop.f32.mrb[0].mxu0
    %v7536 = vadd.f32 0.0, %v7535
    %v7537 = vpop.f32.mrb[0].mxu0
    %v7538 = vpop.f32.mrb[0].mxu0
    %v7539 = vadd.f32 0.0, %v7538
    %v7540 = vpop.f32.mrb[0].mxu0
    %7541 = vdwg.mxu0
    %v7542 = vadd.f32 %v7172, %v7480
    %v7543 = vadd.f32 %v7173, %v7483
    %v7544 = vadd.f32 %v7174, %v7488
    %v7545 = vadd.f32 %v7175, %v7491
    %v7546 = vadd.f32 %v7176, %v7496
    %v7547 = vadd.f32 %v7177, %v7499
    %v7548 = vadd.f32 %v7178, %v7504
    %v7549 = vadd.f32 %v7179, %v7507
    %v7550 = vadd.f32 %v7180, %v7512
    %v7551 = vadd.f32 %v7181, %v7515
    %v7552 = vadd.f32 %v7182, %v7520
    %v7553 = vadd.f32 %v7183, %v7523
    %v7554 = vadd.f32 %v7184, %v7528
    %v7555 = vadd.f32 %v7185, %v7531
    %v7556 = vadd.f32 %v7186, %v7536
    %v7557 = vadd.f32 %v7187, %v7539
    %v7558 = vadd.f32 %v7542, %v7543
    %v7559 = vadd.f32 %v7558, %v7544
    %v7560 = vadd.f32 %v7559, %v7545
    %v7561 = vadd.f32 %v7560, %v7546
    %v7562 = vadd.f32 %v7561, %v7547
    %v7563 = vadd.f32 %v7562, %v7548
    %v7564 = vadd.f32 %v7563, %v7549
    %v7565 = vadd.f32 %v7564, %v7550
    %v7566 = vadd.f32 %v7565, %v7551
    %v7567 = vadd.f32 %v7566, %v7552
    %v7568 = vadd.f32 %v7567, %v7553
    %v7569 = vadd.f32 %v7568, %v7554
    %v7570 = vadd.f32 %v7569, %v7555
    %v7571 = vadd.f32 %v7570, %v7556
    %v7572 = vadd.f32 %v7571, %v7557
    %v7573 = vrot.slane %v7572, 4
    %v7574 = vadd.f32 %v7572, %v7573
    %v7575 = vrot.slane %v7574, 2
    %v7576 = vadd.f32 %v7574, %v7575
    %v7577 = vrot.slane %v7576, 1
    %v7578 = vadd.f32 %v7576, %v7577
    %v7579 = vmul.f32 %v7542, %v7542
    %v7580 = vmul.f32 %v7543, %v7543
    %v7581 = vmul.f32 %v7544, %v7544
    %v7582 = vmul.f32 %v7545, %v7545
    %v7583 = vmul.f32 %v7546, %v7546
    %v7584 = vmul.f32 %v7547, %v7547
    %v7585 = vmul.f32 %v7548, %v7548
    %v7586 = vmul.f32 %v7549, %v7549
    %v7587 = vmul.f32 %v7550, %v7550
    %v7588 = vmul.f32 %v7551, %v7551
    %v7589 = vmul.f32 %v7552, %v7552
    %v7590 = vmul.f32 %v7553, %v7553
    %v7591 = vmul.f32 %v7554, %v7554
    %v7592 = vmul.f32 %v7555, %v7555
    %v7593 = vmul.f32 %v7556, %v7556
    %v7594 = vmul.f32 %v7557, %v7557
    %v7595 = vadd.f32 %v7579, %v7580
    %v7596 = vadd.f32 %v7595, %v7581
    %v7597 = vadd.f32 %v7596, %v7582
    %v7598 = vadd.f32 %v7597, %v7583
    %v7599 = vadd.f32 %v7598, %v7584
    %v7600 = vadd.f32 %v7599, %v7585
    %v7601 = vadd.f32 %v7600, %v7586
    %v7602 = vadd.f32 %v7601, %v7587
    %v7603 = vadd.f32 %v7602, %v7588
    %v7604 = vadd.f32 %v7603, %v7589
    %v7605 = vadd.f32 %v7604, %v7590
    %v7606 = vadd.f32 %v7605, %v7591
    %v7607 = vadd.f32 %v7606, %v7592
    %v7608 = vadd.f32 %v7607, %v7593
    %v7609 = vadd.f32 %v7608, %v7594
    %v7610 = vrot.slane %v7609, 4
    %v7611 = vadd.f32 %v7609, %v7610
    %v7612 = vrot.slane %v7611, 2
    %v7613 = vadd.f32 %v7611, %v7612
    %v7614 = vrot.slane %v7613, 1
    %v7615 = vadd.f32 %v7613, %v7614
    %v7616 = vmul.f32 %v7578, 0.0078125
    %v7617 = vmul.f32 %v7615, 0.0078125
    %v7618 = vmul.f32 %v7616, %v7616
    %v7619 = vsub.f32 %v7617, %v7618
    %v7620 = vmax.f32 %v7619, 0.0
    %v7621 = vld [vmem:[%s5] sm:$0x1]
    %v7622 = vadd.f32 %v7620, 1e-05
    %v7623 = vrsqrt.pop %v7622
    %v7624 = vmul.f32 %v7621, %v7623
    %v7625 = vld [vmem:[%s6] sm:$0x1]
    %v7626 = vmul.f32 %v7616, %v7624
    %v7627 = vsub.f32 %v7625, %v7626
    %v7629 = vlaneseq
    %v7630 = vshrl.u32 %v7629, 7
    %v7631 = vsub.s32 0, %v7630
    %v7632 = vrot.slane %v7624, %v7631
    %v7634 = vmul.f32 %v7542, %v7632
    %v7635 = vmul.f32 %v7543, %v7632
    %v7636 = vmul.f32 %v7544, %v7632
    %v7637 = vmul.f32 %v7545, %v7632
    %v7638 = vmul.f32 %v7546, %v7632
    %v7639 = vmul.f32 %v7547, %v7632
    %v7640 = vmul.f32 %v7548, %v7632
    %v7641 = vmul.f32 %v7549, %v7632
    %v7642 = vmul.f32 %v7550, %v7632
    %v7643 = vmul.f32 %v7551, %v7632
    %v7644 = vmul.f32 %v7552, %v7632
    %v7645 = vmul.f32 %v7553, %v7632
    %v7646 = vmul.f32 %v7554, %v7632
    %v7647 = vmul.f32 %v7555, %v7632
    %v7648 = vmul.f32 %v7556, %v7632
    %v7649 = vmul.f32 %v7557, %v7632
    %v7651 = vlaneseq
    %v7652 = vshrl.u32 %v7651, 7
    %v7653 = vsub.s32 0, %v7652
    %v7654 = vrot.slane %v7627, %v7653
    %v7656 = vadd.f32 %v7634, %v7654
    %v7657 = vadd.f32 %v7635, %v7654
    %v7658 = vadd.f32 %v7636, %v7654
    %v7659 = vadd.f32 %v7637, %v7654
    %v7660 = vadd.f32 %v7638, %v7654
    %v7661 = vadd.f32 %v7639, %v7654
    %v7662 = vadd.f32 %v7640, %v7654
    %v7663 = vadd.f32 %v7641, %v7654
    %v7664 = vadd.f32 %v7642, %v7654
    %v7665 = vadd.f32 %v7643, %v7654
    %v7666 = vadd.f32 %v7644, %v7654
    %v7667 = vadd.f32 %v7645, %v7654
    %v7668 = vadd.f32 %v7646, %v7654
    %v7669 = vadd.f32 %v7647, %v7654
    %v7670 = vadd.f32 %v7648, %v7654
    %v7671 = vadd.f32 %v7649, %v7654
    %v7672 = vmax.f32 %v7656, 0.0
    %v7673 = vmax.f32 %v7657, 0.0
    %v7674 = vmax.f32 %v7658, 0.0
    %v7675 = vmax.f32 %v7659, 0.0
    %v7676 = vmax.f32 %v7660, 0.0
    %v7677 = vmax.f32 %v7661, 0.0
    %v7678 = vmax.f32 %v7662, 0.0
    %v7679 = vmax.f32 %v7663, 0.0
    %v7680 = vmax.f32 %v7664, 0.0
    %v7681 = vmax.f32 %v7665, 0.0
    %v7682 = vmax.f32 %v7666, 0.0
    %v7683 = vmax.f32 %v7667, 0.0
    %v7684 = vmax.f32 %v7668, 0.0
    %v7685 = vmax.f32 %v7669, 0.0
    %v7686 = vmax.f32 %v7670, 0.0
    %v7687 = vmax.f32 %v7671, 0.0
    %7688 = vst [vmem:[#allocation9] sm:$0xff] %v7672
    %7689 = vst [vmem:[#allocation9 + $0x8] sm:$0xff] %v7673
    %7690 = vst [vmem:[#allocation9 + $0x10] sm:$0xff] %v7674
    %7691 = vst [vmem:[#allocation9 + $0x18] sm:$0xff] %v7675
    %7692 = vst [vmem:[#allocation9 + $0x20] sm:$0xff] %v7676
    %7693 = vst [vmem:[#allocation9 + $0x28] sm:$0xff] %v7677
    %7694 = vst [vmem:[#allocation9 + $0x30] sm:$0xff] %v7678
    %7695 = vst [vmem:[#allocation9 + $0x38] sm:$0xff] %v7679
    %7696 = vst [vmem:[#allocation9 + $0x40] sm:$0xff] %v7680
    %7697 = vst [vmem:[#allocation9 + $0x48] sm:$0xff] %v7681
    %7698 = vst [vmem:[#allocation9 + $0x50] sm:$0xff] %v7682
    %7699 = vst [vmem:[#allocation9 + $0x58] sm:$0xff] %v7683
    %7700 = vst [vmem:[#allocation9 + $0x60] sm:$0xff] %v7684
    %7701 = vst [vmem:[#allocation9 + $0x68] sm:$0xff] %v7685
    %7702 = vst [vmem:[#allocation9 + $0x70] sm:$0xff] %v7686
    %7703 = vst [vmem:[#allocation9 + $0x78] sm:$0xff] %v7687
    // Predicated region
    $region42: #{tpu_custom_call.1} parent=1 // pred_check
      _
    $region43: #{tpu_custom_call.1} parent=1 // pred_check_branch
      %7705 = sbr.rel (0) target = $region45
    $region44: #{tpu_custom_call.1} parent=1 // pred_region
      %s7707 = ssub.s32 2048, 2048
      %7708 = vsyncadd [#allocation5], %s7707
      %s7709 = sshll.u32 [#allocation9], 4
      %s7710 = int_to_ptr.vmem [resolvable:$true] %s7709
      %7715 = dma.vmem_to_hbm [thread:$0]  %s7710, 2048, %s7, [#allocation5], 128, 128, 8
    $region45: #{tpu_custom_call.1} parent=1 // pred_fallthru
      _
    // Predicated region
    $region46: #{tpu_custom_call.1} parent=1 // pred_check
      _
    $region47: #{tpu_custom_call.1} parent=1 // pred_check_branch
      %7717 = sbr.rel (0) target = $region49
    $region48: #{tpu_custom_call.1} parent=1 // pred_region
      %7718 = dma.done [#allocation5], 2048
    $region49: #{tpu_custom_call.1} parent=1 // pred_fallthru
      _
    %7719 = vsyncpa [#allocation4], 1
    %7720 = vsyncpa [#allocation7], 1
    %7721 = vsyncpa [#allocation5], 1

</llo_original>
